<compile_context>
chip_gen: v7x
topology: tpu7x:2x2x1
jax: 0.10.0
libtpu: 0.0.40
codegen_flags: <defaults>
</compile_context>

<pallas_src>
import math
import functools

import jax
import jax.numpy as jnp
from jax.experimental import pallas as pl
from jax.experimental.pallas import tpu as pltpu

BN_EPS = 1e-5
LANE = 128
_VMEM_LIMIT = 48 * 1024 * 1024         # safe on v7x (64 MiB), generous for v5e/v6e
_VMEM_SPEC = pl.BlockSpec(memory_space=pltpu.MemorySpace.VMEM)


# ------------------------------ small helpers -------------------------------

def _round_up(x, m):
    return ((x + m - 1) // m) * m


def _cp(c):
    """Channel count padded to a lane-dense multiple of 128."""
    return _round_up(c, LANE)


def _pick_tile(dim, target, align):
    """Largest tile <= target that is a multiple of `align` and divides `dim`;
    falls back to the full dimension (always a legal block shape)."""
    if dim <= target:
        return dim
    t = (target // align) * align
    while t >= align and dim % t:
        t -= align
    return t if t >= align else dim


def _m_tiling(m_real, target=256):
    """Deterministic (tm, M_pad) so producer/consumer GEMMs share one M layout."""
    m8 = _round_up(m_real, 8)
    if m8 <= target:
        return m8, m8
    t = (target // 8) * 8
    while t >= 8 and m8 % t:
        t -= 8
    if t < 8:
        t = target
    return t, _round_up(m8, t)


def _pad_rows(a, rows):
    return a if a.shape[0] == rows else jnp.pad(a, ((0, rows - a.shape[0]), (0, 0)))


# ----------------------------- Pallas kernels ------------------------------

def _gemm_kernel(*refs, n_k, tm, m_real, mask_rows, use_scale, use_bias,
                 relu_in, out_stats):
    """Tiled GEMM.  Optional fused prologue BN (x*scale+shift) + ReLU, optional
    bias, optional per-tile BN column statistics in the k==last epilogue."""
    pos = 0
    x_ref = refs[pos]; pos += 1
    w_ref = refs[pos]; pos += 1
    scale_ref = shift_ref = bias_ref = None
    if use_scale:
        scale_ref = refs[pos]; shift_ref = refs[pos + 1]; pos += 2
    if use_bias:
        bias_ref = refs[pos]; pos += 1
    o_ref = refs[pos]; pos += 1
    st_ref = refs[pos] if out_stats else None
    if out_stats:
        pos += 1
    acc_ref = refs[pos] if n_k > 1 else None

    i = pl.program_id(0)
    k = pl.program_id(2)

    x = x_ref[...]
    if use_scale:                                   # fused BN of the producer
        xf = x.astype(jnp.float32) * scale_ref[...] + shift_ref[...]
        if relu_in:
            xf = jnp.maximum(xf, 0.0)
        x = xf.astype(jnp.bfloat16)
    elif relu_in:
        x = jnp.maximum(x, 0)
    part = jnp.dot(x, w_ref[...], preferred_element_type=jnp.float32)

    def epilogue(y):
        if use_bias:
            y = y + bias_ref[...]
        o_ref[...] = y.astype(o_ref.dtype)
        if out_stats:
            if mask_rows:                           # exclude M-padding rows
                rows = jax.lax.broadcasted_iota(jnp.int32, y.shape, 0) + i * tm
                y = jnp.where(rows < m_real, y, 0.0)
            s = jnp.sum(y, axis=0, keepdims=True)
            q = jnp.sum(y * y, axis=0, keepdims=True)
            st_ref[...] = jnp.concatenate([s, q], axis=0)[None]

    if n_k == 1:
        # single-K fast path: no accumulator scratch round-trip
        epilogue(part)
    else:
        @pl.when(k == 0)
        def _():
            acc_ref[...] = jnp.zeros_like(acc_ref)
        acc_ref[...] += part

        @pl.when(k == n_k - 1)
        def _():
            epilogue(acc_ref[...])


def _affine_kernel(*refs, add_res, relu):
    """out = [relu]( y*scale+shift [+ res*res_scale+res_shift] ) — tiled VPU pass."""
    y_ref, s_ref, b_ref = refs[0:3]
    if add_res:
        r_ref, rs_ref, rb_ref = refs[3:6]
    o_ref = refs[-1]
    y = y_ref[...].astype(jnp.float32) * s_ref[...] + b_ref[...]
    if add_res:
        y = y + r_ref[...].astype(jnp.float32) * rs_ref[...] + rb_ref[...]
    if relu:
        y = jnp.maximum(y, 0.0)
    o_ref[...] = y.astype(o_ref.dtype)


def _maxpool_kernel(p_ref, o_ref):
    # p_ref: (9, tm, C) — window axis leading => 9 dense (tm, C) reads.
    m = p_ref[0]
    for q in range(1, 9):
        m = jnp.maximum(m, p_ref[q])
    o_ref[...] = m


def _global_avgpool_kernel(x_ref, o_ref):
    o_ref[...] = jnp.mean(x_ref[...].astype(jnp.float32), axis=1)


# ------------------------------ Pallas wrappers ------------------------------

def pallas_gemm(x, w, *, m_real, bias=None, scale=None, shift=None,
                relu_in=False, out_stats=False, out_dtype=jnp.bfloat16,
                tm_target=256, tn_target=512, tk_target=512):
    """x:(M or M_pad, K) -> (M_pad, N) out_dtype, plus optional (M_tiles, 2, N)
    f32 per-tile BN column statistics.  Activations stay bf16."""
    x = x.astype(jnp.bfloat16)
    M_in, K = x.shape
    Kw, N = w.shape
    assert K == Kw, (K, Kw)

    tm, M_pad = _m_tiling(m_real, tm_target)
    if M_in == M_pad:
        pass
    elif M_in == m_real:
        x = jnp.pad(x, ((0, M_pad - m_real), (0, 0)))
    else:
        raise ValueError("input rows do not match m_real / padded tiling")
    tk = _pick_tile(K, tk_target, 128)
    tn = _pick_tile(N, tn_target, 128)
    n_k = K // tk
    use_scale = scale is not None

    args = [x, w]
    in_specs = [pl.BlockSpec((tm, tk), lambda i, j, k: (i, k)),
                pl.BlockSpec((tk, tn), lambda i, j, k: (k, j))]
    if use_scale:
        args += [scale.reshape(1, K).astype(jnp.float32),
                 shift.reshape(1, K).astype(jnp.float32)]
        in_specs += [pl.BlockSpec((1, tk), lambda i, j, k: (0, k)),
                     pl.BlockSpec((1, tk), lambda i, j, k: (0, k))]
    if bias is not None:
        args.append(bias.reshape(1, N).astype(jnp.float32))
        in_specs.append(pl.BlockSpec((1, tn), lambda i, j, k: (0, j)))

    if out_stats:
        out_shape = (jax.ShapeDtypeStruct((M_pad, N), out_dtype),
                     jax.ShapeDtypeStruct((M_pad // tm, 2, N), jnp.float32))
        out_specs = [pl.BlockSpec((tm, tn), lambda i, j, k: (i, j)),
                     pl.BlockSpec((1, 2, tn), lambda i, j, k: (i, 0, j))]
    else:
        out_shape = jax.ShapeDtypeStruct((M_pad, N), out_dtype)
        out_specs = pl.BlockSpec((tm, tn), lambda i, j, k: (i, j))

    kernel = functools.partial(
        _gemm_kernel, n_k=n_k, tm=tm, m_real=m_real,
        mask_rows=(M_pad != m_real), use_scale=use_scale,
        use_bias=bias is not None, relu_in=relu_in, out_stats=out_stats)
    scratch = [pltpu.VMEM((tm, tn), jnp.float32)] if n_k > 1 else []

    res = pl.pallas_call(
        kernel,
        out_shape=out_shape,
        grid_spec=pltpu.PrefetchScalarGridSpec(
            num_scalar_prefetch=0,
            grid=(M_pad // tm, N // tn, n_k),
            in_specs=in_specs,
            out_specs=out_specs,
            scratch_shapes=scratch),
        compiler_params=pltpu.CompilerParams(
            dimension_semantics=("parallel", "parallel", "arbitrary"),
            vmem_limit_bytes=_VMEM_LIMIT),
    )(*args)
    if out_stats:
        return res[0], res[1]
    return res, None


def bn_scale_shift(stats, gamma, beta, m_real):
    """(M_tiles, 2, C) partial sums -> per-channel BN scale/shift, tiny JAX op.
    Uses E[x^2]-E[x]^2 in f32 (documented precision caveat vs. PyTorch BN)."""
    s = jnp.sum(stats[:, 0, :], axis=0)
    q = jnp.sum(stats[:, 1, :], axis=0)
    mu = s / float(m_real)
    var = jnp.maximum(q / float(m_real) - mu * mu, 0.0)
    scale = gamma * jax.lax.rsqrt(var + BN_EPS)
    shift = beta - mu * scale
    return scale.reshape(1, -1), shift.reshape(1, -1)


def pallas_affine(y_pad, scale, shift, *, residual=None, res_scale=None,
                  res_shift=None, relu=False, out_dtype=jnp.bfloat16,
                  tm_target=256, tc_target=512):
    M_pad, C = y_pad.shape
    tm = _pick_tile(M_pad, tm_target, 8)
    tc = _pick_tile(C, tc_target, 128)
    args = [y_pad, scale, shift]
    in_specs = [pl.BlockSpec((tm, tc), lambda i, j: (i, j)),
                pl.BlockSpec((1, tc), lambda i, j: (0, j)),
                pl.BlockSpec((1, tc), lambda i, j: (0, j))]
    if residual is not None:
        args += [residual, res_scale, res_shift]
        in_specs += [pl.BlockSpec((tm, tc), lambda i, j: (i, j)),
                     pl.BlockSpec((1, tc), lambda i, j: (0, j)),
                     pl.BlockSpec((1, tc), lambda i, j: (0, j))]
    kernel = functools.partial(_affine_kernel,
                               add_res=residual is not None, relu=relu)
    return pl.pallas_call(
        kernel,
        out_shape=jax.ShapeDtypeStruct((M_pad, C), out_dtype),
        grid_spec=pltpu.PrefetchScalarGridSpec(
            num_scalar_prefetch=0,
            grid=(M_pad // tm, C // tc),
            in_specs=in_specs,
            out_specs=pl.BlockSpec((tm, tc), lambda i, j: (i, j))),
        compiler_params=pltpu.CompilerParams(
            dimension_semantics=("parallel", "parallel"),
            vmem_limit_bytes=_VMEM_LIMIT),
    )(*args)


# ------------------------------ JAX glue -----------------------------------

def _extract_patches(x, k, stride, pad):
    """x: (N,H,W,C) -> (N,Ho,Wo,k*k,C) im2col patches (plain-JAX glue).
    TODO(synk): stream shifted taps via BlockSpec index_maps to kill the k*k
    HBM blowup instead of materializing the patch tensor."""
    N, H, W, C = x.shape
    Ho = (H + 2 * pad - k) // stride + 1
    Wo = (W + 2 * pad - k) // stride + 1
    xp = jnp.pad(x, ((0, 0), (pad, pad), (pad, pad), (0, 0)))
    pats = []
    for di in range(k):
        for dj in range(k):
            pats.append(xp[:, di:di + stride * (Ho - 1) + 1:stride,
                           dj:dj + stride * (Wo - 1) + 1:stride, :])
    return jnp.stack(pats, axis=3), Ho, Wo


def _maxpool_patches(x, k, stride, pad):
    """(k*k, M, C) patches with the window axis LEADING (dense kernel reads)."""
    N, H, W, C = x.shape
    Ho = (H + 2 * pad - k) // stride + 1
    Wo = (W + 2 * pad - k) // stride + 1
    xp = jnp.pad(x, ((0, 0), (pad, pad), (pad, pad), (0, 0)))   # 0-pad: x >= 0
    M = N * Ho * Wo
    pats = []
    for di in range(k):
        for dj in range(k):
            pats.append(xp[:, di:di + stride * (Ho - 1) + 1:stride,
                           dj:dj + stride * (Wo - 1) + 1:stride, :].reshape(M, C))
    return jnp.stack(pats, axis=0), Ho, Wo


def maxpool_3x3_s2_p1(x):
    N = x.shape[0]
    C = x.shape[-1]
    pats, Ho, Wo = _maxpool_patches(x, 3, 2, 1)
    M = N * Ho * Wo
    tm, M_pad = _m_tiling(M, 256)
    if M_pad != M:
        pats = jnp.pad(pats, ((0, 0), (0, M_pad - M), (0, 0)))
    out = pl.pallas_call(
        _maxpool_kernel,
        out_shape=jax.ShapeDtypeStruct((M_pad, C), x.dtype),
        grid_spec=pltpu.PrefetchScalarGridSpec(
            num_scalar_prefetch=0,
            grid=(M_pad // tm,),
            in_specs=[pl.BlockSpec((9, tm, C), lambda i: (0, i, 0))],
            out_specs=pl.BlockSpec((tm, C), lambda i: (i, 0))),
        compiler_params=pltpu.CompilerParams(
            dimension_semantics=("parallel",),
            vmem_limit_bytes=_VMEM_LIMIT),
    )(pats)
    return out[:M].reshape(N, Ho, Wo, C)


def global_avgpool(x):
    N, H, W, C = x.shape
    return pl.pallas_call(
        _global_avgpool_kernel,
        out_shape=jax.ShapeDtypeStruct((N, C), jnp.float32),
        in_specs=[_VMEM_SPEC],
        out_specs=_VMEM_SPEC,
    )(x.reshape(N, H * W, C))


def linear(feat_f32, w, b):
    M = feat_f32.shape[0]
    y, _ = pallas_gemm(feat_f32.astype(jnp.bfloat16), w, m_real=M, bias=b,
                       out_dtype=jnp.float32)
    return y[:M]


# --------------------------- parameter init --------------------------------

class KeyGen:
    def __init__(self, key):
        self.key = key

    def __call__(self):
        self.key, sub = jax.random.split(self.key)
        return sub


def init_conv_gemm(kg, kh, kw, cin_p, cout, *, k_pad_to=None):
    """GEMM-ready (K, cout_p) bf16 conv weight; out channels zero-padded to 128x."""
    cout_p = _cp(cout)
    n = kh * kw * cout                        # matches m.weight.data.normal_(0, sqrt(2/n))
    w = jax.random.normal(kg(), (kh, kw, cin_p, cout), jnp.float32) * math.sqrt(2.0 / n)
    w = jnp.pad(w, ((0, 0), (0, 0), (0, 0), (0, cout_p - cout)))
    w2 = w.reshape(kh * kw * cin_p, cout_p)
    if k_pad_to is not None and k_pad_to > w2.shape[0]:
        w2 = jnp.pad(w2, ((0, k_pad_to - w2.shape[0]), (0, 0)))
    return w2.astype(jnp.bfloat16)


def init_bn(cout):
    cout_p = _cp(cout)
    gamma = jnp.concatenate([jnp.ones((cout,), jnp.float32),
                             jnp.zeros((cout_p - cout,), jnp.float32)])
    beta = jnp.zeros((cout_p,), jnp.float32)
    return gamma, beta


def init_linear(kg, cin_real, cin_p, cout):
    cout_p = _cp(cout)
    bound = 1.0 / math.sqrt(cin_real)
    w = jax.random.uniform(kg(), (cin_p, cout), jnp.float32, -bound, bound)
    w = jnp.pad(w, ((0, 0), (0, cout_p - cout)))
    b = jax.random.uniform(kg(), (cout,), jnp.float32, -bound, bound)
    b = jnp.pad(b, ((0, cout_p - cout),))
    return w.astype(jnp.bfloat16), b


def bottleneck_out_channels(planes, groups=1):
    return 2 * planes if groups > 1 else 4 * planes


def init_bottleneck(kg, inplanes, planes, groups, stride, ds_kind):
    cout = bottleneck_out_channels(planes, groups)
    inp_p, mid_p, cout_p = _cp(inplanes), _cp(planes), _cp(cout)
    p = {'stride': stride,
         'w1': init_conv_gemm(kg, 1, 1, inp_p, planes), 'bn1': init_bn(planes),
         'w2': init_conv_gemm(kg, 3, 3, mid_p, planes), 'bn2': init_bn(planes),
         'w3': init_conv_gemm(kg, 1, 1, mid_p, cout),   'bn3': init_bn(cout),
         'downsample': None}
    if ds_kind == 'basic':
        p['downsample'] = {'kind': 'basic', 'stride': stride,
                           'w': init_conv_gemm(kg, 1, 1, inp_p, cout),
                           'bn': init_bn(cout)}
    elif ds_kind == 'shift_conv':
        # grouped (groups=2) 1x1 conv -> two separate per-group GEMM weights
        half = cout // 2
        n = cout                              # kernel 1x1, m.out_channels = cout
        w0 = jax.random.normal(kg(), (inp_p, half), jnp.float32) * math.sqrt(2.0 / n)
        w1 = jax.random.normal(kg(), (inp_p, half), jnp.float32) * math.sqrt(2.0 / n)
        bound = 1.0 / math.sqrt(inplanes)     # conv bias default init (fan_in per group)
        b0 = jax.random.uniform(kg(), (half,), jnp.float32, -bound, bound)
        b1 = jax.random.uniform(kg(), (half,), jnp.float32, -bound, bound)
        p['downsample'] = {'kind': 'shift_conv', 'coutp': cout_p,
                           'w0': w0.astype(jnp.bfloat16), 'w1': w1.astype(jnp.bfloat16),
                           'b0': b0, 'b1': b1, 'bn': init_bn(cout)}
    return p


def init_resnet(kg, layers, channels, groups=1, num_classes=10, downsample='shift_conv'):
    assert len(layers) == 4
    assert groups == 1   # TODO(synk): grouped 3x3 conv (groups > 1) not implemented
    params = {'num_classes': num_classes}
    inplanes = 64
    params['conv1_w'] = init_conv_gemm(kg, 7, 7, 3, inplanes, k_pad_to=256)
    params['conv1_kpad'] = 256                 # 7*7*3=147 zero-padded to 256 (aligned MXU K)
    params['bn1'] = init_bn(inplanes)
    all_layers = []
    for nblocks, mult, stride in zip(layers, (1, 2, 4, 8), (1, 2, 2, 2)):
        planes = channels * mult
        cout = bottleneck_out_channels(planes, groups)
        blocks = []
        for bi in range(nblocks):
            s = stride if bi == 0 else 1
            ds_kind = None
            if s != 1 or inplanes != cout:
                ds_kind = 'basic' if (downsample == 'basic' or s == 1) else 'shift_conv'
            blocks.append(init_bottleneck(kg, inplanes, planes, groups, s, ds_kind))
            inplanes = cout
        all_layers.append(blocks)
    params['layers'] = all_layers
    params['fc1'] = init_linear(kg, inplanes, _cp(inplanes), num_classes)
    params['fc2'] = init_linear(kg, inplanes, _cp(inplanes), num_classes)
    return params


# ------------------------------ forward ------------------------------------

def apply_downsample(x, d, m_pad_target):
    """Returns (raw residual slab (M_pad, Cp), bn scale, bn shift)."""
    if d['kind'] == 'basic':
        s = d['stride']
        # TODO(synk): express stride>1 via GEMM index_map instead of a JAX slice.
        xs = x if s == 1 else x[:, ::s, ::s, :]
        Nn, Ho, Wo, Cin = xs.shape
        Md = Nn * Ho * Wo
        y, st = pallas_gemm(xs.reshape(Md, Cin), d['w'], m_real=Md, out_stats=True)
        sc, sh = bn_scale_shift(st, *d['bn'], Md)
    else:
        # ShiftConvDownsample: cat(x[..even..], x[..odd..]) -> ReLU -> grouped 1x1
        # conv (bias) -> BN.  Two per-group GEMMs (no zero block-diagonal FLOPs).
        # TODO(synk): fold the even/odd gather into the GEMM input index_map.
        a = x[:, 0::2, 0::2, :]
        b = x[:, 1::2, 1::2, :]
        Nn, Ho, Wo, Cin = a.shape
        Md = Nn * Ho * Wo
        y0, st0 = pallas_gemm(a.reshape(Md, Cin), d['w0'], m_real=Md,
                              bias=d['b0'], relu_in=True, out_stats=True)
        y1, st1 = pallas_gemm(b.reshape(Md, Cin), d['w1'], m_real=Md,
                              bias=d['b1'], relu_in=True, out_stats=True)
        y = jnp.concatenate([y0, y1], axis=-1)
        st = jnp.concatenate([st0, st1], axis=-1)
        coutp = d['coutp']
        if y.shape[1] != coutp:
            y = jnp.pad(y, ((0, 0), (0, coutp - y.shape[1])))
            st = jnp.pad(st, ((0, 0), (0, 0), (0, coutp - st.shape[2])))
        sc, sh = bn_scale_shift(st, *d['bn'], Md)
    assert y.shape[0] == m_pad_target
    return y, sc, sh


def bottleneck_forward(x, p):
    N, H, W, Cin = x.shape
    stride = p['stride']

    # conv1 (1x1) on the normalized block input; BN stats fused in the GEMM.
    M1 = N * H * W
    y1, st1 = pallas_gemm(x.reshape(M1, Cin), p['w1'], m_real=M1, out_stats=True)
    sc1, sh1 = bn_scale_shift(st1, *p['bn1'], M1)
    Cmid = p['w1'].shape[1]
    # standalone BN+ReLU (conv2 needs a spatially padded *normalized* input)
    a1 = pallas_affine(y1, sc1, sh1, relu=True)[:M1].reshape(N, H, W, Cmid)

    # conv2 (3x3, stride s) via im2col GEMM; BN stats fused.
    pats, Ho, Wo = _extract_patches(a1, 3, stride, 1)
    M2 = N * Ho * Wo
    y2, st2 = pallas_gemm(pats.reshape(M2, 9 * Cmid), p['w2'], m_real=M2,
                          out_stats=True)
    sc2, sh2 = bn_scale_shift(st2, *p['bn2'], M2)

    # conv3 (1x1) consumes the RAW conv2 output; BN2 + ReLU fused in its prologue.
    y3, st3 = pallas_gemm(y2, p['w3'], m_real=M2, scale=sc2, shift=sh2,
                          relu_in=True, out_stats=True)
    sc3, sh3 = bn_scale_shift(st3, *p['bn3'], M2)
    Cout = p['w3'].shape[1]

    # residual path
    if p['downsample'] is None:
        res = _pad_rows(x.reshape(M1, Cin), y3.shape[0])   # already normalized
        rs = jnp.ones((1, Cout), jnp.float32)
        rb = jnp.zeros((1, Cout), jnp.float32)
    else:
        res, rs, rb = apply_downsample(x, p['downsample'], y3.shape[0])

    # block tail: BN3(y3) + BN_ds(res) + ReLU in a single fused pass.
    out = pallas_affine(y3, sc3, sh3, residual=res, res_scale=rs, res_shift=rb,
                        relu=True)
    return out[:M2].reshape(N, Ho, Wo, Cout)


def resnet224_forward(x_nchw, params):
    x = jnp.transpose(x_nchw, (0, 2, 3, 1)).astype(jnp.float32)   # NCHW -> NHWC
    N = x.shape[0]

    # stem: 7x7/s2 conv (im2col, K padded to 256) + fused stats, then BN+ReLU pass.
    pats, Ho, Wo = _extract_patches(x, 7, 2, 3)
    M1 = N * Ho * Wo
    cols = pats.reshape(M1, -1)
    kp = params['conv1_kpad']
    if cols.shape[1] != kp:
        cols = jnp.pad(cols, ((0, 0), (0, kp - cols.shape[1])))
    cols = cols.astype(jnp.bfloat16)
    y, st = pallas_gemm(cols, params['conv1_w'], m_real=M1, out_stats=True)
    sc, sh = bn_scale_shift(st, *params['bn1'], M1)
    C1 = params['conv1_w'].shape[1]
    h = pallas_affine(y, sc, sh, relu=True)[:M1].reshape(N, Ho, Wo, C1)

    h = maxpool_3x3_s2_p1(h)

    for blocks in params['layers']:
        for blk in blocks:
            h = bottleneck_forward(h, blk)

    feat = global_avgpool(h)                    # (N, Cp) == x.view(x.size(0), -1)
    nc = params['num_classes']
    out1 = linear(feat, *params['fc1'])[:, :nc]
    out2 = linear(feat, *params['fc2'])[:, :nc]
    return out1, out2


# -------------------------------- main --------------------------------------

if __name__ == "__main__":
    kg = KeyGen(jax.random.PRNGKey(0))
    params = init_resnet(kg, layers=[1, 1, 1, 1], channels=8, groups=1,
                         num_classes=10, downsample='shift_conv')
    x = jax.random.normal(kg(), (2, 3, 32, 32), jnp.float32)      # NCHW like PyTorch

    fwd = jax.jit(lambda inp: resnet224_forward(inp, params))
    logits1, logits2 = fwd(x)
    jax.block_until_ready((logits1, logits2))

    assert logits1.shape == (2, 10) and logits2.shape == (2, 10)
    assert bool(jnp.all(jnp.isfinite(logits1))) and bool(jnp.all(jnp.isfinite(logits2)))
    print("KERNEL_OK")
</pallas_src>

<mosaic_0001>
module attributes {stable_mosaic.version = 11 : i64} {
  func.func @_gemm_kernel(%arg0: i32, %arg1: i32, %arg2: i32, %arg3: memref<256x256xbf16, #tpu.memory_space<vmem>>, %arg4: memref<256x128xbf16, #tpu.memory_space<vmem>>, %arg5: memref<256x128xbf16, #tpu.memory_space<vmem>>, %arg6: memref<1x2x128xf32, #tpu.memory_space<vmem>>) attributes {dimension_semantics = [#tpu.dimension_semantics<parallel>, #tpu.dimension_semantics<parallel>, #tpu.dimension_semantics<arbitrary>], iteration_bounds = array<i64: 2, 1, 1>, scalar_prefetch = 0 : i64, scratch_operands = 0 : i64, tpu.core_type = #tpu.core_type<tc>, window_params = [{transform_indices = @transform_0, window_bounds = array<i64: 256, 256>}, {transform_indices = @transform_1, window_bounds = array<i64: 256, 128>}, {transform_indices = @transform_2, window_bounds = array<i64: 256, 128>}, {transform_indices = @transform_3, window_bounds = array<i64: 1, 2, 128>}]} {
    %c0 = arith.constant 0 : index
    %c0_0 = arith.constant 0 : index
    %0 = vector.load %arg3[%c0, %c0_0] : memref<256x256xbf16, #tpu.memory_space<vmem>>, vector<256x256xbf16>
    %c0_1 = arith.constant 0 : index
    %c0_2 = arith.constant 0 : index
    %1 = vector.load %arg4[%c0_1, %c0_2] : memref<256x128xbf16, #tpu.memory_space<vmem>>, vector<256x128xbf16>
    %cst = arith.constant dense<0.000000e+00> : vector<256x128xf32>
    %2 = tpu.matmul %0, %1, %cst {dimension_numbers = #tpu.dot_dimension_numbers<[1], [0], [0], [1], [0, 0, 1, 1], [], []>} : vector<256x256xbf16>, vector<256x128xbf16>, vector<256x128xf32> -> vector<256x128xf32>
    %3 = arith.truncf %2 : vector<256x128xf32> to vector<256x128xbf16>
    %c0_3 = arith.constant 0 : index
    %c0_4 = arith.constant 0 : index
    %4 = vector.load %arg5[%c0_3, %c0_4] : memref<256x128xbf16, #tpu.memory_space<vmem>>, vector<256x128xbf16>
    tpu.vector_store %arg5[%c0_3, %c0_4], %3 {strides = array<i32>} : memref<256x128xbf16, #tpu.memory_space<vmem>>, vector<256x128xbf16>,
    %cst_5 = arith.constant dense<0.000000e+00> : vector<128xf32>
    %5 = vector.multi_reduction <add>, %2, %cst_5 [0] : vector<256x128xf32> to vector<128xf32>
    %6 = vector.shape_cast %5 : vector<128xf32> to vector<1x128xf32>
    %7 = arith.mulf %2, %2 : vector<256x128xf32>
    %cst_6 = arith.constant dense<0.000000e+00> : vector<128xf32>
    %8 = vector.multi_reduction <add>, %7, %cst_6 [0] : vector<256x128xf32> to vector<128xf32>
    %9 = vector.shape_cast %8 : vector<128xf32> to vector<1x128xf32>
    %10 = tpu.concatenate %6, %9 in 0 : vector<1x128xf32>, vector<1x128xf32> -> vector<2x128xf32>
    %11 = vector.shape_cast %10 : vector<2x128xf32> to vector<1x2x128xf32>
    %c0_7 = arith.constant 0 : index
    %c0_8 = arith.constant 0 : index
    %c0_9 = arith.constant 0 : index
    %12 = vector.load %arg6[%c0_7, %c0_8, %c0_9] : memref<1x2x128xf32, #tpu.memory_space<vmem>>, vector<1x2x128xf32>
    tpu.vector_store %arg6[%c0_7, %c0_8, %c0_9], %11 {strides = array<i32>} : memref<1x2x128xf32, #tpu.memory_space<vmem>>, vector<1x2x128xf32>,
    return
  }
  func.func @transform_0(%arg0: i32, %arg1: i32, %arg2: i32) -> (i32, i32) {
    %c0_i32 = arith.constant 0 : i32
    return %arg0, %arg2 : i32, i32
  }
  func.func @transform_1(%arg0: i32, %arg1: i32, %arg2: i32) -> (i32, i32) {
    %c0_i32 = arith.constant 0 : i32
    return %arg2, %arg1 : i32, i32
  }
  func.func @transform_2(%arg0: i32, %arg1: i32, %arg2: i32) -> (i32, i32) {
    %c0_i32 = arith.constant 0 : i32
    return %arg0, %arg1 : i32, i32
  }
  func.func @transform_3(%arg0: i32, %arg1: i32, %arg2: i32) -> (i32, i32, i32) {
    %c0_i32 = arith.constant 0 : i32
    %c0_i32_0 = arith.constant 0 : i32
    return %arg0, %c0_i32, %arg1 : i32, i32, i32
  }
}

module attributes {stable_mosaic.version = 11 : i64} {
  func.func @_affine_kernel(%arg0: i32, %arg1: i32, %arg2: memref<256x128xbf16, #tpu.memory_space<vmem>>, %arg3: memref<1x128xf32, #tpu.memory_space<vmem>>, %arg4: memref<1x128xf32, #tpu.memory_space<vmem>>, %arg5: memref<256x128xbf16, #tpu.memory_space<vmem>>) attributes {dimension_semantics = [#tpu.dimension_semantics<parallel>, #tpu.dimension_semantics<parallel>], iteration_bounds = array<i64: 2, 1>, scalar_prefetch = 0 : i64, scratch_operands = 0 : i64, tpu.core_type = #tpu.core_type<tc>, window_params = [{transform_indices = @transform_0, window_bounds = array<i64: 256, 128>}, {transform_indices = @transform_1, window_bounds = array<i64: 1, 128>}, {transform_indices = @transform_2, window_bounds = array<i64: 1, 128>}, {transform_indices = @transform_3, window_bounds = array<i64: 256, 128>}]} {
    %c0 = arith.constant 0 : index
    %c0_0 = arith.constant 0 : index
    %0 = vector.load %arg2[%c0, %c0_0] : memref<256x128xbf16, #tpu.memory_space<vmem>>, vector<256x128xbf16>
    %1 = arith.extf %0 : vector<256x128xbf16> to vector<256x128xf32>
    %c0_1 = arith.constant 0 : index
    %c0_2 = arith.constant 0 : index
    %2 = vector.load %arg3[%c0_1, %c0_2] : memref<1x128xf32, #tpu.memory_space<vmem>>, vector<1x128xf32>
    %3 = vector.broadcast %2 : vector<1x128xf32> to vector<256x128xf32>
    %4 = arith.mulf %1, %3 : vector<256x128xf32>
    %c0_3 = arith.constant 0 : index
    %c0_4 = arith.constant 0 : index
    %5 = vector.load %arg4[%c0_3, %c0_4] : memref<1x128xf32, #tpu.memory_space<vmem>>, vector<1x128xf32>
    %6 = vector.broadcast %5 : vector<1x128xf32> to vector<256x128xf32>
    %7 = arith.addf %4, %6 : vector<256x128xf32>
    %cst = arith.constant 0.000000e+00 : f32
    %8 = vector.broadcast %cst : f32 to vector<256x128xf32>
    %9 = arith.maximumf %7, %8 : vector<256x128xf32>
    %10 = arith.truncf %9 : vector<256x128xf32> to vector<256x128xbf16>
    %c0_5 = arith.constant 0 : index
    %c0_6 = arith.constant 0 : index
    %11 = vector.load %arg5[%c0_5, %c0_6] : memref<256x128xbf16, #tpu.memory_space<vmem>>, vector<256x128xbf16>
    tpu.vector_store %arg5[%c0_5, %c0_6], %10 {strides = array<i32>} : memref<256x128xbf16, #tpu.memory_space<vmem>>, vector<256x128xbf16>,
    return
  }
  func.func @transform_0(%arg0: i32, %arg1: i32) -> (i32, i32) {
    %c0_i32 = arith.constant 0 : i32
    return %arg0, %arg1 : i32, i32
  }
  func.func @transform_1(%arg0: i32, %arg1: i32) -> (i32, i32) {
    %c0_i32 = arith.constant 0 : i32
    %c0_i32_0 = arith.constant 0 : i32
    return %c0_i32, %arg1 : i32, i32
  }
  func.func @transform_2(%arg0: i32, %arg1: i32) -> (i32, i32) {
    %c0_i32 = arith.constant 0 : i32
    %c0_i32_0 = arith.constant 0 : i32
    return %c0_i32, %arg1 : i32, i32
  }
  func.func @transform_3(%arg0: i32, %arg1: i32) -> (i32, i32) {
    %c0_i32 = arith.constant 0 : i32
    return %arg0, %arg1 : i32, i32
  }
}

module attributes {stable_mosaic.version = 11 : i64} {
  func.func @_affine_kernel(%arg0: i32, %arg1: i32, %arg2: memref<128x128xbf16, #tpu.memory_space<vmem>>, %arg3: memref<1x128xf32, #tpu.memory_space<vmem>>, %arg4: memref<1x128xf32, #tpu.memory_space<vmem>>, %arg5: memref<128x128xbf16, #tpu.memory_space<vmem>>) attributes {dimension_semantics = [#tpu.dimension_semantics<parallel>, #tpu.dimension_semantics<parallel>], iteration_bounds = array<i64: 1, 1>, scalar_prefetch = 0 : i64, scratch_operands = 0 : i64, tpu.core_type = #tpu.core_type<tc>, window_params = [{transform_indices = @transform_0, window_bounds = array<i64: 128, 128>}, {transform_indices = @transform_1, window_bounds = array<i64: 1, 128>}, {transform_indices = @transform_2, window_bounds = array<i64: 1, 128>}, {transform_indices = @transform_3, window_bounds = array<i64: 128, 128>}]} {
    %c0 = arith.constant 0 : index
    %c0_0 = arith.constant 0 : index
    %0 = vector.load %arg2[%c0, %c0_0] : memref<128x128xbf16, #tpu.memory_space<vmem>>, vector<128x128xbf16>
    %1 = arith.extf %0 : vector<128x128xbf16> to vector<128x128xf32>
    %c0_1 = arith.constant 0 : index
    %c0_2 = arith.constant 0 : index
    %2 = vector.load %arg3[%c0_1, %c0_2] : memref<1x128xf32, #tpu.memory_space<vmem>>, vector<1x128xf32>
    %3 = vector.broadcast %2 : vector<1x128xf32> to vector<128x128xf32>
    %4 = arith.mulf %1, %3 : vector<128x128xf32>
    %c0_3 = arith.constant 0 : index
    %c0_4 = arith.constant 0 : index
    %5 = vector.load %arg4[%c0_3, %c0_4] : memref<1x128xf32, #tpu.memory_space<vmem>>, vector<1x128xf32>
    %6 = vector.broadcast %5 : vector<1x128xf32> to vector<128x128xf32>
    %7 = arith.addf %4, %6 : vector<128x128xf32>
    %cst = arith.constant 0.000000e+00 : f32
    %8 = vector.broadcast %cst : f32 to vector<128x128xf32>
    %9 = arith.maximumf %7, %8 : vector<128x128xf32>
    %10 = arith.truncf %9 : vector<128x128xf32> to vector<128x128xbf16>
    %c0_5 = arith.constant 0 : index
    %c0_6 = arith.constant 0 : index
    %11 = vector.load %arg5[%c0_5, %c0_6] : memref<128x128xbf16, #tpu.memory_space<vmem>>, vector<128x128xbf16>
    tpu.vector_store %arg5[%c0_5, %c0_6], %10 {strides = array<i32>} : memref<128x128xbf16, #tpu.memory_space<vmem>>, vector<128x128xbf16>,
    return
  }
  func.func @transform_0(%arg0: i32, %arg1: i32) -> (i32, i32) {
    %c0_i32 = arith.constant 0 : i32
    return %arg0, %arg1 : i32, i32
  }
  func.func @transform_1(%arg0: i32, %arg1: i32) -> (i32, i32) {
    %c0_i32 = arith.constant 0 : i32
    %c0_i32_0 = arith.constant 0 : i32
    return %c0_i32, %arg1 : i32, i32
  }
  func.func @transform_2(%arg0: i32, %arg1: i32) -> (i32, i32) {
    %c0_i32 = arith.constant 0 : i32
    %c0_i32_0 = arith.constant 0 : i32
    return %c0_i32, %arg1 : i32, i32
  }
  func.func @transform_3(%arg0: i32, %arg1: i32) -> (i32, i32) {
    %c0_i32 = arith.constant 0 : i32
    return %arg0, %arg1 : i32, i32
  }
}

module attributes {stable_mosaic.version = 11 : i64} {
  func.func @_maxpool_kernel(%arg0: i32, %arg1: memref<9x128x128xbf16, #tpu.memory_space<vmem>>, %arg2: memref<128x128xbf16, #tpu.memory_space<vmem>>) attributes {dimension_semantics = [#tpu.dimension_semantics<parallel>], iteration_bounds = array<i64: 1>, scalar_prefetch = 0 : i64, scratch_operands = 0 : i64, tpu.core_type = #tpu.core_type<tc>, window_params = [{transform_indices = @transform_0, window_bounds = array<i64: 9, 128, 128>}, {transform_indices = @transform_1, window_bounds = array<i64: 128, 128>}]} {
    %c0 = arith.constant 0 : index
    %c0_0 = arith.constant 0 : index
    %c0_1 = arith.constant 0 : index
    %0 = vector.load %arg1[%c0, %c0_0, %c0_1] : memref<9x128x128xbf16, #tpu.memory_space<vmem>>, vector<1x128x128xbf16>
    %1 = vector.shape_cast %0 : vector<1x128x128xbf16> to vector<128x128xbf16>
    %c1 = arith.constant 1 : index
    %c0_2 = arith.constant 0 : index
    %c0_3 = arith.constant 0 : index
    %2 = vector.load %arg1[%c1, %c0_2, %c0_3] : memref<9x128x128xbf16, #tpu.memory_space<vmem>>, vector<1x128x128xbf16>
    %3 = vector.shape_cast %2 : vector<1x128x128xbf16> to vector<128x128xbf16>
    %4 = arith.maximumf %1, %3 : vector<128x128xbf16>
    %c2 = arith.constant 2 : index
    %c0_4 = arith.constant 0 : index
    %c0_5 = arith.constant 0 : index
    %5 = vector.load %arg1[%c2, %c0_4, %c0_5] : memref<9x128x128xbf16, #tpu.memory_space<vmem>>, vector<1x128x128xbf16>
    %6 = vector.shape_cast %5 : vector<1x128x128xbf16> to vector<128x128xbf16>
    %7 = arith.maximumf %4, %6 : vector<128x128xbf16>
    %c3 = arith.constant 3 : index
    %c0_6 = arith.constant 0 : index
    %c0_7 = arith.constant 0 : index
    %8 = vector.load %arg1[%c3, %c0_6, %c0_7] : memref<9x128x128xbf16, #tpu.memory_space<vmem>>, vector<1x128x128xbf16>
    %9 = vector.shape_cast %8 : vector<1x128x128xbf16> to vector<128x128xbf16>
    %10 = arith.maximumf %7, %9 : vector<128x128xbf16>
    %c4 = arith.constant 4 : index
    %c0_8 = arith.constant 0 : index
    %c0_9 = arith.constant 0 : index
    %11 = vector.load %arg1[%c4, %c0_8, %c0_9] : memref<9x128x128xbf16, #tpu.memory_space<vmem>>, vector<1x128x128xbf16>
    %12 = vector.shape_cast %11 : vector<1x128x128xbf16> to vector<128x128xbf16>
    %13 = arith.maximumf %10, %12 : vector<128x128xbf16>
    %c5 = arith.constant 5 : index
    %c0_10 = arith.constant 0 : index
    %c0_11 = arith.constant 0 : index
    %14 = vector.load %arg1[%c5, %c0_10, %c0_11] : memref<9x128x128xbf16, #tpu.memory_space<vmem>>, vector<1x128x128xbf16>
    %15 = vector.shape_cast %14 : vector<1x128x128xbf16> to vector<128x128xbf16>
    %16 = arith.maximumf %13, %15 : vector<128x128xbf16>
    %c6 = arith.constant 6 : index
    %c0_12 = arith.constant 0 : index
    %c0_13 = arith.constant 0 : index
    %17 = vector.load %arg1[%c6, %c0_12, %c0_13] : memref<9x128x128xbf16, #tpu.memory_space<vmem>>, vector<1x128x128xbf16>
    %18 = vector.shape_cast %17 : vector<1x128x128xbf16> to vector<128x128xbf16>
    %19 = arith.maximumf %16, %18 : vector<128x128xbf16>
    %c7 = arith.constant 7 : index
    %c0_14 = arith.constant 0 : index
    %c0_15 = arith.constant 0 : index
    %20 = vector.load %arg1[%c7, %c0_14, %c0_15] : memref<9x128x128xbf16, #tpu.memory_space<vmem>>, vector<1x128x128xbf16>
    %21 = vector.shape_cast %20 : vector<1x128x128xbf16> to vector<128x128xbf16>
    %22 = arith.maximumf %19, %21 : vector<128x128xbf16>
    %c8 = arith.constant 8 : index
    %c0_16 = arith.constant 0 : index
    %c0_17 = arith.constant 0 : index
    %23 = vector.load %arg1[%c8, %c0_16, %c0_17] : memref<9x128x128xbf16, #tpu.memory_space<vmem>>, vector<1x128x128xbf16>
    %24 = vector.shape_cast %23 : vector<1x128x128xbf16> to vector<128x128xbf16>
    %25 = arith.maximumf %22, %24 : vector<128x128xbf16>
    %c0_18 = arith.constant 0 : index
    %c0_19 = arith.constant 0 : index
    %26 = vector.load %arg2[%c0_18, %c0_19] : memref<128x128xbf16, #tpu.memory_space<vmem>>, vector<128x128xbf16>
    tpu.vector_store %arg2[%c0_18, %c0_19], %25 {strides = array<i32>} : memref<128x128xbf16, #tpu.memory_space<vmem>>, vector<128x128xbf16>,
    return
  }
  func.func @transform_0(%arg0: i32) -> (i32, i32, i32) {
    %c0_i32 = arith.constant 0 : i32
    %c0_i32_0 = arith.constant 0 : i32
    %c0_i32_1 = arith.constant 0 : i32
    return %c0_i32, %arg0, %c0_i32_0 : i32, i32, i32
  }
  func.func @transform_1(%arg0: i32) -> (i32, i32) {
    %c0_i32 = arith.constant 0 : i32
    %c0_i32_0 = arith.constant 0 : i32
    return %arg0, %c0_i32 : i32, i32
  }
}

module attributes {stable_mosaic.version = 11 : i64} {
  func.func @_gemm_kernel(%arg0: i32, %arg1: i32, %arg2: i32, %arg3: memref<128x128xbf16, #tpu.memory_space<vmem>>, %arg4: memref<128x128xbf16, #tpu.memory_space<vmem>>, %arg5: memref<128x128xbf16, #tpu.memory_space<vmem>>, %arg6: memref<1x2x128xf32, #tpu.memory_space<vmem>>) attributes {dimension_semantics = [#tpu.dimension_semantics<parallel>, #tpu.dimension_semantics<parallel>, #tpu.dimension_semantics<arbitrary>], iteration_bounds = array<i64: 1, 1, 1>, scalar_prefetch = 0 : i64, scratch_operands = 0 : i64, tpu.core_type = #tpu.core_type<tc>, window_params = [{transform_indices = @transform_0, window_bounds = array<i64: 128, 128>}, {transform_indices = @transform_1, window_bounds = array<i64: 128, 128>}, {transform_indices = @transform_2, window_bounds = array<i64: 128, 128>}, {transform_indices = @transform_3, window_bounds = array<i64: 1, 2, 128>}]} {
    %c0 = arith.constant 0 : index
    %c0_0 = arith.constant 0 : index
    %0 = vector.load %arg3[%c0, %c0_0] : memref<128x128xbf16, #tpu.memory_space<vmem>>, vector<128x128xbf16>
    %c0_1 = arith.constant 0 : index
    %c0_2 = arith.constant 0 : index
    %1 = vector.load %arg4[%c0_1, %c0_2] : memref<128x128xbf16, #tpu.memory_space<vmem>>, vector<128x128xbf16>
    %cst = arith.constant dense<0.000000e+00> : vector<128x128xf32>
    %2 = tpu.matmul %0, %1, %cst {dimension_numbers = #tpu.dot_dimension_numbers<[1], [0], [0], [1], [0, 0, 1, 1], [], []>} : vector<128x128xbf16>, vector<128x128xbf16>, vector<128x128xf32> -> vector<128x128xf32>
    %3 = arith.truncf %2 : vector<128x128xf32> to vector<128x128xbf16>
    %c0_3 = arith.constant 0 : index
    %c0_4 = arith.constant 0 : index
    %4 = vector.load %arg5[%c0_3, %c0_4] : memref<128x128xbf16, #tpu.memory_space<vmem>>, vector<128x128xbf16>
    tpu.vector_store %arg5[%c0_3, %c0_4], %3 {strides = array<i32>} : memref<128x128xbf16, #tpu.memory_space<vmem>>, vector<128x128xbf16>,
    %cst_5 = arith.constant dense<0.000000e+00> : vector<128xf32>
    %5 = vector.multi_reduction <add>, %2, %cst_5 [0] : vector<128x128xf32> to vector<128xf32>
    %6 = vector.shape_cast %5 : vector<128xf32> to vector<1x128xf32>
    %7 = arith.mulf %2, %2 : vector<128x128xf32>
    %cst_6 = arith.constant dense<0.000000e+00> : vector<128xf32>
    %8 = vector.multi_reduction <add>, %7, %cst_6 [0] : vector<128x128xf32> to vector<128xf32>
    %9 = vector.shape_cast %8 : vector<128xf32> to vector<1x128xf32>
    %10 = tpu.concatenate %6, %9 in 0 : vector<1x128xf32>, vector<1x128xf32> -> vector<2x128xf32>
    %11 = vector.shape_cast %10 : vector<2x128xf32> to vector<1x2x128xf32>
    %c0_7 = arith.constant 0 : index
    %c0_8 = arith.constant 0 : index
    %c0_9 = arith.constant 0 : index
    %12 = vector.load %arg6[%c0_7, %c0_8, %c0_9] : memref<1x2x128xf32, #tpu.memory_space<vmem>>, vector<1x2x128xf32>
    tpu.vector_store %arg6[%c0_7, %c0_8, %c0_9], %11 {strides = array<i32>} : memref<1x2x128xf32, #tpu.memory_space<vmem>>, vector<1x2x128xf32>,
    return
  }
  func.func @transform_0(%arg0: i32, %arg1: i32, %arg2: i32) -> (i32, i32) {
    %c0_i32 = arith.constant 0 : i32
    return %arg0, %arg2 : i32, i32
  }
  func.func @transform_1(%arg0: i32, %arg1: i32, %arg2: i32) -> (i32, i32) {
    %c0_i32 = arith.constant 0 : i32
    return %arg2, %arg1 : i32, i32
  }
  func.func @transform_2(%arg0: i32, %arg1: i32, %arg2: i32) -> (i32, i32) {
    %c0_i32 = arith.constant 0 : i32
    return %arg0, %arg1 : i32, i32
  }
  func.func @transform_3(%arg0: i32, %arg1: i32, %arg2: i32) -> (i32, i32, i32) {
    %c0_i32 = arith.constant 0 : i32
    %c0_i32_0 = arith.constant 0 : i32
    return %arg0, %c0_i32, %arg1 : i32, i32, i32
  }
}

module attributes {stable_mosaic.version = 11 : i64} {
  func.func @_gemm_kernel(%arg0: i32, %arg1: i32, %arg2: i32, %arg3: memref<128x384xbf16, #tpu.memory_space<vmem>>, %arg4: memref<384x128xbf16, #tpu.memory_space<vmem>>, %arg5: memref<128x128xbf16, #tpu.memory_space<vmem>>, %arg6: memref<1x2x128xf32, #tpu.memory_space<vmem>>, %arg7: memref<128x128xf32, #tpu.memory_space<vmem>>) attributes {dimension_semantics = [#tpu.dimension_semantics<parallel>, #tpu.dimension_semantics<parallel>, #tpu.dimension_semantics<arbitrary>], iteration_bounds = array<i64: 1, 1, 3>, scalar_prefetch = 0 : i64, scratch_operands = 1 : i64, tpu.core_type = #tpu.core_type<tc>, window_params = [{transform_indices = @transform_0, window_bounds = array<i64: 128, 384>}, {transform_indices = @transform_1, window_bounds = array<i64: 384, 128>}, {transform_indices = @transform_2, window_bounds = array<i64: 128, 128>}, {transform_indices = @transform_3, window_bounds = array<i64: 1, 2, 128>}]} {
    %c0 = arith.constant 0 : index
    %c0_0 = arith.constant 0 : index
    %0 = vector.load %arg3[%c0, %c0_0] : memref<128x384xbf16, #tpu.memory_space<vmem>>, vector<128x384xbf16>
    %c0_1 = arith.constant 0 : index
    %c0_2 = arith.constant 0 : index
    %1 = vector.load %arg4[%c0_1, %c0_2] : memref<384x128xbf16, #tpu.memory_space<vmem>>, vector<384x128xbf16>
    %cst = arith.constant dense<0.000000e+00> : vector<128x128xf32>
    %2 = tpu.matmul %0, %1, %cst {dimension_numbers = #tpu.dot_dimension_numbers<[1], [0], [0], [1], [0, 0, 1, 1], [], []>} : vector<128x384xbf16>, vector<384x128xbf16>, vector<128x128xf32> -> vector<128x128xf32>
    %c0_i32 = arith.constant 0 : i32
    %3 = arith.cmpi eq, %arg2, %c0_i32 : i32
    %4 = arith.extui %3 : i1 to i32
    %c0_i32_3 = arith.constant 0 : i32
    %5 = arith.cmpi ne, %4, %c0_i32_3 : i32
    scf.if %5 {
      %cst_9 = arith.constant 0.000000e+00 : f32
      %12 = vector.broadcast %cst_9 : f32 to vector<128x128xf32>
      %c0_10 = arith.constant 0 : index
      %c0_11 = arith.constant 0 : index
      %13 = vector.load %arg7[%c0_10, %c0_11] : memref<128x128xf32, #tpu.memory_space<vmem>>, vector<128x128xf32>
      tpu.vector_store %arg7[%c0_10, %c0_11], %12 {strides = array<i32>} : memref<128x128xf32, #tpu.memory_space<vmem>>, vector<128x128xf32>,
    } else {
    }
    %c0_4 = arith.constant 0 : index
    %c0_5 = arith.constant 0 : index
    %6 = vector.load %arg7[%c0_4, %c0_5] : memref<128x128xf32, #tpu.memory_space<vmem>>, vector<128x128xf32>
    %7 = arith.addf %6, %2 : vector<128x128xf32>
    %c0_6 = arith.constant 0 : index
    %c0_7 = arith.constant 0 : index
    %8 = vector.load %arg7[%c0_6, %c0_7] : memref<128x128xf32, #tpu.memory_space<vmem>>, vector<128x128xf32>
    tpu.vector_store %arg7[%c0_6, %c0_7], %7 {strides = array<i32>} : memref<128x128xf32, #tpu.memory_space<vmem>>, vector<128x128xf32>,
    %c2_i32 = arith.constant 2 : i32
    %9 = arith.cmpi eq, %arg2, %c2_i32 : i32
    %10 = arith.extui %9 : i1 to i32
    %c0_i32_8 = arith.constant 0 : i32
    %11 = arith.cmpi ne, %10, %c0_i32_8 : i32
    scf.if %11 {
      %c0_9 = arith.constant 0 : index
      %c0_10 = arith.constant 0 : index
      %12 = vector.load %arg7[%c0_9, %c0_10] : memref<128x128xf32, #tpu.memory_space<vmem>>, vector<128x128xf32>
      %13 = arith.truncf %12 : vector<128x128xf32> to vector<128x128xbf16>
      %c0_11 = arith.constant 0 : index
      %c0_12 = arith.constant 0 : index
      %14 = vector.load %arg5[%c0_11, %c0_12] : memref<128x128xbf16, #tpu.memory_space<vmem>>, vector<128x128xbf16>
      tpu.vector_store %arg5[%c0_11, %c0_12], %13 {strides = array<i32>} : memref<128x128xbf16, #tpu.memory_space<vmem>>, vector<128x128xbf16>,
      %cst_13 = arith.constant dense<0.000000e+00> : vector<128xf32>
      %15 = vector.multi_reduction <add>, %12, %cst_13 [0] : vector<128x128xf32> to vector<128xf32>
      %16 = vector.shape_cast %15 : vector<128xf32> to vector<1x128xf32>
      %17 = arith.mulf %12, %12 : vector<128x128xf32>
      %cst_14 = arith.constant dense<0.000000e+00> : vector<128xf32>
      %18 = vector.multi_reduction <add>, %17, %cst_14 [0] : vector<128x128xf32> to vector<128xf32>
      %19 = vector.shape_cast %18 : vector<128xf32> to vector<1x128xf32>
      %20 = tpu.concatenate %16, %19 in 0 : vector<1x128xf32>, vector<1x128xf32> -> vector<2x128xf32>
      %21 = vector.shape_cast %20 : vector<2x128xf32> to vector<1x2x128xf32>
      %c0_15 = arith.constant 0 : index
      %c0_16 = arith.constant 0 : index
      %c0_17 = arith.constant 0 : index
      %22 = vector.load %arg6[%c0_15, %c0_16, %c0_17] : memref<1x2x128xf32, #tpu.memory_space<vmem>>, vector<1x2x128xf32>
      tpu.vector_store %arg6[%c0_15, %c0_16, %c0_17], %21 {strides = array<i32>} : memref<1x2x128xf32, #tpu.memory_space<vmem>>, vector<1x2x128xf32>,
    } else {
    }
    return
  }
  func.func @transform_0(%arg0: i32, %arg1: i32, %arg2: i32) -> (i32, i32) {
    %c0_i32 = arith.constant 0 : i32
    return %arg0, %arg2 : i32, i32
  }
  func.func @transform_1(%arg0: i32, %arg1: i32, %arg2: i32) -> (i32, i32) {
    %c0_i32 = arith.constant 0 : i32
    return %arg2, %arg1 : i32, i32
  }
  func.func @transform_2(%arg0: i32, %arg1: i32, %arg2: i32) -> (i32, i32) {
    %c0_i32 = arith.constant 0 : i32
    return %arg0, %arg1 : i32, i32
  }
  func.func @transform_3(%arg0: i32, %arg1: i32, %arg2: i32) -> (i32, i32, i32) {
    %c0_i32 = arith.constant 0 : i32
    %c0_i32_0 = arith.constant 0 : i32
    return %arg0, %c0_i32, %arg1 : i32, i32, i32
  }
}

module attributes {stable_mosaic.version = 11 : i64} {
  func.func @_gemm_kernel(%arg0: i32, %arg1: i32, %arg2: i32, %arg3: memref<128x128xbf16, #tpu.memory_space<vmem>>, %arg4: memref<128x128xbf16, #tpu.memory_space<vmem>>, %arg5: memref<1x128xf32, #tpu.memory_space<vmem>>, %arg6: memref<1x128xf32, #tpu.memory_space<vmem>>, %arg7: memref<128x128xbf16, #tpu.memory_space<vmem>>, %arg8: memref<1x2x128xf32, #tpu.memory_space<vmem>>) attributes {dimension_semantics = [#tpu.dimension_semantics<parallel>, #tpu.dimension_semantics<parallel>, #tpu.dimension_semantics<arbitrary>], iteration_bounds = array<i64: 1, 1, 1>, scalar_prefetch = 0 : i64, scratch_operands = 0 : i64, tpu.core_type = #tpu.core_type<tc>, window_params = [{transform_indices = @transform_0, window_bounds = array<i64: 128, 128>}, {transform_indices = @transform_1, window_bounds = array<i64: 128, 128>}, {transform_indices = @transform_2, window_bounds = array<i64: 1, 128>}, {transform_indices = @transform_3, window_bounds = array<i64: 1, 128>}, {transform_indices = @transform_4, window_bounds = array<i64: 128, 128>}, {transform_indices = @transform_5, window_bounds = array<i64: 1, 2, 128>}]} {
    %c0 = arith.constant 0 : index
    %c0_0 = arith.constant 0 : index
    %0 = vector.load %arg3[%c0, %c0_0] : memref<128x128xbf16, #tpu.memory_space<vmem>>, vector<128x128xbf16>
    %1 = arith.extf %0 : vector<128x128xbf16> to vector<128x128xf32>
    %c0_1 = arith.constant 0 : index
    %c0_2 = arith.constant 0 : index
    %2 = vector.load %arg5[%c0_1, %c0_2] : memref<1x128xf32, #tpu.memory_space<vmem>>, vector<1x128xf32>
    %3 = vector.broadcast %2 : vector<1x128xf32> to vector<128x128xf32>
    %4 = arith.mulf %1, %3 : vector<128x128xf32>
    %c0_3 = arith.constant 0 : index
    %c0_4 = arith.constant 0 : index
    %5 = vector.load %arg6[%c0_3, %c0_4] : memref<1x128xf32, #tpu.memory_space<vmem>>, vector<1x128xf32>
    %6 = vector.broadcast %5 : vector<1x128xf32> to vector<128x128xf32>
    %7 = arith.addf %4, %6 : vector<128x128xf32>
    %cst = arith.constant 0.000000e+00 : f32
    %8 = vector.broadcast %cst : f32 to vector<128x128xf32>
    %9 = arith.maximumf %7, %8 : vector<128x128xf32>
    %10 = arith.truncf %9 : vector<128x128xf32> to vector<128x128xbf16>
    %c0_5 = arith.constant 0 : index
    %c0_6 = arith.constant 0 : index
    %11 = vector.load %arg4[%c0_5, %c0_6] : memref<128x128xbf16, #tpu.memory_space<vmem>>, vector<128x128xbf16>
    %cst_7 = arith.constant dense<0.000000e+00> : vector<128x128xf32>
    %12 = tpu.matmul %10, %11, %cst_7 {dimension_numbers = #tpu.dot_dimension_numbers<[1], [0], [0], [1], [0, 0, 1, 1], [], []>} : vector<128x128xbf16>, vector<128x128xbf16>, vector<128x128xf32> -> vector<128x128xf32>
    %13 = arith.truncf %12 : vector<128x128xf32> to vector<128x128xbf16>
    %c0_8 = arith.constant 0 : index
    %c0_9 = arith.constant 0 : index
    %14 = vector.load %arg7[%c0_8, %c0_9] : memref<128x128xbf16, #tpu.memory_space<vmem>>, vector<128x128xbf16>
    tpu.vector_store %arg7[%c0_8, %c0_9], %13 {strides = array<i32>} : memref<128x128xbf16, #tpu.memory_space<vmem>>, vector<128x128xbf16>,
    %cst_10 = arith.constant dense<0.000000e+00> : vector<128xf32>
    %15 = vector.multi_reduction <add>, %12, %cst_10 [0] : vector<128x128xf32> to vector<128xf32>
    %16 = vector.shape_cast %15 : vector<128xf32> to vector<1x128xf32>
    %17 = arith.mulf %12, %12 : vector<128x128xf32>
    %cst_11 = arith.constant dense<0.000000e+00> : vector<128xf32>
    %18 = vector.multi_reduction <add>, %17, %cst_11 [0] : vector<128x128xf32> to vector<128xf32>
    %19 = vector.shape_cast %18 : vector<128xf32> to vector<1x128xf32>
    %20 = tpu.concatenate %16, %19 in 0 : vector<1x128xf32>, vector<1x128xf32> -> vector<2x128xf32>
    %21 = vector.shape_cast %20 : vector<2x128xf32> to vector<1x2x128xf32>
    %c0_12 = arith.constant 0 : index
    %c0_13 = arith.constant 0 : index
    %c0_14 = arith.constant 0 : index
    %22 = vector.load %arg8[%c0_12, %c0_13, %c0_14] : memref<1x2x128xf32, #tpu.memory_space<vmem>>, vector<1x2x128xf32>
    tpu.vector_store %arg8[%c0_12, %c0_13, %c0_14], %21 {strides = array<i32>} : memref<1x2x128xf32, #tpu.memory_space<vmem>>, vector<1x2x128xf32>,
    return
  }
  func.func @transform_0(%arg0: i32, %arg1: i32, %arg2: i32) -> (i32, i32) {
    %c0_i32 = arith.constant 0 : i32
    return %arg0, %arg2 : i32, i32
  }
  func.func @transform_1(%arg0: i32, %arg1: i32, %arg2: i32) -> (i32, i32) {
    %c0_i32 = arith.constant 0 : i32
    return %arg2, %arg1 : i32, i32
  }
  func.func @transform_2(%arg0: i32, %arg1: i32, %arg2: i32) -> (i32, i32) {
    %c0_i32 = arith.constant 0 : i32
    %c0_i32_0 = arith.constant 0 : i32
    return %c0_i32, %arg2 : i32, i32
  }
  func.func @transform_3(%arg0: i32, %arg1: i32, %arg2: i32) -> (i32, i32) {
    %c0_i32 = arith.constant 0 : i32
    %c0_i32_0 = arith.constant 0 : i32
    return %c0_i32, %arg2 : i32, i32
  }
  func.func @transform_4(%arg0: i32, %arg1: i32, %arg2: i32) -> (i32, i32) {
    %c0_i32 = arith.constant 0 : i32
    return %arg0, %arg1 : i32, i32
  }
  func.func @transform_5(%arg0: i32, %arg1: i32, %arg2: i32) -> (i32, i32, i32) {
    %c0_i32 = arith.constant 0 : i32
    %c0_i32_0 = arith.constant 0 : i32
    return %arg0, %c0_i32, %arg1 : i32, i32, i32
  }
}

module attributes {stable_mosaic.version = 11 : i64} {
  func.func @_affine_kernel(%arg0: i32, %arg1: i32, %arg2: memref<128x128xbf16, #tpu.memory_space<vmem>>, %arg3: memref<1x128xf32, #tpu.memory_space<vmem>>, %arg4: memref<1x128xf32, #tpu.memory_space<vmem>>, %arg5: memref<128x128xbf16, #tpu.memory_space<vmem>>, %arg6: memref<1x128xf32, #tpu.memory_space<vmem>>, %arg7: memref<1x128xf32, #tpu.memory_space<vmem>>, %arg8: memref<128x128xbf16, #tpu.memory_space<vmem>>) attributes {dimension_semantics = [#tpu.dimension_semantics<parallel>, #tpu.dimension_semantics<parallel>], iteration_bounds = array<i64: 1, 1>, scalar_prefetch = 0 : i64, scratch_operands = 0 : i64, tpu.core_type = #tpu.core_type<tc>, window_params = [{transform_indices = @transform_0, window_bounds = array<i64: 128, 128>}, {transform_indices = @transform_1, window_bounds = array<i64: 1, 128>}, {transform_indices = @transform_2, window_bounds = array<i64: 1, 128>}, {transform_indices = @transform_3, window_bounds = array<i64: 128, 128>}, {transform_indices = @transform_4, window_bounds = array<i64: 1, 128>}, {transform_indices = @transform_5, window_bounds = array<i64: 1, 128>}, {transform_indices = @transform_6, window_bounds = array<i64: 128, 128>}]} {
    %c0 = arith.constant 0 : index
    %c0_0 = arith.constant 0 : index
    %0 = vector.load %arg2[%c0, %c0_0] : memref<128x128xbf16, #tpu.memory_space<vmem>>, vector<128x128xbf16>
    %1 = arith.extf %0 : vector<128x128xbf16> to vector<128x128xf32>
    %c0_1 = arith.constant 0 : index
    %c0_2 = arith.constant 0 : index
    %2 = vector.load %arg3[%c0_1, %c0_2] : memref<1x128xf32, #tpu.memory_space<vmem>>, vector<1x128xf32>
    %3 = vector.broadcast %2 : vector<1x128xf32> to vector<128x128xf32>
    %4 = arith.mulf %1, %3 : vector<128x128xf32>
    %c0_3 = arith.constant 0 : index
    %c0_4 = arith.constant 0 : index
    %5 = vector.load %arg4[%c0_3, %c0_4] : memref<1x128xf32, #tpu.memory_space<vmem>>, vector<1x128xf32>
    %6 = vector.broadcast %5 : vector<1x128xf32> to vector<128x128xf32>
    %7 = arith.addf %4, %6 : vector<128x128xf32>
    %c0_5 = arith.constant 0 : index
    %c0_6 = arith.constant 0 : index
    %8 = vector.load %arg5[%c0_5, %c0_6] : memref<128x128xbf16, #tpu.memory_space<vmem>>, vector<128x128xbf16>
    %9 = arith.extf %8 : vector<128x128xbf16> to vector<128x128xf32>
    %c0_7 = arith.constant 0 : index
    %c0_8 = arith.constant 0 : index
    %10 = vector.load %arg6[%c0_7, %c0_8] : memref<1x128xf32, #tpu.memory_space<vmem>>, vector<1x128xf32>
    %11 = vector.broadcast %10 : vector<1x128xf32> to vector<128x128xf32>
    %12 = arith.mulf %9, %11 : vector<128x128xf32>
    %13 = arith.addf %7, %12 : vector<128x128xf32>
    %c0_9 = arith.constant 0 : index
    %c0_10 = arith.constant 0 : index
    %14 = vector.load %arg7[%c0_9, %c0_10] : memref<1x128xf32, #tpu.memory_space<vmem>>, vector<1x128xf32>
    %15 = vector.broadcast %14 : vector<1x128xf32> to vector<128x128xf32>
    %16 = arith.addf %13, %15 : vector<128x128xf32>
    %cst = arith.constant 0.000000e+00 : f32
    %17 = vector.broadcast %cst : f32 to vector<128x128xf32>
    %18 = arith.maximumf %16, %17 : vector<128x128xf32>
    %19 = arith.truncf %18 : vector<128x128xf32> to vector<128x128xbf16>
    %c0_11 = arith.constant 0 : index
    %c0_12 = arith.constant 0 : index
    %20 = vector.load %arg8[%c0_11, %c0_12] : memref<128x128xbf16, #tpu.memory_space<vmem>>, vector<128x128xbf16>
    tpu.vector_store %arg8[%c0_11, %c0_12], %19 {strides = array<i32>} : memref<128x128xbf16, #tpu.memory_space<vmem>>, vector<128x128xbf16>,
    return
  }
  func.func @transform_0(%arg0: i32, %arg1: i32) -> (i32, i32) {
    %c0_i32 = arith.constant 0 : i32
    return %arg0, %arg1 : i32, i32
  }
  func.func @transform_1(%arg0: i32, %arg1: i32) -> (i32, i32) {
    %c0_i32 = arith.constant 0 : i32
    %c0_i32_0 = arith.constant 0 : i32
    return %c0_i32, %arg1 : i32, i32
  }
  func.func @transform_2(%arg0: i32, %arg1: i32) -> (i32, i32) {
    %c0_i32 = arith.constant 0 : i32
    %c0_i32_0 = arith.constant 0 : i32
    return %c0_i32, %arg1 : i32, i32
  }
  func.func @transform_3(%arg0: i32, %arg1: i32) -> (i32, i32) {
    %c0_i32 = arith.constant 0 : i32
    return %arg0, %arg1 : i32, i32
  }
  func.func @transform_4(%arg0: i32, %arg1: i32) -> (i32, i32) {
    %c0_i32 = arith.constant 0 : i32
    %c0_i32_0 = arith.constant 0 : i32
    return %c0_i32, %arg1 : i32, i32
  }
  func.func @transform_5(%arg0: i32, %arg1: i32) -> (i32, i32) {
    %c0_i32 = arith.constant 0 : i32
    %c0_i32_0 = arith.constant 0 : i32
    return %c0_i32, %arg1 : i32, i32
  }
  func.func @transform_6(%arg0: i32, %arg1: i32) -> (i32, i32) {
    %c0_i32 = arith.constant 0 : i32
    return %arg0, %arg1 : i32, i32
  }
}

module attributes {stable_mosaic.version = 11 : i64} {
  func.func @_gemm_kernel(%arg0: i32, %arg1: i32, %arg2: i32, %arg3: memref<32x128xbf16, #tpu.memory_space<vmem>>, %arg4: memref<128x32xbf16, #tpu.memory_space<vmem>>, %arg5: memref<1x32xf32, #tpu.memory_space<vmem>>, %arg6: memref<32x32xbf16, #tpu.memory_space<vmem>>, %arg7: memref<1x2x32xf32, #tpu.memory_space<vmem>>) attributes {dimension_semantics = [#tpu.dimension_semantics<parallel>, #tpu.dimension_semantics<parallel>, #tpu.dimension_semantics<arbitrary>], iteration_bounds = array<i64: 1, 1, 1>, scalar_prefetch = 0 : i64, scratch_operands = 0 : i64, tpu.core_type = #tpu.core_type<tc>, window_params = [{transform_indices = @transform_0, window_bounds = array<i64: 32, 128>}, {transform_indices = @transform_1, window_bounds = array<i64: 128, 32>}, {transform_indices = @transform_2, window_bounds = array<i64: 1, 32>}, {transform_indices = @transform_3, window_bounds = array<i64: 32, 32>}, {transform_indices = @transform_4, window_bounds = array<i64: 1, 2, 32>}]} {
    %c0 = arith.constant 0 : index
    %c0_0 = arith.constant 0 : index
    %0 = vector.load %arg3[%c0, %c0_0] : memref<32x128xbf16, #tpu.memory_space<vmem>>, vector<32x128xbf16>
    %cst = arith.constant 0.000000e+00 : bf16
    %1 = vector.broadcast %cst : bf16 to vector<32x128xbf16>
    %2 = arith.maximumf %0, %1 : vector<32x128xbf16>
    %c0_1 = arith.constant 0 : index
    %c0_2 = arith.constant 0 : index
    %3 = vector.load %arg4[%c0_1, %c0_2] : memref<128x32xbf16, #tpu.memory_space<vmem>>, vector<128x32xbf16>
    %cst_3 = arith.constant dense<0.000000e+00> : vector<32x32xf32>
    %4 = tpu.matmul %2, %3, %cst_3 {dimension_numbers = #tpu.dot_dimension_numbers<[1], [0], [0], [1], [0, 0, 1, 1], [], []>} : vector<32x128xbf16>, vector<128x32xbf16>, vector<32x32xf32> -> vector<32x32xf32>
    %c0_4 = arith.constant 0 : index
    %c0_5 = arith.constant 0 : index
    %5 = vector.load %arg5[%c0_4, %c0_5] : memref<1x32xf32, #tpu.memory_space<vmem>>, vector<1x32xf32>
    %6 = vector.broadcast %5 : vector<1x32xf32> to vector<32x32xf32>
    %7 = arith.addf %4, %6 : vector<32x32xf32>
    %8 = arith.truncf %7 : vector<32x32xf32> to vector<32x32xbf16>
    %c0_6 = arith.constant 0 : index
    %c0_7 = arith.constant 0 : index
    %9 = vector.load %arg6[%c0_6, %c0_7] : memref<32x32xbf16, #tpu.memory_space<vmem>>, vector<32x32xbf16>
    tpu.vector_store %arg6[%c0_6, %c0_7], %8 {strides = array<i32>} : memref<32x32xbf16, #tpu.memory_space<vmem>>, vector<32x32xbf16>,
    %cst_8 = arith.constant dense<0.000000e+00> : vector<32xf32>
    %10 = vector.multi_reduction <add>, %7, %cst_8 [0] : vector<32x32xf32> to vector<32xf32>
    %11 = vector.shape_cast %10 : vector<32xf32> to vector<1x32xf32>
    %12 = arith.mulf %7, %7 : vector<32x32xf32>
    %cst_9 = arith.constant dense<0.000000e+00> : vector<32xf32>
    %13 = vector.multi_reduction <add>, %12, %cst_9 [0] : vector<32x32xf32> to vector<32xf32>
    %14 = vector.shape_cast %13 : vector<32xf32> to vector<1x32xf32>
    %15 = tpu.concatenate %11, %14 in 0 : vector<1x32xf32>, vector<1x32xf32> -> vector<2x32xf32>
    %16 = vector.shape_cast %15 : vector<2x32xf32> to vector<1x2x32xf32>
    %c0_10 = arith.constant 0 : index
    %c0_11 = arith.constant 0 : index
    %c0_12 = arith.constant 0 : index
    %17 = vector.load %arg7[%c0_10, %c0_11, %c0_12] : memref<1x2x32xf32, #tpu.memory_space<vmem>>, vector<1x2x32xf32>
    tpu.vector_store %arg7[%c0_10, %c0_11, %c0_12], %16 {strides = array<i32>} : memref<1x2x32xf32, #tpu.memory_space<vmem>>, vector<1x2x32xf32>,
    return
  }
  func.func @transform_0(%arg0: i32, %arg1: i32, %arg2: i32) -> (i32, i32) {
    %c0_i32 = arith.constant 0 : i32
    return %arg0, %arg2 : i32, i32
  }
  func.func @transform_1(%arg0: i32, %arg1: i32, %arg2: i32) -> (i32, i32) {
    %c0_i32 = arith.constant 0 : i32
    return %arg2, %arg1 : i32, i32
  }
  func.func @transform_2(%arg0: i32, %arg1: i32, %arg2: i32) -> (i32, i32) {
    %c0_i32 = arith.constant 0 : i32
    %c0_i32_0 = arith.constant 0 : i32
    return %c0_i32, %arg1 : i32, i32
  }
  func.func @transform_3(%arg0: i32, %arg1: i32, %arg2: i32) -> (i32, i32) {
    %c0_i32 = arith.constant 0 : i32
    return %arg0, %arg1 : i32, i32
  }
  func.func @transform_4(%arg0: i32, %arg1: i32, %arg2: i32) -> (i32, i32, i32) {
    %c0_i32 = arith.constant 0 : i32
    %c0_i32_0 = arith.constant 0 : i32
    return %arg0, %c0_i32, %arg1 : i32, i32, i32
  }
}

module attributes {stable_mosaic.version = 11 : i64} {
  func.func @_gemm_kernel(%arg0: i32, %arg1: i32, %arg2: i32, %arg3: memref<32x384xbf16, #tpu.memory_space<vmem>>, %arg4: memref<384x128xbf16, #tpu.memory_space<vmem>>, %arg5: memref<32x128xbf16, #tpu.memory_space<vmem>>, %arg6: memref<1x2x128xf32, #tpu.memory_space<vmem>>, %arg7: memref<32x128xf32, #tpu.memory_space<vmem>>) attributes {dimension_semantics = [#tpu.dimension_semantics<parallel>, #tpu.dimension_semantics<parallel>, #tpu.dimension_semantics<arbitrary>], iteration_bounds = array<i64: 1, 1, 3>, scalar_prefetch = 0 : i64, scratch_operands = 1 : i64, tpu.core_type = #tpu.core_type<tc>, window_params = [{transform_indices = @transform_0, window_bounds = array<i64: 32, 384>}, {transform_indices = @transform_1, window_bounds = array<i64: 384, 128>}, {transform_indices = @transform_2, window_bounds = array<i64: 32, 128>}, {transform_indices = @transform_3, window_bounds = array<i64: 1, 2, 128>}]} {
    %c0 = arith.constant 0 : index
    %c0_0 = arith.constant 0 : index
    %0 = vector.load %arg3[%c0, %c0_0] : memref<32x384xbf16, #tpu.memory_space<vmem>>, vector<32x384xbf16>
    %c0_1 = arith.constant 0 : index
    %c0_2 = arith.constant 0 : index
    %1 = vector.load %arg4[%c0_1, %c0_2] : memref<384x128xbf16, #tpu.memory_space<vmem>>, vector<384x128xbf16>
    %cst = arith.constant dense<0.000000e+00> : vector<32x128xf32>
    %2 = tpu.matmul %0, %1, %cst {dimension_numbers = #tpu.dot_dimension_numbers<[1], [0], [0], [1], [0, 0, 1, 1], [], []>} : vector<32x384xbf16>, vector<384x128xbf16>, vector<32x128xf32> -> vector<32x128xf32>
    %c0_i32 = arith.constant 0 : i32
    %3 = arith.cmpi eq, %arg2, %c0_i32 : i32
    %4 = arith.extui %3 : i1 to i32
    %c0_i32_3 = arith.constant 0 : i32
    %5 = arith.cmpi ne, %4, %c0_i32_3 : i32
    scf.if %5 {
      %cst_9 = arith.constant 0.000000e+00 : f32
      %12 = vector.broadcast %cst_9 : f32 to vector<32x128xf32>
      %c0_10 = arith.constant 0 : index
      %c0_11 = arith.constant 0 : index
      %13 = vector.load %arg7[%c0_10, %c0_11] : memref<32x128xf32, #tpu.memory_space<vmem>>, vector<32x128xf32>
      tpu.vector_store %arg7[%c0_10, %c0_11], %12 {strides = array<i32>} : memref<32x128xf32, #tpu.memory_space<vmem>>, vector<32x128xf32>,
    } else {
    }
    %c0_4 = arith.constant 0 : index
    %c0_5 = arith.constant 0 : index
    %6 = vector.load %arg7[%c0_4, %c0_5] : memref<32x128xf32, #tpu.memory_space<vmem>>, vector<32x128xf32>
    %7 = arith.addf %6, %2 : vector<32x128xf32>
    %c0_6 = arith.constant 0 : index
    %c0_7 = arith.constant 0 : index
    %8 = vector.load %arg7[%c0_6, %c0_7] : memref<32x128xf32, #tpu.memory_space<vmem>>, vector<32x128xf32>
    tpu.vector_store %arg7[%c0_6, %c0_7], %7 {strides = array<i32>} : memref<32x128xf32, #tpu.memory_space<vmem>>, vector<32x128xf32>,
    %c2_i32 = arith.constant 2 : i32
    %9 = arith.cmpi eq, %arg2, %c2_i32 : i32
    %10 = arith.extui %9 : i1 to i32
    %c0_i32_8 = arith.constant 0 : i32
    %11 = arith.cmpi ne, %10, %c0_i32_8 : i32
    scf.if %11 {
      %c0_9 = arith.constant 0 : index
      %c0_10 = arith.constant 0 : index
      %12 = vector.load %arg7[%c0_9, %c0_10] : memref<32x128xf32, #tpu.memory_space<vmem>>, vector<32x128xf32>
      %13 = arith.truncf %12 : vector<32x128xf32> to vector<32x128xbf16>
      %c0_11 = arith.constant 0 : index
      %c0_12 = arith.constant 0 : index
      %14 = vector.load %arg5[%c0_11, %c0_12] : memref<32x128xbf16, #tpu.memory_space<vmem>>, vector<32x128xbf16>
      tpu.vector_store %arg5[%c0_11, %c0_12], %13 {strides = array<i32>} : memref<32x128xbf16, #tpu.memory_space<vmem>>, vector<32x128xbf16>,
      %cst_13 = arith.constant dense<0.000000e+00> : vector<128xf32>
      %15 = vector.multi_reduction <add>, %12, %cst_13 [0] : vector<32x128xf32> to vector<128xf32>
      %16 = vector.shape_cast %15 : vector<128xf32> to vector<1x128xf32>
      %17 = arith.mulf %12, %12 : vector<32x128xf32>
      %cst_14 = arith.constant dense<0.000000e+00> : vector<128xf32>
      %18 = vector.multi_reduction <add>, %17, %cst_14 [0] : vector<32x128xf32> to vector<128xf32>
      %19 = vector.shape_cast %18 : vector<128xf32> to vector<1x128xf32>
      %20 = tpu.concatenate %16, %19 in 0 : vector<1x128xf32>, vector<1x128xf32> -> vector<2x128xf32>
      %21 = vector.shape_cast %20 : vector<2x128xf32> to vector<1x2x128xf32>
      %c0_15 = arith.constant 0 : index
      %c0_16 = arith.constant 0 : index
      %c0_17 = arith.constant 0 : index
      %22 = vector.load %arg6[%c0_15, %c0_16, %c0_17] : memref<1x2x128xf32, #tpu.memory_space<vmem>>, vector<1x2x128xf32>
      tpu.vector_store %arg6[%c0_15, %c0_16, %c0_17], %21 {strides = array<i32>} : memref<1x2x128xf32, #tpu.memory_space<vmem>>, vector<1x2x128xf32>,
    } else {
    }
    return
  }
  func.func @transform_0(%arg0: i32, %arg1: i32, %arg2: i32) -> (i32, i32) {
    %c0_i32 = arith.constant 0 : i32
    return %arg0, %arg2 : i32, i32
  }
  func.func @transform_1(%arg0: i32, %arg1: i32, %arg2: i32) -> (i32, i32) {
    %c0_i32 = arith.constant 0 : i32
    return %arg2, %arg1 : i32, i32
  }
  func.func @transform_2(%arg0: i32, %arg1: i32, %arg2: i32) -> (i32, i32) {
    %c0_i32 = arith.constant 0 : i32
    return %arg0, %arg1 : i32, i32
  }
  func.func @transform_3(%arg0: i32, %arg1: i32, %arg2: i32) -> (i32, i32, i32) {
    %c0_i32 = arith.constant 0 : i32
    %c0_i32_0 = arith.constant 0 : i32
    return %arg0, %c0_i32, %arg1 : i32, i32, i32
  }
}

module attributes {stable_mosaic.version = 11 : i64} {
  func.func @_gemm_kernel(%arg0: i32, %arg1: i32, %arg2: i32, %arg3: memref<32x128xbf16, #tpu.memory_space<vmem>>, %arg4: memref<128x128xbf16, #tpu.memory_space<vmem>>, %arg5: memref<1x128xf32, #tpu.memory_space<vmem>>, %arg6: memref<1x128xf32, #tpu.memory_space<vmem>>, %arg7: memref<32x128xbf16, #tpu.memory_space<vmem>>, %arg8: memref<1x2x128xf32, #tpu.memory_space<vmem>>) attributes {dimension_semantics = [#tpu.dimension_semantics<parallel>, #tpu.dimension_semantics<parallel>, #tpu.dimension_semantics<arbitrary>], iteration_bounds = array<i64: 1, 1, 1>, scalar_prefetch = 0 : i64, scratch_operands = 0 : i64, tpu.core_type = #tpu.core_type<tc>, window_params = [{transform_indices = @transform_0, window_bounds = array<i64: 32, 128>}, {transform_indices = @transform_1, window_bounds = array<i64: 128, 128>}, {transform_indices = @transform_2, window_bounds = array<i64: 1, 128>}, {transform_indices = @transform_3, window_bounds = array<i64: 1, 128>}, {transform_indices = @transform_4, window_bounds = array<i64: 32, 128>}, {transform_indices = @transform_5, window_bounds = array<i64: 1, 2, 128>}]} {
    %c0 = arith.constant 0 : index
    %c0_0 = arith.constant 0 : index
    %0 = vector.load %arg3[%c0, %c0_0] : memref<32x128xbf16, #tpu.memory_space<vmem>>, vector<32x128xbf16>
    %1 = arith.extf %0 : vector<32x128xbf16> to vector<32x128xf32>
    %c0_1 = arith.constant 0 : index
    %c0_2 = arith.constant 0 : index
    %2 = vector.load %arg5[%c0_1, %c0_2] : memref<1x128xf32, #tpu.memory_space<vmem>>, vector<1x128xf32>
    %3 = vector.broadcast %2 : vector<1x128xf32> to vector<32x128xf32>
    %4 = arith.mulf %1, %3 : vector<32x128xf32>
    %c0_3 = arith.constant 0 : index
    %c0_4 = arith.constant 0 : index
    %5 = vector.load %arg6[%c0_3, %c0_4] : memref<1x128xf32, #tpu.memory_space<vmem>>, vector<1x128xf32>
    %6 = vector.broadcast %5 : vector<1x128xf32> to vector<32x128xf32>
    %7 = arith.addf %4, %6 : vector<32x128xf32>
    %cst = arith.constant 0.000000e+00 : f32
    %8 = vector.broadcast %cst : f32 to vector<32x128xf32>
    %9 = arith.maximumf %7, %8 : vector<32x128xf32>
    %10 = arith.truncf %9 : vector<32x128xf32> to vector<32x128xbf16>
    %c0_5 = arith.constant 0 : index
    %c0_6 = arith.constant 0 : index
    %11 = vector.load %arg4[%c0_5, %c0_6] : memref<128x128xbf16, #tpu.memory_space<vmem>>, vector<128x128xbf16>
    %cst_7 = arith.constant dense<0.000000e+00> : vector<32x128xf32>
    %12 = tpu.matmul %10, %11, %cst_7 {dimension_numbers = #tpu.dot_dimension_numbers<[1], [0], [0], [1], [0, 0, 1, 1], [], []>} : vector<32x128xbf16>, vector<128x128xbf16>, vector<32x128xf32> -> vector<32x128xf32>
    %13 = arith.truncf %12 : vector<32x128xf32> to vector<32x128xbf16>
    %c0_8 = arith.constant 0 : index
    %c0_9 = arith.constant 0 : index
    %14 = vector.load %arg7[%c0_8, %c0_9] : memref<32x128xbf16, #tpu.memory_space<vmem>>, vector<32x128xbf16>
    tpu.vector_store %arg7[%c0_8, %c0_9], %13 {strides = array<i32>} : memref<32x128xbf16, #tpu.memory_space<vmem>>, vector<32x128xbf16>,
    %cst_10 = arith.constant dense<0.000000e+00> : vector<128xf32>
    %15 = vector.multi_reduction <add>, %12, %cst_10 [0] : vector<32x128xf32> to vector<128xf32>
    %16 = vector.shape_cast %15 : vector<128xf32> to vector<1x128xf32>
    %17 = arith.mulf %12, %12 : vector<32x128xf32>
    %cst_11 = arith.constant dense<0.000000e+00> : vector<128xf32>
    %18 = vector.multi_reduction <add>, %17, %cst_11 [0] : vector<32x128xf32> to vector<128xf32>
    %19 = vector.shape_cast %18 : vector<128xf32> to vector<1x128xf32>
    %20 = tpu.concatenate %16, %19 in 0 : vector<1x128xf32>, vector<1x128xf32> -> vector<2x128xf32>
    %21 = vector.shape_cast %20 : vector<2x128xf32> to vector<1x2x128xf32>
    %c0_12 = arith.constant 0 : index
    %c0_13 = arith.constant 0 : index
    %c0_14 = arith.constant 0 : index
    %22 = vector.load %arg8[%c0_12, %c0_13, %c0_14] : memref<1x2x128xf32, #tpu.memory_space<vmem>>, vector<1x2x128xf32>
    tpu.vector_store %arg8[%c0_12, %c0_13, %c0_14], %21 {strides = array<i32>} : memref<1x2x128xf32, #tpu.memory_space<vmem>>, vector<1x2x128xf32>,
    return
  }
  func.func @transform_0(%arg0: i32, %arg1: i32, %arg2: i32) -> (i32, i32) {
    %c0_i32 = arith.constant 0 : i32
    return %arg0, %arg2 : i32, i32
  }
  func.func @transform_1(%arg0: i32, %arg1: i32, %arg2: i32) -> (i32, i32) {
    %c0_i32 = arith.constant 0 : i32
    return %arg2, %arg1 : i32, i32
  }
  func.func @transform_2(%arg0: i32, %arg1: i32, %arg2: i32) -> (i32, i32) {
    %c0_i32 = arith.constant 0 : i32
    %c0_i32_0 = arith.constant 0 : i32
    return %c0_i32, %arg2 : i32, i32
  }
  func.func @transform_3(%arg0: i32, %arg1: i32, %arg2: i32) -> (i32, i32) {
    %c0_i32 = arith.constant 0 : i32
    %c0_i32_0 = arith.constant 0 : i32
    return %c0_i32, %arg2 : i32, i32
  }
  func.func @transform_4(%arg0: i32, %arg1: i32, %arg2: i32) -> (i32, i32) {
    %c0_i32 = arith.constant 0 : i32
    return %arg0, %arg1 : i32, i32
  }
  func.func @transform_5(%arg0: i32, %arg1: i32, %arg2: i32) -> (i32, i32, i32) {
    %c0_i32 = arith.constant 0 : i32
    %c0_i32_0 = arith.constant 0 : i32
    return %arg0, %c0_i32, %arg1 : i32, i32, i32
  }
}

module attributes {stable_mosaic.version = 11 : i64} {
  func.func @_affine_kernel(%arg0: i32, %arg1: i32, %arg2: memref<32x128xbf16, #tpu.memory_space<vmem>>, %arg3: memref<1x128xf32, #tpu.memory_space<vmem>>, %arg4: memref<1x128xf32, #tpu.memory_space<vmem>>, %arg5: memref<32x128xbf16, #tpu.memory_space<vmem>>, %arg6: memref<1x128xf32, #tpu.memory_space<vmem>>, %arg7: memref<1x128xf32, #tpu.memory_space<vmem>>, %arg8: memref<32x128xbf16, #tpu.memory_space<vmem>>) attributes {dimension_semantics = [#tpu.dimension_semantics<parallel>, #tpu.dimension_semantics<parallel>], iteration_bounds = array<i64: 1, 1>, scalar_prefetch = 0 : i64, scratch_operands = 0 : i64, tpu.core_type = #tpu.core_type<tc>, window_params = [{transform_indices = @transform_0, window_bounds = array<i64: 32, 128>}, {transform_indices = @transform_1, window_bounds = array<i64: 1, 128>}, {transform_indices = @transform_2, window_bounds = array<i64: 1, 128>}, {transform_indices = @transform_3, window_bounds = array<i64: 32, 128>}, {transform_indices = @transform_4, window_bounds = array<i64: 1, 128>}, {transform_indices = @transform_5, window_bounds = array<i64: 1, 128>}, {transform_indices = @transform_6, window_bounds = array<i64: 32, 128>}]} {
    %c0 = arith.constant 0 : index
    %c0_0 = arith.constant 0 : index
    %0 = vector.load %arg2[%c0, %c0_0] : memref<32x128xbf16, #tpu.memory_space<vmem>>, vector<32x128xbf16>
    %1 = arith.extf %0 : vector<32x128xbf16> to vector<32x128xf32>
    %c0_1 = arith.constant 0 : index
    %c0_2 = arith.constant 0 : index
    %2 = vector.load %arg3[%c0_1, %c0_2] : memref<1x128xf32, #tpu.memory_space<vmem>>, vector<1x128xf32>
    %3 = vector.broadcast %2 : vector<1x128xf32> to vector<32x128xf32>
    %4 = arith.mulf %1, %3 : vector<32x128xf32>
    %c0_3 = arith.constant 0 : index
    %c0_4 = arith.constant 0 : index
    %5 = vector.load %arg4[%c0_3, %c0_4] : memref<1x128xf32, #tpu.memory_space<vmem>>, vector<1x128xf32>
    %6 = vector.broadcast %5 : vector<1x128xf32> to vector<32x128xf32>
    %7 = arith.addf %4, %6 : vector<32x128xf32>
    %c0_5 = arith.constant 0 : index
    %c0_6 = arith.constant 0 : index
    %8 = vector.load %arg5[%c0_5, %c0_6] : memref<32x128xbf16, #tpu.memory_space<vmem>>, vector<32x128xbf16>
    %9 = arith.extf %8 : vector<32x128xbf16> to vector<32x128xf32>
    %c0_7 = arith.constant 0 : index
    %c0_8 = arith.constant 0 : index
    %10 = vector.load %arg6[%c0_7, %c0_8] : memref<1x128xf32, #tpu.memory_space<vmem>>, vector<1x128xf32>
    %11 = vector.broadcast %10 : vector<1x128xf32> to vector<32x128xf32>
    %12 = arith.mulf %9, %11 : vector<32x128xf32>
    %13 = arith.addf %7, %12 : vector<32x128xf32>
    %c0_9 = arith.constant 0 : index
    %c0_10 = arith.constant 0 : index
    %14 = vector.load %arg7[%c0_9, %c0_10] : memref<1x128xf32, #tpu.memory_space<vmem>>, vector<1x128xf32>
    %15 = vector.broadcast %14 : vector<1x128xf32> to vector<32x128xf32>
    %16 = arith.addf %13, %15 : vector<32x128xf32>
    %cst = arith.constant 0.000000e+00 : f32
    %17 = vector.broadcast %cst : f32 to vector<32x128xf32>
    %18 = arith.maximumf %16, %17 : vector<32x128xf32>
    %19 = arith.truncf %18 : vector<32x128xf32> to vector<32x128xbf16>
    %c0_11 = arith.constant 0 : index
    %c0_12 = arith.constant 0 : index
    %20 = vector.load %arg8[%c0_11, %c0_12] : memref<32x128xbf16, #tpu.memory_space<vmem>>, vector<32x128xbf16>
    tpu.vector_store %arg8[%c0_11, %c0_12], %19 {strides = array<i32>} : memref<32x128xbf16, #tpu.memory_space<vmem>>, vector<32x128xbf16>,
    return
  }
  func.func @transform_0(%arg0: i32, %arg1: i32) -> (i32, i32) {
    %c0_i32 = arith.constant 0 : i32
    return %arg0, %arg1 : i32, i32
  }
  func.func @transform_1(%arg0: i32, %arg1: i32) -> (i32, i32) {
    %c0_i32 = arith.constant 0 : i32
    %c0_i32_0 = arith.constant 0 : i32
    return %c0_i32, %arg1 : i32, i32
  }
  func.func @transform_2(%arg0: i32, %arg1: i32) -> (i32, i32) {
    %c0_i32 = arith.constant 0 : i32
    %c0_i32_0 = arith.constant 0 : i32
    return %c0_i32, %arg1 : i32, i32
  }
  func.func @transform_3(%arg0: i32, %arg1: i32) -> (i32, i32) {
    %c0_i32 = arith.constant 0 : i32
    return %arg0, %arg1 : i32, i32
  }
  func.func @transform_4(%arg0: i32, %arg1: i32) -> (i32, i32) {
    %c0_i32 = arith.constant 0 : i32
    %c0_i32_0 = arith.constant 0 : i32
    return %c0_i32, %arg1 : i32, i32
  }
  func.func @transform_5(%arg0: i32, %arg1: i32) -> (i32, i32) {
    %c0_i32 = arith.constant 0 : i32
    %c0_i32_0 = arith.constant 0 : i32
    return %c0_i32, %arg1 : i32, i32
  }
  func.func @transform_6(%arg0: i32, %arg1: i32) -> (i32, i32) {
    %c0_i32 = arith.constant 0 : i32
    return %arg0, %arg1 : i32, i32
  }
}

module attributes {stable_mosaic.version = 11 : i64} {
  func.func @_gemm_kernel(%arg0: i32, %arg1: i32, %arg2: i32, %arg3: memref<8x128xbf16, #tpu.memory_space<vmem>>, %arg4: memref<128x64xbf16, #tpu.memory_space<vmem>>, %arg5: memref<1x64xf32, #tpu.memory_space<vmem>>, %arg6: memref<8x64xbf16, #tpu.memory_space<vmem>>, %arg7: memref<1x2x64xf32, #tpu.memory_space<vmem>>) attributes {dimension_semantics = [#tpu.dimension_semantics<parallel>, #tpu.dimension_semantics<parallel>, #tpu.dimension_semantics<arbitrary>], iteration_bounds = array<i64: 1, 1, 1>, scalar_prefetch = 0 : i64, scratch_operands = 0 : i64, tpu.core_type = #tpu.core_type<tc>, window_params = [{transform_indices = @transform_0, window_bounds = array<i64: 8, 128>}, {transform_indices = @transform_1, window_bounds = array<i64: 128, 64>}, {transform_indices = @transform_2, window_bounds = array<i64: 1, 64>}, {transform_indices = @transform_3, window_bounds = array<i64: 8, 64>}, {transform_indices = @transform_4, window_bounds = array<i64: 1, 2, 64>}]} {
    %c0 = arith.constant 0 : index
    %c0_0 = arith.constant 0 : index
    %0 = vector.load %arg3[%c0, %c0_0] : memref<8x128xbf16, #tpu.memory_space<vmem>>, vector<8x128xbf16>
    %cst = arith.constant 0.000000e+00 : bf16
    %1 = vector.broadcast %cst : bf16 to vector<8x128xbf16>
    %2 = arith.maximumf %0, %1 : vector<8x128xbf16>
    %c0_1 = arith.constant 0 : index
    %c0_2 = arith.constant 0 : index
    %3 = vector.load %arg4[%c0_1, %c0_2] : memref<128x64xbf16, #tpu.memory_space<vmem>>, vector<128x64xbf16>
    %cst_3 = arith.constant dense<0.000000e+00> : vector<8x64xf32>
    %4 = tpu.matmul %2, %3, %cst_3 {dimension_numbers = #tpu.dot_dimension_numbers<[1], [0], [0], [1], [0, 0, 1, 1], [], []>} : vector<8x128xbf16>, vector<128x64xbf16>, vector<8x64xf32> -> vector<8x64xf32>
    %c0_4 = arith.constant 0 : index
    %c0_5 = arith.constant 0 : index
    %5 = vector.load %arg5[%c0_4, %c0_5] : memref<1x64xf32, #tpu.memory_space<vmem>>, vector<1x64xf32>
    %6 = vector.broadcast %5 : vector<1x64xf32> to vector<8x64xf32>
    %7 = arith.addf %4, %6 : vector<8x64xf32>
    %8 = arith.truncf %7 : vector<8x64xf32> to vector<8x64xbf16>
    %c0_6 = arith.constant 0 : index
    %c0_7 = arith.constant 0 : index
    %9 = vector.load %arg6[%c0_6, %c0_7] : memref<8x64xbf16, #tpu.memory_space<vmem>>, vector<8x64xbf16>
    tpu.vector_store %arg6[%c0_6, %c0_7], %8 {strides = array<i32>} : memref<8x64xbf16, #tpu.memory_space<vmem>>, vector<8x64xbf16>,
    %cst_8 = arith.constant dense<0.000000e+00> : vector<64xf32>
    %10 = vector.multi_reduction <add>, %7, %cst_8 [0] : vector<8x64xf32> to vector<64xf32>
    %11 = vector.shape_cast %10 : vector<64xf32> to vector<1x64xf32>
    %12 = arith.mulf %7, %7 : vector<8x64xf32>
    %cst_9 = arith.constant dense<0.000000e+00> : vector<64xf32>
    %13 = vector.multi_reduction <add>, %12, %cst_9 [0] : vector<8x64xf32> to vector<64xf32>
    %14 = vector.shape_cast %13 : vector<64xf32> to vector<1x64xf32>
    %15 = tpu.concatenate %11, %14 in 0 : vector<1x64xf32>, vector<1x64xf32> -> vector<2x64xf32>
    %16 = vector.shape_cast %15 : vector<2x64xf32> to vector<1x2x64xf32>
    %c0_10 = arith.constant 0 : index
    %c0_11 = arith.constant 0 : index
    %c0_12 = arith.constant 0 : index
    %17 = vector.load %arg7[%c0_10, %c0_11, %c0_12] : memref<1x2x64xf32, #tpu.memory_space<vmem>>, vector<1x2x64xf32>
    tpu.vector_store %arg7[%c0_10, %c0_11, %c0_12], %16 {strides = array<i32>} : memref<1x2x64xf32, #tpu.memory_space<vmem>>, vector<1x2x64xf32>,
    return
  }
  func.func @transform_0(%arg0: i32, %arg1: i32, %arg2: i32) -> (i32, i32) {
    %c0_i32 = arith.constant 0 : i32
    return %arg0, %arg2 : i32, i32
  }
  func.func @transform_1(%arg0: i32, %arg1: i32, %arg2: i32) -> (i32, i32) {
    %c0_i32 = arith.constant 0 : i32
    return %arg2, %arg1 : i32, i32
  }
  func.func @transform_2(%arg0: i32, %arg1: i32, %arg2: i32) -> (i32, i32) {
    %c0_i32 = arith.constant 0 : i32
    %c0_i32_0 = arith.constant 0 : i32
    return %c0_i32, %arg1 : i32, i32
  }
  func.func @transform_3(%arg0: i32, %arg1: i32, %arg2: i32) -> (i32, i32) {
    %c0_i32 = arith.constant 0 : i32
    return %arg0, %arg1 : i32, i32
  }
  func.func @transform_4(%arg0: i32, %arg1: i32, %arg2: i32) -> (i32, i32, i32) {
    %c0_i32 = arith.constant 0 : i32
    %c0_i32_0 = arith.constant 0 : i32
    return %arg0, %c0_i32, %arg1 : i32, i32, i32
  }
}

module attributes {stable_mosaic.version = 11 : i64} {
  func.func @_affine_kernel(%arg0: i32, %arg1: i32, %arg2: memref<32x128xbf16, #tpu.memory_space<vmem>>, %arg3: memref<1x128xf32, #tpu.memory_space<vmem>>, %arg4: memref<1x128xf32, #tpu.memory_space<vmem>>, %arg5: memref<32x128xbf16, #tpu.memory_space<vmem>>) attributes {dimension_semantics = [#tpu.dimension_semantics<parallel>, #tpu.dimension_semantics<parallel>], iteration_bounds = array<i64: 1, 1>, scalar_prefetch = 0 : i64, scratch_operands = 0 : i64, tpu.core_type = #tpu.core_type<tc>, window_params = [{transform_indices = @transform_0, window_bounds = array<i64: 32, 128>}, {transform_indices = @transform_1, window_bounds = array<i64: 1, 128>}, {transform_indices = @transform_2, window_bounds = array<i64: 1, 128>}, {transform_indices = @transform_3, window_bounds = array<i64: 32, 128>}]} {
    %c0 = arith.constant 0 : index
    %c0_0 = arith.constant 0 : index
    %0 = vector.load %arg2[%c0, %c0_0] : memref<32x128xbf16, #tpu.memory_space<vmem>>, vector<32x128xbf16>
    %1 = arith.extf %0 : vector<32x128xbf16> to vector<32x128xf32>
    %c0_1 = arith.constant 0 : index
    %c0_2 = arith.constant 0 : index
    %2 = vector.load %arg3[%c0_1, %c0_2] : memref<1x128xf32, #tpu.memory_space<vmem>>, vector<1x128xf32>
    %3 = vector.broadcast %2 : vector<1x128xf32> to vector<32x128xf32>
    %4 = arith.mulf %1, %3 : vector<32x128xf32>
    %c0_3 = arith.constant 0 : index
    %c0_4 = arith.constant 0 : index
    %5 = vector.load %arg4[%c0_3, %c0_4] : memref<1x128xf32, #tpu.memory_space<vmem>>, vector<1x128xf32>
    %6 = vector.broadcast %5 : vector<1x128xf32> to vector<32x128xf32>
    %7 = arith.addf %4, %6 : vector<32x128xf32>
    %cst = arith.constant 0.000000e+00 : f32
    %8 = vector.broadcast %cst : f32 to vector<32x128xf32>
    %9 = arith.maximumf %7, %8 : vector<32x128xf32>
    %10 = arith.truncf %9 : vector<32x128xf32> to vector<32x128xbf16>
    %c0_5 = arith.constant 0 : index
    %c0_6 = arith.constant 0 : index
    %11 = vector.load %arg5[%c0_5, %c0_6] : memref<32x128xbf16, #tpu.memory_space<vmem>>, vector<32x128xbf16>
    tpu.vector_store %arg5[%c0_5, %c0_6], %10 {strides = array<i32>} : memref<32x128xbf16, #tpu.memory_space<vmem>>, vector<32x128xbf16>,
    return
  }
  func.func @transform_0(%arg0: i32, %arg1: i32) -> (i32, i32) {
    %c0_i32 = arith.constant 0 : i32
    return %arg0, %arg1 : i32, i32
  }
  func.func @transform_1(%arg0: i32, %arg1: i32) -> (i32, i32) {
    %c0_i32 = arith.constant 0 : i32
    %c0_i32_0 = arith.constant 0 : i32
    return %c0_i32, %arg1 : i32, i32
  }
  func.func @transform_2(%arg0: i32, %arg1: i32) -> (i32, i32) {
    %c0_i32 = arith.constant 0 : i32
    %c0_i32_0 = arith.constant 0 : i32
    return %c0_i32, %arg1 : i32, i32
  }
  func.func @transform_3(%arg0: i32, %arg1: i32) -> (i32, i32) {
    %c0_i32 = arith.constant 0 : i32
    return %arg0, %arg1 : i32, i32
  }
}

module attributes {stable_mosaic.version = 11 : i64} {
  func.func @_gemm_kernel(%arg0: i32, %arg1: i32, %arg2: i32, %arg3: memref<32x128xbf16, #tpu.memory_space<vmem>>, %arg4: memref<128x128xbf16, #tpu.memory_space<vmem>>, %arg5: memref<32x128xbf16, #tpu.memory_space<vmem>>, %arg6: memref<1x2x128xf32, #tpu.memory_space<vmem>>) attributes {dimension_semantics = [#tpu.dimension_semantics<parallel>, #tpu.dimension_semantics<parallel>, #tpu.dimension_semantics<arbitrary>], iteration_bounds = array<i64: 1, 1, 1>, scalar_prefetch = 0 : i64, scratch_operands = 0 : i64, tpu.core_type = #tpu.core_type<tc>, window_params = [{transform_indices = @transform_0, window_bounds = array<i64: 32, 128>}, {transform_indices = @transform_1, window_bounds = array<i64: 128, 128>}, {transform_indices = @transform_2, window_bounds = array<i64: 32, 128>}, {transform_indices = @transform_3, window_bounds = array<i64: 1, 2, 128>}]} {
    %c0 = arith.constant 0 : index
    %c0_0 = arith.constant 0 : index
    %0 = vector.load %arg3[%c0, %c0_0] : memref<32x128xbf16, #tpu.memory_space<vmem>>, vector<32x128xbf16>
    %c0_1 = arith.constant 0 : index
    %c0_2 = arith.constant 0 : index
    %1 = vector.load %arg4[%c0_1, %c0_2] : memref<128x128xbf16, #tpu.memory_space<vmem>>, vector<128x128xbf16>
    %cst = arith.constant dense<0.000000e+00> : vector<32x128xf32>
    %2 = tpu.matmul %0, %1, %cst {dimension_numbers = #tpu.dot_dimension_numbers<[1], [0], [0], [1], [0, 0, 1, 1], [], []>} : vector<32x128xbf16>, vector<128x128xbf16>, vector<32x128xf32> -> vector<32x128xf32>
    %3 = arith.truncf %2 : vector<32x128xf32> to vector<32x128xbf16>
    %c0_3 = arith.constant 0 : index
    %c0_4 = arith.constant 0 : index
    %4 = vector.load %arg5[%c0_3, %c0_4] : memref<32x128xbf16, #tpu.memory_space<vmem>>, vector<32x128xbf16>
    tpu.vector_store %arg5[%c0_3, %c0_4], %3 {strides = array<i32>} : memref<32x128xbf16, #tpu.memory_space<vmem>>, vector<32x128xbf16>,
    %cst_5 = arith.constant dense<0.000000e+00> : vector<128xf32>
    %5 = vector.multi_reduction <add>, %2, %cst_5 [0] : vector<32x128xf32> to vector<128xf32>
    %6 = vector.shape_cast %5 : vector<128xf32> to vector<1x128xf32>
    %7 = arith.mulf %2, %2 : vector<32x128xf32>
    %cst_6 = arith.constant dense<0.000000e+00> : vector<128xf32>
    %8 = vector.multi_reduction <add>, %7, %cst_6 [0] : vector<32x128xf32> to vector<128xf32>
    %9 = vector.shape_cast %8 : vector<128xf32> to vector<1x128xf32>
    %10 = tpu.concatenate %6, %9 in 0 : vector<1x128xf32>, vector<1x128xf32> -> vector<2x128xf32>
    %11 = vector.shape_cast %10 : vector<2x128xf32> to vector<1x2x128xf32>
    %c0_7 = arith.constant 0 : index
    %c0_8 = arith.constant 0 : index
    %c0_9 = arith.constant 0 : index
    %12 = vector.load %arg6[%c0_7, %c0_8, %c0_9] : memref<1x2x128xf32, #tpu.memory_space<vmem>>, vector<1x2x128xf32>
    tpu.vector_store %arg6[%c0_7, %c0_8, %c0_9], %11 {strides = array<i32>} : memref<1x2x128xf32, #tpu.memory_space<vmem>>, vector<1x2x128xf32>,
    return
  }
  func.func @transform_0(%arg0: i32, %arg1: i32, %arg2: i32) -> (i32, i32) {
    %c0_i32 = arith.constant 0 : i32
    return %arg0, %arg2 : i32, i32
  }
  func.func @transform_1(%arg0: i32, %arg1: i32, %arg2: i32) -> (i32, i32) {
    %c0_i32 = arith.constant 0 : i32
    return %arg2, %arg1 : i32, i32
  }
  func.func @transform_2(%arg0: i32, %arg1: i32, %arg2: i32) -> (i32, i32) {
    %c0_i32 = arith.constant 0 : i32
    return %arg0, %arg1 : i32, i32
  }
  func.func @transform_3(%arg0: i32, %arg1: i32, %arg2: i32) -> (i32, i32, i32) {
    %c0_i32 = arith.constant 0 : i32
    %c0_i32_0 = arith.constant 0 : i32
    return %arg0, %c0_i32, %arg1 : i32, i32, i32
  }
}

module attributes {stable_mosaic.version = 11 : i64} {
  func.func @_gemm_kernel(%arg0: i32, %arg1: i32, %arg2: i32, %arg3: memref<8x384xbf16, #tpu.memory_space<vmem>>, %arg4: memref<384x128xbf16, #tpu.memory_space<vmem>>, %arg5: memref<8x128xbf16, #tpu.memory_space<vmem>>, %arg6: memref<1x2x128xf32, #tpu.memory_space<vmem>>, %arg7: memref<8x128xf32, #tpu.memory_space<vmem>>) attributes {dimension_semantics = [#tpu.dimension_semantics<parallel>, #tpu.dimension_semantics<parallel>, #tpu.dimension_semantics<arbitrary>], iteration_bounds = array<i64: 1, 1, 3>, scalar_prefetch = 0 : i64, scratch_operands = 1 : i64, tpu.core_type = #tpu.core_type<tc>, window_params = [{transform_indices = @transform_0, window_bounds = array<i64: 8, 384>}, {transform_indices = @transform_1, window_bounds = array<i64: 384, 128>}, {transform_indices = @transform_2, window_bounds = array<i64: 8, 128>}, {transform_indices = @transform_3, window_bounds = array<i64: 1, 2, 128>}]} {
    %c0 = arith.constant 0 : index
    %c0_0 = arith.constant 0 : index
    %0 = vector.load %arg3[%c0, %c0_0] : memref<8x384xbf16, #tpu.memory_space<vmem>>, vector<8x384xbf16>
    %c0_1 = arith.constant 0 : index
    %c0_2 = arith.constant 0 : index
    %1 = vector.load %arg4[%c0_1, %c0_2] : memref<384x128xbf16, #tpu.memory_space<vmem>>, vector<384x128xbf16>
    %cst = arith.constant dense<0.000000e+00> : vector<8x128xf32>
    %2 = tpu.matmul %0, %1, %cst {dimension_numbers = #tpu.dot_dimension_numbers<[1], [0], [0], [1], [0, 0, 1, 1], [], []>} : vector<8x384xbf16>, vector<384x128xbf16>, vector<8x128xf32> -> vector<8x128xf32>
    %c0_i32 = arith.constant 0 : i32
    %3 = arith.cmpi eq, %arg2, %c0_i32 : i32
    %4 = arith.extui %3 : i1 to i32
    %c0_i32_3 = arith.constant 0 : i32
    %5 = arith.cmpi ne, %4, %c0_i32_3 : i32
    scf.if %5 {
      %cst_9 = arith.constant 0.000000e+00 : f32
      %12 = vector.broadcast %cst_9 : f32 to vector<8x128xf32>
      %c0_10 = arith.constant 0 : index
      %c0_11 = arith.constant 0 : index
      %13 = vector.load %arg7[%c0_10, %c0_11] : memref<8x128xf32, #tpu.memory_space<vmem>>, vector<8x128xf32>
      tpu.vector_store %arg7[%c0_10, %c0_11], %12 {strides = array<i32>} : memref<8x128xf32, #tpu.memory_space<vmem>>, vector<8x128xf32>,
    } else {
    }
    %c0_4 = arith.constant 0 : index
    %c0_5 = arith.constant 0 : index
    %6 = vector.load %arg7[%c0_4, %c0_5] : memref<8x128xf32, #tpu.memory_space<vmem>>, vector<8x128xf32>
    %7 = arith.addf %6, %2 : vector<8x128xf32>
    %c0_6 = arith.constant 0 : index
    %c0_7 = arith.constant 0 : index
    %8 = vector.load %arg7[%c0_6, %c0_7] : memref<8x128xf32, #tpu.memory_space<vmem>>, vector<8x128xf32>
    tpu.vector_store %arg7[%c0_6, %c0_7], %7 {strides = array<i32>} : memref<8x128xf32, #tpu.memory_space<vmem>>, vector<8x128xf32>,
    %c2_i32 = arith.constant 2 : i32
    %9 = arith.cmpi eq, %arg2, %c2_i32 : i32
    %10 = arith.extui %9 : i1 to i32
    %c0_i32_8 = arith.constant 0 : i32
    %11 = arith.cmpi ne, %10, %c0_i32_8 : i32
    scf.if %11 {
      %c0_9 = arith.constant 0 : index
      %c0_10 = arith.constant 0 : index
      %12 = vector.load %arg7[%c0_9, %c0_10] : memref<8x128xf32, #tpu.memory_space<vmem>>, vector<8x128xf32>
      %13 = arith.truncf %12 : vector<8x128xf32> to vector<8x128xbf16>
      %c0_11 = arith.constant 0 : index
      %c0_12 = arith.constant 0 : index
      %14 = vector.load %arg5[%c0_11, %c0_12] : memref<8x128xbf16, #tpu.memory_space<vmem>>, vector<8x128xbf16>
      tpu.vector_store %arg5[%c0_11, %c0_12], %13 {strides = array<i32>} : memref<8x128xbf16, #tpu.memory_space<vmem>>, vector<8x128xbf16>,
      %cst_13 = arith.constant dense<0.000000e+00> : vector<128xf32>
      %15 = vector.multi_reduction <add>, %12, %cst_13 [0] : vector<8x128xf32> to vector<128xf32>
      %16 = vector.shape_cast %15 : vector<128xf32> to vector<1x128xf32>
      %17 = arith.mulf %12, %12 : vector<8x128xf32>
      %cst_14 = arith.constant dense<0.000000e+00> : vector<128xf32>
      %18 = vector.multi_reduction <add>, %17, %cst_14 [0] : vector<8x128xf32> to vector<128xf32>
      %19 = vector.shape_cast %18 : vector<128xf32> to vector<1x128xf32>
      %20 = tpu.concatenate %16, %19 in 0 : vector<1x128xf32>, vector<1x128xf32> -> vector<2x128xf32>
      %21 = vector.shape_cast %20 : vector<2x128xf32> to vector<1x2x128xf32>
      %c0_15 = arith.constant 0 : index
      %c0_16 = arith.constant 0 : index
      %c0_17 = arith.constant 0 : index
      %22 = vector.load %arg6[%c0_15, %c0_16, %c0_17] : memref<1x2x128xf32, #tpu.memory_space<vmem>>, vector<1x2x128xf32>
      tpu.vector_store %arg6[%c0_15, %c0_16, %c0_17], %21 {strides = array<i32>} : memref<1x2x128xf32, #tpu.memory_space<vmem>>, vector<1x2x128xf32>,
    } else {
    }
    return
  }
  func.func @transform_0(%arg0: i32, %arg1: i32, %arg2: i32) -> (i32, i32) {
    %c0_i32 = arith.constant 0 : i32
    return %arg0, %arg2 : i32, i32
  }
  func.func @transform_1(%arg0: i32, %arg1: i32, %arg2: i32) -> (i32, i32) {
    %c0_i32 = arith.constant 0 : i32
    return %arg2, %arg1 : i32, i32
  }
  func.func @transform_2(%arg0: i32, %arg1: i32, %arg2: i32) -> (i32, i32) {
    %c0_i32 = arith.constant 0 : i32
    return %arg0, %arg1 : i32, i32
  }
  func.func @transform_3(%arg0: i32, %arg1: i32, %arg2: i32) -> (i32, i32, i32) {
    %c0_i32 = arith.constant 0 : i32
    %c0_i32_0 = arith.constant 0 : i32
    return %arg0, %c0_i32, %arg1 : i32, i32, i32
  }
}

module attributes {stable_mosaic.version = 11 : i64} {
  func.func @_gemm_kernel(%arg0: i32, %arg1: i32, %arg2: i32, %arg3: memref<8x128xbf16, #tpu.memory_space<vmem>>, %arg4: memref<128x128xbf16, #tpu.memory_space<vmem>>, %arg5: memref<1x128xf32, #tpu.memory_space<vmem>>, %arg6: memref<1x128xf32, #tpu.memory_space<vmem>>, %arg7: memref<8x128xbf16, #tpu.memory_space<vmem>>, %arg8: memref<1x2x128xf32, #tpu.memory_space<vmem>>) attributes {dimension_semantics = [#tpu.dimension_semantics<parallel>, #tpu.dimension_semantics<parallel>, #tpu.dimension_semantics<arbitrary>], iteration_bounds = array<i64: 1, 1, 1>, scalar_prefetch = 0 : i64, scratch_operands = 0 : i64, tpu.core_type = #tpu.core_type<tc>, window_params = [{transform_indices = @transform_0, window_bounds = array<i64: 8, 128>}, {transform_indices = @transform_1, window_bounds = array<i64: 128, 128>}, {transform_indices = @transform_2, window_bounds = array<i64: 1, 128>}, {transform_indices = @transform_3, window_bounds = array<i64: 1, 128>}, {transform_indices = @transform_4, window_bounds = array<i64: 8, 128>}, {transform_indices = @transform_5, window_bounds = array<i64: 1, 2, 128>}]} {
    %c0 = arith.constant 0 : index
    %c0_0 = arith.constant 0 : index
    %0 = vector.load %arg3[%c0, %c0_0] : memref<8x128xbf16, #tpu.memory_space<vmem>>, vector<8x128xbf16>
    %1 = arith.extf %0 : vector<8x128xbf16> to vector<8x128xf32>
    %c0_1 = arith.constant 0 : index
    %c0_2 = arith.constant 0 : index
    %2 = vector.load %arg5[%c0_1, %c0_2] : memref<1x128xf32, #tpu.memory_space<vmem>>, vector<1x128xf32>
    %3 = vector.broadcast %2 : vector<1x128xf32> to vector<8x128xf32>
    %4 = arith.mulf %1, %3 : vector<8x128xf32>
    %c0_3 = arith.constant 0 : index
    %c0_4 = arith.constant 0 : index
    %5 = vector.load %arg6[%c0_3, %c0_4] : memref<1x128xf32, #tpu.memory_space<vmem>>, vector<1x128xf32>
    %6 = vector.broadcast %5 : vector<1x128xf32> to vector<8x128xf32>
    %7 = arith.addf %4, %6 : vector<8x128xf32>
    %cst = arith.constant 0.000000e+00 : f32
    %8 = vector.broadcast %cst : f32 to vector<8x128xf32>
    %9 = arith.maximumf %7, %8 : vector<8x128xf32>
    %10 = arith.truncf %9 : vector<8x128xf32> to vector<8x128xbf16>
    %c0_5 = arith.constant 0 : index
    %c0_6 = arith.constant 0 : index
    %11 = vector.load %arg4[%c0_5, %c0_6] : memref<128x128xbf16, #tpu.memory_space<vmem>>, vector<128x128xbf16>
    %cst_7 = arith.constant dense<0.000000e+00> : vector<8x128xf32>
    %12 = tpu.matmul %10, %11, %cst_7 {dimension_numbers = #tpu.dot_dimension_numbers<[1], [0], [0], [1], [0, 0, 1, 1], [], []>} : vector<8x128xbf16>, vector<128x128xbf16>, vector<8x128xf32> -> vector<8x128xf32>
    %13 = arith.truncf %12 : vector<8x128xf32> to vector<8x128xbf16>
    %c0_8 = arith.constant 0 : index
    %c0_9 = arith.constant 0 : index
    %14 = vector.load %arg7[%c0_8, %c0_9] : memref<8x128xbf16, #tpu.memory_space<vmem>>, vector<8x128xbf16>
    tpu.vector_store %arg7[%c0_8, %c0_9], %13 {strides = array<i32>} : memref<8x128xbf16, #tpu.memory_space<vmem>>, vector<8x128xbf16>,
    %cst_10 = arith.constant dense<0.000000e+00> : vector<128xf32>
    %15 = vector.multi_reduction <add>, %12, %cst_10 [0] : vector<8x128xf32> to vector<128xf32>
    %16 = vector.shape_cast %15 : vector<128xf32> to vector<1x128xf32>
    %17 = arith.mulf %12, %12 : vector<8x128xf32>
    %cst_11 = arith.constant dense<0.000000e+00> : vector<128xf32>
    %18 = vector.multi_reduction <add>, %17, %cst_11 [0] : vector<8x128xf32> to vector<128xf32>
    %19 = vector.shape_cast %18 : vector<128xf32> to vector<1x128xf32>
    %20 = tpu.concatenate %16, %19 in 0 : vector<1x128xf32>, vector<1x128xf32> -> vector<2x128xf32>
    %21 = vector.shape_cast %20 : vector<2x128xf32> to vector<1x2x128xf32>
    %c0_12 = arith.constant 0 : index
    %c0_13 = arith.constant 0 : index
    %c0_14 = arith.constant 0 : index
    %22 = vector.load %arg8[%c0_12, %c0_13, %c0_14] : memref<1x2x128xf32, #tpu.memory_space<vmem>>, vector<1x2x128xf32>
    tpu.vector_store %arg8[%c0_12, %c0_13, %c0_14], %21 {strides = array<i32>} : memref<1x2x128xf32, #tpu.memory_space<vmem>>, vector<1x2x128xf32>,
    return
  }
  func.func @transform_0(%arg0: i32, %arg1: i32, %arg2: i32) -> (i32, i32) {
    %c0_i32 = arith.constant 0 : i32
    return %arg0, %arg2 : i32, i32
  }
  func.func @transform_1(%arg0: i32, %arg1: i32, %arg2: i32) -> (i32, i32) {
    %c0_i32 = arith.constant 0 : i32
    return %arg2, %arg1 : i32, i32
  }
  func.func @transform_2(%arg0: i32, %arg1: i32, %arg2: i32) -> (i32, i32) {
    %c0_i32 = arith.constant 0 : i32
    %c0_i32_0 = arith.constant 0 : i32
    return %c0_i32, %arg2 : i32, i32
  }
  func.func @transform_3(%arg0: i32, %arg1: i32, %arg2: i32) -> (i32, i32) {
    %c0_i32 = arith.constant 0 : i32
    %c0_i32_0 = arith.constant 0 : i32
    return %c0_i32, %arg2 : i32, i32
  }
  func.func @transform_4(%arg0: i32, %arg1: i32, %arg2: i32) -> (i32, i32) {
    %c0_i32 = arith.constant 0 : i32
    return %arg0, %arg1 : i32, i32
  }
  func.func @transform_5(%arg0: i32, %arg1: i32, %arg2: i32) -> (i32, i32, i32) {
    %c0_i32 = arith.constant 0 : i32
    %c0_i32_0 = arith.constant 0 : i32
    return %arg0, %c0_i32, %arg1 : i32, i32, i32
  }
}

module attributes {stable_mosaic.version = 11 : i64} {
  func.func @_affine_kernel(%arg0: i32, %arg1: i32, %arg2: memref<8x128xbf16, #tpu.memory_space<vmem>>, %arg3: memref<1x128xf32, #tpu.memory_space<vmem>>, %arg4: memref<1x128xf32, #tpu.memory_space<vmem>>, %arg5: memref<8x128xbf16, #tpu.memory_space<vmem>>, %arg6: memref<1x128xf32, #tpu.memory_space<vmem>>, %arg7: memref<1x128xf32, #tpu.memory_space<vmem>>, %arg8: memref<8x128xbf16, #tpu.memory_space<vmem>>) attributes {dimension_semantics = [#tpu.dimension_semantics<parallel>, #tpu.dimension_semantics<parallel>], iteration_bounds = array<i64: 1, 1>, scalar_prefetch = 0 : i64, scratch_operands = 0 : i64, tpu.core_type = #tpu.core_type<tc>, window_params = [{transform_indices = @transform_0, window_bounds = array<i64: 8, 128>}, {transform_indices = @transform_1, window_bounds = array<i64: 1, 128>}, {transform_indices = @transform_2, window_bounds = array<i64: 1, 128>}, {transform_indices = @transform_3, window_bounds = array<i64: 8, 128>}, {transform_indices = @transform_4, window_bounds = array<i64: 1, 128>}, {transform_indices = @transform_5, window_bounds = array<i64: 1, 128>}, {transform_indices = @transform_6, window_bounds = array<i64: 8, 128>}]} {
    %c0 = arith.constant 0 : index
    %c0_0 = arith.constant 0 : index
    %0 = vector.load %arg2[%c0, %c0_0] : memref<8x128xbf16, #tpu.memory_space<vmem>>, vector<8x128xbf16>
    %1 = arith.extf %0 : vector<8x128xbf16> to vector<8x128xf32>
    %c0_1 = arith.constant 0 : index
    %c0_2 = arith.constant 0 : index
    %2 = vector.load %arg3[%c0_1, %c0_2] : memref<1x128xf32, #tpu.memory_space<vmem>>, vector<1x128xf32>
    %3 = vector.broadcast %2 : vector<1x128xf32> to vector<8x128xf32>
    %4 = arith.mulf %1, %3 : vector<8x128xf32>
    %c0_3 = arith.constant 0 : index
    %c0_4 = arith.constant 0 : index
    %5 = vector.load %arg4[%c0_3, %c0_4] : memref<1x128xf32, #tpu.memory_space<vmem>>, vector<1x128xf32>
    %6 = vector.broadcast %5 : vector<1x128xf32> to vector<8x128xf32>
    %7 = arith.addf %4, %6 : vector<8x128xf32>
    %c0_5 = arith.constant 0 : index
    %c0_6 = arith.constant 0 : index
    %8 = vector.load %arg5[%c0_5, %c0_6] : memref<8x128xbf16, #tpu.memory_space<vmem>>, vector<8x128xbf16>
    %9 = arith.extf %8 : vector<8x128xbf16> to vector<8x128xf32>
    %c0_7 = arith.constant 0 : index
    %c0_8 = arith.constant 0 : index
    %10 = vector.load %arg6[%c0_7, %c0_8] : memref<1x128xf32, #tpu.memory_space<vmem>>, vector<1x128xf32>
    %11 = vector.broadcast %10 : vector<1x128xf32> to vector<8x128xf32>
    %12 = arith.mulf %9, %11 : vector<8x128xf32>
    %13 = arith.addf %7, %12 : vector<8x128xf32>
    %c0_9 = arith.constant 0 : index
    %c0_10 = arith.constant 0 : index
    %14 = vector.load %arg7[%c0_9, %c0_10] : memref<1x128xf32, #tpu.memory_space<vmem>>, vector<1x128xf32>
    %15 = vector.broadcast %14 : vector<1x128xf32> to vector<8x128xf32>
    %16 = arith.addf %13, %15 : vector<8x128xf32>
    %cst = arith.constant 0.000000e+00 : f32
    %17 = vector.broadcast %cst : f32 to vector<8x128xf32>
    %18 = arith.maximumf %16, %17 : vector<8x128xf32>
    %19 = arith.truncf %18 : vector<8x128xf32> to vector<8x128xbf16>
    %c0_11 = arith.constant 0 : index
    %c0_12 = arith.constant 0 : index
    %20 = vector.load %arg8[%c0_11, %c0_12] : memref<8x128xbf16, #tpu.memory_space<vmem>>, vector<8x128xbf16>
    tpu.vector_store %arg8[%c0_11, %c0_12], %19 {strides = array<i32>} : memref<8x128xbf16, #tpu.memory_space<vmem>>, vector<8x128xbf16>,
    return
  }
  func.func @transform_0(%arg0: i32, %arg1: i32) -> (i32, i32) {
    %c0_i32 = arith.constant 0 : i32
    return %arg0, %arg1 : i32, i32
  }
  func.func @transform_1(%arg0: i32, %arg1: i32) -> (i32, i32) {
    %c0_i32 = arith.constant 0 : i32
    %c0_i32_0 = arith.constant 0 : i32
    return %c0_i32, %arg1 : i32, i32
  }
  func.func @transform_2(%arg0: i32, %arg1: i32) -> (i32, i32) {
    %c0_i32 = arith.constant 0 : i32
    %c0_i32_0 = arith.constant 0 : i32
    return %c0_i32, %arg1 : i32, i32
  }
  func.func @transform_3(%arg0: i32, %arg1: i32) -> (i32, i32) {
    %c0_i32 = arith.constant 0 : i32
    return %arg0, %arg1 : i32, i32
  }
  func.func @transform_4(%arg0: i32, %arg1: i32) -> (i32, i32) {
    %c0_i32 = arith.constant 0 : i32
    %c0_i32_0 = arith.constant 0 : i32
    return %c0_i32, %arg1 : i32, i32
  }
  func.func @transform_5(%arg0: i32, %arg1: i32) -> (i32, i32) {
    %c0_i32 = arith.constant 0 : i32
    %c0_i32_0 = arith.constant 0 : i32
    return %c0_i32, %arg1 : i32, i32
  }
  func.func @transform_6(%arg0: i32, %arg1: i32) -> (i32, i32) {
    %c0_i32 = arith.constant 0 : i32
    return %arg0, %arg1 : i32, i32
  }
}

module attributes {stable_mosaic.version = 11 : i64} {
  func.func @_gemm_kernel(%arg0: i32, %arg1: i32, %arg2: i32, %arg3: memref<8x128xbf16, #tpu.memory_space<vmem>>, %arg4: memref<128x128xbf16, #tpu.memory_space<vmem>>, %arg5: memref<1x128xf32, #tpu.memory_space<vmem>>, %arg6: memref<8x128xbf16, #tpu.memory_space<vmem>>, %arg7: memref<1x2x128xf32, #tpu.memory_space<vmem>>) attributes {dimension_semantics = [#tpu.dimension_semantics<parallel>, #tpu.dimension_semantics<parallel>, #tpu.dimension_semantics<arbitrary>], iteration_bounds = array<i64: 1, 1, 1>, scalar_prefetch = 0 : i64, scratch_operands = 0 : i64, tpu.core_type = #tpu.core_type<tc>, window_params = [{transform_indices = @transform_0, window_bounds = array<i64: 8, 128>}, {transform_indices = @transform_1, window_bounds = array<i64: 128, 128>}, {transform_indices = @transform_2, window_bounds = array<i64: 1, 128>}, {transform_indices = @transform_3, window_bounds = array<i64: 8, 128>}, {transform_indices = @transform_4, window_bounds = array<i64: 1, 2, 128>}]} {
    %c0 = arith.constant 0 : index
    %c0_0 = arith.constant 0 : index
    %0 = vector.load %arg3[%c0, %c0_0] : memref<8x128xbf16, #tpu.memory_space<vmem>>, vector<8x128xbf16>
    %cst = arith.constant 0.000000e+00 : bf16
    %1 = vector.broadcast %cst : bf16 to vector<8x128xbf16>
    %2 = arith.maximumf %0, %1 : vector<8x128xbf16>
    %c0_1 = arith.constant 0 : index
    %c0_2 = arith.constant 0 : index
    %3 = vector.load %arg4[%c0_1, %c0_2] : memref<128x128xbf16, #tpu.memory_space<vmem>>, vector<128x128xbf16>
    %cst_3 = arith.constant dense<0.000000e+00> : vector<8x128xf32>
    %4 = tpu.matmul %2, %3, %cst_3 {dimension_numbers = #tpu.dot_dimension_numbers<[1], [0], [0], [1], [0, 0, 1, 1], [], []>} : vector<8x128xbf16>, vector<128x128xbf16>, vector<8x128xf32> -> vector<8x128xf32>
    %c0_4 = arith.constant 0 : index
    %c0_5 = arith.constant 0 : index
    %5 = vector.load %arg5[%c0_4, %c0_5] : memref<1x128xf32, #tpu.memory_space<vmem>>, vector<1x128xf32>
    %6 = vector.broadcast %5 : vector<1x128xf32> to vector<8x128xf32>
    %7 = arith.addf %4, %6 : vector<8x128xf32>
    %8 = arith.truncf %7 : vector<8x128xf32> to vector<8x128xbf16>
    %c0_6 = arith.constant 0 : index
    %c0_7 = arith.constant 0 : index
    %9 = vector.load %arg6[%c0_6, %c0_7] : memref<8x128xbf16, #tpu.memory_space<vmem>>, vector<8x128xbf16>
    tpu.vector_store %arg6[%c0_6, %c0_7], %8 {strides = array<i32>} : memref<8x128xbf16, #tpu.memory_space<vmem>>, vector<8x128xbf16>,
    %10 = tpu.iota {dimensions = array<i32: 0>} : vector<8x128xi32>
    %c8_i32 = arith.constant 8 : i32
    %11 = arith.muli %arg0, %c8_i32 : i32
    %12 = vector.broadcast %11 : i32 to vector<8x128xi32>
    %13 = arith.addi %10, %12 : vector<8x128xi32>
    %c2_i32 = arith.constant 2 : i32
    %14 = vector.broadcast %c2_i32 : i32 to vector<8x128xi32>
    %15 = arith.cmpi slt, %13, %14 : vector<8x128xi32>
    %cst_8 = arith.constant 0.000000e+00 : f32
    %16 = vector.broadcast %cst_8 : f32 to vector<8x128xf32>
    %17 = arith.select %15, %7, %16 : vector<8x128xi1>, vector<8x128xf32>
    %cst_9 = arith.constant dense<0.000000e+00> : vector<128xf32>
    %18 = vector.multi_reduction <add>, %17, %cst_9 [0] : vector<8x128xf32> to vector<128xf32>
    %19 = vector.shape_cast %18 : vector<128xf32> to vector<1x128xf32>
    %20 = arith.mulf %17, %17 : vector<8x128xf32>
    %cst_10 = arith.constant dense<0.000000e+00> : vector<128xf32>
    %21 = vector.multi_reduction <add>, %20, %cst_10 [0] : vector<8x128xf32> to vector<128xf32>
    %22 = vector.shape_cast %21 : vector<128xf32> to vector<1x128xf32>
    %23 = tpu.concatenate %19, %22 in 0 : vector<1x128xf32>, vector<1x128xf32> -> vector<2x128xf32>
    %24 = vector.shape_cast %23 : vector<2x128xf32> to vector<1x2x128xf32>
    %c0_11 = arith.constant 0 : index
    %c0_12 = arith.constant 0 : index
    %c0_13 = arith.constant 0 : index
    %25 = vector.load %arg7[%c0_11, %c0_12, %c0_13] : memref<1x2x128xf32, #tpu.memory_space<vmem>>, vector<1x2x128xf32>
    tpu.vector_store %arg7[%c0_11, %c0_12, %c0_13], %24 {strides = array<i32>} : memref<1x2x128xf32, #tpu.memory_space<vmem>>, vector<1x2x128xf32>,
    return
  }
  func.func @transform_0(%arg0: i32, %arg1: i32, %arg2: i32) -> (i32, i32) {
    %c0_i32 = arith.constant 0 : i32
    return %arg0, %arg2 : i32, i32
  }
  func.func @transform_1(%arg0: i32, %arg1: i32, %arg2: i32) -> (i32, i32) {
    %c0_i32 = arith.constant 0 : i32
    return %arg2, %arg1 : i32, i32
  }
  func.func @transform_2(%arg0: i32, %arg1: i32, %arg2: i32) -> (i32, i32) {
    %c0_i32 = arith.constant 0 : i32
    %c0_i32_0 = arith.constant 0 : i32
    return %c0_i32, %arg1 : i32, i32
  }
  func.func @transform_3(%arg0: i32, %arg1: i32, %arg2: i32) -> (i32, i32) {
    %c0_i32 = arith.constant 0 : i32
    return %arg0, %arg1 : i32, i32
  }
  func.func @transform_4(%arg0: i32, %arg1: i32, %arg2: i32) -> (i32, i32, i32) {
    %c0_i32 = arith.constant 0 : i32
    %c0_i32_0 = arith.constant 0 : i32
    return %arg0, %c0_i32, %arg1 : i32, i32, i32
  }
}

module attributes {stable_mosaic.version = 11 : i64} {
  func.func @_gemm_kernel(%arg0: i32, %arg1: i32, %arg2: i32, %arg3: memref<8x128xbf16, #tpu.memory_space<vmem>>, %arg4: memref<128x128xbf16, #tpu.memory_space<vmem>>, %arg5: memref<8x128xbf16, #tpu.memory_space<vmem>>, %arg6: memref<1x2x128xf32, #tpu.memory_space<vmem>>) attributes {dimension_semantics = [#tpu.dimension_semantics<parallel>, #tpu.dimension_semantics<parallel>, #tpu.dimension_semantics<arbitrary>], iteration_bounds = array<i64: 1, 1, 1>, scalar_prefetch = 0 : i64, scratch_operands = 0 : i64, tpu.core_type = #tpu.core_type<tc>, window_params = [{transform_indices = @transform_0, window_bounds = array<i64: 8, 128>}, {transform_indices = @transform_1, window_bounds = array<i64: 128, 128>}, {transform_indices = @transform_2, window_bounds = array<i64: 8, 128>}, {transform_indices = @transform_3, window_bounds = array<i64: 1, 2, 128>}]} {
    %c0 = arith.constant 0 : index
    %c0_0 = arith.constant 0 : index
    %0 = vector.load %arg3[%c0, %c0_0] : memref<8x128xbf16, #tpu.memory_space<vmem>>, vector<8x128xbf16>
    %c0_1 = arith.constant 0 : index
    %c0_2 = arith.constant 0 : index
    %1 = vector.load %arg4[%c0_1, %c0_2] : memref<128x128xbf16, #tpu.memory_space<vmem>>, vector<128x128xbf16>
    %cst = arith.constant dense<0.000000e+00> : vector<8x128xf32>
    %2 = tpu.matmul %0, %1, %cst {dimension_numbers = #tpu.dot_dimension_numbers<[1], [0], [0], [1], [0, 0, 1, 1], [], []>} : vector<8x128xbf16>, vector<128x128xbf16>, vector<8x128xf32> -> vector<8x128xf32>
    %3 = arith.truncf %2 : vector<8x128xf32> to vector<8x128xbf16>
    %c0_3 = arith.constant 0 : index
    %c0_4 = arith.constant 0 : index
    %4 = vector.load %arg5[%c0_3, %c0_4] : memref<8x128xbf16, #tpu.memory_space<vmem>>, vector<8x128xbf16>
    tpu.vector_store %arg5[%c0_3, %c0_4], %3 {strides = array<i32>} : memref<8x128xbf16, #tpu.memory_space<vmem>>, vector<8x128xbf16>,
    %cst_5 = arith.constant dense<0.000000e+00> : vector<128xf32>
    %5 = vector.multi_reduction <add>, %2, %cst_5 [0] : vector<8x128xf32> to vector<128xf32>
    %6 = vector.shape_cast %5 : vector<128xf32> to vector<1x128xf32>
    %7 = arith.mulf %2, %2 : vector<8x128xf32>
    %cst_6 = arith.constant dense<0.000000e+00> : vector<128xf32>
    %8 = vector.multi_reduction <add>, %7, %cst_6 [0] : vector<8x128xf32> to vector<128xf32>
    %9 = vector.shape_cast %8 : vector<128xf32> to vector<1x128xf32>
    %10 = tpu.concatenate %6, %9 in 0 : vector<1x128xf32>, vector<1x128xf32> -> vector<2x128xf32>
    %11 = vector.shape_cast %10 : vector<2x128xf32> to vector<1x2x128xf32>
    %c0_7 = arith.constant 0 : index
    %c0_8 = arith.constant 0 : index
    %c0_9 = arith.constant 0 : index
    %12 = vector.load %arg6[%c0_7, %c0_8, %c0_9] : memref<1x2x128xf32, #tpu.memory_space<vmem>>, vector<1x2x128xf32>
    tpu.vector_store %arg6[%c0_7, %c0_8, %c0_9], %11 {strides = array<i32>} : memref<1x2x128xf32, #tpu.memory_space<vmem>>, vector<1x2x128xf32>,
    return
  }
  func.func @transform_0(%arg0: i32, %arg1: i32, %arg2: i32) -> (i32, i32) {
    %c0_i32 = arith.constant 0 : i32
    return %arg0, %arg2 : i32, i32
  }
  func.func @transform_1(%arg0: i32, %arg1: i32, %arg2: i32) -> (i32, i32) {
    %c0_i32 = arith.constant 0 : i32
    return %arg2, %arg1 : i32, i32
  }
  func.func @transform_2(%arg0: i32, %arg1: i32, %arg2: i32) -> (i32, i32) {
    %c0_i32 = arith.constant 0 : i32
    return %arg0, %arg1 : i32, i32
  }
  func.func @transform_3(%arg0: i32, %arg1: i32, %arg2: i32) -> (i32, i32, i32) {
    %c0_i32 = arith.constant 0 : i32
    %c0_i32_0 = arith.constant 0 : i32
    return %arg0, %c0_i32, %arg1 : i32, i32, i32
  }
}

module attributes {stable_mosaic.version = 11 : i64} {
  func.func @_affine_kernel(%arg0: i32, %arg1: i32, %arg2: memref<8x128xbf16, #tpu.memory_space<vmem>>, %arg3: memref<1x128xf32, #tpu.memory_space<vmem>>, %arg4: memref<1x128xf32, #tpu.memory_space<vmem>>, %arg5: memref<8x128xbf16, #tpu.memory_space<vmem>>) attributes {dimension_semantics = [#tpu.dimension_semantics<parallel>, #tpu.dimension_semantics<parallel>], iteration_bounds = array<i64: 1, 1>, scalar_prefetch = 0 : i64, scratch_operands = 0 : i64, tpu.core_type = #tpu.core_type<tc>, window_params = [{transform_indices = @transform_0, window_bounds = array<i64: 8, 128>}, {transform_indices = @transform_1, window_bounds = array<i64: 1, 128>}, {transform_indices = @transform_2, window_bounds = array<i64: 1, 128>}, {transform_indices = @transform_3, window_bounds = array<i64: 8, 128>}]} {
    %c0 = arith.constant 0 : index
    %c0_0 = arith.constant 0 : index
    %0 = vector.load %arg2[%c0, %c0_0] : memref<8x128xbf16, #tpu.memory_space<vmem>>, vector<8x128xbf16>
    %1 = arith.extf %0 : vector<8x128xbf16> to vector<8x128xf32>
    %c0_1 = arith.constant 0 : index
    %c0_2 = arith.constant 0 : index
    %2 = vector.load %arg3[%c0_1, %c0_2] : memref<1x128xf32, #tpu.memory_space<vmem>>, vector<1x128xf32>
    %3 = vector.broadcast %2 : vector<1x128xf32> to vector<8x128xf32>
    %4 = arith.mulf %1, %3 : vector<8x128xf32>
    %c0_3 = arith.constant 0 : index
    %c0_4 = arith.constant 0 : index
    %5 = vector.load %arg4[%c0_3, %c0_4] : memref<1x128xf32, #tpu.memory_space<vmem>>, vector<1x128xf32>
    %6 = vector.broadcast %5 : vector<1x128xf32> to vector<8x128xf32>
    %7 = arith.addf %4, %6 : vector<8x128xf32>
    %cst = arith.constant 0.000000e+00 : f32
    %8 = vector.broadcast %cst : f32 to vector<8x128xf32>
    %9 = arith.maximumf %7, %8 : vector<8x128xf32>
    %10 = arith.truncf %9 : vector<8x128xf32> to vector<8x128xbf16>
    %c0_5 = arith.constant 0 : index
    %c0_6 = arith.constant 0 : index
    %11 = vector.load %arg5[%c0_5, %c0_6] : memref<8x128xbf16, #tpu.memory_space<vmem>>, vector<8x128xbf16>
    tpu.vector_store %arg5[%c0_5, %c0_6], %10 {strides = array<i32>} : memref<8x128xbf16, #tpu.memory_space<vmem>>, vector<8x128xbf16>,
    return
  }
  func.func @transform_0(%arg0: i32, %arg1: i32) -> (i32, i32) {
    %c0_i32 = arith.constant 0 : i32
    return %arg0, %arg1 : i32, i32
  }
  func.func @transform_1(%arg0: i32, %arg1: i32) -> (i32, i32) {
    %c0_i32 = arith.constant 0 : i32
    %c0_i32_0 = arith.constant 0 : i32
    return %c0_i32, %arg1 : i32, i32
  }
  func.func @transform_2(%arg0: i32, %arg1: i32) -> (i32, i32) {
    %c0_i32 = arith.constant 0 : i32
    %c0_i32_0 = arith.constant 0 : i32
    return %c0_i32, %arg1 : i32, i32
  }
  func.func @transform_3(%arg0: i32, %arg1: i32) -> (i32, i32) {
    %c0_i32 = arith.constant 0 : i32
    return %arg0, %arg1 : i32, i32
  }
}

module attributes {stable_mosaic.version = 11 : i64} {
  func.func @_gemm_kernel(%arg0: i32, %arg1: i32, %arg2: i32, %arg3: memref<8x384xbf16, #tpu.memory_space<vmem>>, %arg4: memref<384x128xbf16, #tpu.memory_space<vmem>>, %arg5: memref<8x128xbf16, #tpu.memory_space<vmem>>, %arg6: memref<1x2x128xf32, #tpu.memory_space<vmem>>, %arg7: memref<8x128xf32, #tpu.memory_space<vmem>>) attributes {dimension_semantics = [#tpu.dimension_semantics<parallel>, #tpu.dimension_semantics<parallel>, #tpu.dimension_semantics<arbitrary>], iteration_bounds = array<i64: 1, 1, 3>, scalar_prefetch = 0 : i64, scratch_operands = 1 : i64, tpu.core_type = #tpu.core_type<tc>, window_params = [{transform_indices = @transform_0, window_bounds = array<i64: 8, 384>}, {transform_indices = @transform_1, window_bounds = array<i64: 384, 128>}, {transform_indices = @transform_2, window_bounds = array<i64: 8, 128>}, {transform_indices = @transform_3, window_bounds = array<i64: 1, 2, 128>}]} {
    %c0 = arith.constant 0 : index
    %c0_0 = arith.constant 0 : index
    %0 = vector.load %arg3[%c0, %c0_0] : memref<8x384xbf16, #tpu.memory_space<vmem>>, vector<8x384xbf16>
    %c0_1 = arith.constant 0 : index
    %c0_2 = arith.constant 0 : index
    %1 = vector.load %arg4[%c0_1, %c0_2] : memref<384x128xbf16, #tpu.memory_space<vmem>>, vector<384x128xbf16>
    %cst = arith.constant dense<0.000000e+00> : vector<8x128xf32>
    %2 = tpu.matmul %0, %1, %cst {dimension_numbers = #tpu.dot_dimension_numbers<[1], [0], [0], [1], [0, 0, 1, 1], [], []>} : vector<8x384xbf16>, vector<384x128xbf16>, vector<8x128xf32> -> vector<8x128xf32>
    %c0_i32 = arith.constant 0 : i32
    %3 = arith.cmpi eq, %arg2, %c0_i32 : i32
    %4 = arith.extui %3 : i1 to i32
    %c0_i32_3 = arith.constant 0 : i32
    %5 = arith.cmpi ne, %4, %c0_i32_3 : i32
    scf.if %5 {
      %cst_9 = arith.constant 0.000000e+00 : f32
      %12 = vector.broadcast %cst_9 : f32 to vector<8x128xf32>
      %c0_10 = arith.constant 0 : index
      %c0_11 = arith.constant 0 : index
      %13 = vector.load %arg7[%c0_10, %c0_11] : memref<8x128xf32, #tpu.memory_space<vmem>>, vector<8x128xf32>
      tpu.vector_store %arg7[%c0_10, %c0_11], %12 {strides = array<i32>} : memref<8x128xf32, #tpu.memory_space<vmem>>, vector<8x128xf32>,
    } else {
    }
    %c0_4 = arith.constant 0 : index
    %c0_5 = arith.constant 0 : index
    %6 = vector.load %arg7[%c0_4, %c0_5] : memref<8x128xf32, #tpu.memory_space<vmem>>, vector<8x128xf32>
    %7 = arith.addf %6, %2 : vector<8x128xf32>
    %c0_6 = arith.constant 0 : index
    %c0_7 = arith.constant 0 : index
    %8 = vector.load %arg7[%c0_6, %c0_7] : memref<8x128xf32, #tpu.memory_space<vmem>>, vector<8x128xf32>
    tpu.vector_store %arg7[%c0_6, %c0_7], %7 {strides = array<i32>} : memref<8x128xf32, #tpu.memory_space<vmem>>, vector<8x128xf32>,
    %c2_i32 = arith.constant 2 : i32
    %9 = arith.cmpi eq, %arg2, %c2_i32 : i32
    %10 = arith.extui %9 : i1 to i32
    %c0_i32_8 = arith.constant 0 : i32
    %11 = arith.cmpi ne, %10, %c0_i32_8 : i32
    scf.if %11 {
      %c0_9 = arith.constant 0 : index
      %c0_10 = arith.constant 0 : index
      %12 = vector.load %arg7[%c0_9, %c0_10] : memref<8x128xf32, #tpu.memory_space<vmem>>, vector<8x128xf32>
      %13 = arith.truncf %12 : vector<8x128xf32> to vector<8x128xbf16>
      %c0_11 = arith.constant 0 : index
      %c0_12 = arith.constant 0 : index
      %14 = vector.load %arg5[%c0_11, %c0_12] : memref<8x128xbf16, #tpu.memory_space<vmem>>, vector<8x128xbf16>
      tpu.vector_store %arg5[%c0_11, %c0_12], %13 {strides = array<i32>} : memref<8x128xbf16, #tpu.memory_space<vmem>>, vector<8x128xbf16>,
      %15 = tpu.iota {dimensions = array<i32: 0>} : vector<8x128xi32>
      %c8_i32 = arith.constant 8 : i32
      %16 = arith.muli %arg0, %c8_i32 : i32
      %17 = vector.broadcast %16 : i32 to vector<8x128xi32>
      %18 = arith.addi %15, %17 : vector<8x128xi32>
      %c2_i32_13 = arith.constant 2 : i32
      %19 = vector.broadcast %c2_i32_13 : i32 to vector<8x128xi32>
      %20 = arith.cmpi slt, %18, %19 : vector<8x128xi32>
      %cst_14 = arith.constant 0.000000e+00 : f32
      %21 = vector.broadcast %cst_14 : f32 to vector<8x128xf32>
      %22 = arith.select %20, %12, %21 : vector<8x128xi1>, vector<8x128xf32>
      %cst_15 = arith.constant dense<0.000000e+00> : vector<128xf32>
      %23 = vector.multi_reduction <add>, %22, %cst_15 [0] : vector<8x128xf32> to vector<128xf32>
      %24 = vector.shape_cast %23 : vector<128xf32> to vector<1x128xf32>
      %25 = arith.mulf %22, %22 : vector<8x128xf32>
      %cst_16 = arith.constant dense<0.000000e+00> : vector<128xf32>
      %26 = vector.multi_reduction <add>, %25, %cst_16 [0] : vector<8x128xf32> to vector<128xf32>
      %27 = vector.shape_cast %26 : vector<128xf32> to vector<1x128xf32>
      %28 = tpu.concatenate %24, %27 in 0 : vector<1x128xf32>, vector<1x128xf32> -> vector<2x128xf32>
      %29 = vector.shape_cast %28 : vector<2x128xf32> to vector<1x2x128xf32>
      %c0_17 = arith.constant 0 : index
      %c0_18 = arith.constant 0 : index
      %c0_19 = arith.constant 0 : index
      %30 = vector.load %arg6[%c0_17, %c0_18, %c0_19] : memref<1x2x128xf32, #tpu.memory_space<vmem>>, vector<1x2x128xf32>
      tpu.vector_store %arg6[%c0_17, %c0_18, %c0_19], %29 {strides = array<i32>} : memref<1x2x128xf32, #tpu.memory_space<vmem>>, vector<1x2x128xf32>,
    } else {
    }
    return
  }
  func.func @transform_0(%arg0: i32, %arg1: i32, %arg2: i32) -> (i32, i32) {
    %c0_i32 = arith.constant 0 : i32
    return %arg0, %arg2 : i32, i32
  }
  func.func @transform_1(%arg0: i32, %arg1: i32, %arg2: i32) -> (i32, i32) {
    %c0_i32 = arith.constant 0 : i32
    return %arg2, %arg1 : i32, i32
  }
  func.func @transform_2(%arg0: i32, %arg1: i32, %arg2: i32) -> (i32, i32) {
    %c0_i32 = arith.constant 0 : i32
    return %arg0, %arg1 : i32, i32
  }
  func.func @transform_3(%arg0: i32, %arg1: i32, %arg2: i32) -> (i32, i32, i32) {
    %c0_i32 = arith.constant 0 : i32
    %c0_i32_0 = arith.constant 0 : i32
    return %arg0, %c0_i32, %arg1 : i32, i32, i32
  }
}

module attributes {stable_mosaic.version = 11 : i64} {
  func.func @_gemm_kernel(%arg0: i32, %arg1: i32, %arg2: i32, %arg3: memref<8x128xbf16, #tpu.memory_space<vmem>>, %arg4: memref<128x256xbf16, #tpu.memory_space<vmem>>, %arg5: memref<1x128xf32, #tpu.memory_space<vmem>>, %arg6: memref<1x128xf32, #tpu.memory_space<vmem>>, %arg7: memref<8x256xbf16, #tpu.memory_space<vmem>>, %arg8: memref<1x2x256xf32, #tpu.memory_space<vmem>>) attributes {dimension_semantics = [#tpu.dimension_semantics<parallel>, #tpu.dimension_semantics<parallel>, #tpu.dimension_semantics<arbitrary>], iteration_bounds = array<i64: 1, 1, 1>, scalar_prefetch = 0 : i64, scratch_operands = 0 : i64, tpu.core_type = #tpu.core_type<tc>, window_params = [{transform_indices = @transform_0, window_bounds = array<i64: 8, 128>}, {transform_indices = @transform_1, window_bounds = array<i64: 128, 256>}, {transform_indices = @transform_2, window_bounds = array<i64: 1, 128>}, {transform_indices = @transform_3, window_bounds = array<i64: 1, 128>}, {transform_indices = @transform_4, window_bounds = array<i64: 8, 256>}, {transform_indices = @transform_5, window_bounds = array<i64: 1, 2, 256>}]} {
    %c0 = arith.constant 0 : index
    %c0_0 = arith.constant 0 : index
    %0 = vector.load %arg3[%c0, %c0_0] : memref<8x128xbf16, #tpu.memory_space<vmem>>, vector<8x128xbf16>
    %1 = arith.extf %0 : vector<8x128xbf16> to vector<8x128xf32>
    %c0_1 = arith.constant 0 : index
    %c0_2 = arith.constant 0 : index
    %2 = vector.load %arg5[%c0_1, %c0_2] : memref<1x128xf32, #tpu.memory_space<vmem>>, vector<1x128xf32>
    %3 = vector.broadcast %2 : vector<1x128xf32> to vector<8x128xf32>
    %4 = arith.mulf %1, %3 : vector<8x128xf32>
    %c0_3 = arith.constant 0 : index
    %c0_4 = arith.constant 0 : index
    %5 = vector.load %arg6[%c0_3, %c0_4] : memref<1x128xf32, #tpu.memory_space<vmem>>, vector<1x128xf32>
    %6 = vector.broadcast %5 : vector<1x128xf32> to vector<8x128xf32>
    %7 = arith.addf %4, %6 : vector<8x128xf32>
    %cst = arith.constant 0.000000e+00 : f32
    %8 = vector.broadcast %cst : f32 to vector<8x128xf32>
    %9 = arith.maximumf %7, %8 : vector<8x128xf32>
    %10 = arith.truncf %9 : vector<8x128xf32> to vector<8x128xbf16>
    %c0_5 = arith.constant 0 : index
    %c0_6 = arith.constant 0 : index
    %11 = vector.load %arg4[%c0_5, %c0_6] : memref<128x256xbf16, #tpu.memory_space<vmem>>, vector<128x256xbf16>
    %cst_7 = arith.constant dense<0.000000e+00> : vector<8x256xf32>
    %12 = tpu.matmul %10, %11, %cst_7 {dimension_numbers = #tpu.dot_dimension_numbers<[1], [0], [0], [1], [0, 0, 1, 1], [], []>} : vector<8x128xbf16>, vector<128x256xbf16>, vector<8x256xf32> -> vector<8x256xf32>
    %13 = arith.truncf %12 : vector<8x256xf32> to vector<8x256xbf16>
    %c0_8 = arith.constant 0 : index
    %c0_9 = arith.constant 0 : index
    %14 = vector.load %arg7[%c0_8, %c0_9] : memref<8x256xbf16, #tpu.memory_space<vmem>>, vector<8x256xbf16>
    tpu.vector_store %arg7[%c0_8, %c0_9], %13 {strides = array<i32>} : memref<8x256xbf16, #tpu.memory_space<vmem>>, vector<8x256xbf16>,
    %15 = tpu.iota {dimensions = array<i32: 0>} : vector<8x256xi32>
    %c8_i32 = arith.constant 8 : i32
    %16 = arith.muli %arg0, %c8_i32 : i32
    %17 = vector.broadcast %16 : i32 to vector<8x256xi32>
    %18 = arith.addi %15, %17 : vector<8x256xi32>
    %c2_i32 = arith.constant 2 : i32
    %19 = vector.broadcast %c2_i32 : i32 to vector<8x256xi32>
    %20 = arith.cmpi slt, %18, %19 : vector<8x256xi32>
    %cst_10 = arith.constant 0.000000e+00 : f32
    %21 = vector.broadcast %cst_10 : f32 to vector<8x256xf32>
    %22 = arith.select %20, %12, %21 : vector<8x256xi1>, vector<8x256xf32>
    %cst_11 = arith.constant dense<0.000000e+00> : vector<256xf32>
    %23 = vector.multi_reduction <add>, %22, %cst_11 [0] : vector<8x256xf32> to vector<256xf32>
    %24 = vector.shape_cast %23 : vector<256xf32> to vector<1x256xf32>
    %25 = arith.mulf %22, %22 : vector<8x256xf32>
    %cst_12 = arith.constant dense<0.000000e+00> : vector<256xf32>
    %26 = vector.multi_reduction <add>, %25, %cst_12 [0] : vector<8x256xf32> to vector<256xf32>
    %27 = vector.shape_cast %26 : vector<256xf32> to vector<1x256xf32>
    %28 = tpu.concatenate %24, %27 in 0 : vector<1x256xf32>, vector<1x256xf32> -> vector<2x256xf32>
    %29 = vector.shape_cast %28 : vector<2x256xf32> to vector<1x2x256xf32>
    %c0_13 = arith.constant 0 : index
    %c0_14 = arith.constant 0 : index
    %c0_15 = arith.constant 0 : index
    %30 = vector.load %arg8[%c0_13, %c0_14, %c0_15] : memref<1x2x256xf32, #tpu.memory_space<vmem>>, vector<1x2x256xf32>
    tpu.vector_store %arg8[%c0_13, %c0_14, %c0_15], %29 {strides = array<i32>} : memref<1x2x256xf32, #tpu.memory_space<vmem>>, vector<1x2x256xf32>,
    return
  }
  func.func @transform_0(%arg0: i32, %arg1: i32, %arg2: i32) -> (i32, i32) {
    %c0_i32 = arith.constant 0 : i32
    return %arg0, %arg2 : i32, i32
  }
  func.func @transform_1(%arg0: i32, %arg1: i32, %arg2: i32) -> (i32, i32) {
    %c0_i32 = arith.constant 0 : i32
    return %arg2, %arg1 : i32, i32
  }
  func.func @transform_2(%arg0: i32, %arg1: i32, %arg2: i32) -> (i32, i32) {
    %c0_i32 = arith.constant 0 : i32
    %c0_i32_0 = arith.constant 0 : i32
    return %c0_i32, %arg2 : i32, i32
  }
  func.func @transform_3(%arg0: i32, %arg1: i32, %arg2: i32) -> (i32, i32) {
    %c0_i32 = arith.constant 0 : i32
    %c0_i32_0 = arith.constant 0 : i32
    return %c0_i32, %arg2 : i32, i32
  }
  func.func @transform_4(%arg0: i32, %arg1: i32, %arg2: i32) -> (i32, i32) {
    %c0_i32 = arith.constant 0 : i32
    return %arg0, %arg1 : i32, i32
  }
  func.func @transform_5(%arg0: i32, %arg1: i32, %arg2: i32) -> (i32, i32, i32) {
    %c0_i32 = arith.constant 0 : i32
    %c0_i32_0 = arith.constant 0 : i32
    return %arg0, %c0_i32, %arg1 : i32, i32, i32
  }
}

module attributes {stable_mosaic.version = 11 : i64} {
  func.func @_affine_kernel(%arg0: i32, %arg1: i32, %arg2: memref<8x256xbf16, #tpu.memory_space<vmem>>, %arg3: memref<1x256xf32, #tpu.memory_space<vmem>>, %arg4: memref<1x256xf32, #tpu.memory_space<vmem>>, %arg5: memref<8x256xbf16, #tpu.memory_space<vmem>>, %arg6: memref<1x256xf32, #tpu.memory_space<vmem>>, %arg7: memref<1x256xf32, #tpu.memory_space<vmem>>, %arg8: memref<8x256xbf16, #tpu.memory_space<vmem>>) attributes {dimension_semantics = [#tpu.dimension_semantics<parallel>, #tpu.dimension_semantics<parallel>], iteration_bounds = array<i64: 1, 1>, scalar_prefetch = 0 : i64, scratch_operands = 0 : i64, tpu.core_type = #tpu.core_type<tc>, window_params = [{transform_indices = @transform_0, window_bounds = array<i64: 8, 256>}, {transform_indices = @transform_1, window_bounds = array<i64: 1, 256>}, {transform_indices = @transform_2, window_bounds = array<i64: 1, 256>}, {transform_indices = @transform_3, window_bounds = array<i64: 8, 256>}, {transform_indices = @transform_4, window_bounds = array<i64: 1, 256>}, {transform_indices = @transform_5, window_bounds = array<i64: 1, 256>}, {transform_indices = @transform_6, window_bounds = array<i64: 8, 256>}]} {
    %c0 = arith.constant 0 : index
    %c0_0 = arith.constant 0 : index
    %0 = vector.load %arg2[%c0, %c0_0] : memref<8x256xbf16, #tpu.memory_space<vmem>>, vector<8x256xbf16>
    %1 = arith.extf %0 : vector<8x256xbf16> to vector<8x256xf32>
    %c0_1 = arith.constant 0 : index
    %c0_2 = arith.constant 0 : index
    %2 = vector.load %arg3[%c0_1, %c0_2] : memref<1x256xf32, #tpu.memory_space<vmem>>, vector<1x256xf32>
    %3 = vector.broadcast %2 : vector<1x256xf32> to vector<8x256xf32>
    %4 = arith.mulf %1, %3 : vector<8x256xf32>
    %c0_3 = arith.constant 0 : index
    %c0_4 = arith.constant 0 : index
    %5 = vector.load %arg4[%c0_3, %c0_4] : memref<1x256xf32, #tpu.memory_space<vmem>>, vector<1x256xf32>
    %6 = vector.broadcast %5 : vector<1x256xf32> to vector<8x256xf32>
    %7 = arith.addf %4, %6 : vector<8x256xf32>
    %c0_5 = arith.constant 0 : index
    %c0_6 = arith.constant 0 : index
    %8 = vector.load %arg5[%c0_5, %c0_6] : memref<8x256xbf16, #tpu.memory_space<vmem>>, vector<8x256xbf16>
    %9 = arith.extf %8 : vector<8x256xbf16> to vector<8x256xf32>
    %c0_7 = arith.constant 0 : index
    %c0_8 = arith.constant 0 : index
    %10 = vector.load %arg6[%c0_7, %c0_8] : memref<1x256xf32, #tpu.memory_space<vmem>>, vector<1x256xf32>
    %11 = vector.broadcast %10 : vector<1x256xf32> to vector<8x256xf32>
    %12 = arith.mulf %9, %11 : vector<8x256xf32>
    %13 = arith.addf %7, %12 : vector<8x256xf32>
    %c0_9 = arith.constant 0 : index
    %c0_10 = arith.constant 0 : index
    %14 = vector.load %arg7[%c0_9, %c0_10] : memref<1x256xf32, #tpu.memory_space<vmem>>, vector<1x256xf32>
    %15 = vector.broadcast %14 : vector<1x256xf32> to vector<8x256xf32>
    %16 = arith.addf %13, %15 : vector<8x256xf32>
    %cst = arith.constant 0.000000e+00 : f32
    %17 = vector.broadcast %cst : f32 to vector<8x256xf32>
    %18 = arith.maximumf %16, %17 : vector<8x256xf32>
    %19 = arith.truncf %18 : vector<8x256xf32> to vector<8x256xbf16>
    %c0_11 = arith.constant 0 : index
    %c0_12 = arith.constant 0 : index
    %20 = vector.load %arg8[%c0_11, %c0_12] : memref<8x256xbf16, #tpu.memory_space<vmem>>, vector<8x256xbf16>
    tpu.vector_store %arg8[%c0_11, %c0_12], %19 {strides = array<i32>} : memref<8x256xbf16, #tpu.memory_space<vmem>>, vector<8x256xbf16>,
    return
  }
  func.func @transform_0(%arg0: i32, %arg1: i32) -> (i32, i32) {
    %c0_i32 = arith.constant 0 : i32
    return %arg0, %arg1 : i32, i32
  }
  func.func @transform_1(%arg0: i32, %arg1: i32) -> (i32, i32) {
    %c0_i32 = arith.constant 0 : i32
    %c0_i32_0 = arith.constant 0 : i32
    return %c0_i32, %arg1 : i32, i32
  }
  func.func @transform_2(%arg0: i32, %arg1: i32) -> (i32, i32) {
    %c0_i32 = arith.constant 0 : i32
    %c0_i32_0 = arith.constant 0 : i32
    return %c0_i32, %arg1 : i32, i32
  }
  func.func @transform_3(%arg0: i32, %arg1: i32) -> (i32, i32) {
    %c0_i32 = arith.constant 0 : i32
    return %arg0, %arg1 : i32, i32
  }
  func.func @transform_4(%arg0: i32, %arg1: i32) -> (i32, i32) {
    %c0_i32 = arith.constant 0 : i32
    %c0_i32_0 = arith.constant 0 : i32
    return %c0_i32, %arg1 : i32, i32
  }
  func.func @transform_5(%arg0: i32, %arg1: i32) -> (i32, i32) {
    %c0_i32 = arith.constant 0 : i32
    %c0_i32_0 = arith.constant 0 : i32
    return %c0_i32, %arg1 : i32, i32
  }
  func.func @transform_6(%arg0: i32, %arg1: i32) -> (i32, i32) {
    %c0_i32 = arith.constant 0 : i32
    return %arg0, %arg1 : i32, i32
  }
}

module attributes {stable_mosaic.version = 11 : i64} {
  func.func @_global_avgpool_kernel(%arg0: memref<2x1x256xbf16, #tpu.memory_space<vmem>>, %arg1: memref<2x256xf32, #tpu.memory_space<vmem>>) attributes {dimension_semantics = [], scalar_prefetch = 0 : i64, scratch_operands = 0 : i64, tpu.core_type = #tpu.core_type<tc>} {
    %c0 = arith.constant 0 : index
    %c0_0 = arith.constant 0 : index
    %c0_1 = arith.constant 0 : index
    %0 = vector.load %arg0[%c0, %c0_0, %c0_1] : memref<2x1x256xbf16, #tpu.memory_space<vmem>>, vector<2x1x256xbf16>
    %1 = arith.extf %0 : vector<2x1x256xbf16> to vector<2x1x256xf32>
    %cst = arith.constant dense<0.000000e+00> : vector<2x256xf32>
    %2 = vector.multi_reduction <add>, %1, %cst [1] : vector<2x1x256xf32> to vector<2x256xf32>
    %cst_2 = arith.constant 1.000000e+00 : f32
    %3 = vector.broadcast %cst_2 : f32 to vector<2x256xf32>
    %4 = arith.divf %2, %3 : vector<2x256xf32>
    %c0_3 = arith.constant 0 : index
    %c0_4 = arith.constant 0 : index
    %5 = vector.load %arg1[%c0_3, %c0_4] : memref<2x256xf32, #tpu.memory_space<vmem>>, vector<2x256xf32>
    tpu.vector_store %arg1[%c0_3, %c0_4], %4 {strides = array<i32>} : memref<2x256xf32, #tpu.memory_space<vmem>>, vector<2x256xf32>,
    return
  }
}

module attributes {stable_mosaic.version = 11 : i64} {
  func.func @_gemm_kernel(%arg0: i32, %arg1: i32, %arg2: i32, %arg3: memref<8x256xbf16, #tpu.memory_space<vmem>>, %arg4: memref<256x128xbf16, #tpu.memory_space<vmem>>, %arg5: memref<1x128xf32, #tpu.memory_space<vmem>>, %arg6: memref<8x128xf32, #tpu.memory_space<vmem>>) attributes {dimension_semantics = [#tpu.dimension_semantics<parallel>, #tpu.dimension_semantics<parallel>, #tpu.dimension_semantics<arbitrary>], iteration_bounds = array<i64: 1, 1, 1>, scalar_prefetch = 0 : i64, scratch_operands = 0 : i64, tpu.core_type = #tpu.core_type<tc>, window_params = [{transform_indices = @transform_0, window_bounds = array<i64: 8, 256>}, {transform_indices = @transform_1, window_bounds = array<i64: 256, 128>}, {transform_indices = @transform_2, window_bounds = array<i64: 1, 128>}, {transform_indices = @transform_3, window_bounds = array<i64: 8, 128>}]} {
    %c0 = arith.constant 0 : index
    %c0_0 = arith.constant 0 : index
    %0 = vector.load %arg3[%c0, %c0_0] : memref<8x256xbf16, #tpu.memory_space<vmem>>, vector<8x256xbf16>
    %c0_1 = arith.constant 0 : index
    %c0_2 = arith.constant 0 : index
    %1 = vector.load %arg4[%c0_1, %c0_2] : memref<256x128xbf16, #tpu.memory_space<vmem>>, vector<256x128xbf16>
    %cst = arith.constant dense<0.000000e+00> : vector<8x128xf32>
    %2 = tpu.matmul %0, %1, %cst {dimension_numbers = #tpu.dot_dimension_numbers<[1], [0], [0], [1], [0, 0, 1, 1], [], []>} : vector<8x256xbf16>, vector<256x128xbf16>, vector<8x128xf32> -> vector<8x128xf32>
    %c0_3 = arith.constant 0 : index
    %c0_4 = arith.constant 0 : index
    %3 = vector.load %arg5[%c0_3, %c0_4] : memref<1x128xf32, #tpu.memory_space<vmem>>, vector<1x128xf32>
    %4 = vector.broadcast %3 : vector<1x128xf32> to vector<8x128xf32>
    %5 = arith.addf %2, %4 : vector<8x128xf32>
    %c0_5 = arith.constant 0 : index
    %c0_6 = arith.constant 0 : index
    %6 = vector.load %arg6[%c0_5, %c0_6] : memref<8x128xf32, #tpu.memory_space<vmem>>, vector<8x128xf32>
    tpu.vector_store %arg6[%c0_5, %c0_6], %5 {strides = array<i32>} : memref<8x128xf32, #tpu.memory_space<vmem>>, vector<8x128xf32>,
    return
  }
  func.func @transform_0(%arg0: i32, %arg1: i32, %arg2: i32) -> (i32, i32) {
    %c0_i32 = arith.constant 0 : i32
    return %arg0, %arg2 : i32, i32
  }
  func.func @transform_1(%arg0: i32, %arg1: i32, %arg2: i32) -> (i32, i32) {
    %c0_i32 = arith.constant 0 : i32
    return %arg2, %arg1 : i32, i32
  }
  func.func @transform_2(%arg0: i32, %arg1: i32, %arg2: i32) -> (i32, i32) {
    %c0_i32 = arith.constant 0 : i32
    %c0_i32_0 = arith.constant 0 : i32
    return %c0_i32, %arg1 : i32, i32
  }
  func.func @transform_3(%arg0: i32, %arg1: i32, %arg2: i32) -> (i32, i32) {
    %c0_i32 = arith.constant 0 : i32
    return %arg0, %arg1 : i32, i32
  }
}

</mosaic_0001>

<llo_original>
// kernel: _lambda_.34
$region0: #{_lambda_.34}
  #allocation0 [shape = 'u32[]', space=smem, size = 0x4, offset = 0x4, fixed_abs, tag = 'smem constant byte address 0x4 - core index']
  #allocation1 [shape = 'u32[144,128]{1,0:T(1,128)}', space=vmem, size = 0x12000, scoped, tag = 'internal scratch']
  %s0 = inlined_call_operand.vmem [shape: bf16[512,128], index: 0, kind: input, shape index: {}]
  %s1 = inlined_call_operand.vmem [shape: f32[1,128], index: 1, kind: input, shape index: {}]
  %s2 = inlined_call_operand.vmem [shape: f32[1,128], index: 2, kind: input, shape index: {}]
  %s3 = inlined_call_operand.vmem [shape: bf16[512,128], index: 3, kind: output, shape index: {}]
  %s4 = sld [smem:[#allocation0]]
  $region45: #{_lambda_.34} parent=0
    _
  %s6 = ssub.s32 1, %s4
  %s7 = scalar_select 0, %s6, %s4
  loop: start=0, step=1, limit=4
  $region2: #{_lambda_.34} parent=0 // loop_pre_header
    _
  $region3: #{_lambda_.34} parent=0 // loop_header
    %s9 = sphi 0, %s13
    %p10 = scmp.ge.s32.totalorder %s9, 4
    %s16 = sphi 0, %s28
    %s17 = sphi 0, %s24
    %s18 = sphi 0, %s16
    %s19 = sphi 0, %s17
    %s20 = sphi 0, %s18
    %s21 = sphi 0, %s19
    %s33 = sphi 0, %s35
    %s36 = sphi 0, %s33
    %s37 = sphi 0, %s36
    %s53 = sphi 0, %s37
    %s59 = sphi 0, %s61
    %s62 = sphi 0, %s59
    %s63 = sphi 0, %s62
    %s79 = sphi 0, %s63
    %s85 = sphi 0, %s87
    %s88 = sphi 0, %s85
    %s89 = sphi 0, %s88
    %s105 = sphi 0, %s89
    %s113 = sphi 0, %s115
    %s116 = sphi 0, %s113
    %s117 = sphi 0, %s116
    %s133 = sphi 0, %s117
  $region4: #{_lambda_.34} parent=0 // loop_header_branch
    %12 = sbr.rel (%p10) target = $region8
  $region5: #{_lambda_.34} parent=0 // loop_body
    %s14 = ssub.s32 %s9, 1
    %s15 = ssub.s32 %s9, 2
    %s22 = sadd.s32 1, %s17
    %p23 = scmp.ge.s32.totalorder %s22, 1
    %s24 = scalar_select %p23, 0, %s22
    %s25 = sadd.s32 1, %s16
    %s26 = scalar_select %p23, %s25, %s16
    %p27 = scmp.ge.s32.totalorder %s26, 2
    %s28 = scalar_select %p27, 0, %s26
    %s29 = ssub.s32 %s16, %s28
    %s30 = ssub.s32 %s17, %s24
    %s31 = sor.u32 %s29, %s30
    %p32 = scmp.eq.s32.totalorder %s31, 0
    %s34 = sadd.s32 %s33, 1
    %s35 = scalar_select %p32, %s33, %s34
    %p38 = pneg %p32
    %p39 = scmp.eq.s32.totalorder %s9, 1
    %p40 = por %p38, %p39
    %p41 = scmp.ne.s32.totalorder %s33, %s36
    %p42 = scmp.eq.s32.totalorder %s9, 0
    %p43 = por %p41, %p42
    %p44 = scmp.ne.s32.totalorder %s33, %s36
    %p45 = scmp.eq.s32.totalorder %s14, 1
    %p46 = por %p44, %p45
    %p47 = scmp.ne.s32.totalorder %s36, %s37
    %p48 = scmp.eq.s32.totalorder %s14, 0
    %p49 = por %p47, %p48
    %p50 = scmp.ne.s32.totalorder %s36, %s37
    %p51 = scmp.eq.s32.totalorder %s15, 1
    %p52 = por %p50, %p51
    %p54 = scmp.ne.s32.totalorder %s37, %s53
    %p55 = scmp.eq.s32.totalorder %s15, 0
    %p56 = por %p54, %p55
    %s57 = ssub.s32 %s17, %s24
    %p58 = scmp.eq.s32.totalorder %s57, 0
    %s60 = sadd.s32 %s59, 1
    %s61 = scalar_select %p58, %s59, %s60
    %p64 = pneg %p58
    %p65 = scmp.eq.s32.totalorder %s9, 1
    %p66 = por %p64, %p65
    %p67 = scmp.ne.s32.totalorder %s59, %s62
    %p68 = scmp.eq.s32.totalorder %s9, 0
    %p69 = por %p67, %p68
    %p70 = scmp.ne.s32.totalorder %s59, %s62
    %p71 = scmp.eq.s32.totalorder %s14, 1
    %p72 = por %p70, %p71
    %p73 = scmp.ne.s32.totalorder %s62, %s63
    %p74 = scmp.eq.s32.totalorder %s14, 0
    %p75 = por %p73, %p74
    %p76 = scmp.ne.s32.totalorder %s62, %s63
    %p77 = scmp.eq.s32.totalorder %s15, 1
    %p78 = por %p76, %p77
    %p80 = scmp.ne.s32.totalorder %s63, %s79
    %p81 = scmp.eq.s32.totalorder %s15, 0
    %p82 = por %p80, %p81
    %s83 = ssub.s32 %s17, %s24
    %p84 = scmp.eq.s32.totalorder %s83, 0
    %s86 = sadd.s32 %s85, 1
    %s87 = scalar_select %p84, %s85, %s86
    %p90 = pneg %p84
    %p91 = scmp.eq.s32.totalorder %s9, 1
    %p92 = por %p90, %p91
    %p93 = scmp.ne.s32.totalorder %s85, %s88
    %p94 = scmp.eq.s32.totalorder %s9, 0
    %p95 = por %p93, %p94
    %p96 = scmp.ne.s32.totalorder %s85, %s88
    %p97 = scmp.eq.s32.totalorder %s14, 1
    %p98 = por %p96, %p97
    %p99 = scmp.ne.s32.totalorder %s88, %s89
    %p100 = scmp.eq.s32.totalorder %s14, 0
    %p101 = por %p99, %p100
    %p102 = scmp.ne.s32.totalorder %s88, %s89
    %p103 = scmp.eq.s32.totalorder %s15, 1
    %p104 = por %p102, %p103
    %p106 = scmp.ne.s32.totalorder %s89, %s105
    %p107 = scmp.eq.s32.totalorder %s15, 0
    %p108 = por %p106, %p107
    %s109 = ssub.s32 %s16, %s28
    %s110 = ssub.s32 %s17, %s24
    %s111 = sor.u32 %s109, %s110
    %p112 = scmp.eq.s32.totalorder %s111, 0
    %s114 = sadd.s32 %s113, 1
    %s115 = scalar_select %p112, %s113, %s114
    %p118 = pneg %p112
    %p119 = scmp.eq.s32.totalorder %s9, 1
    %p120 = por %p118, %p119
    %p121 = scmp.ne.s32.totalorder %s113, %s116
    %p122 = scmp.eq.s32.totalorder %s9, 0
    %p123 = por %p121, %p122
    %p124 = scmp.ne.s32.totalorder %s113, %s116
    %p125 = scmp.eq.s32.totalorder %s14, 1
    %p126 = por %p124, %p125
    %p127 = scmp.ne.s32.totalorder %s116, %s117
    %p128 = scmp.eq.s32.totalorder %s14, 0
    %p129 = por %p127, %p128
    %p130 = scmp.ne.s32.totalorder %s116, %s117
    %p131 = scmp.eq.s32.totalorder %s15, 1
    %p132 = por %p130, %p131
    %p134 = scmp.ne.s32.totalorder %s117, %s133
    %p135 = scmp.eq.s32.totalorder %s15, 0
    %p136 = por %p134, %p135
    %p137 = scmp.le.s32.totalorder 1, %s9
    %p138 = scmp.lt.s32.totalorder %s9, 3
    %p139 = pnand %p137, %p138
    %p140 = pneg %p139
    // Predicated region
    $region9: #{_lambda_.34} parent=5 // pred_check
      _
    $region10: #{_lambda_.34} parent=5 // pred_check_branch
      %142 = sbr.rel (%p139) target = $region12
    $region11: #{_lambda_.34} parent=5 // pred_region
      %s143 = ssub.s32 %s9, 1
      // Predicated region
      $region13: #{_lambda_.34} parent=11 // pred_check
        %p144 = pneg %p75
      $region14: #{_lambda_.34} parent=11 // pred_check_branch
        %146 = sbr.rel (%p144) target = $region16
      $region15: #{_lambda_.34} parent=11 // pred_region
        %p147 = scmp.lt.s32.totalorder %s19, 0
        %s148 = scalar_select %p147, %s19, 0
        %s149 = scalar_lea.vmem %s1, %s148
      $region16: #{_lambda_.34} parent=11 // pred_fallthru
        _
      // Predicated region
      $region17: #{_lambda_.34} parent=11 // pred_check
        %p150 = pneg %p101
      $region18: #{_lambda_.34} parent=11 // pred_check_branch
        %152 = sbr.rel (%p150) target = $region20
      $region19: #{_lambda_.34} parent=11 // pred_region
        %p153 = scmp.lt.s32.totalorder %s19, 0
        %s154 = scalar_select %p153, %s19, 0
        %s155 = scalar_lea.vmem %s2, %s154
      $region20: #{_lambda_.34} parent=11 // pred_fallthru
        _
    $region12: #{_lambda_.34} parent=5 // pred_fallthru
      _
    %p156 = scmp.lt.s32.totalorder %s9, 2
    // Predicated region
    $region21: #{_lambda_.34} parent=5 // pred_check
      %p157 = pneg %p156
    $region22: #{_lambda_.34} parent=5 // pred_check_branch
      %159 = sbr.rel (%p157) target = $region24
    $region23: #{_lambda_.34} parent=5 // pred_region
      // Predicated region
      $region25: #{_lambda_.34} parent=23 // pred_check
        %p160 = pneg %p43
      $region26: #{_lambda_.34} parent=23 // pred_check_branch
        %162 = sbr.rel (%p160) target = $region28
      $region27: #{_lambda_.34} parent=23 // pred_region
        %s163 = smul.u32 32, %s16
        %p164 = scmp.lt.s32.totalorder %s163, 63
        %s165 = scalar_select %p164, %s163, 63
        %p166 = scmp.lt.s32.totalorder %s17, 0
        %s167 = scalar_select %p166, %s17, 0
        %s168 = sadd.s32 %s167, %s165
        %s169 = smul.addr %s168, 4
        %s170 = scalar_lea.vmem %s0, %s169
        %s171 = smul.u32 32, %s16
      $region28: #{_lambda_.34} parent=23 // pred_fallthru
        _
    $region24: #{_lambda_.34} parent=5 // pred_fallthru
      _
    %p172 = scmp.le.s32.totalorder 1, %s9
    %p173 = scmp.lt.s32.totalorder %s9, 3
    %p174 = pnand %p172, %p173
    %p175 = pneg %p174
    // Predicated region
    $region29: #{_lambda_.34} parent=5 // pred_check
      _
    $region30: #{_lambda_.34} parent=5 // pred_check_branch
      %177 = sbr.rel (%p174) target = $region32
    $region31: #{_lambda_.34} parent=5 // pred_region
      %s178 = ssub.s32 %s9, 1
      %s179 = smul.u32 32, %s18
      %p180 = scmp.lt.s32.totalorder %s179, 63
      %s181 = scalar_select %p180, %s179, 63
      %p182 = scmp.lt.s32.totalorder %s19, 0
      %s183 = scalar_select %p182, %s19, 0
      %s184 = sadd.s32 %s183, %s181
      %s185 = smul.addr %s184, 4
      %s186 = scalar_lea.vmem %s0, %s185
      %p187 = pneg %p49
      %p188 = pneg %p46
      %p189 = scmp.lt.s32.totalorder %s19, 0
      %s190 = scalar_select %p189, %s19, 0
      %s191 = scalar_lea.vmem %s1, %s190
      %p192 = pneg %p75
      %p193 = pneg %p72
      %p194 = scmp.lt.s32.totalorder %s19, 0
      %s195 = scalar_select %p194, %s19, 0
      %s196 = scalar_lea.vmem %s2, %s195
      %p197 = pneg %p101
      %p198 = pneg %p98
      %p199 = pneg %p129
      %p200 = pneg %p126
      %s201 = smul.u32 32, %s18
      %p202 = scmp.lt.s32.totalorder %s201, 63
      %s203 = scalar_select %p202, %s201, 63
      %p204 = scmp.lt.s32.totalorder %s19, 0
      %s205 = scalar_select %p204, %s19, 0
      %s206 = sadd.s32 %s205, %s203
      %s207 = smul.addr %s206, 4
      %s208 = scalar_lea.vmem %s3, %s207
      %s209 = smul.u32 32, %s18
      %p210 = scmp.lt.s32.totalorder %s209, 63
      %s211 = scalar_select %p210, %s209, 63
      %p212 = scmp.lt.s32.totalorder %s19, 0
      %s213 = scalar_select %p212, %s19, 0
      %s214 = sadd.s32 %s213, %s211
      %s215 = smul.addr %s214, 4
      %s216 = scalar_lea.vmem %s0, %s215
      %s217 = smul.u32 32, %s18
      %p218 = scmp.lt.s32.totalorder %s19, 0
      %s219 = scalar_select %p218, %s19, 0
      %s220 = scalar_lea.vmem %s1, %s219
      %p221 = scmp.lt.s32.totalorder %s19, 0
      %s222 = scalar_select %p221, %s19, 0
      %s223 = scalar_lea.vmem %s2, %s222
      %s224 = smul.u32 32, %s18
      %p225 = scmp.lt.s32.totalorder %s224, 63
      %s226 = scalar_select %p225, %s224, 63
      %p227 = scmp.lt.s32.totalorder %s19, 0
      %s228 = scalar_select %p227, %s19, 0
      %s229 = sadd.s32 %s228, %s226
      %s230 = smul.addr %s229, 4
      %s231 = scalar_lea.vmem %s3, %s230
      %s232 = smul.u32 32, %s18
      %v233 = vld [vmem:[%s216] sm:$0xf]
      %v234 = vld [vmem:[%s216 + $0x4] sm:$0xf]
      %v235 = vld [vmem:[%s216 + $0x8] sm:$0xf]
      %v236 = vld [vmem:[%s216 + $0xc] sm:$0xf]
      %v237 = vld [vmem:[%s216 + $0x10] sm:$0xf]
      %v238 = vld [vmem:[%s216 + $0x14] sm:$0xf]
      %v239 = vld [vmem:[%s216 + $0x18] sm:$0xf]
      %v240 = vld [vmem:[%s216 + $0x1c] sm:$0xf]
      %v241 = vld [vmem:[%s216 + $0x20] sm:$0xf]
      %v242 = vld [vmem:[%s216 + $0x24] sm:$0xf]
      %v243 = vld [vmem:[%s216 + $0x28] sm:$0xf]
      %v244 = vld [vmem:[%s216 + $0x2c] sm:$0xf]
      %v245 = vld [vmem:[%s216 + $0x30] sm:$0xf]
      %v246 = vld [vmem:[%s216 + $0x34] sm:$0xf]
      %v247 = vld [vmem:[%s216 + $0x38] sm:$0xf]
      %v248 = vld [vmem:[%s216 + $0x3c] sm:$0xf]
      %v249 = vld [vmem:[%s216 + $0x40] sm:$0xf]
      %v250 = vld [vmem:[%s216 + $0x44] sm:$0xf]
      %v251 = vld [vmem:[%s216 + $0x48] sm:$0xf]
      %v252 = vld [vmem:[%s216 + $0x4c] sm:$0xf]
      %v253 = vld [vmem:[%s216 + $0x50] sm:$0xf]
      %v254 = vld [vmem:[%s216 + $0x54] sm:$0xf]
      %v255 = vld [vmem:[%s216 + $0x58] sm:$0xf]
      %v256 = vld [vmem:[%s216 + $0x5c] sm:$0xf]
      %v257 = vld [vmem:[%s216 + $0x60] sm:$0xf]
      %v258 = vld [vmem:[%s216 + $0x64] sm:$0xf]
      %v259 = vld [vmem:[%s216 + $0x68] sm:$0xf]
      %v260 = vld [vmem:[%s216 + $0x6c] sm:$0xf]
      %v261 = vld [vmem:[%s216 + $0x70] sm:$0xf]
      %v262 = vld [vmem:[%s216 + $0x74] sm:$0xf]
      %v263 = vld [vmem:[%s216 + $0x78] sm:$0xf]
      %v264 = vld [vmem:[%s216 + $0x7c] sm:$0xf]
      %v265 = vunpack.c.l.bf16 %v233
      %v266 = vunpack.c.l.bf16 %v234
      %v267 = vunpack.c.l.bf16 %v235
      %v268 = vunpack.c.l.bf16 %v236
      %v269 = vunpack.c.l.bf16 %v237
      %v270 = vunpack.c.l.bf16 %v238
      %v271 = vunpack.c.l.bf16 %v239
      %v272 = vunpack.c.l.bf16 %v240
      %v273 = vunpack.c.l.bf16 %v241
      %v274 = vunpack.c.l.bf16 %v242
      %v275 = vunpack.c.l.bf16 %v243
      %v276 = vunpack.c.l.bf16 %v244
      %v277 = vunpack.c.l.bf16 %v245
      %v278 = vunpack.c.l.bf16 %v246
      %v279 = vunpack.c.l.bf16 %v247
      %v280 = vunpack.c.l.bf16 %v248
      %v281 = vunpack.c.l.bf16 %v249
      %v282 = vunpack.c.l.bf16 %v250
      %v283 = vunpack.c.l.bf16 %v251
      %v284 = vunpack.c.l.bf16 %v252
      %v285 = vunpack.c.l.bf16 %v253
      %v286 = vunpack.c.l.bf16 %v254
      %v287 = vunpack.c.l.bf16 %v255
      %v288 = vunpack.c.l.bf16 %v256
      %v289 = vunpack.c.l.bf16 %v257
      %v290 = vunpack.c.l.bf16 %v258
      %v291 = vunpack.c.l.bf16 %v259
      %v292 = vunpack.c.l.bf16 %v260
      %v293 = vunpack.c.l.bf16 %v261
      %v294 = vunpack.c.l.bf16 %v262
      %v295 = vunpack.c.l.bf16 %v263
      %v296 = vunpack.c.l.bf16 %v264
      %v297 = vld [vmem:[%s220] sm:$0x1]
      %v299 = vlaneseq
      %v300 = vshrl.u32 %v299, 7
      %v301 = vsub.s32 0, %v300
      %v302 = vrot.slane %v297, %v301
      %v304 = vmul.f32 %v265, %v302
      %v305 = vmul.f32 %v266, %v302
      %v306 = vmul.f32 %v267, %v302
      %v307 = vmul.f32 %v268, %v302
      %v308 = vmul.f32 %v269, %v302
      %v309 = vmul.f32 %v270, %v302
      %v310 = vmul.f32 %v271, %v302
      %v311 = vmul.f32 %v272, %v302
      %v312 = vmul.f32 %v273, %v302
      %v313 = vmul.f32 %v274, %v302
      %v314 = vmul.f32 %v275, %v302
      %v315 = vmul.f32 %v276, %v302
      %v316 = vmul.f32 %v277, %v302
      %v317 = vmul.f32 %v278, %v302
      %v318 = vmul.f32 %v279, %v302
      %v319 = vmul.f32 %v280, %v302
      %v320 = vmul.f32 %v281, %v302
      %v321 = vmul.f32 %v282, %v302
      %v322 = vmul.f32 %v283, %v302
      %v323 = vmul.f32 %v284, %v302
      %v324 = vmul.f32 %v285, %v302
      %v325 = vmul.f32 %v286, %v302
      %v326 = vmul.f32 %v287, %v302
      %v327 = vmul.f32 %v288, %v302
      %v328 = vmul.f32 %v289, %v302
      %v329 = vmul.f32 %v290, %v302
      %v330 = vmul.f32 %v291, %v302
      %v331 = vmul.f32 %v292, %v302
      %v332 = vmul.f32 %v293, %v302
      %v333 = vmul.f32 %v294, %v302
      %v334 = vmul.f32 %v295, %v302
      %v335 = vmul.f32 %v296, %v302
      %v336 = vld [vmem:[%s223] sm:$0x1]
      %v338 = vlaneseq
      %v339 = vshrl.u32 %v338, 7
      %v340 = vsub.s32 0, %v339
      %v341 = vrot.slane %v336, %v340
      %v343 = vadd.f32 %v304, %v341
      %v344 = vadd.f32 %v305, %v341
      %v345 = vadd.f32 %v306, %v341
      %v346 = vadd.f32 %v307, %v341
      %v347 = vadd.f32 %v308, %v341
      %v348 = vadd.f32 %v309, %v341
      %v349 = vadd.f32 %v310, %v341
      %v350 = vadd.f32 %v311, %v341
      %v351 = vadd.f32 %v312, %v341
      %v352 = vadd.f32 %v313, %v341
      %v353 = vadd.f32 %v314, %v341
      %v354 = vadd.f32 %v315, %v341
      %v355 = vadd.f32 %v316, %v341
      %v356 = vadd.f32 %v317, %v341
      %v357 = vadd.f32 %v318, %v341
      %v358 = vadd.f32 %v319, %v341
      %v359 = vadd.f32 %v320, %v341
      %v360 = vadd.f32 %v321, %v341
      %v361 = vadd.f32 %v322, %v341
      %v362 = vadd.f32 %v323, %v341
      %v363 = vadd.f32 %v324, %v341
      %v364 = vadd.f32 %v325, %v341
      %v365 = vadd.f32 %v326, %v341
      %v366 = vadd.f32 %v327, %v341
      %v367 = vadd.f32 %v328, %v341
      %v368 = vadd.f32 %v329, %v341
      %v369 = vadd.f32 %v330, %v341
      %v370 = vadd.f32 %v331, %v341
      %v371 = vadd.f32 %v332, %v341
      %v372 = vadd.f32 %v333, %v341
      %v373 = vadd.f32 %v334, %v341
      %v374 = vadd.f32 %v335, %v341
      %v375 = vmax.f32 %v343, 0.0
      %v376 = vmax.f32 %v344, 0.0
      %v377 = vmax.f32 %v345, 0.0
      %v378 = vmax.f32 %v346, 0.0
      %v379 = vmax.f32 %v347, 0.0
      %v380 = vmax.f32 %v348, 0.0
      %v381 = vmax.f32 %v349, 0.0
      %v382 = vmax.f32 %v350, 0.0
      %v383 = vmax.f32 %v351, 0.0
      %v384 = vmax.f32 %v352, 0.0
      %v385 = vmax.f32 %v353, 0.0
      %v386 = vmax.f32 %v354, 0.0
      %v387 = vmax.f32 %v355, 0.0
      %v388 = vmax.f32 %v356, 0.0
      %v389 = vmax.f32 %v357, 0.0
      %v390 = vmax.f32 %v358, 0.0
      %v391 = vmax.f32 %v359, 0.0
      %v392 = vmax.f32 %v360, 0.0
      %v393 = vmax.f32 %v361, 0.0
      %v394 = vmax.f32 %v362, 0.0
      %v395 = vmax.f32 %v363, 0.0
      %v396 = vmax.f32 %v364, 0.0
      %v397 = vmax.f32 %v365, 0.0
      %v398 = vmax.f32 %v366, 0.0
      %v399 = vmax.f32 %v367, 0.0
      %v400 = vmax.f32 %v368, 0.0
      %v401 = vmax.f32 %v369, 0.0
      %v402 = vmax.f32 %v370, 0.0
      %v403 = vmax.f32 %v371, 0.0
      %v404 = vmax.f32 %v372, 0.0
      %v405 = vmax.f32 %v373, 0.0
      %v406 = vmax.f32 %v374, 0.0
      %v407 = vpack.c.bf16 %v376, %v375
      %v408 = vpack.c.bf16 %v378, %v377
      %v409 = vpack.c.bf16 %v380, %v379
      %v410 = vpack.c.bf16 %v382, %v381
      %v411 = vpack.c.bf16 %v384, %v383
      %v412 = vpack.c.bf16 %v386, %v385
      %v413 = vpack.c.bf16 %v388, %v387
      %v414 = vpack.c.bf16 %v390, %v389
      %v415 = vpack.c.bf16 %v392, %v391
      %v416 = vpack.c.bf16 %v394, %v393
      %v417 = vpack.c.bf16 %v396, %v395
      %v418 = vpack.c.bf16 %v398, %v397
      %v419 = vpack.c.bf16 %v400, %v399
      %v420 = vpack.c.bf16 %v402, %v401
      %v421 = vpack.c.bf16 %v404, %v403
      %v422 = vpack.c.bf16 %v406, %v405
      %v439 = vunpack.c.l.b16 %v407
      %v440 = vunpack.c.h.b16 %v407
      %v441 = vunpack.c.l.b16 %v408
      %v442 = vunpack.c.h.b16 %v408
      %v443 = vunpack.c.l.b16 %v409
      %v444 = vunpack.c.h.b16 %v409
      %v445 = vunpack.c.l.b16 %v410
      %v446 = vunpack.c.h.b16 %v410
      %v447 = vunpack.c.l.b16 %v411
      %v448 = vunpack.c.h.b16 %v411
      %v449 = vunpack.c.l.b16 %v412
      %v450 = vunpack.c.h.b16 %v412
      %v451 = vunpack.c.l.b16 %v413
      %v452 = vunpack.c.h.b16 %v413
      %v453 = vunpack.c.l.b16 %v414
      %v454 = vunpack.c.h.b16 %v414
      %v455 = vunpack.c.l.b16 %v415
      %v456 = vunpack.c.h.b16 %v415
      %v457 = vunpack.c.l.b16 %v416
      %v458 = vunpack.c.h.b16 %v416
      %v459 = vunpack.c.l.b16 %v417
      %v460 = vunpack.c.h.b16 %v417
      %v461 = vunpack.c.l.b16 %v418
      %v462 = vunpack.c.h.b16 %v418
      %v463 = vunpack.c.l.b16 %v419
      %v464 = vunpack.c.h.b16 %v419
      %v465 = vunpack.c.l.b16 %v420
      %v466 = vunpack.c.h.b16 %v420
      %v467 = vunpack.c.l.b16 %v421
      %v468 = vunpack.c.h.b16 %v421
      %v469 = vunpack.c.l.b16 %v422
      %v470 = vunpack.c.h.b16 %v422
      %v471 = vpack.c.b16 %v439, %v439
      %v472 = vpack.c.b16 %v440, %v440
      %v473 = vpack.c.b16 %v441, %v441
      %v474 = vpack.c.b16 %v442, %v442
      %v475 = vpack.c.b16 %v443, %v443
      %v476 = vpack.c.b16 %v444, %v444
      %v477 = vpack.c.b16 %v445, %v445
      %v478 = vpack.c.b16 %v446, %v446
      %v479 = vpack.c.b16 %v447, %v447
      %v480 = vpack.c.b16 %v448, %v448
      %v481 = vpack.c.b16 %v449, %v449
      %v482 = vpack.c.b16 %v450, %v450
      %v483 = vpack.c.b16 %v451, %v451
      %v484 = vpack.c.b16 %v452, %v452
      %v485 = vpack.c.b16 %v453, %v453
      %v486 = vpack.c.b16 %v454, %v454
      %v487 = vpack.c.b16 %v455, %v455
      %v488 = vpack.c.b16 %v456, %v456
      %v489 = vpack.c.b16 %v457, %v457
      %v490 = vpack.c.b16 %v458, %v458
      %v491 = vpack.c.b16 %v459, %v459
      %v492 = vpack.c.b16 %v460, %v460
      %v493 = vpack.c.b16 %v461, %v461
      %v494 = vpack.c.b16 %v462, %v462
      %v495 = vpack.c.b16 %v463, %v463
      %v496 = vpack.c.b16 %v464, %v464
      %v497 = vpack.c.b16 %v465, %v465
      %v498 = vpack.c.b16 %v466, %v466
      %v499 = vpack.c.b16 %v467, %v467
      %v500 = vpack.c.b16 %v468, %v468
      %v501 = vpack.c.b16 %v469, %v469
      %v502 = vpack.c.b16 %v470, %v470
      %535 = vst [vmem:[%s231] sm:$0xf] %v471
      %536 = vst [vmem:[%s231 + $0x4] sm:$0xf] %v472
      %537 = vst [vmem:[%s231 + $0x8] sm:$0xf] %v473
      %538 = vst [vmem:[%s231 + $0xc] sm:$0xf] %v474
      %539 = vst [vmem:[%s231 + $0x10] sm:$0xf] %v475
      %540 = vst [vmem:[%s231 + $0x14] sm:$0xf] %v476
      %541 = vst [vmem:[%s231 + $0x18] sm:$0xf] %v477
      %542 = vst [vmem:[%s231 + $0x1c] sm:$0xf] %v478
      %543 = vst [vmem:[%s231 + $0x20] sm:$0xf] %v479
      %544 = vst [vmem:[%s231 + $0x24] sm:$0xf] %v480
      %545 = vst [vmem:[%s231 + $0x28] sm:$0xf] %v481
      %546 = vst [vmem:[%s231 + $0x2c] sm:$0xf] %v482
      %547 = vst [vmem:[%s231 + $0x30] sm:$0xf] %v483
      %548 = vst [vmem:[%s231 + $0x34] sm:$0xf] %v484
      %549 = vst [vmem:[%s231 + $0x38] sm:$0xf] %v485
      %550 = vst [vmem:[%s231 + $0x3c] sm:$0xf] %v486
      %551 = vst [vmem:[%s231 + $0x40] sm:$0xf] %v487
      %552 = vst [vmem:[%s231 + $0x44] sm:$0xf] %v488
      %553 = vst [vmem:[%s231 + $0x48] sm:$0xf] %v489
      %554 = vst [vmem:[%s231 + $0x4c] sm:$0xf] %v490
      %555 = vst [vmem:[%s231 + $0x50] sm:$0xf] %v491
      %556 = vst [vmem:[%s231 + $0x54] sm:$0xf] %v492
      %557 = vst [vmem:[%s231 + $0x58] sm:$0xf] %v493
      %558 = vst [vmem:[%s231 + $0x5c] sm:$0xf] %v494
      %559 = vst [vmem:[%s231 + $0x60] sm:$0xf] %v495
      %560 = vst [vmem:[%s231 + $0x64] sm:$0xf] %v496
      %561 = vst [vmem:[%s231 + $0x68] sm:$0xf] %v497
      %562 = vst [vmem:[%s231 + $0x6c] sm:$0xf] %v498
      %563 = vst [vmem:[%s231 + $0x70] sm:$0xf] %v499
      %564 = vst [vmem:[%s231 + $0x74] sm:$0xf] %v500
      %565 = vst [vmem:[%s231 + $0x78] sm:$0xf] %v501
      %566 = vst [vmem:[%s231 + $0x7c] sm:$0xf] %v502
      %s567 = smul.u32 32, %s18
      %p568 = scmp.lt.s32.totalorder %s567, 63
      %s569 = scalar_select %p568, %s567, 63
      %p570 = scmp.lt.s32.totalorder %s19, 0
      %s571 = scalar_select %p570, %s19, 0
      %s572 = sadd.s32 %s571, %s569
      %s573 = smul.addr %s572, 4
      %s574 = scalar_lea.vmem %s3, %s573
      // Predicated region
      $region33: #{_lambda_.34} parent=31 // pred_check
        %p575 = pneg %p126
      $region34: #{_lambda_.34} parent=31 // pred_check_branch
        %577 = sbr.rel (%p575) target = $region36
      $region35: #{_lambda_.34} parent=31 // pred_region
        %s578 = smul.u32 32, %s18
      $region36: #{_lambda_.34} parent=31 // pred_fallthru
        _
    $region32: #{_lambda_.34} parent=5 // pred_fallthru
      _
    %p579 = scmp.le.s32.totalorder 2, %s9
    // Predicated region
    $region37: #{_lambda_.34} parent=5 // pred_check
      %p580 = pneg %p579
    $region38: #{_lambda_.34} parent=5 // pred_check_branch
      %582 = sbr.rel (%p580) target = $region40
    $region39: #{_lambda_.34} parent=5 // pred_region
      %s583 = ssub.s32 %s9, 2
      // Predicated region
      $region41: #{_lambda_.34} parent=39 // pred_check
        %p584 = pneg %p132
      $region42: #{_lambda_.34} parent=39 // pred_check_branch
        %586 = sbr.rel (%p584) target = $region44
      $region43: #{_lambda_.34} parent=39 // pred_region
        %s587 = smul.u32 32, %s20
        %p588 = scmp.lt.s32.totalorder %s587, 63
        %s589 = scalar_select %p588, %s587, 63
        %p590 = scmp.lt.s32.totalorder %s21, 0
        %s591 = scalar_select %p590, %s21, 0
        %s592 = sadd.s32 %s591, %s589
        %s593 = smul.addr %s592, 4
        %s594 = scalar_lea.vmem %s3, %s593
      $region44: #{_lambda_.34} parent=39 // pred_fallthru
        _
    $region40: #{_lambda_.34} parent=5 // pred_fallthru
      _
  $region6: #{_lambda_.34} parent=0 // loop_footer
    %s13 = sadd.s32 1, %s9
  $region7: #{_lambda_.34} parent=0 // loop_footer_branch
    %8 = sbr.rel target = $region3
  $region8: #{_lambda_.34} parent=0 // loop_exit
    _

// kernel: _lambda_.33
$region0: #{_lambda_.33}
  #allocation0 [shape = 'u32[]', space=smem, size = 0x4, offset = 0x4, fixed_abs, tag = 'smem constant byte address 0x4 - core index']
  #allocation1 [shape = 'u32[144,128]{1,0:T(1,128)}', space=vmem, size = 0x12000, scoped, tag = 'internal scratch']
  %s0 = inlined_call_operand.vmem [shape: bf16[512,256], index: 0, kind: input, shape index: {}]
  %s1 = inlined_call_operand.vmem [shape: bf16[256,128], index: 1, kind: input, shape index: {}]
  %s2 = inlined_call_operand.vmem [shape: bf16[512,128], index: 2, kind: output, shape index: {0}]
  %s3 = inlined_call_operand.vmem [shape: f32[2,2,128], index: 3, kind: output, shape index: {1}]
  %4 = xla_tuple %s2, %s3
  %s5 = sld [smem:[#allocation0]]
  $region49: #{_lambda_.33} parent=0
    _
  %s7 = ssub.s32 1, %s5
  %s8 = scalar_select 0, %s7, %s5
  loop: start=0, step=1, limit=4
  $region2: #{_lambda_.33} parent=0 // loop_pre_header
    _
  $region3: #{_lambda_.33} parent=0 // loop_header
    %s10 = sphi 0, %s14
    %p11 = scmp.ge.s32.totalorder %s10, 4
    %s17 = sphi 0, %s36
    %s18 = sphi 0, %s32
    %s19 = sphi 0, %s28
    %s20 = sphi 0, %s17
    %s21 = sphi 0, %s18
    %s22 = sphi 0, %s19
    %s23 = sphi 0, %s20
    %s24 = sphi 0, %s21
    %s25 = sphi 0, %s22
    %s41 = sphi 0, %s43
    %s44 = sphi 0, %s41
    %s45 = sphi 0, %s44
    %s61 = sphi 0, %s45
    %s69 = sphi 0, %s71
    %s72 = sphi 0, %s69
    %s73 = sphi 0, %s72
    %s89 = sphi 0, %s73
    %s97 = sphi 0, %s99
    %s100 = sphi 0, %s97
    %s101 = sphi 0, %s100
    %s117 = sphi 0, %s101
    %s125 = sphi 0, %s127
    %s128 = sphi 0, %s125
    %s129 = sphi 0, %s128
    %s145 = sphi 0, %s129
  $region4: #{_lambda_.33} parent=0 // loop_header_branch
    %13 = sbr.rel (%p11) target = $region8
  $region5: #{_lambda_.33} parent=0 // loop_body
    %s15 = ssub.s32 %s10, 1
    %s16 = ssub.s32 %s10, 2
    %s26 = sadd.s32 1, %s19
    %p27 = scmp.ge.s32.totalorder %s26, 1
    %s28 = scalar_select %p27, 0, %s26
    %s29 = sadd.s32 1, %s18
    %s30 = scalar_select %p27, %s29, %s18
    %p31 = scmp.ge.s32.totalorder %s30, 1
    %s32 = scalar_select %p31, 0, %s30
    %s33 = sadd.s32 1, %s17
    %s34 = scalar_select %p31, %s33, %s17
    %p35 = scmp.ge.s32.totalorder %s34, 2
    %s36 = scalar_select %p35, 0, %s34
    %s37 = ssub.s32 %s17, %s36
    %s38 = ssub.s32 %s19, %s28
    %s39 = sor.u32 %s37, %s38
    %p40 = scmp.eq.s32.totalorder %s39, 0
    %s42 = sadd.s32 %s41, 1
    %s43 = scalar_select %p40, %s41, %s42
    %p46 = pneg %p40
    %p47 = scmp.eq.s32.totalorder %s10, 1
    %p48 = por %p46, %p47
    %p49 = scmp.ne.s32.totalorder %s41, %s44
    %p50 = scmp.eq.s32.totalorder %s10, 0
    %p51 = por %p49, %p50
    %p52 = scmp.ne.s32.totalorder %s41, %s44
    %p53 = scmp.eq.s32.totalorder %s15, 1
    %p54 = por %p52, %p53
    %p55 = scmp.ne.s32.totalorder %s44, %s45
    %p56 = scmp.eq.s32.totalorder %s15, 0
    %p57 = por %p55, %p56
    %p58 = scmp.ne.s32.totalorder %s44, %s45
    %p59 = scmp.eq.s32.totalorder %s16, 1
    %p60 = por %p58, %p59
    %p62 = scmp.ne.s32.totalorder %s45, %s61
    %p63 = scmp.eq.s32.totalorder %s16, 0
    %p64 = por %p62, %p63
    %s65 = ssub.s32 %s19, %s28
    %s66 = ssub.s32 %s18, %s32
    %s67 = sor.u32 %s65, %s66
    %p68 = scmp.eq.s32.totalorder %s67, 0
    %s70 = sadd.s32 %s69, 1
    %s71 = scalar_select %p68, %s69, %s70
    %p74 = pneg %p68
    %p75 = scmp.eq.s32.totalorder %s10, 1
    %p76 = por %p74, %p75
    %p77 = scmp.ne.s32.totalorder %s69, %s72
    %p78 = scmp.eq.s32.totalorder %s10, 0
    %p79 = por %p77, %p78
    %p80 = scmp.ne.s32.totalorder %s69, %s72
    %p81 = scmp.eq.s32.totalorder %s15, 1
    %p82 = por %p80, %p81
    %p83 = scmp.ne.s32.totalorder %s72, %s73
    %p84 = scmp.eq.s32.totalorder %s15, 0
    %p85 = por %p83, %p84
    %p86 = scmp.ne.s32.totalorder %s72, %s73
    %p87 = scmp.eq.s32.totalorder %s16, 1
    %p88 = por %p86, %p87
    %p90 = scmp.ne.s32.totalorder %s73, %s89
    %p91 = scmp.eq.s32.totalorder %s16, 0
    %p92 = por %p90, %p91
    %s93 = ssub.s32 %s17, %s36
    %s94 = ssub.s32 %s18, %s32
    %s95 = sor.u32 %s93, %s94
    %p96 = scmp.eq.s32.totalorder %s95, 0
    %s98 = sadd.s32 %s97, 1
    %s99 = scalar_select %p96, %s97, %s98
    %p102 = pneg %p96
    %p103 = scmp.eq.s32.totalorder %s10, 1
    %p104 = por %p102, %p103
    %p105 = scmp.ne.s32.totalorder %s97, %s100
    %p106 = scmp.eq.s32.totalorder %s10, 0
    %p107 = por %p105, %p106
    %p108 = scmp.ne.s32.totalorder %s97, %s100
    %p109 = scmp.eq.s32.totalorder %s15, 1
    %p110 = por %p108, %p109
    %p111 = scmp.ne.s32.totalorder %s100, %s101
    %p112 = scmp.eq.s32.totalorder %s15, 0
    %p113 = por %p111, %p112
    %p114 = scmp.ne.s32.totalorder %s100, %s101
    %p115 = scmp.eq.s32.totalorder %s16, 1
    %p116 = por %p114, %p115
    %p118 = scmp.ne.s32.totalorder %s101, %s117
    %p119 = scmp.eq.s32.totalorder %s16, 0
    %p120 = por %p118, %p119
    %s121 = ssub.s32 %s17, %s36
    %s122 = ssub.s32 %s18, %s32
    %s123 = sor.u32 %s121, %s122
    %p124 = scmp.eq.s32.totalorder %s123, 0
    %s126 = sadd.s32 %s125, 1
    %s127 = scalar_select %p124, %s125, %s126
    %p130 = pneg %p124
    %p131 = scmp.eq.s32.totalorder %s10, 1
    %p132 = por %p130, %p131
    %p133 = scmp.ne.s32.totalorder %s125, %s128
    %p134 = scmp.eq.s32.totalorder %s10, 0
    %p135 = por %p133, %p134
    %p136 = scmp.ne.s32.totalorder %s125, %s128
    %p137 = scmp.eq.s32.totalorder %s15, 1
    %p138 = por %p136, %p137
    %p139 = scmp.ne.s32.totalorder %s128, %s129
    %p140 = scmp.eq.s32.totalorder %s15, 0
    %p141 = por %p139, %p140
    %p142 = scmp.ne.s32.totalorder %s128, %s129
    %p143 = scmp.eq.s32.totalorder %s16, 1
    %p144 = por %p142, %p143
    %p146 = scmp.ne.s32.totalorder %s129, %s145
    %p147 = scmp.eq.s32.totalorder %s16, 0
    %p148 = por %p146, %p147
    %p149 = scmp.le.s32.totalorder 1, %s10
    %p150 = scmp.lt.s32.totalorder %s10, 3
    %p151 = pnand %p149, %p150
    %p152 = pneg %p151
    // Predicated region
    $region9: #{_lambda_.33} parent=5 // pred_check
      _
    $region10: #{_lambda_.33} parent=5 // pred_check_branch
      %154 = sbr.rel (%p151) target = $region12
    $region11: #{_lambda_.33} parent=5 // pred_region
      %s155 = ssub.s32 %s10, 1
      // Predicated region
      $region13: #{_lambda_.33} parent=11 // pred_check
        %p156 = pneg %p85
      $region14: #{_lambda_.33} parent=11 // pred_check_branch
        %158 = sbr.rel (%p156) target = $region16
      $region15: #{_lambda_.33} parent=11 // pred_region
        %s159 = smul.u32 32, %s22
        %p160 = scmp.lt.s32.totalorder %s159, 31
        %s161 = scalar_select %p160, %s159, 31
        %p162 = scmp.lt.s32.totalorder %s21, 0
        %s163 = scalar_select %p162, %s21, 0
        %s164 = sadd.s32 %s163, %s161
        %s165 = smul.addr %s164, 4
        %s166 = scalar_lea.vmem %s1, %s165
        %s167 = smul.u32 32, %s22
      $region16: #{_lambda_.33} parent=11 // pred_fallthru
        _
    $region12: #{_lambda_.33} parent=5 // pred_fallthru
      _
    %p168 = scmp.lt.s32.totalorder %s10, 2
    // Predicated region
    $region17: #{_lambda_.33} parent=5 // pred_check
      %p169 = pneg %p168
    $region18: #{_lambda_.33} parent=5 // pred_check_branch
      %171 = sbr.rel (%p169) target = $region20
    $region19: #{_lambda_.33} parent=5 // pred_region
      // Predicated region
      $region21: #{_lambda_.33} parent=19 // pred_check
        %p172 = pneg %p51
      $region22: #{_lambda_.33} parent=19 // pred_check_branch
        %174 = sbr.rel (%p172) target = $region24
      $region23: #{_lambda_.33} parent=19 // pred_region
        %s175 = smul.u32 32, %s17
        %s176 = smul.u32 2, %s19
        %p177 = scmp.lt.s32.totalorder %s175, 63
        %s178 = scalar_select %p177, %s175, 63
        %p179 = scmp.lt.s32.totalorder %s176, 1
        %s180 = scalar_select %p179, %s176, 1
        %s181 = smul.addr %s178, 2
        %s182 = sadd.s32 %s180, %s181
        %s183 = smul.addr %s182, 4
        %s184 = scalar_lea.vmem %s0, %s183
        %s185 = smul.u32 32, %s17
        %s186 = smul.u32 2, %s19
      $region24: #{_lambda_.33} parent=19 // pred_fallthru
        _
    $region20: #{_lambda_.33} parent=5 // pred_fallthru
      _
    %p187 = scmp.le.s32.totalorder 1, %s10
    %p188 = scmp.lt.s32.totalorder %s10, 3
    %p189 = pnand %p187, %p188
    %p190 = pneg %p189
    // Predicated region
    $region25: #{_lambda_.33} parent=5 // pred_check
      _
    $region26: #{_lambda_.33} parent=5 // pred_check_branch
      %192 = sbr.rel (%p189) target = $region28
    $region27: #{_lambda_.33} parent=5 // pred_region
      %s193 = ssub.s32 %s10, 1
      %s194 = smul.u32 32, %s20
      %s195 = smul.u32 2, %s22
      %p196 = scmp.lt.s32.totalorder %s194, 63
      %s197 = scalar_select %p196, %s194, 63
      %p198 = scmp.lt.s32.totalorder %s195, 1
      %s199 = scalar_select %p198, %s195, 1
      %s200 = smul.addr %s197, 2
      %s201 = sadd.s32 %s199, %s200
      %s202 = smul.addr %s201, 4
      %s203 = scalar_lea.vmem %s0, %s202
      %p204 = pneg %p57
      %p205 = pneg %p54
      %s206 = smul.u32 32, %s22
      %p207 = scmp.lt.s32.totalorder %s206, 31
      %s208 = scalar_select %p207, %s206, 31
      %p209 = scmp.lt.s32.totalorder %s21, 0
      %s210 = scalar_select %p209, %s21, 0
      %s211 = sadd.s32 %s210, %s208
      %s212 = smul.addr %s211, 4
      %s213 = scalar_lea.vmem %s1, %s212
      %p214 = pneg %p85
      %p215 = pneg %p82
      %p216 = pneg %p113
      %p217 = pneg %p110
      %s218 = smul.u32 32, %s20
      %p219 = scmp.lt.s32.totalorder %s218, 63
      %s220 = scalar_select %p219, %s218, 63
      %p221 = scmp.lt.s32.totalorder %s21, 0
      %s222 = scalar_select %p221, %s21, 0
      %s223 = sadd.s32 %s222, %s220
      %s224 = smul.addr %s223, 4
      %s225 = scalar_lea.vmem %s2, %s224
      %p226 = pneg %p141
      %p227 = pneg %p138
      %p228 = scmp.lt.s32.totalorder %s20, 1
      %s229 = scalar_select %p228, %s20, 1
      %p230 = scmp.lt.s32.totalorder %s21, 0
      %s231 = scalar_select %p230, %s21, 0
      %s232 = sadd.s32 %s231, %s229
      %s233 = smul.addr %s232, 2
      %s234 = scalar_lea.vmem %s3, %s233
      %s235 = smul.u32 32, %s20
      %s236 = smul.u32 2, %s22
      %p237 = scmp.lt.s32.totalorder %s235, 63
      %s238 = scalar_select %p237, %s235, 63
      %p239 = scmp.lt.s32.totalorder %s236, 1
      %s240 = scalar_select %p239, %s236, 1
      %s241 = smul.addr %s238, 2
      %s242 = sadd.s32 %s240, %s241
      %s243 = smul.addr %s242, 4
      %s244 = scalar_lea.vmem %s0, %s243
      %s245 = smul.u32 32, %s20
      %s246 = smul.u32 2, %s22
      %s247 = smul.u32 32, %s22
      %p248 = scmp.lt.s32.totalorder %s247, 31
      %s249 = scalar_select %p248, %s247, 31
      %p250 = scmp.lt.s32.totalorder %s21, 0
      %s251 = scalar_select %p250, %s21, 0
      %s252 = sadd.s32 %s251, %s249
      %s253 = smul.addr %s252, 4
      %s254 = scalar_lea.vmem %s1, %s253
      %s255 = smul.u32 32, %s22
      %s256 = smul.u32 32, %s20
      %p257 = scmp.lt.s32.totalorder %s256, 63
      %s258 = scalar_select %p257, %s256, 63
      %p259 = scmp.lt.s32.totalorder %s21, 0
      %s260 = scalar_select %p259, %s21, 0
      %s261 = sadd.s32 %s260, %s258
      %s262 = smul.addr %s261, 4
      %s263 = scalar_lea.vmem %s2, %s262
      %s264 = smul.u32 32, %s20
      %p265 = scmp.lt.s32.totalorder %s20, 1
      %s266 = scalar_select %p265, %s20, 1
      %p267 = scmp.lt.s32.totalorder %s21, 0
      %s268 = scalar_select %p267, %s21, 0
      %s269 = sadd.s32 %s268, %s266
      %s270 = smul.addr %s269, 2
      %s271 = scalar_lea.vmem %s3, %s270
      %v273 = vld [vmem:[%s244] sm:$0xff]
      %v274 = vld [vmem:[%s244 + $0x8] sm:$0xff]
      %v275 = vld [vmem:[%s244 + $0x10] sm:$0xff]
      %v276 = vld [vmem:[%s244 + $0x18] sm:$0xff]
      %v277 = vld [vmem:[%s244 + $0x20] sm:$0xff]
      %v278 = vld [vmem:[%s244 + $0x28] sm:$0xff]
      %v279 = vld [vmem:[%s244 + $0x30] sm:$0xff]
      %v280 = vld [vmem:[%s244 + $0x38] sm:$0xff]
      %v281 = vld [vmem:[%s244 + $0x40] sm:$0xff]
      %v282 = vld [vmem:[%s244 + $0x48] sm:$0xff]
      %v283 = vld [vmem:[%s244 + $0x50] sm:$0xff]
      %v284 = vld [vmem:[%s244 + $0x58] sm:$0xff]
      %v285 = vld [vmem:[%s244 + $0x60] sm:$0xff]
      %v286 = vld [vmem:[%s244 + $0x68] sm:$0xff]
      %v287 = vld [vmem:[%s244 + $0x70] sm:$0xff]
      %v288 = vld [vmem:[%s244 + $0x78] sm:$0xff]
      %v289 = vld [vmem:[%s244 + $0x80] sm:$0xff]
      %v290 = vld [vmem:[%s244 + $0x88] sm:$0xff]
      %v291 = vld [vmem:[%s244 + $0x90] sm:$0xff]
      %v292 = vld [vmem:[%s244 + $0x98] sm:$0xff]
      %v293 = vld [vmem:[%s244 + $0xa0] sm:$0xff]
      %v294 = vld [vmem:[%s244 + $0xa8] sm:$0xff]
      %v295 = vld [vmem:[%s244 + $0xb0] sm:$0xff]
      %v296 = vld [vmem:[%s244 + $0xb8] sm:$0xff]
      %v297 = vld [vmem:[%s244 + $0xc0] sm:$0xff]
      %v298 = vld [vmem:[%s244 + $0xc8] sm:$0xff]
      %v299 = vld [vmem:[%s244 + $0xd0] sm:$0xff]
      %v300 = vld [vmem:[%s244 + $0xd8] sm:$0xff]
      %v301 = vld [vmem:[%s244 + $0xe0] sm:$0xff]
      %v302 = vld [vmem:[%s244 + $0xe8] sm:$0xff]
      %v303 = vld [vmem:[%s244 + $0xf0] sm:$0xff]
      %v304 = vld [vmem:[%s244 + $0xf8] sm:$0xff]
      %v305 = vld [vmem:[%s254] sm:$0xf]
      %v306 = vld [vmem:[%s254 + $0x4] sm:$0xf]
      %v307 = vld [vmem:[%s254 + $0x8] sm:$0xf]
      %v308 = vld [vmem:[%s254 + $0xc] sm:$0xf]
      %v309 = vld [vmem:[%s254 + $0x10] sm:$0xf]
      %v310 = vld [vmem:[%s254 + $0x14] sm:$0xf]
      %v311 = vld [vmem:[%s254 + $0x18] sm:$0xf]
      %v312 = vld [vmem:[%s254 + $0x1c] sm:$0xf]
      %v313 = vld [vmem:[%s254 + $0x20] sm:$0xf]
      %v314 = vld [vmem:[%s254 + $0x24] sm:$0xf]
      %v315 = vld [vmem:[%s254 + $0x28] sm:$0xf]
      %v316 = vld [vmem:[%s254 + $0x2c] sm:$0xf]
      %v317 = vld [vmem:[%s254 + $0x30] sm:$0xf]
      %v318 = vld [vmem:[%s254 + $0x34] sm:$0xf]
      %v319 = vld [vmem:[%s254 + $0x38] sm:$0xf]
      %v320 = vld [vmem:[%s254 + $0x3c] sm:$0xf]
      %v321 = vld [vmem:[%s254 + $0x40] sm:$0xf]
      %v322 = vld [vmem:[%s254 + $0x44] sm:$0xf]
      %v323 = vld [vmem:[%s254 + $0x48] sm:$0xf]
      %v324 = vld [vmem:[%s254 + $0x4c] sm:$0xf]
      %v325 = vld [vmem:[%s254 + $0x50] sm:$0xf]
      %v326 = vld [vmem:[%s254 + $0x54] sm:$0xf]
      %v327 = vld [vmem:[%s254 + $0x58] sm:$0xf]
      %v328 = vld [vmem:[%s254 + $0x5c] sm:$0xf]
      %v329 = vld [vmem:[%s254 + $0x60] sm:$0xf]
      %v330 = vld [vmem:[%s254 + $0x64] sm:$0xf]
      %v331 = vld [vmem:[%s254 + $0x68] sm:$0xf]
      %v332 = vld [vmem:[%s254 + $0x6c] sm:$0xf]
      %v333 = vld [vmem:[%s254 + $0x70] sm:$0xf]
      %v334 = vld [vmem:[%s254 + $0x74] sm:$0xf]
      %v335 = vld [vmem:[%s254 + $0x78] sm:$0xf]
      %v336 = vld [vmem:[%s254 + $0x7c] sm:$0xf]
      %v369 = vunpack.c.l.b16 %v273
      %v370 = vunpack.c.h.b16 %v273
      %v371 = vunpack.c.l.b16 %v274
      %v372 = vunpack.c.h.b16 %v274
      %v373 = vunpack.c.l.b16 %v275
      %v374 = vunpack.c.h.b16 %v275
      %v375 = vunpack.c.l.b16 %v276
      %v376 = vunpack.c.h.b16 %v276
      %v377 = vunpack.c.l.b16 %v277
      %v378 = vunpack.c.h.b16 %v277
      %v379 = vunpack.c.l.b16 %v278
      %v380 = vunpack.c.h.b16 %v278
      %v381 = vunpack.c.l.b16 %v279
      %v382 = vunpack.c.h.b16 %v279
      %v383 = vunpack.c.l.b16 %v280
      %v384 = vunpack.c.h.b16 %v280
      %v385 = vunpack.c.l.b16 %v281
      %v386 = vunpack.c.h.b16 %v281
      %v387 = vunpack.c.l.b16 %v282
      %v388 = vunpack.c.h.b16 %v282
      %v389 = vunpack.c.l.b16 %v283
      %v390 = vunpack.c.h.b16 %v283
      %v391 = vunpack.c.l.b16 %v284
      %v392 = vunpack.c.h.b16 %v284
      %v393 = vunpack.c.l.b16 %v285
      %v394 = vunpack.c.h.b16 %v285
      %v395 = vunpack.c.l.b16 %v286
      %v396 = vunpack.c.h.b16 %v286
      %v397 = vunpack.c.l.b16 %v287
      %v398 = vunpack.c.h.b16 %v287
      %v399 = vunpack.c.l.b16 %v288
      %v400 = vunpack.c.h.b16 %v288
      %v401 = vunpack.c.l.b16 %v289
      %v402 = vunpack.c.h.b16 %v289
      %v403 = vunpack.c.l.b16 %v290
      %v404 = vunpack.c.h.b16 %v290
      %v405 = vunpack.c.l.b16 %v291
      %v406 = vunpack.c.h.b16 %v291
      %v407 = vunpack.c.l.b16 %v292
      %v408 = vunpack.c.h.b16 %v292
      %v409 = vunpack.c.l.b16 %v293
      %v410 = vunpack.c.h.b16 %v293
      %v411 = vunpack.c.l.b16 %v294
      %v412 = vunpack.c.h.b16 %v294
      %v413 = vunpack.c.l.b16 %v295
      %v414 = vunpack.c.h.b16 %v295
      %v415 = vunpack.c.l.b16 %v296
      %v416 = vunpack.c.h.b16 %v296
      %v417 = vunpack.c.l.b16 %v297
      %v418 = vunpack.c.h.b16 %v297
      %v419 = vunpack.c.l.b16 %v298
      %v420 = vunpack.c.h.b16 %v298
      %v421 = vunpack.c.l.b16 %v299
      %v422 = vunpack.c.h.b16 %v299
      %v423 = vunpack.c.l.b16 %v300
      %v424 = vunpack.c.h.b16 %v300
      %v425 = vunpack.c.l.b16 %v301
      %v426 = vunpack.c.h.b16 %v301
      %v427 = vunpack.c.l.b16 %v302
      %v428 = vunpack.c.h.b16 %v302
      %v429 = vunpack.c.l.b16 %v303
      %v430 = vunpack.c.h.b16 %v303
      %v431 = vunpack.c.l.b16 %v304
      %v432 = vunpack.c.h.b16 %v304
      %v433 = vpack.c.b16 %v371, %v369
      %v434 = vpack.c.b16 %v372, %v370
      %v435 = vpack.c.b16 %v375, %v373
      %v436 = vpack.c.b16 %v376, %v374
      %v437 = vpack.c.b16 %v379, %v377
      %v438 = vpack.c.b16 %v380, %v378
      %v439 = vpack.c.b16 %v383, %v381
      %v440 = vpack.c.b16 %v384, %v382
      %v441 = vpack.c.b16 %v387, %v385
      %v442 = vpack.c.b16 %v388, %v386
      %v443 = vpack.c.b16 %v391, %v389
      %v444 = vpack.c.b16 %v392, %v390
      %v445 = vpack.c.b16 %v395, %v393
      %v446 = vpack.c.b16 %v396, %v394
      %v447 = vpack.c.b16 %v399, %v397
      %v448 = vpack.c.b16 %v400, %v398
      %v449 = vpack.c.b16 %v403, %v401
      %v450 = vpack.c.b16 %v404, %v402
      %v451 = vpack.c.b16 %v407, %v405
      %v452 = vpack.c.b16 %v408, %v406
      %v453 = vpack.c.b16 %v411, %v409
      %v454 = vpack.c.b16 %v412, %v410
      %v455 = vpack.c.b16 %v415, %v413
      %v456 = vpack.c.b16 %v416, %v414
      %v457 = vpack.c.b16 %v419, %v417
      %v458 = vpack.c.b16 %v420, %v418
      %v459 = vpack.c.b16 %v423, %v421
      %v460 = vpack.c.b16 %v424, %v422
      %v461 = vpack.c.b16 %v427, %v425
      %v462 = vpack.c.b16 %v428, %v426
      %v463 = vpack.c.b16 %v431, %v429
      %v464 = vpack.c.b16 %v432, %v430
      %v529 = vunpack.c.l.b16 %v305
      %v530 = vunpack.c.l.b16 %v306
      %v531 = vunpack.c.l.b16 %v307
      %v532 = vunpack.c.l.b16 %v308
      %v533 = vunpack.c.l.b16 %v309
      %v534 = vunpack.c.l.b16 %v310
      %v535 = vunpack.c.l.b16 %v311
      %v536 = vunpack.c.l.b16 %v312
      %v537 = vunpack.c.l.b16 %v313
      %v538 = vunpack.c.l.b16 %v314
      %v539 = vunpack.c.l.b16 %v315
      %v540 = vunpack.c.l.b16 %v316
      %v541 = vunpack.c.l.b16 %v317
      %v542 = vunpack.c.l.b16 %v318
      %v543 = vunpack.c.l.b16 %v319
      %v544 = vunpack.c.l.b16 %v320
      %v545 = vunpack.c.l.b16 %v321
      %v546 = vunpack.c.l.b16 %v322
      %v547 = vunpack.c.l.b16 %v323
      %v548 = vunpack.c.l.b16 %v324
      %v549 = vunpack.c.l.b16 %v325
      %v550 = vunpack.c.l.b16 %v326
      %v551 = vunpack.c.l.b16 %v327
      %v552 = vunpack.c.l.b16 %v328
      %v553 = vunpack.c.l.b16 %v329
      %v554 = vunpack.c.l.b16 %v330
      %v555 = vunpack.c.l.b16 %v331
      %v556 = vunpack.c.l.b16 %v332
      %v557 = vunpack.c.l.b16 %v333
      %v558 = vunpack.c.l.b16 %v334
      %v559 = vunpack.c.l.b16 %v335
      %v560 = vunpack.c.l.b16 %v336
      %v561 = vpack.c.b16 %v530, %v529
      %v562 = vpack.c.b16 %v532, %v531
      %v563 = vpack.c.b16 %v534, %v533
      %v564 = vpack.c.b16 %v536, %v535
      %v565 = vpack.c.b16 %v538, %v537
      %v566 = vpack.c.b16 %v540, %v539
      %v567 = vpack.c.b16 %v542, %v541
      %v568 = vpack.c.b16 %v544, %v543
      %v569 = vpack.c.b16 %v546, %v545
      %v570 = vpack.c.b16 %v548, %v547
      %v571 = vpack.c.b16 %v550, %v549
      %v572 = vpack.c.b16 %v552, %v551
      %v573 = vpack.c.b16 %v554, %v553
      %v574 = vpack.c.b16 %v556, %v555
      %v575 = vpack.c.b16 %v558, %v557
      %v576 = vpack.c.b16 %v560, %v559
      %593 = vmatprep.subr.bf16.mxu0 0
      %594 = vmatpush1.bf16.msra.mxu0 %v561
      %595 = vmatprep.subr.bf16.mxu0 0
      %596 = vmatpush1.bf16.msra.mxu0 %v562
      %597 = vmatprep.subr.bf16.mxu0 0
      %598 = vmatpush1.bf16.msra.mxu0 %v563
      %599 = vmatprep.subr.bf16.mxu0 0
      %600 = vmatpush1.bf16.msra.mxu0 %v564
      %601 = vmatprep.subr.bf16.mxu0 0
      %602 = vmatpush1.bf16.msra.mxu0 %v565
      %603 = vmatprep.subr.bf16.mxu0 0
      %604 = vmatpush1.bf16.msra.mxu0 %v566
      %605 = vmatprep.subr.bf16.mxu0 0
      %606 = vmatpush1.bf16.msra.mxu0 %v567
      %607 = vmatprep.subr.bf16.mxu0 0
      %608 = vmatpush1.bf16.msra.mxu0 %v568
      %609 = vmatprep.subr.bf16.mxu0 0
      %610 = vmatpush1.bf16.msra.mxu0 %v569
      %611 = vmatprep.subr.bf16.mxu0 0
      %612 = vmatpush1.bf16.msra.mxu0 %v570
      %613 = vmatprep.subr.bf16.mxu0 0
      %614 = vmatpush1.bf16.msra.mxu0 %v571
      %615 = vmatprep.subr.bf16.mxu0 0
      %616 = vmatpush1.bf16.msra.mxu0 %v572
      %617 = vmatprep.subr.bf16.mxu0 0
      %618 = vmatpush1.bf16.msra.mxu0 %v573
      %619 = vmatprep.subr.bf16.mxu0 0
      %620 = vmatpush1.bf16.msra.mxu0 %v574
      %621 = vmatprep.subr.bf16.mxu0 0
      %622 = vmatpush1.bf16.msra.mxu0 %v575
      %623 = vmatprep.subr.bf16.mxu0 0
      %624 = vmatpush1.bf16.msra.mxu0 %v576
      %625 = vmatprep.mubr.bf16.mxu0 %v434
      %626 = vmatmul.mubr.bf16.gmra.mrb[0].mxu0 %v433
      %v627 = vpop.f32.mrb[0].mxu0
      %v628 = vadd.f32 0.0, %v627
      %v629 = vpop.f32.mrb[0].mxu0
      %v630 = vpop.f32.mrb[0].mxu0
      %v631 = vadd.f32 0.0, %v630
      %v632 = vpop.f32.mrb[0].mxu0
      %633 = vmatprep.mubr.bf16.mxu0 %v436
      %634 = vmatmul.mubr.bf16.gmra.mrb[0].mxu0 %v435
      %v635 = vpop.f32.mrb[0].mxu0
      %v636 = vadd.f32 0.0, %v635
      %v637 = vpop.f32.mrb[0].mxu0
      %v638 = vpop.f32.mrb[0].mxu0
      %v639 = vadd.f32 0.0, %v638
      %v640 = vpop.f32.mrb[0].mxu0
      %641 = vmatprep.mubr.bf16.mxu0 %v438
      %642 = vmatmul.mubr.bf16.gmra.mrb[0].mxu0 %v437
      %v643 = vpop.f32.mrb[0].mxu0
      %v644 = vadd.f32 0.0, %v643
      %v645 = vpop.f32.mrb[0].mxu0
      %v646 = vpop.f32.mrb[0].mxu0
      %v647 = vadd.f32 0.0, %v646
      %v648 = vpop.f32.mrb[0].mxu0
      %649 = vmatprep.mubr.bf16.mxu0 %v440
      %650 = vmatmul.mubr.bf16.gmra.mrb[0].mxu0 %v439
      %v651 = vpop.f32.mrb[0].mxu0
      %v652 = vadd.f32 0.0, %v651
      %v653 = vpop.f32.mrb[0].mxu0
      %v654 = vpop.f32.mrb[0].mxu0
      %v655 = vadd.f32 0.0, %v654
      %v656 = vpop.f32.mrb[0].mxu0
      %657 = vmatprep.mubr.bf16.mxu0 %v442
      %658 = vmatmul.mubr.bf16.gmra.mrb[0].mxu0 %v441
      %v659 = vpop.f32.mrb[0].mxu0
      %v660 = vadd.f32 0.0, %v659
      %v661 = vpop.f32.mrb[0].mxu0
      %v662 = vpop.f32.mrb[0].mxu0
      %v663 = vadd.f32 0.0, %v662
      %v664 = vpop.f32.mrb[0].mxu0
      %665 = vmatprep.mubr.bf16.mxu0 %v444
      %666 = vmatmul.mubr.bf16.gmra.mrb[0].mxu0 %v443
      %v667 = vpop.f32.mrb[0].mxu0
      %v668 = vadd.f32 0.0, %v667
      %v669 = vpop.f32.mrb[0].mxu0
      %v670 = vpop.f32.mrb[0].mxu0
      %v671 = vadd.f32 0.0, %v670
      %v672 = vpop.f32.mrb[0].mxu0
      %673 = vmatprep.mubr.bf16.mxu0 %v446
      %674 = vmatmul.mubr.bf16.gmra.mrb[0].mxu0 %v445
      %v675 = vpop.f32.mrb[0].mxu0
      %v676 = vadd.f32 0.0, %v675
      %v677 = vpop.f32.mrb[0].mxu0
      %v678 = vpop.f32.mrb[0].mxu0
      %v679 = vadd.f32 0.0, %v678
      %v680 = vpop.f32.mrb[0].mxu0
      %681 = vmatprep.mubr.bf16.mxu0 %v448
      %682 = vmatmul.mubr.bf16.gmra.mrb[0].mxu0 %v447
      %v683 = vpop.f32.mrb[0].mxu0
      %v684 = vadd.f32 0.0, %v683
      %v685 = vpop.f32.mrb[0].mxu0
      %v686 = vpop.f32.mrb[0].mxu0
      %v687 = vadd.f32 0.0, %v686
      %v688 = vpop.f32.mrb[0].mxu0
      %689 = vmatprep.mubr.bf16.mxu0 %v450
      %690 = vmatmul.mubr.bf16.gmra.mrb[0].mxu0 %v449
      %v691 = vpop.f32.mrb[0].mxu0
      %v692 = vadd.f32 0.0, %v691
      %v693 = vpop.f32.mrb[0].mxu0
      %v694 = vpop.f32.mrb[0].mxu0
      %v695 = vadd.f32 0.0, %v694
      %v696 = vpop.f32.mrb[0].mxu0
      %697 = vmatprep.mubr.bf16.mxu0 %v452
      %698 = vmatmul.mubr.bf16.gmra.mrb[0].mxu0 %v451
      %v699 = vpop.f32.mrb[0].mxu0
      %v700 = vadd.f32 0.0, %v699
      %v701 = vpop.f32.mrb[0].mxu0
      %v702 = vpop.f32.mrb[0].mxu0
      %v703 = vadd.f32 0.0, %v702
      %v704 = vpop.f32.mrb[0].mxu0
      %705 = vmatprep.mubr.bf16.mxu0 %v454
      %706 = vmatmul.mubr.bf16.gmra.mrb[0].mxu0 %v453
      %v707 = vpop.f32.mrb[0].mxu0
      %v708 = vadd.f32 0.0, %v707
      %v709 = vpop.f32.mrb[0].mxu0
      %v710 = vpop.f32.mrb[0].mxu0
      %v711 = vadd.f32 0.0, %v710
      %v712 = vpop.f32.mrb[0].mxu0
      %713 = vmatprep.mubr.bf16.mxu0 %v456
      %714 = vmatmul.mubr.bf16.gmra.mrb[0].mxu0 %v455
      %v715 = vpop.f32.mrb[0].mxu0
      %v716 = vadd.f32 0.0, %v715
      %v717 = vpop.f32.mrb[0].mxu0
      %v718 = vpop.f32.mrb[0].mxu0
      %v719 = vadd.f32 0.0, %v718
      %v720 = vpop.f32.mrb[0].mxu0
      %721 = vmatprep.mubr.bf16.mxu0 %v458
      %722 = vmatmul.mubr.bf16.gmra.mrb[0].mxu0 %v457
      %v723 = vpop.f32.mrb[0].mxu0
      %v724 = vadd.f32 0.0, %v723
      %v725 = vpop.f32.mrb[0].mxu0
      %v726 = vpop.f32.mrb[0].mxu0
      %v727 = vadd.f32 0.0, %v726
      %v728 = vpop.f32.mrb[0].mxu0
      %729 = vmatprep.mubr.bf16.mxu0 %v460
      %730 = vmatmul.mubr.bf16.gmra.mrb[0].mxu0 %v459
      %v731 = vpop.f32.mrb[0].mxu0
      %v732 = vadd.f32 0.0, %v731
      %v733 = vpop.f32.mrb[0].mxu0
      %v734 = vpop.f32.mrb[0].mxu0
      %v735 = vadd.f32 0.0, %v734
      %v736 = vpop.f32.mrb[0].mxu0
      %737 = vmatprep.mubr.bf16.mxu0 %v462
      %738 = vmatmul.mubr.bf16.gmra.mrb[0].mxu0 %v461
      %v739 = vpop.f32.mrb[0].mxu0
      %v740 = vadd.f32 0.0, %v739
      %v741 = vpop.f32.mrb[0].mxu0
      %v742 = vpop.f32.mrb[0].mxu0
      %v743 = vadd.f32 0.0, %v742
      %v744 = vpop.f32.mrb[0].mxu0
      %745 = vmatprep.mubr.bf16.mxu0 %v464
      %746 = vmatmul.mubr.bf16.gmra.mrb[0].mxu0 %v463
      %v747 = vpop.f32.mrb[0].mxu0
      %v748 = vadd.f32 0.0, %v747
      %v749 = vpop.f32.mrb[0].mxu0
      %v750 = vpop.f32.mrb[0].mxu0
      %v751 = vadd.f32 0.0, %v750
      %v752 = vpop.f32.mrb[0].mxu0
      %753 = vdwg.mxu0
      %v754 = vpack.c.bf16 %v631, %v628
      %v755 = vpack.c.bf16 %v639, %v636
      %v756 = vpack.c.bf16 %v647, %v644
      %v757 = vpack.c.bf16 %v655, %v652
      %v758 = vpack.c.bf16 %v663, %v660
      %v759 = vpack.c.bf16 %v671, %v668
      %v760 = vpack.c.bf16 %v679, %v676
      %v761 = vpack.c.bf16 %v687, %v684
      %v762 = vpack.c.bf16 %v695, %v692
      %v763 = vpack.c.bf16 %v703, %v700
      %v764 = vpack.c.bf16 %v711, %v708
      %v765 = vpack.c.bf16 %v719, %v716
      %v766 = vpack.c.bf16 %v727, %v724
      %v767 = vpack.c.bf16 %v735, %v732
      %v768 = vpack.c.bf16 %v743, %v740
      %v769 = vpack.c.bf16 %v751, %v748
      %v786 = vunpack.c.l.b16 %v754
      %v787 = vunpack.c.h.b16 %v754
      %v788 = vunpack.c.l.b16 %v755
      %v789 = vunpack.c.h.b16 %v755
      %v790 = vunpack.c.l.b16 %v756
      %v791 = vunpack.c.h.b16 %v756
      %v792 = vunpack.c.l.b16 %v757
      %v793 = vunpack.c.h.b16 %v757
      %v794 = vunpack.c.l.b16 %v758
      %v795 = vunpack.c.h.b16 %v758
      %v796 = vunpack.c.l.b16 %v759
      %v797 = vunpack.c.h.b16 %v759
      %v798 = vunpack.c.l.b16 %v760
      %v799 = vunpack.c.h.b16 %v760
      %v800 = vunpack.c.l.b16 %v761
      %v801 = vunpack.c.h.b16 %v761
      %v802 = vunpack.c.l.b16 %v762
      %v803 = vunpack.c.h.b16 %v762
      %v804 = vunpack.c.l.b16 %v763
      %v805 = vunpack.c.h.b16 %v763
      %v806 = vunpack.c.l.b16 %v764
      %v807 = vunpack.c.h.b16 %v764
      %v808 = vunpack.c.l.b16 %v765
      %v809 = vunpack.c.h.b16 %v765
      %v810 = vunpack.c.l.b16 %v766
      %v811 = vunpack.c.h.b16 %v766
      %v812 = vunpack.c.l.b16 %v767
      %v813 = vunpack.c.h.b16 %v767
      %v814 = vunpack.c.l.b16 %v768
      %v815 = vunpack.c.h.b16 %v768
      %v816 = vunpack.c.l.b16 %v769
      %v817 = vunpack.c.h.b16 %v769
      %v818 = vpack.c.b16 %v786, %v786
      %v819 = vpack.c.b16 %v787, %v787
      %v820 = vpack.c.b16 %v788, %v788
      %v821 = vpack.c.b16 %v789, %v789
      %v822 = vpack.c.b16 %v790, %v790
      %v823 = vpack.c.b16 %v791, %v791
      %v824 = vpack.c.b16 %v792, %v792
      %v825 = vpack.c.b16 %v793, %v793
      %v826 = vpack.c.b16 %v794, %v794
      %v827 = vpack.c.b16 %v795, %v795
      %v828 = vpack.c.b16 %v796, %v796
      %v829 = vpack.c.b16 %v797, %v797
      %v830 = vpack.c.b16 %v798, %v798
      %v831 = vpack.c.b16 %v799, %v799
      %v832 = vpack.c.b16 %v800, %v800
      %v833 = vpack.c.b16 %v801, %v801
      %v834 = vpack.c.b16 %v802, %v802
      %v835 = vpack.c.b16 %v803, %v803
      %v836 = vpack.c.b16 %v804, %v804
      %v837 = vpack.c.b16 %v805, %v805
      %v838 = vpack.c.b16 %v806, %v806
      %v839 = vpack.c.b16 %v807, %v807
      %v840 = vpack.c.b16 %v808, %v808
      %v841 = vpack.c.b16 %v809, %v809
      %v842 = vpack.c.b16 %v810, %v810
      %v843 = vpack.c.b16 %v811, %v811
      %v844 = vpack.c.b16 %v812, %v812
      %v845 = vpack.c.b16 %v813, %v813
      %v846 = vpack.c.b16 %v814, %v814
      %v847 = vpack.c.b16 %v815, %v815
      %v848 = vpack.c.b16 %v816, %v816
      %v849 = vpack.c.b16 %v817, %v817
      %882 = vst [vmem:[%s263] sm:$0xf] %v818
      %883 = vst [vmem:[%s263 + $0x4] sm:$0xf] %v819
      %884 = vst [vmem:[%s263 + $0x8] sm:$0xf] %v820
      %885 = vst [vmem:[%s263 + $0xc] sm:$0xf] %v821
      %886 = vst [vmem:[%s263 + $0x10] sm:$0xf] %v822
      %887 = vst [vmem:[%s263 + $0x14] sm:$0xf] %v823
      %888 = vst [vmem:[%s263 + $0x18] sm:$0xf] %v824
      %889 = vst [vmem:[%s263 + $0x1c] sm:$0xf] %v825
      %890 = vst [vmem:[%s263 + $0x20] sm:$0xf] %v826
      %891 = vst [vmem:[%s263 + $0x24] sm:$0xf] %v827
      %892 = vst [vmem:[%s263 + $0x28] sm:$0xf] %v828
      %893 = vst [vmem:[%s263 + $0x2c] sm:$0xf] %v829
      %894 = vst [vmem:[%s263 + $0x30] sm:$0xf] %v830
      %895 = vst [vmem:[%s263 + $0x34] sm:$0xf] %v831
      %896 = vst [vmem:[%s263 + $0x38] sm:$0xf] %v832
      %897 = vst [vmem:[%s263 + $0x3c] sm:$0xf] %v833
      %898 = vst [vmem:[%s263 + $0x40] sm:$0xf] %v834
      %899 = vst [vmem:[%s263 + $0x44] sm:$0xf] %v835
      %900 = vst [vmem:[%s263 + $0x48] sm:$0xf] %v836
      %901 = vst [vmem:[%s263 + $0x4c] sm:$0xf] %v837
      %902 = vst [vmem:[%s263 + $0x50] sm:$0xf] %v838
      %903 = vst [vmem:[%s263 + $0x54] sm:$0xf] %v839
      %904 = vst [vmem:[%s263 + $0x58] sm:$0xf] %v840
      %905 = vst [vmem:[%s263 + $0x5c] sm:$0xf] %v841
      %906 = vst [vmem:[%s263 + $0x60] sm:$0xf] %v842
      %907 = vst [vmem:[%s263 + $0x64] sm:$0xf] %v843
      %908 = vst [vmem:[%s263 + $0x68] sm:$0xf] %v844
      %909 = vst [vmem:[%s263 + $0x6c] sm:$0xf] %v845
      %910 = vst [vmem:[%s263 + $0x70] sm:$0xf] %v846
      %911 = vst [vmem:[%s263 + $0x74] sm:$0xf] %v847
      %912 = vst [vmem:[%s263 + $0x78] sm:$0xf] %v848
      %913 = vst [vmem:[%s263 + $0x7c] sm:$0xf] %v849
      %v914 = vadd.f32 %v628, %v631
      %v915 = vadd.f32 %v914, %v636
      %v916 = vadd.f32 %v915, %v639
      %v917 = vadd.f32 %v916, %v644
      %v918 = vadd.f32 %v917, %v647
      %v919 = vadd.f32 %v918, %v652
      %v920 = vadd.f32 %v919, %v655
      %v921 = vadd.f32 %v920, %v660
      %v922 = vadd.f32 %v921, %v663
      %v923 = vadd.f32 %v922, %v668
      %v924 = vadd.f32 %v923, %v671
      %v925 = vadd.f32 %v924, %v676
      %v926 = vadd.f32 %v925, %v679
      %v927 = vadd.f32 %v926, %v684
      %v928 = vadd.f32 %v927, %v687
      %v929 = vadd.f32 %v928, %v692
      %v930 = vadd.f32 %v929, %v695
      %v931 = vadd.f32 %v930, %v700
      %v932 = vadd.f32 %v931, %v703
      %v933 = vadd.f32 %v932, %v708
      %v934 = vadd.f32 %v933, %v711
      %v935 = vadd.f32 %v934, %v716
      %v936 = vadd.f32 %v935, %v719
      %v937 = vadd.f32 %v936, %v724
      %v938 = vadd.f32 %v937, %v727
      %v939 = vadd.f32 %v938, %v732
      %v940 = vadd.f32 %v939, %v735
      %v941 = vadd.f32 %v940, %v740
      %v942 = vadd.f32 %v941, %v743
      %v943 = vadd.f32 %v942, %v748
      %v944 = vadd.f32 %v943, %v751
      %v945 = vrot.slane %v944, 4
      %v946 = vadd.f32 %v944, %v945
      %v947 = vrot.slane %v946, 2
      %v948 = vadd.f32 %v946, %v947
      %v949 = vrot.slane %v948, 1
      %v950 = vadd.f32 %v948, %v949
      %v951 = vmul.f32 %v628, %v628
      %v952 = vmul.f32 %v631, %v631
      %v953 = vmul.f32 %v636, %v636
      %v954 = vmul.f32 %v639, %v639
      %v955 = vmul.f32 %v644, %v644
      %v956 = vmul.f32 %v647, %v647
      %v957 = vmul.f32 %v652, %v652
      %v958 = vmul.f32 %v655, %v655
      %v959 = vmul.f32 %v660, %v660
      %v960 = vmul.f32 %v663, %v663
      %v961 = vmul.f32 %v668, %v668
      %v962 = vmul.f32 %v671, %v671
      %v963 = vmul.f32 %v676, %v676
      %v964 = vmul.f32 %v679, %v679
      %v965 = vmul.f32 %v684, %v684
      %v966 = vmul.f32 %v687, %v687
      %v967 = vmul.f32 %v692, %v692
      %v968 = vmul.f32 %v695, %v695
      %v969 = vmul.f32 %v700, %v700
      %v970 = vmul.f32 %v703, %v703
      %v971 = vmul.f32 %v708, %v708
      %v972 = vmul.f32 %v711, %v711
      %v973 = vmul.f32 %v716, %v716
      %v974 = vmul.f32 %v719, %v719
      %v975 = vmul.f32 %v724, %v724
      %v976 = vmul.f32 %v727, %v727
      %v977 = vmul.f32 %v732, %v732
      %v978 = vmul.f32 %v735, %v735
      %v979 = vmul.f32 %v740, %v740
      %v980 = vmul.f32 %v743, %v743
      %v981 = vmul.f32 %v748, %v748
      %v982 = vmul.f32 %v751, %v751
      %v983 = vadd.f32 %v951, %v952
      %v984 = vadd.f32 %v983, %v953
      %v985 = vadd.f32 %v984, %v954
      %v986 = vadd.f32 %v985, %v955
      %v987 = vadd.f32 %v986, %v956
      %v988 = vadd.f32 %v987, %v957
      %v989 = vadd.f32 %v988, %v958
      %v990 = vadd.f32 %v989, %v959
      %v991 = vadd.f32 %v990, %v960
      %v992 = vadd.f32 %v991, %v961
      %v993 = vadd.f32 %v992, %v962
      %v994 = vadd.f32 %v993, %v963
      %v995 = vadd.f32 %v994, %v964
      %v996 = vadd.f32 %v995, %v965
      %v997 = vadd.f32 %v996, %v966
      %v998 = vadd.f32 %v997, %v967
      %v999 = vadd.f32 %v998, %v968
      %v1000 = vadd.f32 %v999, %v969
      %v1001 = vadd.f32 %v1000, %v970
      %v1002 = vadd.f32 %v1001, %v971
      %v1003 = vadd.f32 %v1002, %v972
      %v1004 = vadd.f32 %v1003, %v973
      %v1005 = vadd.f32 %v1004, %v974
      %v1006 = vadd.f32 %v1005, %v975
      %v1007 = vadd.f32 %v1006, %v976
      %v1008 = vadd.f32 %v1007, %v977
      %v1009 = vadd.f32 %v1008, %v978
      %v1010 = vadd.f32 %v1009, %v979
      %v1011 = vadd.f32 %v1010, %v980
      %v1012 = vadd.f32 %v1011, %v981
      %v1013 = vadd.f32 %v1012, %v982
      %v1014 = vrot.slane %v1013, 4
      %v1015 = vadd.f32 %v1013, %v1014
      %v1016 = vrot.slane %v1015, 2
      %v1017 = vadd.f32 %v1015, %v1016
      %v1018 = vrot.slane %v1017, 1
      %v1019 = vadd.f32 %v1017, %v1018
      %vm1020 = vcmask 1040384
      %v1021 = vsel %vm1020, %v950, %v1019
      %1022 = vst [vmem:[%s271] sm:$0x3] %v1021
      %s1023 = smul.u32 32, %s20
      %p1024 = scmp.lt.s32.totalorder %s1023, 63
      %s1025 = scalar_select %p1024, %s1023, 63
      %p1026 = scmp.lt.s32.totalorder %s21, 0
      %s1027 = scalar_select %p1026, %s21, 0
      %s1028 = sadd.s32 %s1027, %s1025
      %s1029 = smul.addr %s1028, 4
      %s1030 = scalar_lea.vmem %s2, %s1029
      %p1031 = scmp.lt.s32.totalorder %s20, 1
      %s1032 = scalar_select %p1031, %s20, 1
      %p1033 = scmp.lt.s32.totalorder %s21, 0
      %s1034 = scalar_select %p1033, %s21, 0
      %s1035 = sadd.s32 %s1034, %s1032
      %s1036 = smul.addr %s1035, 2
      %s1037 = scalar_lea.vmem %s3, %s1036
      // Predicated region
      $region29: #{_lambda_.33} parent=27 // pred_check
        %p1038 = pneg %p110
      $region30: #{_lambda_.33} parent=27 // pred_check_branch
        %1040 = sbr.rel (%p1038) target = $region32
      $region31: #{_lambda_.33} parent=27 // pred_region
        %s1041 = smul.u32 32, %s20
      $region32: #{_lambda_.33} parent=27 // pred_fallthru
        _
      // Predicated region
      $region33: #{_lambda_.33} parent=27 // pred_check
        %p1042 = pneg %p138
      $region34: #{_lambda_.33} parent=27 // pred_check_branch
        %1044 = sbr.rel (%p1042) target = $region36
      $region35: #{_lambda_.33} parent=27 // pred_region
        _
      $region36: #{_lambda_.33} parent=27 // pred_fallthru
        _
    $region28: #{_lambda_.33} parent=5 // pred_fallthru
      _
    %p1045 = scmp.le.s32.totalorder 2, %s10
    // Predicated region
    $region37: #{_lambda_.33} parent=5 // pred_check
      %p1046 = pneg %p1045
    $region38: #{_lambda_.33} parent=5 // pred_check_branch
      %1048 = sbr.rel (%p1046) target = $region40
    $region39: #{_lambda_.33} parent=5 // pred_region
      %s1049 = ssub.s32 %s10, 2
      // Predicated region
      $region41: #{_lambda_.33} parent=39 // pred_check
        %p1050 = pneg %p116
      $region42: #{_lambda_.33} parent=39 // pred_check_branch
        %1052 = sbr.rel (%p1050) target = $region44
      $region43: #{_lambda_.33} parent=39 // pred_region
        %s1053 = smul.u32 32, %s23
        %p1054 = scmp.lt.s32.totalorder %s1053, 63
        %s1055 = scalar_select %p1054, %s1053, 63
        %p1056 = scmp.lt.s32.totalorder %s24, 0
        %s1057 = scalar_select %p1056, %s24, 0
        %s1058 = sadd.s32 %s1057, %s1055
        %s1059 = smul.addr %s1058, 4
        %s1060 = scalar_lea.vmem %s2, %s1059
      $region44: #{_lambda_.33} parent=39 // pred_fallthru
        _
      // Predicated region
      $region45: #{_lambda_.33} parent=39 // pred_check
        %p1061 = pneg %p144
      $region46: #{_lambda_.33} parent=39 // pred_check_branch
        %1063 = sbr.rel (%p1061) target = $region48
      $region47: #{_lambda_.33} parent=39 // pred_region
        %p1064 = scmp.lt.s32.totalorder %s23, 1
        %s1065 = scalar_select %p1064, %s23, 1
        %p1066 = scmp.lt.s32.totalorder %s24, 0
        %s1067 = scalar_select %p1066, %s24, 0
        %s1068 = sadd.s32 %s1067, %s1065
        %s1069 = smul.addr %s1068, 2
        %s1070 = scalar_lea.vmem %s3, %s1069
      $region48: #{_lambda_.33} parent=39 // pred_fallthru
        _
    $region40: #{_lambda_.33} parent=5 // pred_fallthru
      _
  $region6: #{_lambda_.33} parent=0 // loop_footer
    %s14 = sadd.s32 1, %s10
  $region7: #{_lambda_.33} parent=0 // loop_footer_branch
    %9 = sbr.rel target = $region3
  $region8: #{_lambda_.33} parent=0 // loop_exit
    _

// kernel: _lambda_.37
$region0: #{_lambda_.37}
  #allocation0 [shape = 'u32[]', space=smem, size = 0x4, offset = 0x4, fixed_abs, tag = 'smem constant byte address 0x4 - core index']
  #allocation1 [shape = 'u32[144,128]{1,0:T(1,128)}', space=vmem, size = 0x12000, scoped, tag = 'internal scratch']
  %s0 = inlined_call_operand.vmem [shape: bf16[128,128], index: 0, kind: input, shape index: {}]
  %s1 = inlined_call_operand.vmem [shape: f32[1,128], index: 1, kind: input, shape index: {}]
  %s2 = inlined_call_operand.vmem [shape: f32[1,128], index: 2, kind: input, shape index: {}]
  %s3 = inlined_call_operand.vmem [shape: bf16[128,128], index: 3, kind: output, shape index: {}]
  %s4 = sld [smem:[#allocation0]]
  $region22: #{_lambda_.37} parent=0
    _
  %s6 = ssub.s32 1, %s4
  %s7 = scalar_select 0, %s6, %s4
  // Predicated region
  $region2: #{_lambda_.37} parent=0 // pred_check
    _
  $region3: #{_lambda_.37} parent=0 // pred_check_branch
    %9 = sbr.rel (0) target = $region5
  $region4: #{_lambda_.37} parent=0 // pred_region
    _
  $region5: #{_lambda_.37} parent=0 // pred_fallthru
    _
  // Predicated region
  $region6: #{_lambda_.37} parent=0 // pred_check
    _
  $region7: #{_lambda_.37} parent=0 // pred_check_branch
    %11 = sbr.rel (0) target = $region9
  $region8: #{_lambda_.37} parent=0 // pred_region
    _
  $region9: #{_lambda_.37} parent=0 // pred_fallthru
    _
  // Predicated region
  $region10: #{_lambda_.37} parent=0 // pred_check
    _
  $region11: #{_lambda_.37} parent=0 // pred_check_branch
    %13 = sbr.rel (0) target = $region13
  $region12: #{_lambda_.37} parent=0 // pred_region
    _
  $region13: #{_lambda_.37} parent=0 // pred_fallthru
    _
  %v14 = vld [vmem:[%s0] sm:$0xf]
  %v15 = vld [vmem:[%s0 + $0x4] sm:$0xf]
  %v16 = vld [vmem:[%s0 + $0x8] sm:$0xf]
  %v17 = vld [vmem:[%s0 + $0xc] sm:$0xf]
  %v18 = vld [vmem:[%s0 + $0x10] sm:$0xf]
  %v19 = vld [vmem:[%s0 + $0x14] sm:$0xf]
  %v20 = vld [vmem:[%s0 + $0x18] sm:$0xf]
  %v21 = vld [vmem:[%s0 + $0x1c] sm:$0xf]
  %v22 = vld [vmem:[%s0 + $0x20] sm:$0xf]
  %v23 = vld [vmem:[%s0 + $0x24] sm:$0xf]
  %v24 = vld [vmem:[%s0 + $0x28] sm:$0xf]
  %v25 = vld [vmem:[%s0 + $0x2c] sm:$0xf]
  %v26 = vld [vmem:[%s0 + $0x30] sm:$0xf]
  %v27 = vld [vmem:[%s0 + $0x34] sm:$0xf]
  %v28 = vld [vmem:[%s0 + $0x38] sm:$0xf]
  %v29 = vld [vmem:[%s0 + $0x3c] sm:$0xf]
  %v30 = vunpack.c.l.bf16 %v14
  %v31 = vunpack.c.l.bf16 %v15
  %v32 = vunpack.c.l.bf16 %v16
  %v33 = vunpack.c.l.bf16 %v17
  %v34 = vunpack.c.l.bf16 %v18
  %v35 = vunpack.c.l.bf16 %v19
  %v36 = vunpack.c.l.bf16 %v20
  %v37 = vunpack.c.l.bf16 %v21
  %v38 = vunpack.c.l.bf16 %v22
  %v39 = vunpack.c.l.bf16 %v23
  %v40 = vunpack.c.l.bf16 %v24
  %v41 = vunpack.c.l.bf16 %v25
  %v42 = vunpack.c.l.bf16 %v26
  %v43 = vunpack.c.l.bf16 %v27
  %v44 = vunpack.c.l.bf16 %v28
  %v45 = vunpack.c.l.bf16 %v29
  %v46 = vld [vmem:[%s1] sm:$0x1]
  %v48 = vlaneseq
  %v49 = vshrl.u32 %v48, 7
  %v50 = vsub.s32 0, %v49
  %v51 = vrot.slane %v46, %v50
  %v53 = vmul.f32 %v30, %v51
  %v54 = vmul.f32 %v31, %v51
  %v55 = vmul.f32 %v32, %v51
  %v56 = vmul.f32 %v33, %v51
  %v57 = vmul.f32 %v34, %v51
  %v58 = vmul.f32 %v35, %v51
  %v59 = vmul.f32 %v36, %v51
  %v60 = vmul.f32 %v37, %v51
  %v61 = vmul.f32 %v38, %v51
  %v62 = vmul.f32 %v39, %v51
  %v63 = vmul.f32 %v40, %v51
  %v64 = vmul.f32 %v41, %v51
  %v65 = vmul.f32 %v42, %v51
  %v66 = vmul.f32 %v43, %v51
  %v67 = vmul.f32 %v44, %v51
  %v68 = vmul.f32 %v45, %v51
  %v69 = vld [vmem:[%s2] sm:$0x1]
  %v71 = vlaneseq
  %v72 = vshrl.u32 %v71, 7
  %v73 = vsub.s32 0, %v72
  %v74 = vrot.slane %v69, %v73
  %v76 = vadd.f32 %v53, %v74
  %v77 = vadd.f32 %v54, %v74
  %v78 = vadd.f32 %v55, %v74
  %v79 = vadd.f32 %v56, %v74
  %v80 = vadd.f32 %v57, %v74
  %v81 = vadd.f32 %v58, %v74
  %v82 = vadd.f32 %v59, %v74
  %v83 = vadd.f32 %v60, %v74
  %v84 = vadd.f32 %v61, %v74
  %v85 = vadd.f32 %v62, %v74
  %v86 = vadd.f32 %v63, %v74
  %v87 = vadd.f32 %v64, %v74
  %v88 = vadd.f32 %v65, %v74
  %v89 = vadd.f32 %v66, %v74
  %v90 = vadd.f32 %v67, %v74
  %v91 = vadd.f32 %v68, %v74
  %v92 = vmax.f32 %v76, 0.0
  %v93 = vmax.f32 %v77, 0.0
  %v94 = vmax.f32 %v78, 0.0
  %v95 = vmax.f32 %v79, 0.0
  %v96 = vmax.f32 %v80, 0.0
  %v97 = vmax.f32 %v81, 0.0
  %v98 = vmax.f32 %v82, 0.0
  %v99 = vmax.f32 %v83, 0.0
  %v100 = vmax.f32 %v84, 0.0
  %v101 = vmax.f32 %v85, 0.0
  %v102 = vmax.f32 %v86, 0.0
  %v103 = vmax.f32 %v87, 0.0
  %v104 = vmax.f32 %v88, 0.0
  %v105 = vmax.f32 %v89, 0.0
  %v106 = vmax.f32 %v90, 0.0
  %v107 = vmax.f32 %v91, 0.0
  %v108 = vpack.c.bf16 %v93, %v92
  %v109 = vpack.c.bf16 %v95, %v94
  %v110 = vpack.c.bf16 %v97, %v96
  %v111 = vpack.c.bf16 %v99, %v98
  %v112 = vpack.c.bf16 %v101, %v100
  %v113 = vpack.c.bf16 %v103, %v102
  %v114 = vpack.c.bf16 %v105, %v104
  %v115 = vpack.c.bf16 %v107, %v106
  %v124 = vunpack.c.l.b16 %v108
  %v125 = vunpack.c.h.b16 %v108
  %v126 = vunpack.c.l.b16 %v109
  %v127 = vunpack.c.h.b16 %v109
  %v128 = vunpack.c.l.b16 %v110
  %v129 = vunpack.c.h.b16 %v110
  %v130 = vunpack.c.l.b16 %v111
  %v131 = vunpack.c.h.b16 %v111
  %v132 = vunpack.c.l.b16 %v112
  %v133 = vunpack.c.h.b16 %v112
  %v134 = vunpack.c.l.b16 %v113
  %v135 = vunpack.c.h.b16 %v113
  %v136 = vunpack.c.l.b16 %v114
  %v137 = vunpack.c.h.b16 %v114
  %v138 = vunpack.c.l.b16 %v115
  %v139 = vunpack.c.h.b16 %v115
  %v140 = vpack.c.b16 %v124, %v124
  %v141 = vpack.c.b16 %v125, %v125
  %v142 = vpack.c.b16 %v126, %v126
  %v143 = vpack.c.b16 %v127, %v127
  %v144 = vpack.c.b16 %v128, %v128
  %v145 = vpack.c.b16 %v129, %v129
  %v146 = vpack.c.b16 %v130, %v130
  %v147 = vpack.c.b16 %v131, %v131
  %v148 = vpack.c.b16 %v132, %v132
  %v149 = vpack.c.b16 %v133, %v133
  %v150 = vpack.c.b16 %v134, %v134
  %v151 = vpack.c.b16 %v135, %v135
  %v152 = vpack.c.b16 %v136, %v136
  %v153 = vpack.c.b16 %v137, %v137
  %v154 = vpack.c.b16 %v138, %v138
  %v155 = vpack.c.b16 %v139, %v139
  %172 = vst [vmem:[%s3] sm:$0xf] %v140
  %173 = vst [vmem:[%s3 + $0x4] sm:$0xf] %v141
  %174 = vst [vmem:[%s3 + $0x8] sm:$0xf] %v142
  %175 = vst [vmem:[%s3 + $0xc] sm:$0xf] %v143
  %176 = vst [vmem:[%s3 + $0x10] sm:$0xf] %v144
  %177 = vst [vmem:[%s3 + $0x14] sm:$0xf] %v145
  %178 = vst [vmem:[%s3 + $0x18] sm:$0xf] %v146
  %179 = vst [vmem:[%s3 + $0x1c] sm:$0xf] %v147
  %180 = vst [vmem:[%s3 + $0x20] sm:$0xf] %v148
  %181 = vst [vmem:[%s3 + $0x24] sm:$0xf] %v149
  %182 = vst [vmem:[%s3 + $0x28] sm:$0xf] %v150
  %183 = vst [vmem:[%s3 + $0x2c] sm:$0xf] %v151
  %184 = vst [vmem:[%s3 + $0x30] sm:$0xf] %v152
  %185 = vst [vmem:[%s3 + $0x34] sm:$0xf] %v153
  %186 = vst [vmem:[%s3 + $0x38] sm:$0xf] %v154
  %187 = vst [vmem:[%s3 + $0x3c] sm:$0xf] %v155
  // Predicated region
  $region14: #{_lambda_.37} parent=0 // pred_check
    _
  $region15: #{_lambda_.37} parent=0 // pred_check_branch
    %189 = sbr.rel (0) target = $region17
  $region16: #{_lambda_.37} parent=0 // pred_region
    _
  $region17: #{_lambda_.37} parent=0 // pred_fallthru
    _
  // Predicated region
  $region18: #{_lambda_.37} parent=0 // pred_check
    _
  $region19: #{_lambda_.37} parent=0 // pred_check_branch
    %191 = sbr.rel (0) target = $region21
  $region20: #{_lambda_.37} parent=0 // pred_region
    _
  $region21: #{_lambda_.37} parent=0 // pred_fallthru
    _

// kernel: _lambda_.36
$region0: #{_lambda_.36}
  #allocation0 [shape = 'u32[]', space=smem, size = 0x4, offset = 0x4, fixed_abs, tag = 'smem constant byte address 0x4 - core index']
  #allocation1 [shape = 'u32[144,128]{1,0:T(1,128)}', space=vmem, size = 0x12000, scoped, tag = 'internal scratch']
  %s0 = inlined_call_operand.vmem [shape: bf16[128,128], index: 0, kind: input, shape index: {}]
  %s1 = inlined_call_operand.vmem [shape: bf16[128,128], index: 1, kind: input, shape index: {}]
  %s2 = inlined_call_operand.vmem [shape: bf16[128,128], index: 2, kind: output, shape index: {0}]
  %s3 = inlined_call_operand.vmem [shape: f32[1,2,128], index: 3, kind: output, shape index: {1}]
  %4 = xla_tuple %s2, %s3
  %s5 = sld [smem:[#allocation0]]
  $region26: #{_lambda_.36} parent=0
    _
  %s7 = ssub.s32 1, %s5
  %s8 = scalar_select 0, %s7, %s5
  // Predicated region
  $region2: #{_lambda_.36} parent=0 // pred_check
    _
  $region3: #{_lambda_.36} parent=0 // pred_check_branch
    %10 = sbr.rel (0) target = $region5
  $region4: #{_lambda_.36} parent=0 // pred_region
    _
  $region5: #{_lambda_.36} parent=0 // pred_fallthru
    _
  // Predicated region
  $region6: #{_lambda_.36} parent=0 // pred_check
    _
  $region7: #{_lambda_.36} parent=0 // pred_check_branch
    %12 = sbr.rel (0) target = $region9
  $region8: #{_lambda_.36} parent=0 // pred_region
    _
  $region9: #{_lambda_.36} parent=0 // pred_fallthru
    _
  %v14 = vld [vmem:[%s0] sm:$0xf]
  %v15 = vld [vmem:[%s0 + $0x4] sm:$0xf]
  %v16 = vld [vmem:[%s0 + $0x8] sm:$0xf]
  %v17 = vld [vmem:[%s0 + $0xc] sm:$0xf]
  %v18 = vld [vmem:[%s0 + $0x10] sm:$0xf]
  %v19 = vld [vmem:[%s0 + $0x14] sm:$0xf]
  %v20 = vld [vmem:[%s0 + $0x18] sm:$0xf]
  %v21 = vld [vmem:[%s0 + $0x1c] sm:$0xf]
  %v22 = vld [vmem:[%s0 + $0x20] sm:$0xf]
  %v23 = vld [vmem:[%s0 + $0x24] sm:$0xf]
  %v24 = vld [vmem:[%s0 + $0x28] sm:$0xf]
  %v25 = vld [vmem:[%s0 + $0x2c] sm:$0xf]
  %v26 = vld [vmem:[%s0 + $0x30] sm:$0xf]
  %v27 = vld [vmem:[%s0 + $0x34] sm:$0xf]
  %v28 = vld [vmem:[%s0 + $0x38] sm:$0xf]
  %v29 = vld [vmem:[%s0 + $0x3c] sm:$0xf]
  %v30 = vld [vmem:[%s1] sm:$0xf]
  %v31 = vld [vmem:[%s1 + $0x4] sm:$0xf]
  %v32 = vld [vmem:[%s1 + $0x8] sm:$0xf]
  %v33 = vld [vmem:[%s1 + $0xc] sm:$0xf]
  %v34 = vld [vmem:[%s1 + $0x10] sm:$0xf]
  %v35 = vld [vmem:[%s1 + $0x14] sm:$0xf]
  %v36 = vld [vmem:[%s1 + $0x18] sm:$0xf]
  %v37 = vld [vmem:[%s1 + $0x1c] sm:$0xf]
  %v38 = vld [vmem:[%s1 + $0x20] sm:$0xf]
  %v39 = vld [vmem:[%s1 + $0x24] sm:$0xf]
  %v40 = vld [vmem:[%s1 + $0x28] sm:$0xf]
  %v41 = vld [vmem:[%s1 + $0x2c] sm:$0xf]
  %v42 = vld [vmem:[%s1 + $0x30] sm:$0xf]
  %v43 = vld [vmem:[%s1 + $0x34] sm:$0xf]
  %v44 = vld [vmem:[%s1 + $0x38] sm:$0xf]
  %v45 = vld [vmem:[%s1 + $0x3c] sm:$0xf]
  %v62 = vunpack.c.l.b16 %v14
  %v63 = vunpack.c.l.b16 %v15
  %v64 = vunpack.c.l.b16 %v16
  %v65 = vunpack.c.l.b16 %v17
  %v66 = vunpack.c.l.b16 %v18
  %v67 = vunpack.c.l.b16 %v19
  %v68 = vunpack.c.l.b16 %v20
  %v69 = vunpack.c.l.b16 %v21
  %v70 = vunpack.c.l.b16 %v22
  %v71 = vunpack.c.l.b16 %v23
  %v72 = vunpack.c.l.b16 %v24
  %v73 = vunpack.c.l.b16 %v25
  %v74 = vunpack.c.l.b16 %v26
  %v75 = vunpack.c.l.b16 %v27
  %v76 = vunpack.c.l.b16 %v28
  %v77 = vunpack.c.l.b16 %v29
  %v78 = vpack.c.b16 %v63, %v62
  %v79 = vpack.c.b16 %v65, %v64
  %v80 = vpack.c.b16 %v67, %v66
  %v81 = vpack.c.b16 %v69, %v68
  %v82 = vpack.c.b16 %v71, %v70
  %v83 = vpack.c.b16 %v73, %v72
  %v84 = vpack.c.b16 %v75, %v74
  %v85 = vpack.c.b16 %v77, %v76
  %v110 = vunpack.c.l.b16 %v30
  %v111 = vunpack.c.l.b16 %v31
  %v112 = vunpack.c.l.b16 %v32
  %v113 = vunpack.c.l.b16 %v33
  %v114 = vunpack.c.l.b16 %v34
  %v115 = vunpack.c.l.b16 %v35
  %v116 = vunpack.c.l.b16 %v36
  %v117 = vunpack.c.l.b16 %v37
  %v118 = vunpack.c.l.b16 %v38
  %v119 = vunpack.c.l.b16 %v39
  %v120 = vunpack.c.l.b16 %v40
  %v121 = vunpack.c.l.b16 %v41
  %v122 = vunpack.c.l.b16 %v42
  %v123 = vunpack.c.l.b16 %v43
  %v124 = vunpack.c.l.b16 %v44
  %v125 = vunpack.c.l.b16 %v45
  %v126 = vpack.c.b16 %v111, %v110
  %v127 = vpack.c.b16 %v113, %v112
  %v128 = vpack.c.b16 %v115, %v114
  %v129 = vpack.c.b16 %v117, %v116
  %v130 = vpack.c.b16 %v119, %v118
  %v131 = vpack.c.b16 %v121, %v120
  %v132 = vpack.c.b16 %v123, %v122
  %v133 = vpack.c.b16 %v125, %v124
  %142 = vmatprep.subr.bf16.mxu0 0
  %143 = vmatpush1.bf16.msra.mxu0 %v126
  %144 = vmatprep.subr.bf16.mxu0 0
  %145 = vmatpush1.bf16.msra.mxu0 %v127
  %146 = vmatprep.subr.bf16.mxu0 0
  %147 = vmatpush1.bf16.msra.mxu0 %v128
  %148 = vmatprep.subr.bf16.mxu0 0
  %149 = vmatpush1.bf16.msra.mxu0 %v129
  %150 = vmatprep.subr.bf16.mxu0 0
  %151 = vmatpush1.bf16.msra.mxu0 %v130
  %152 = vmatprep.subr.bf16.mxu0 0
  %153 = vmatpush1.bf16.msra.mxu0 %v131
  %154 = vmatprep.subr.bf16.mxu0 0
  %155 = vmatpush1.bf16.msra.mxu0 %v132
  %156 = vmatprep.subr.bf16.mxu0 0
  %157 = vmatpush1.bf16.msra.mxu0 %v133
  %158 = vmatprep.subr.bf16.mxu0 0
  %159 = vmatpush1.bf16.msra.mxu0 0
  %160 = vmatprep.subr.bf16.mxu0 0
  %161 = vmatpush1.bf16.msra.mxu0 0
  %162 = vmatprep.subr.bf16.mxu0 0
  %163 = vmatpush1.bf16.msra.mxu0 0
  %164 = vmatprep.subr.bf16.mxu0 0
  %165 = vmatpush1.bf16.msra.mxu0 0
  %166 = vmatprep.subr.bf16.mxu0 0
  %167 = vmatpush1.bf16.msra.mxu0 0
  %168 = vmatprep.subr.bf16.mxu0 0
  %169 = vmatpush1.bf16.msra.mxu0 0
  %170 = vmatprep.subr.bf16.mxu0 0
  %171 = vmatpush1.bf16.msra.mxu0 0
  %172 = vmatprep.subr.bf16.mxu0 0
  %173 = vmatpush1.bf16.msra.mxu0 0
  %174 = vmatprep.mubr.bf16.mxu0 0
  %175 = vmatmul.mubr.bf16.gmra.mrb[0].mxu0 %v78
  %v176 = vpop.f32.mrb[0].mxu0
  %v177 = vadd.f32 0.0, %v176
  %v178 = vpop.f32.mrb[0].mxu0
  %v179 = vpop.f32.mrb[0].mxu0
  %v180 = vadd.f32 0.0, %v179
  %v181 = vpop.f32.mrb[0].mxu0
  %182 = vmatprep.mubr.bf16.mxu0 0
  %183 = vmatmul.mubr.bf16.gmra.mrb[0].mxu0 %v79
  %v184 = vpop.f32.mrb[0].mxu0
  %v185 = vadd.f32 0.0, %v184
  %v186 = vpop.f32.mrb[0].mxu0
  %v187 = vpop.f32.mrb[0].mxu0
  %v188 = vadd.f32 0.0, %v187
  %v189 = vpop.f32.mrb[0].mxu0
  %190 = vmatprep.mubr.bf16.mxu0 0
  %191 = vmatmul.mubr.bf16.gmra.mrb[0].mxu0 %v80
  %v192 = vpop.f32.mrb[0].mxu0
  %v193 = vadd.f32 0.0, %v192
  %v194 = vpop.f32.mrb[0].mxu0
  %v195 = vpop.f32.mrb[0].mxu0
  %v196 = vadd.f32 0.0, %v195
  %v197 = vpop.f32.mrb[0].mxu0
  %198 = vmatprep.mubr.bf16.mxu0 0
  %199 = vmatmul.mubr.bf16.gmra.mrb[0].mxu0 %v81
  %v200 = vpop.f32.mrb[0].mxu0
  %v201 = vadd.f32 0.0, %v200
  %v202 = vpop.f32.mrb[0].mxu0
  %v203 = vpop.f32.mrb[0].mxu0
  %v204 = vadd.f32 0.0, %v203
  %v205 = vpop.f32.mrb[0].mxu0
  %206 = vmatprep.mubr.bf16.mxu0 0
  %207 = vmatmul.mubr.bf16.gmra.mrb[0].mxu0 %v82
  %v208 = vpop.f32.mrb[0].mxu0
  %v209 = vadd.f32 0.0, %v208
  %v210 = vpop.f32.mrb[0].mxu0
  %v211 = vpop.f32.mrb[0].mxu0
  %v212 = vadd.f32 0.0, %v211
  %v213 = vpop.f32.mrb[0].mxu0
  %214 = vmatprep.mubr.bf16.mxu0 0
  %215 = vmatmul.mubr.bf16.gmra.mrb[0].mxu0 %v83
  %v216 = vpop.f32.mrb[0].mxu0
  %v217 = vadd.f32 0.0, %v216
  %v218 = vpop.f32.mrb[0].mxu0
  %v219 = vpop.f32.mrb[0].mxu0
  %v220 = vadd.f32 0.0, %v219
  %v221 = vpop.f32.mrb[0].mxu0
  %222 = vmatprep.mubr.bf16.mxu0 0
  %223 = vmatmul.mubr.bf16.gmra.mrb[0].mxu0 %v84
  %v224 = vpop.f32.mrb[0].mxu0
  %v225 = vadd.f32 0.0, %v224
  %v226 = vpop.f32.mrb[0].mxu0
  %v227 = vpop.f32.mrb[0].mxu0
  %v228 = vadd.f32 0.0, %v227
  %v229 = vpop.f32.mrb[0].mxu0
  %230 = vmatprep.mubr.bf16.mxu0 0
  %231 = vmatmul.mubr.bf16.gmra.mrb[0].mxu0 %v85
  %v232 = vpop.f32.mrb[0].mxu0
  %v233 = vadd.f32 0.0, %v232
  %v234 = vpop.f32.mrb[0].mxu0
  %v235 = vpop.f32.mrb[0].mxu0
  %v236 = vadd.f32 0.0, %v235
  %v237 = vpop.f32.mrb[0].mxu0
  %238 = vdwg.mxu0
  %v239 = vpack.c.bf16 %v180, %v177
  %v240 = vpack.c.bf16 %v188, %v185
  %v241 = vpack.c.bf16 %v196, %v193
  %v242 = vpack.c.bf16 %v204, %v201
  %v243 = vpack.c.bf16 %v212, %v209
  %v244 = vpack.c.bf16 %v220, %v217
  %v245 = vpack.c.bf16 %v228, %v225
  %v246 = vpack.c.bf16 %v236, %v233
  %v255 = vunpack.c.l.b16 %v239
  %v256 = vunpack.c.h.b16 %v239
  %v257 = vunpack.c.l.b16 %v240
  %v258 = vunpack.c.h.b16 %v240
  %v259 = vunpack.c.l.b16 %v241
  %v260 = vunpack.c.h.b16 %v241
  %v261 = vunpack.c.l.b16 %v242
  %v262 = vunpack.c.h.b16 %v242
  %v263 = vunpack.c.l.b16 %v243
  %v264 = vunpack.c.h.b16 %v243
  %v265 = vunpack.c.l.b16 %v244
  %v266 = vunpack.c.h.b16 %v244
  %v267 = vunpack.c.l.b16 %v245
  %v268 = vunpack.c.h.b16 %v245
  %v269 = vunpack.c.l.b16 %v246
  %v270 = vunpack.c.h.b16 %v246
  %v271 = vpack.c.b16 %v255, %v255
  %v272 = vpack.c.b16 %v256, %v256
  %v273 = vpack.c.b16 %v257, %v257
  %v274 = vpack.c.b16 %v258, %v258
  %v275 = vpack.c.b16 %v259, %v259
  %v276 = vpack.c.b16 %v260, %v260
  %v277 = vpack.c.b16 %v261, %v261
  %v278 = vpack.c.b16 %v262, %v262
  %v279 = vpack.c.b16 %v263, %v263
  %v280 = vpack.c.b16 %v264, %v264
  %v281 = vpack.c.b16 %v265, %v265
  %v282 = vpack.c.b16 %v266, %v266
  %v283 = vpack.c.b16 %v267, %v267
  %v284 = vpack.c.b16 %v268, %v268
  %v285 = vpack.c.b16 %v269, %v269
  %v286 = vpack.c.b16 %v270, %v270
  %303 = vst [vmem:[%s2] sm:$0xf] %v271
  %304 = vst [vmem:[%s2 + $0x4] sm:$0xf] %v272
  %305 = vst [vmem:[%s2 + $0x8] sm:$0xf] %v273
  %306 = vst [vmem:[%s2 + $0xc] sm:$0xf] %v274
  %307 = vst [vmem:[%s2 + $0x10] sm:$0xf] %v275
  %308 = vst [vmem:[%s2 + $0x14] sm:$0xf] %v276
  %309 = vst [vmem:[%s2 + $0x18] sm:$0xf] %v277
  %310 = vst [vmem:[%s2 + $0x1c] sm:$0xf] %v278
  %311 = vst [vmem:[%s2 + $0x20] sm:$0xf] %v279
  %312 = vst [vmem:[%s2 + $0x24] sm:$0xf] %v280
  %313 = vst [vmem:[%s2 + $0x28] sm:$0xf] %v281
  %314 = vst [vmem:[%s2 + $0x2c] sm:$0xf] %v282
  %315 = vst [vmem:[%s2 + $0x30] sm:$0xf] %v283
  %316 = vst [vmem:[%s2 + $0x34] sm:$0xf] %v284
  %317 = vst [vmem:[%s2 + $0x38] sm:$0xf] %v285
  %318 = vst [vmem:[%s2 + $0x3c] sm:$0xf] %v286
  %v319 = vadd.f32 %v177, %v180
  %v320 = vadd.f32 %v319, %v185
  %v321 = vadd.f32 %v320, %v188
  %v322 = vadd.f32 %v321, %v193
  %v323 = vadd.f32 %v322, %v196
  %v324 = vadd.f32 %v323, %v201
  %v325 = vadd.f32 %v324, %v204
  %v326 = vadd.f32 %v325, %v209
  %v327 = vadd.f32 %v326, %v212
  %v328 = vadd.f32 %v327, %v217
  %v329 = vadd.f32 %v328, %v220
  %v330 = vadd.f32 %v329, %v225
  %v331 = vadd.f32 %v330, %v228
  %v332 = vadd.f32 %v331, %v233
  %v333 = vadd.f32 %v332, %v236
  %v334 = vrot.slane %v333, 4
  %v335 = vadd.f32 %v333, %v334
  %v336 = vrot.slane %v335, 2
  %v337 = vadd.f32 %v335, %v336
  %v338 = vrot.slane %v337, 1
  %v339 = vadd.f32 %v337, %v338
  %v340 = vmul.f32 %v177, %v177
  %v341 = vmul.f32 %v180, %v180
  %v342 = vmul.f32 %v185, %v185
  %v343 = vmul.f32 %v188, %v188
  %v344 = vmul.f32 %v193, %v193
  %v345 = vmul.f32 %v196, %v196
  %v346 = vmul.f32 %v201, %v201
  %v347 = vmul.f32 %v204, %v204
  %v348 = vmul.f32 %v209, %v209
  %v349 = vmul.f32 %v212, %v212
  %v350 = vmul.f32 %v217, %v217
  %v351 = vmul.f32 %v220, %v220
  %v352 = vmul.f32 %v225, %v225
  %v353 = vmul.f32 %v228, %v228
  %v354 = vmul.f32 %v233, %v233
  %v355 = vmul.f32 %v236, %v236
  %v356 = vadd.f32 %v340, %v341
  %v357 = vadd.f32 %v356, %v342
  %v358 = vadd.f32 %v357, %v343
  %v359 = vadd.f32 %v358, %v344
  %v360 = vadd.f32 %v359, %v345
  %v361 = vadd.f32 %v360, %v346
  %v362 = vadd.f32 %v361, %v347
  %v363 = vadd.f32 %v362, %v348
  %v364 = vadd.f32 %v363, %v349
  %v365 = vadd.f32 %v364, %v350
  %v366 = vadd.f32 %v365, %v351
  %v367 = vadd.f32 %v366, %v352
  %v368 = vadd.f32 %v367, %v353
  %v369 = vadd.f32 %v368, %v354
  %v370 = vadd.f32 %v369, %v355
  %v371 = vrot.slane %v370, 4
  %v372 = vadd.f32 %v370, %v371
  %v373 = vrot.slane %v372, 2
  %v374 = vadd.f32 %v372, %v373
  %v375 = vrot.slane %v374, 1
  %v376 = vadd.f32 %v374, %v375
  %vm377 = vcmask 1040384
  %v378 = vsel %vm377, %v339, %v376
  %379 = vst [vmem:[%s3] sm:$0x3] %v378
  // Predicated region
  $region10: #{_lambda_.36} parent=0 // pred_check
    _
  $region11: #{_lambda_.36} parent=0 // pred_check_branch
    %381 = sbr.rel (0) target = $region13
  $region12: #{_lambda_.36} parent=0 // pred_region
    _
  $region13: #{_lambda_.36} parent=0 // pred_fallthru
    _
  // Predicated region
  $region14: #{_lambda_.36} parent=0 // pred_check
    _
  $region15: #{_lambda_.36} parent=0 // pred_check_branch
    %383 = sbr.rel (0) target = $region17
  $region16: #{_lambda_.36} parent=0 // pred_region
    _
  $region17: #{_lambda_.36} parent=0 // pred_fallthru
    _
  // Predicated region
  $region18: #{_lambda_.36} parent=0 // pred_check
    _
  $region19: #{_lambda_.36} parent=0 // pred_check_branch
    %385 = sbr.rel (0) target = $region21
  $region20: #{_lambda_.36} parent=0 // pred_region
    _
  $region21: #{_lambda_.36} parent=0 // pred_fallthru
    _
  // Predicated region
  $region22: #{_lambda_.36} parent=0 // pred_check
    _
  $region23: #{_lambda_.36} parent=0 // pred_check_branch
    %387 = sbr.rel (0) target = $region25
  $region24: #{_lambda_.36} parent=0 // pred_region
    _
  $region25: #{_lambda_.36} parent=0 // pred_fallthru
    _

// kernel: _lambda_.35
$region0: #{_lambda_.35}
  #allocation0 [shape = 'u32[]', space=smem, size = 0x4, offset = 0x4, fixed_abs, tag = 'smem constant byte address 0x4 - core index']
  #allocation1 [shape = 'u32[144,128]{1,0:T(1,128)}', space=vmem, size = 0x12000, scoped, tag = 'internal scratch']
  %s0 = inlined_call_operand.vmem [shape: bf16[9,128,128], index: 0, kind: input, shape index: {}]
  %s1 = inlined_call_operand.vmem [shape: bf16[128,128], index: 1, kind: output, shape index: {}]
  %s2 = sld [smem:[#allocation0]]
  $region14: #{_lambda_.35} parent=0
    _
  %s4 = ssub.s32 1, %s2
  %s5 = scalar_select 0, %s4, %s2
  // Predicated region
  $region2: #{_lambda_.35} parent=0 // pred_check
    _
  $region3: #{_lambda_.35} parent=0 // pred_check_branch
    %7 = sbr.rel (0) target = $region5
  $region4: #{_lambda_.35} parent=0 // pred_region
    _
  $region5: #{_lambda_.35} parent=0 // pred_fallthru
    _
  %v8 = vld [vmem:[%s0] sm:$0xf]
  %v9 = vld [vmem:[%s0 + $0x4] sm:$0xf]
  %v10 = vld [vmem:[%s0 + $0x8] sm:$0xf]
  %v11 = vld [vmem:[%s0 + $0xc] sm:$0xf]
  %v12 = vld [vmem:[%s0 + $0x10] sm:$0xf]
  %v13 = vld [vmem:[%s0 + $0x14] sm:$0xf]
  %v14 = vld [vmem:[%s0 + $0x18] sm:$0xf]
  %v15 = vld [vmem:[%s0 + $0x1c] sm:$0xf]
  %v16 = vld [vmem:[%s0 + $0x20] sm:$0xf]
  %v17 = vld [vmem:[%s0 + $0x24] sm:$0xf]
  %v18 = vld [vmem:[%s0 + $0x28] sm:$0xf]
  %v19 = vld [vmem:[%s0 + $0x2c] sm:$0xf]
  %v20 = vld [vmem:[%s0 + $0x30] sm:$0xf]
  %v21 = vld [vmem:[%s0 + $0x34] sm:$0xf]
  %v22 = vld [vmem:[%s0 + $0x38] sm:$0xf]
  %v23 = vld [vmem:[%s0 + $0x3c] sm:$0xf]
  %s24 = scalar_lea.vmem %s0, 64
  %v25 = vld [vmem:[%s24] sm:$0xf]
  %v26 = vld [vmem:[%s24 + $0x4] sm:$0xf]
  %v27 = vld [vmem:[%s24 + $0x8] sm:$0xf]
  %v28 = vld [vmem:[%s24 + $0xc] sm:$0xf]
  %v29 = vld [vmem:[%s24 + $0x10] sm:$0xf]
  %v30 = vld [vmem:[%s24 + $0x14] sm:$0xf]
  %v31 = vld [vmem:[%s24 + $0x18] sm:$0xf]
  %v32 = vld [vmem:[%s24 + $0x1c] sm:$0xf]
  %v33 = vld [vmem:[%s24 + $0x20] sm:$0xf]
  %v34 = vld [vmem:[%s24 + $0x24] sm:$0xf]
  %v35 = vld [vmem:[%s24 + $0x28] sm:$0xf]
  %v36 = vld [vmem:[%s24 + $0x2c] sm:$0xf]
  %v37 = vld [vmem:[%s24 + $0x30] sm:$0xf]
  %v38 = vld [vmem:[%s24 + $0x34] sm:$0xf]
  %v39 = vld [vmem:[%s24 + $0x38] sm:$0xf]
  %v40 = vld [vmem:[%s24 + $0x3c] sm:$0xf]
  %v41 = vmax.bf16 %v8, %v25
  %v42 = vmax.bf16 %v9, %v26
  %v43 = vmax.bf16 %v10, %v27
  %v44 = vmax.bf16 %v11, %v28
  %v45 = vmax.bf16 %v12, %v29
  %v46 = vmax.bf16 %v13, %v30
  %v47 = vmax.bf16 %v14, %v31
  %v48 = vmax.bf16 %v15, %v32
  %v49 = vmax.bf16 %v16, %v33
  %v50 = vmax.bf16 %v17, %v34
  %v51 = vmax.bf16 %v18, %v35
  %v52 = vmax.bf16 %v19, %v36
  %v53 = vmax.bf16 %v20, %v37
  %v54 = vmax.bf16 %v21, %v38
  %v55 = vmax.bf16 %v22, %v39
  %v56 = vmax.bf16 %v23, %v40
  %s57 = scalar_lea.vmem %s0, 128
  %v58 = vld [vmem:[%s57] sm:$0xf]
  %v59 = vld [vmem:[%s57 + $0x4] sm:$0xf]
  %v60 = vld [vmem:[%s57 + $0x8] sm:$0xf]
  %v61 = vld [vmem:[%s57 + $0xc] sm:$0xf]
  %v62 = vld [vmem:[%s57 + $0x10] sm:$0xf]
  %v63 = vld [vmem:[%s57 + $0x14] sm:$0xf]
  %v64 = vld [vmem:[%s57 + $0x18] sm:$0xf]
  %v65 = vld [vmem:[%s57 + $0x1c] sm:$0xf]
  %v66 = vld [vmem:[%s57 + $0x20] sm:$0xf]
  %v67 = vld [vmem:[%s57 + $0x24] sm:$0xf]
  %v68 = vld [vmem:[%s57 + $0x28] sm:$0xf]
  %v69 = vld [vmem:[%s57 + $0x2c] sm:$0xf]
  %v70 = vld [vmem:[%s57 + $0x30] sm:$0xf]
  %v71 = vld [vmem:[%s57 + $0x34] sm:$0xf]
  %v72 = vld [vmem:[%s57 + $0x38] sm:$0xf]
  %v73 = vld [vmem:[%s57 + $0x3c] sm:$0xf]
  %v74 = vmax.bf16 %v41, %v58
  %v75 = vmax.bf16 %v42, %v59
  %v76 = vmax.bf16 %v43, %v60
  %v77 = vmax.bf16 %v44, %v61
  %v78 = vmax.bf16 %v45, %v62
  %v79 = vmax.bf16 %v46, %v63
  %v80 = vmax.bf16 %v47, %v64
  %v81 = vmax.bf16 %v48, %v65
  %v82 = vmax.bf16 %v49, %v66
  %v83 = vmax.bf16 %v50, %v67
  %v84 = vmax.bf16 %v51, %v68
  %v85 = vmax.bf16 %v52, %v69
  %v86 = vmax.bf16 %v53, %v70
  %v87 = vmax.bf16 %v54, %v71
  %v88 = vmax.bf16 %v55, %v72
  %v89 = vmax.bf16 %v56, %v73
  %s90 = scalar_lea.vmem %s0, 192
  %v91 = vld [vmem:[%s90] sm:$0xf]
  %v92 = vld [vmem:[%s90 + $0x4] sm:$0xf]
  %v93 = vld [vmem:[%s90 + $0x8] sm:$0xf]
  %v94 = vld [vmem:[%s90 + $0xc] sm:$0xf]
  %v95 = vld [vmem:[%s90 + $0x10] sm:$0xf]
  %v96 = vld [vmem:[%s90 + $0x14] sm:$0xf]
  %v97 = vld [vmem:[%s90 + $0x18] sm:$0xf]
  %v98 = vld [vmem:[%s90 + $0x1c] sm:$0xf]
  %v99 = vld [vmem:[%s90 + $0x20] sm:$0xf]
  %v100 = vld [vmem:[%s90 + $0x24] sm:$0xf]
  %v101 = vld [vmem:[%s90 + $0x28] sm:$0xf]
  %v102 = vld [vmem:[%s90 + $0x2c] sm:$0xf]
  %v103 = vld [vmem:[%s90 + $0x30] sm:$0xf]
  %v104 = vld [vmem:[%s90 + $0x34] sm:$0xf]
  %v105 = vld [vmem:[%s90 + $0x38] sm:$0xf]
  %v106 = vld [vmem:[%s90 + $0x3c] sm:$0xf]
  %v107 = vmax.bf16 %v74, %v91
  %v108 = vmax.bf16 %v75, %v92
  %v109 = vmax.bf16 %v76, %v93
  %v110 = vmax.bf16 %v77, %v94
  %v111 = vmax.bf16 %v78, %v95
  %v112 = vmax.bf16 %v79, %v96
  %v113 = vmax.bf16 %v80, %v97
  %v114 = vmax.bf16 %v81, %v98
  %v115 = vmax.bf16 %v82, %v99
  %v116 = vmax.bf16 %v83, %v100
  %v117 = vmax.bf16 %v84, %v101
  %v118 = vmax.bf16 %v85, %v102
  %v119 = vmax.bf16 %v86, %v103
  %v120 = vmax.bf16 %v87, %v104
  %v121 = vmax.bf16 %v88, %v105
  %v122 = vmax.bf16 %v89, %v106
  %s123 = scalar_lea.vmem %s0, 256
  %v124 = vld [vmem:[%s123] sm:$0xf]
  %v125 = vld [vmem:[%s123 + $0x4] sm:$0xf]
  %v126 = vld [vmem:[%s123 + $0x8] sm:$0xf]
  %v127 = vld [vmem:[%s123 + $0xc] sm:$0xf]
  %v128 = vld [vmem:[%s123 + $0x10] sm:$0xf]
  %v129 = vld [vmem:[%s123 + $0x14] sm:$0xf]
  %v130 = vld [vmem:[%s123 + $0x18] sm:$0xf]
  %v131 = vld [vmem:[%s123 + $0x1c] sm:$0xf]
  %v132 = vld [vmem:[%s123 + $0x20] sm:$0xf]
  %v133 = vld [vmem:[%s123 + $0x24] sm:$0xf]
  %v134 = vld [vmem:[%s123 + $0x28] sm:$0xf]
  %v135 = vld [vmem:[%s123 + $0x2c] sm:$0xf]
  %v136 = vld [vmem:[%s123 + $0x30] sm:$0xf]
  %v137 = vld [vmem:[%s123 + $0x34] sm:$0xf]
  %v138 = vld [vmem:[%s123 + $0x38] sm:$0xf]
  %v139 = vld [vmem:[%s123 + $0x3c] sm:$0xf]
  %v140 = vmax.bf16 %v107, %v124
  %v141 = vmax.bf16 %v108, %v125
  %v142 = vmax.bf16 %v109, %v126
  %v143 = vmax.bf16 %v110, %v127
  %v144 = vmax.bf16 %v111, %v128
  %v145 = vmax.bf16 %v112, %v129
  %v146 = vmax.bf16 %v113, %v130
  %v147 = vmax.bf16 %v114, %v131
  %v148 = vmax.bf16 %v115, %v132
  %v149 = vmax.bf16 %v116, %v133
  %v150 = vmax.bf16 %v117, %v134
  %v151 = vmax.bf16 %v118, %v135
  %v152 = vmax.bf16 %v119, %v136
  %v153 = vmax.bf16 %v120, %v137
  %v154 = vmax.bf16 %v121, %v138
  %v155 = vmax.bf16 %v122, %v139
  %s156 = scalar_lea.vmem %s0, 320
  %v157 = vld [vmem:[%s156] sm:$0xf]
  %v158 = vld [vmem:[%s156 + $0x4] sm:$0xf]
  %v159 = vld [vmem:[%s156 + $0x8] sm:$0xf]
  %v160 = vld [vmem:[%s156 + $0xc] sm:$0xf]
  %v161 = vld [vmem:[%s156 + $0x10] sm:$0xf]
  %v162 = vld [vmem:[%s156 + $0x14] sm:$0xf]
  %v163 = vld [vmem:[%s156 + $0x18] sm:$0xf]
  %v164 = vld [vmem:[%s156 + $0x1c] sm:$0xf]
  %v165 = vld [vmem:[%s156 + $0x20] sm:$0xf]
  %v166 = vld [vmem:[%s156 + $0x24] sm:$0xf]
  %v167 = vld [vmem:[%s156 + $0x28] sm:$0xf]
  %v168 = vld [vmem:[%s156 + $0x2c] sm:$0xf]
  %v169 = vld [vmem:[%s156 + $0x30] sm:$0xf]
  %v170 = vld [vmem:[%s156 + $0x34] sm:$0xf]
  %v171 = vld [vmem:[%s156 + $0x38] sm:$0xf]
  %v172 = vld [vmem:[%s156 + $0x3c] sm:$0xf]
  %v173 = vmax.bf16 %v140, %v157
  %v174 = vmax.bf16 %v141, %v158
  %v175 = vmax.bf16 %v142, %v159
  %v176 = vmax.bf16 %v143, %v160
  %v177 = vmax.bf16 %v144, %v161
  %v178 = vmax.bf16 %v145, %v162
  %v179 = vmax.bf16 %v146, %v163
  %v180 = vmax.bf16 %v147, %v164
  %v181 = vmax.bf16 %v148, %v165
  %v182 = vmax.bf16 %v149, %v166
  %v183 = vmax.bf16 %v150, %v167
  %v184 = vmax.bf16 %v151, %v168
  %v185 = vmax.bf16 %v152, %v169
  %v186 = vmax.bf16 %v153, %v170
  %v187 = vmax.bf16 %v154, %v171
  %v188 = vmax.bf16 %v155, %v172
  %s189 = scalar_lea.vmem %s0, 384
  %v190 = vld [vmem:[%s189] sm:$0xf]
  %v191 = vld [vmem:[%s189 + $0x4] sm:$0xf]
  %v192 = vld [vmem:[%s189 + $0x8] sm:$0xf]
  %v193 = vld [vmem:[%s189 + $0xc] sm:$0xf]
  %v194 = vld [vmem:[%s189 + $0x10] sm:$0xf]
  %v195 = vld [vmem:[%s189 + $0x14] sm:$0xf]
  %v196 = vld [vmem:[%s189 + $0x18] sm:$0xf]
  %v197 = vld [vmem:[%s189 + $0x1c] sm:$0xf]
  %v198 = vld [vmem:[%s189 + $0x20] sm:$0xf]
  %v199 = vld [vmem:[%s189 + $0x24] sm:$0xf]
  %v200 = vld [vmem:[%s189 + $0x28] sm:$0xf]
  %v201 = vld [vmem:[%s189 + $0x2c] sm:$0xf]
  %v202 = vld [vmem:[%s189 + $0x30] sm:$0xf]
  %v203 = vld [vmem:[%s189 + $0x34] sm:$0xf]
  %v204 = vld [vmem:[%s189 + $0x38] sm:$0xf]
  %v205 = vld [vmem:[%s189 + $0x3c] sm:$0xf]
  %v206 = vmax.bf16 %v173, %v190
  %v207 = vmax.bf16 %v174, %v191
  %v208 = vmax.bf16 %v175, %v192
  %v209 = vmax.bf16 %v176, %v193
  %v210 = vmax.bf16 %v177, %v194
  %v211 = vmax.bf16 %v178, %v195
  %v212 = vmax.bf16 %v179, %v196
  %v213 = vmax.bf16 %v180, %v197
  %v214 = vmax.bf16 %v181, %v198
  %v215 = vmax.bf16 %v182, %v199
  %v216 = vmax.bf16 %v183, %v200
  %v217 = vmax.bf16 %v184, %v201
  %v218 = vmax.bf16 %v185, %v202
  %v219 = vmax.bf16 %v186, %v203
  %v220 = vmax.bf16 %v187, %v204
  %v221 = vmax.bf16 %v188, %v205
  %s222 = scalar_lea.vmem %s0, 448
  %v223 = vld [vmem:[%s222] sm:$0xf]
  %v224 = vld [vmem:[%s222 + $0x4] sm:$0xf]
  %v225 = vld [vmem:[%s222 + $0x8] sm:$0xf]
  %v226 = vld [vmem:[%s222 + $0xc] sm:$0xf]
  %v227 = vld [vmem:[%s222 + $0x10] sm:$0xf]
  %v228 = vld [vmem:[%s222 + $0x14] sm:$0xf]
  %v229 = vld [vmem:[%s222 + $0x18] sm:$0xf]
  %v230 = vld [vmem:[%s222 + $0x1c] sm:$0xf]
  %v231 = vld [vmem:[%s222 + $0x20] sm:$0xf]
  %v232 = vld [vmem:[%s222 + $0x24] sm:$0xf]
  %v233 = vld [vmem:[%s222 + $0x28] sm:$0xf]
  %v234 = vld [vmem:[%s222 + $0x2c] sm:$0xf]
  %v235 = vld [vmem:[%s222 + $0x30] sm:$0xf]
  %v236 = vld [vmem:[%s222 + $0x34] sm:$0xf]
  %v237 = vld [vmem:[%s222 + $0x38] sm:$0xf]
  %v238 = vld [vmem:[%s222 + $0x3c] sm:$0xf]
  %v239 = vmax.bf16 %v206, %v223
  %v240 = vmax.bf16 %v207, %v224
  %v241 = vmax.bf16 %v208, %v225
  %v242 = vmax.bf16 %v209, %v226
  %v243 = vmax.bf16 %v210, %v227
  %v244 = vmax.bf16 %v211, %v228
  %v245 = vmax.bf16 %v212, %v229
  %v246 = vmax.bf16 %v213, %v230
  %v247 = vmax.bf16 %v214, %v231
  %v248 = vmax.bf16 %v215, %v232
  %v249 = vmax.bf16 %v216, %v233
  %v250 = vmax.bf16 %v217, %v234
  %v251 = vmax.bf16 %v218, %v235
  %v252 = vmax.bf16 %v219, %v236
  %v253 = vmax.bf16 %v220, %v237
  %v254 = vmax.bf16 %v221, %v238
  %s255 = scalar_lea.vmem %s0, 512
  %v256 = vld [vmem:[%s255] sm:$0xf]
  %v257 = vld [vmem:[%s255 + $0x4] sm:$0xf]
  %v258 = vld [vmem:[%s255 + $0x8] sm:$0xf]
  %v259 = vld [vmem:[%s255 + $0xc] sm:$0xf]
  %v260 = vld [vmem:[%s255 + $0x10] sm:$0xf]
  %v261 = vld [vmem:[%s255 + $0x14] sm:$0xf]
  %v262 = vld [vmem:[%s255 + $0x18] sm:$0xf]
  %v263 = vld [vmem:[%s255 + $0x1c] sm:$0xf]
  %v264 = vld [vmem:[%s255 + $0x20] sm:$0xf]
  %v265 = vld [vmem:[%s255 + $0x24] sm:$0xf]
  %v266 = vld [vmem:[%s255 + $0x28] sm:$0xf]
  %v267 = vld [vmem:[%s255 + $0x2c] sm:$0xf]
  %v268 = vld [vmem:[%s255 + $0x30] sm:$0xf]
  %v269 = vld [vmem:[%s255 + $0x34] sm:$0xf]
  %v270 = vld [vmem:[%s255 + $0x38] sm:$0xf]
  %v271 = vld [vmem:[%s255 + $0x3c] sm:$0xf]
  %v272 = vmax.bf16 %v239, %v256
  %v273 = vmax.bf16 %v240, %v257
  %v274 = vmax.bf16 %v241, %v258
  %v275 = vmax.bf16 %v242, %v259
  %v276 = vmax.bf16 %v243, %v260
  %v277 = vmax.bf16 %v244, %v261
  %v278 = vmax.bf16 %v245, %v262
  %v279 = vmax.bf16 %v246, %v263
  %v280 = vmax.bf16 %v247, %v264
  %v281 = vmax.bf16 %v248, %v265
  %v282 = vmax.bf16 %v249, %v266
  %v283 = vmax.bf16 %v250, %v267
  %v284 = vmax.bf16 %v251, %v268
  %v285 = vmax.bf16 %v252, %v269
  %v286 = vmax.bf16 %v253, %v270
  %v287 = vmax.bf16 %v254, %v271
  %288 = vst [vmem:[%s1] sm:$0xf] %v272
  %289 = vst [vmem:[%s1 + $0x4] sm:$0xf] %v273
  %290 = vst [vmem:[%s1 + $0x8] sm:$0xf] %v274
  %291 = vst [vmem:[%s1 + $0xc] sm:$0xf] %v275
  %292 = vst [vmem:[%s1 + $0x10] sm:$0xf] %v276
  %293 = vst [vmem:[%s1 + $0x14] sm:$0xf] %v277
  %294 = vst [vmem:[%s1 + $0x18] sm:$0xf] %v278
  %295 = vst [vmem:[%s1 + $0x1c] sm:$0xf] %v279
  %296 = vst [vmem:[%s1 + $0x20] sm:$0xf] %v280
  %297 = vst [vmem:[%s1 + $0x24] sm:$0xf] %v281
  %298 = vst [vmem:[%s1 + $0x28] sm:$0xf] %v282
  %299 = vst [vmem:[%s1 + $0x2c] sm:$0xf] %v283
  %300 = vst [vmem:[%s1 + $0x30] sm:$0xf] %v284
  %301 = vst [vmem:[%s1 + $0x34] sm:$0xf] %v285
  %302 = vst [vmem:[%s1 + $0x38] sm:$0xf] %v286
  %303 = vst [vmem:[%s1 + $0x3c] sm:$0xf] %v287
  // Predicated region
  $region6: #{_lambda_.35} parent=0 // pred_check
    _
  $region7: #{_lambda_.35} parent=0 // pred_check_branch
    %305 = sbr.rel (0) target = $region9
  $region8: #{_lambda_.35} parent=0 // pred_region
    _
  $region9: #{_lambda_.35} parent=0 // pred_fallthru
    _
  // Predicated region
  $region10: #{_lambda_.35} parent=0 // pred_check
    _
  $region11: #{_lambda_.35} parent=0 // pred_check_branch
    %307 = sbr.rel (0) target = $region13
  $region12: #{_lambda_.35} parent=0 // pred_region
    _
  $region13: #{_lambda_.35} parent=0 // pred_fallthru
    _

// kernel: _lambda_.39
$region0: #{_lambda_.39}
  #allocation0 [shape = 'u32[]', space=smem, size = 0x4, offset = 0x4, fixed_abs, tag = 'smem constant byte address 0x4 - core index']
  #allocation1 [shape = 'u32[144,128]{1,0:T(1,128)}', space=vmem, size = 0x12000, scoped, tag = 'internal scratch']
  %s0 = inlined_call_operand.vmem [shape: bf16[128,128], index: 0, kind: input, shape index: {}]
  %s1 = inlined_call_operand.vmem [shape: bf16[128,128], index: 1, kind: input, shape index: {}]
  %s2 = inlined_call_operand.vmem [shape: f32[1,128], index: 2, kind: input, shape index: {}]
  %s3 = inlined_call_operand.vmem [shape: f32[1,128], index: 3, kind: input, shape index: {}]
  %s4 = inlined_call_operand.vmem [shape: bf16[128,128], index: 4, kind: output, shape index: {0}]
  %s5 = inlined_call_operand.vmem [shape: f32[1,2,128], index: 5, kind: output, shape index: {1}]
  %6 = xla_tuple %s4, %s5
  %s7 = sld [smem:[#allocation0]]
  $region34: #{_lambda_.39} parent=0
    _
  %s9 = ssub.s32 1, %s7
  %s10 = scalar_select 0, %s9, %s7
  // Predicated region
  $region2: #{_lambda_.39} parent=0 // pred_check
    _
  $region3: #{_lambda_.39} parent=0 // pred_check_branch
    %12 = sbr.rel (0) target = $region5
  $region4: #{_lambda_.39} parent=0 // pred_region
    _
  $region5: #{_lambda_.39} parent=0 // pred_fallthru
    _
  // Predicated region
  $region6: #{_lambda_.39} parent=0 // pred_check
    _
  $region7: #{_lambda_.39} parent=0 // pred_check_branch
    %14 = sbr.rel (0) target = $region9
  $region8: #{_lambda_.39} parent=0 // pred_region
    _
  $region9: #{_lambda_.39} parent=0 // pred_fallthru
    _
  // Predicated region
  $region10: #{_lambda_.39} parent=0 // pred_check
    _
  $region11: #{_lambda_.39} parent=0 // pred_check_branch
    %16 = sbr.rel (0) target = $region13
  $region12: #{_lambda_.39} parent=0 // pred_region
    _
  $region13: #{_lambda_.39} parent=0 // pred_fallthru
    _
  // Predicated region
  $region14: #{_lambda_.39} parent=0 // pred_check
    _
  $region15: #{_lambda_.39} parent=0 // pred_check_branch
    %18 = sbr.rel (0) target = $region17
  $region16: #{_lambda_.39} parent=0 // pred_region
    _
  $region17: #{_lambda_.39} parent=0 // pred_fallthru
    _
  %v20 = vld [vmem:[%s0] sm:$0xf]
  %v21 = vld [vmem:[%s0 + $0x4] sm:$0xf]
  %v22 = vld [vmem:[%s0 + $0x8] sm:$0xf]
  %v23 = vld [vmem:[%s0 + $0xc] sm:$0xf]
  %v24 = vld [vmem:[%s0 + $0x10] sm:$0xf]
  %v25 = vld [vmem:[%s0 + $0x14] sm:$0xf]
  %v26 = vld [vmem:[%s0 + $0x18] sm:$0xf]
  %v27 = vld [vmem:[%s0 + $0x1c] sm:$0xf]
  %v28 = vld [vmem:[%s0 + $0x20] sm:$0xf]
  %v29 = vld [vmem:[%s0 + $0x24] sm:$0xf]
  %v30 = vld [vmem:[%s0 + $0x28] sm:$0xf]
  %v31 = vld [vmem:[%s0 + $0x2c] sm:$0xf]
  %v32 = vld [vmem:[%s0 + $0x30] sm:$0xf]
  %v33 = vld [vmem:[%s0 + $0x34] sm:$0xf]
  %v34 = vld [vmem:[%s0 + $0x38] sm:$0xf]
  %v35 = vld [vmem:[%s0 + $0x3c] sm:$0xf]
  %v36 = vunpack.c.l.bf16 %v20
  %v37 = vunpack.c.l.bf16 %v21
  %v38 = vunpack.c.l.bf16 %v22
  %v39 = vunpack.c.l.bf16 %v23
  %v40 = vunpack.c.l.bf16 %v24
  %v41 = vunpack.c.l.bf16 %v25
  %v42 = vunpack.c.l.bf16 %v26
  %v43 = vunpack.c.l.bf16 %v27
  %v44 = vunpack.c.l.bf16 %v28
  %v45 = vunpack.c.l.bf16 %v29
  %v46 = vunpack.c.l.bf16 %v30
  %v47 = vunpack.c.l.bf16 %v31
  %v48 = vunpack.c.l.bf16 %v32
  %v49 = vunpack.c.l.bf16 %v33
  %v50 = vunpack.c.l.bf16 %v34
  %v51 = vunpack.c.l.bf16 %v35
  %v52 = vld [vmem:[%s2] sm:$0x1]
  %v54 = vlaneseq
  %v55 = vshrl.u32 %v54, 7
  %v56 = vsub.s32 0, %v55
  %v57 = vrot.slane %v52, %v56
  %v59 = vmul.f32 %v36, %v57
  %v60 = vmul.f32 %v37, %v57
  %v61 = vmul.f32 %v38, %v57
  %v62 = vmul.f32 %v39, %v57
  %v63 = vmul.f32 %v40, %v57
  %v64 = vmul.f32 %v41, %v57
  %v65 = vmul.f32 %v42, %v57
  %v66 = vmul.f32 %v43, %v57
  %v67 = vmul.f32 %v44, %v57
  %v68 = vmul.f32 %v45, %v57
  %v69 = vmul.f32 %v46, %v57
  %v70 = vmul.f32 %v47, %v57
  %v71 = vmul.f32 %v48, %v57
  %v72 = vmul.f32 %v49, %v57
  %v73 = vmul.f32 %v50, %v57
  %v74 = vmul.f32 %v51, %v57
  %v75 = vld [vmem:[%s3] sm:$0x1]
  %v77 = vlaneseq
  %v78 = vshrl.u32 %v77, 7
  %v79 = vsub.s32 0, %v78
  %v80 = vrot.slane %v75, %v79
  %v82 = vadd.f32 %v59, %v80
  %v83 = vadd.f32 %v60, %v80
  %v84 = vadd.f32 %v61, %v80
  %v85 = vadd.f32 %v62, %v80
  %v86 = vadd.f32 %v63, %v80
  %v87 = vadd.f32 %v64, %v80
  %v88 = vadd.f32 %v65, %v80
  %v89 = vadd.f32 %v66, %v80
  %v90 = vadd.f32 %v67, %v80
  %v91 = vadd.f32 %v68, %v80
  %v92 = vadd.f32 %v69, %v80
  %v93 = vadd.f32 %v70, %v80
  %v94 = vadd.f32 %v71, %v80
  %v95 = vadd.f32 %v72, %v80
  %v96 = vadd.f32 %v73, %v80
  %v97 = vadd.f32 %v74, %v80
  %v98 = vmax.f32 %v82, 0.0
  %v99 = vmax.f32 %v83, 0.0
  %v100 = vmax.f32 %v84, 0.0
  %v101 = vmax.f32 %v85, 0.0
  %v102 = vmax.f32 %v86, 0.0
  %v103 = vmax.f32 %v87, 0.0
  %v104 = vmax.f32 %v88, 0.0
  %v105 = vmax.f32 %v89, 0.0
  %v106 = vmax.f32 %v90, 0.0
  %v107 = vmax.f32 %v91, 0.0
  %v108 = vmax.f32 %v92, 0.0
  %v109 = vmax.f32 %v93, 0.0
  %v110 = vmax.f32 %v94, 0.0
  %v111 = vmax.f32 %v95, 0.0
  %v112 = vmax.f32 %v96, 0.0
  %v113 = vmax.f32 %v97, 0.0
  %v114 = vpack.c.bf16 %v99, %v98
  %v115 = vpack.c.bf16 %v101, %v100
  %v116 = vpack.c.bf16 %v103, %v102
  %v117 = vpack.c.bf16 %v105, %v104
  %v118 = vpack.c.bf16 %v107, %v106
  %v119 = vpack.c.bf16 %v109, %v108
  %v120 = vpack.c.bf16 %v111, %v110
  %v121 = vpack.c.bf16 %v113, %v112
  %v122 = vld [vmem:[%s1] sm:$0xf]
  %v123 = vld [vmem:[%s1 + $0x4] sm:$0xf]
  %v124 = vld [vmem:[%s1 + $0x8] sm:$0xf]
  %v125 = vld [vmem:[%s1 + $0xc] sm:$0xf]
  %v126 = vld [vmem:[%s1 + $0x10] sm:$0xf]
  %v127 = vld [vmem:[%s1 + $0x14] sm:$0xf]
  %v128 = vld [vmem:[%s1 + $0x18] sm:$0xf]
  %v129 = vld [vmem:[%s1 + $0x1c] sm:$0xf]
  %v130 = vld [vmem:[%s1 + $0x20] sm:$0xf]
  %v131 = vld [vmem:[%s1 + $0x24] sm:$0xf]
  %v132 = vld [vmem:[%s1 + $0x28] sm:$0xf]
  %v133 = vld [vmem:[%s1 + $0x2c] sm:$0xf]
  %v134 = vld [vmem:[%s1 + $0x30] sm:$0xf]
  %v135 = vld [vmem:[%s1 + $0x34] sm:$0xf]
  %v136 = vld [vmem:[%s1 + $0x38] sm:$0xf]
  %v137 = vld [vmem:[%s1 + $0x3c] sm:$0xf]
  %v154 = vunpack.c.l.b16 %v122
  %v155 = vunpack.c.l.b16 %v123
  %v156 = vunpack.c.l.b16 %v124
  %v157 = vunpack.c.l.b16 %v125
  %v158 = vunpack.c.l.b16 %v126
  %v159 = vunpack.c.l.b16 %v127
  %v160 = vunpack.c.l.b16 %v128
  %v161 = vunpack.c.l.b16 %v129
  %v162 = vunpack.c.l.b16 %v130
  %v163 = vunpack.c.l.b16 %v131
  %v164 = vunpack.c.l.b16 %v132
  %v165 = vunpack.c.l.b16 %v133
  %v166 = vunpack.c.l.b16 %v134
  %v167 = vunpack.c.l.b16 %v135
  %v168 = vunpack.c.l.b16 %v136
  %v169 = vunpack.c.l.b16 %v137
  %v170 = vpack.c.b16 %v155, %v154
  %v171 = vpack.c.b16 %v157, %v156
  %v172 = vpack.c.b16 %v159, %v158
  %v173 = vpack.c.b16 %v161, %v160
  %v174 = vpack.c.b16 %v163, %v162
  %v175 = vpack.c.b16 %v165, %v164
  %v176 = vpack.c.b16 %v167, %v166
  %v177 = vpack.c.b16 %v169, %v168
  %186 = vmatprep.subr.bf16.mxu0 0
  %187 = vmatpush1.bf16.msra.mxu0 %v170
  %188 = vmatprep.subr.bf16.mxu0 0
  %189 = vmatpush1.bf16.msra.mxu0 %v171
  %190 = vmatprep.subr.bf16.mxu0 0
  %191 = vmatpush1.bf16.msra.mxu0 %v172
  %192 = vmatprep.subr.bf16.mxu0 0
  %193 = vmatpush1.bf16.msra.mxu0 %v173
  %194 = vmatprep.subr.bf16.mxu0 0
  %195 = vmatpush1.bf16.msra.mxu0 %v174
  %196 = vmatprep.subr.bf16.mxu0 0
  %197 = vmatpush1.bf16.msra.mxu0 %v175
  %198 = vmatprep.subr.bf16.mxu0 0
  %199 = vmatpush1.bf16.msra.mxu0 %v176
  %200 = vmatprep.subr.bf16.mxu0 0
  %201 = vmatpush1.bf16.msra.mxu0 %v177
  %202 = vmatprep.subr.bf16.mxu0 0
  %203 = vmatpush1.bf16.msra.mxu0 0
  %204 = vmatprep.subr.bf16.mxu0 0
  %205 = vmatpush1.bf16.msra.mxu0 0
  %206 = vmatprep.subr.bf16.mxu0 0
  %207 = vmatpush1.bf16.msra.mxu0 0
  %208 = vmatprep.subr.bf16.mxu0 0
  %209 = vmatpush1.bf16.msra.mxu0 0
  %210 = vmatprep.subr.bf16.mxu0 0
  %211 = vmatpush1.bf16.msra.mxu0 0
  %212 = vmatprep.subr.bf16.mxu0 0
  %213 = vmatpush1.bf16.msra.mxu0 0
  %214 = vmatprep.subr.bf16.mxu0 0
  %215 = vmatpush1.bf16.msra.mxu0 0
  %216 = vmatprep.subr.bf16.mxu0 0
  %217 = vmatpush1.bf16.msra.mxu0 0
  %218 = vmatprep.mubr.bf16.mxu0 0
  %219 = vmatmul.mubr.bf16.gmra.mrb[0].mxu0 %v114
  %v220 = vpop.f32.mrb[0].mxu0
  %v221 = vadd.f32 0.0, %v220
  %v222 = vpop.f32.mrb[0].mxu0
  %v223 = vpop.f32.mrb[0].mxu0
  %v224 = vadd.f32 0.0, %v223
  %v225 = vpop.f32.mrb[0].mxu0
  %226 = vmatprep.mubr.bf16.mxu0 0
  %227 = vmatmul.mubr.bf16.gmra.mrb[0].mxu0 %v115
  %v228 = vpop.f32.mrb[0].mxu0
  %v229 = vadd.f32 0.0, %v228
  %v230 = vpop.f32.mrb[0].mxu0
  %v231 = vpop.f32.mrb[0].mxu0
  %v232 = vadd.f32 0.0, %v231
  %v233 = vpop.f32.mrb[0].mxu0
  %234 = vmatprep.mubr.bf16.mxu0 0
  %235 = vmatmul.mubr.bf16.gmra.mrb[0].mxu0 %v116
  %v236 = vpop.f32.mrb[0].mxu0
  %v237 = vadd.f32 0.0, %v236
  %v238 = vpop.f32.mrb[0].mxu0
  %v239 = vpop.f32.mrb[0].mxu0
  %v240 = vadd.f32 0.0, %v239
  %v241 = vpop.f32.mrb[0].mxu0
  %242 = vmatprep.mubr.bf16.mxu0 0
  %243 = vmatmul.mubr.bf16.gmra.mrb[0].mxu0 %v117
  %v244 = vpop.f32.mrb[0].mxu0
  %v245 = vadd.f32 0.0, %v244
  %v246 = vpop.f32.mrb[0].mxu0
  %v247 = vpop.f32.mrb[0].mxu0
  %v248 = vadd.f32 0.0, %v247
  %v249 = vpop.f32.mrb[0].mxu0
  %250 = vmatprep.mubr.bf16.mxu0 0
  %251 = vmatmul.mubr.bf16.gmra.mrb[0].mxu0 %v118
  %v252 = vpop.f32.mrb[0].mxu0
  %v253 = vadd.f32 0.0, %v252
  %v254 = vpop.f32.mrb[0].mxu0
  %v255 = vpop.f32.mrb[0].mxu0
  %v256 = vadd.f32 0.0, %v255
  %v257 = vpop.f32.mrb[0].mxu0
  %258 = vmatprep.mubr.bf16.mxu0 0
  %259 = vmatmul.mubr.bf16.gmra.mrb[0].mxu0 %v119
  %v260 = vpop.f32.mrb[0].mxu0
  %v261 = vadd.f32 0.0, %v260
  %v262 = vpop.f32.mrb[0].mxu0
  %v263 = vpop.f32.mrb[0].mxu0
  %v264 = vadd.f32 0.0, %v263
  %v265 = vpop.f32.mrb[0].mxu0
  %266 = vmatprep.mubr.bf16.mxu0 0
  %267 = vmatmul.mubr.bf16.gmra.mrb[0].mxu0 %v120
  %v268 = vpop.f32.mrb[0].mxu0
  %v269 = vadd.f32 0.0, %v268
  %v270 = vpop.f32.mrb[0].mxu0
  %v271 = vpop.f32.mrb[0].mxu0
  %v272 = vadd.f32 0.0, %v271
  %v273 = vpop.f32.mrb[0].mxu0
  %274 = vmatprep.mubr.bf16.mxu0 0
  %275 = vmatmul.mubr.bf16.gmra.mrb[0].mxu0 %v121
  %v276 = vpop.f32.mrb[0].mxu0
  %v277 = vadd.f32 0.0, %v276
  %v278 = vpop.f32.mrb[0].mxu0
  %v279 = vpop.f32.mrb[0].mxu0
  %v280 = vadd.f32 0.0, %v279
  %v281 = vpop.f32.mrb[0].mxu0
  %282 = vdwg.mxu0
  %v283 = vpack.c.bf16 %v224, %v221
  %v284 = vpack.c.bf16 %v232, %v229
  %v285 = vpack.c.bf16 %v240, %v237
  %v286 = vpack.c.bf16 %v248, %v245
  %v287 = vpack.c.bf16 %v256, %v253
  %v288 = vpack.c.bf16 %v264, %v261
  %v289 = vpack.c.bf16 %v272, %v269
  %v290 = vpack.c.bf16 %v280, %v277
  %v299 = vunpack.c.l.b16 %v283
  %v300 = vunpack.c.h.b16 %v283
  %v301 = vunpack.c.l.b16 %v284
  %v302 = vunpack.c.h.b16 %v284
  %v303 = vunpack.c.l.b16 %v285
  %v304 = vunpack.c.h.b16 %v285
  %v305 = vunpack.c.l.b16 %v286
  %v306 = vunpack.c.h.b16 %v286
  %v307 = vunpack.c.l.b16 %v287
  %v308 = vunpack.c.h.b16 %v287
  %v309 = vunpack.c.l.b16 %v288
  %v310 = vunpack.c.h.b16 %v288
  %v311 = vunpack.c.l.b16 %v289
  %v312 = vunpack.c.h.b16 %v289
  %v313 = vunpack.c.l.b16 %v290
  %v314 = vunpack.c.h.b16 %v290
  %v315 = vpack.c.b16 %v299, %v299
  %v316 = vpack.c.b16 %v300, %v300
  %v317 = vpack.c.b16 %v301, %v301
  %v318 = vpack.c.b16 %v302, %v302
  %v319 = vpack.c.b16 %v303, %v303
  %v320 = vpack.c.b16 %v304, %v304
  %v321 = vpack.c.b16 %v305, %v305
  %v322 = vpack.c.b16 %v306, %v306
  %v323 = vpack.c.b16 %v307, %v307
  %v324 = vpack.c.b16 %v308, %v308
  %v325 = vpack.c.b16 %v309, %v309
  %v326 = vpack.c.b16 %v310, %v310
  %v327 = vpack.c.b16 %v311, %v311
  %v328 = vpack.c.b16 %v312, %v312
  %v329 = vpack.c.b16 %v313, %v313
  %v330 = vpack.c.b16 %v314, %v314
  %347 = vst [vmem:[%s4] sm:$0xf] %v315
  %348 = vst [vmem:[%s4 + $0x4] sm:$0xf] %v316
  %349 = vst [vmem:[%s4 + $0x8] sm:$0xf] %v317
  %350 = vst [vmem:[%s4 + $0xc] sm:$0xf] %v318
  %351 = vst [vmem:[%s4 + $0x10] sm:$0xf] %v319
  %352 = vst [vmem:[%s4 + $0x14] sm:$0xf] %v320
  %353 = vst [vmem:[%s4 + $0x18] sm:$0xf] %v321
  %354 = vst [vmem:[%s4 + $0x1c] sm:$0xf] %v322
  %355 = vst [vmem:[%s4 + $0x20] sm:$0xf] %v323
  %356 = vst [vmem:[%s4 + $0x24] sm:$0xf] %v324
  %357 = vst [vmem:[%s4 + $0x28] sm:$0xf] %v325
  %358 = vst [vmem:[%s4 + $0x2c] sm:$0xf] %v326
  %359 = vst [vmem:[%s4 + $0x30] sm:$0xf] %v327
  %360 = vst [vmem:[%s4 + $0x34] sm:$0xf] %v328
  %361 = vst [vmem:[%s4 + $0x38] sm:$0xf] %v329
  %362 = vst [vmem:[%s4 + $0x3c] sm:$0xf] %v330
  %v363 = vadd.f32 %v221, %v224
  %v364 = vadd.f32 %v363, %v229
  %v365 = vadd.f32 %v364, %v232
  %v366 = vadd.f32 %v365, %v237
  %v367 = vadd.f32 %v366, %v240
  %v368 = vadd.f32 %v367, %v245
  %v369 = vadd.f32 %v368, %v248
  %v370 = vadd.f32 %v369, %v253
  %v371 = vadd.f32 %v370, %v256
  %v372 = vadd.f32 %v371, %v261
  %v373 = vadd.f32 %v372, %v264
  %v374 = vadd.f32 %v373, %v269
  %v375 = vadd.f32 %v374, %v272
  %v376 = vadd.f32 %v375, %v277
  %v377 = vadd.f32 %v376, %v280
  %v378 = vrot.slane %v377, 4
  %v379 = vadd.f32 %v377, %v378
  %v380 = vrot.slane %v379, 2
  %v381 = vadd.f32 %v379, %v380
  %v382 = vrot.slane %v381, 1
  %v383 = vadd.f32 %v381, %v382
  %v384 = vmul.f32 %v221, %v221
  %v385 = vmul.f32 %v224, %v224
  %v386 = vmul.f32 %v229, %v229
  %v387 = vmul.f32 %v232, %v232
  %v388 = vmul.f32 %v237, %v237
  %v389 = vmul.f32 %v240, %v240
  %v390 = vmul.f32 %v245, %v245
  %v391 = vmul.f32 %v248, %v248
  %v392 = vmul.f32 %v253, %v253
  %v393 = vmul.f32 %v256, %v256
  %v394 = vmul.f32 %v261, %v261
  %v395 = vmul.f32 %v264, %v264
  %v396 = vmul.f32 %v269, %v269
  %v397 = vmul.f32 %v272, %v272
  %v398 = vmul.f32 %v277, %v277
  %v399 = vmul.f32 %v280, %v280
  %v400 = vadd.f32 %v384, %v385
  %v401 = vadd.f32 %v400, %v386
  %v402 = vadd.f32 %v401, %v387
  %v403 = vadd.f32 %v402, %v388
  %v404 = vadd.f32 %v403, %v389
  %v405 = vadd.f32 %v404, %v390
  %v406 = vadd.f32 %v405, %v391
  %v407 = vadd.f32 %v406, %v392
  %v408 = vadd.f32 %v407, %v393
  %v409 = vadd.f32 %v408, %v394
  %v410 = vadd.f32 %v409, %v395
  %v411 = vadd.f32 %v410, %v396
  %v412 = vadd.f32 %v411, %v397
  %v413 = vadd.f32 %v412, %v398
  %v414 = vadd.f32 %v413, %v399
  %v415 = vrot.slane %v414, 4
  %v416 = vadd.f32 %v414, %v415
  %v417 = vrot.slane %v416, 2
  %v418 = vadd.f32 %v416, %v417
  %v419 = vrot.slane %v418, 1
  %v420 = vadd.f32 %v418, %v419
  %vm421 = vcmask 1040384
  %v422 = vsel %vm421, %v383, %v420
  %423 = vst [vmem:[%s5] sm:$0x3] %v422
  // Predicated region
  $region18: #{_lambda_.39} parent=0 // pred_check
    _
  $region19: #{_lambda_.39} parent=0 // pred_check_branch
    %425 = sbr.rel (0) target = $region21
  $region20: #{_lambda_.39} parent=0 // pred_region
    _
  $region21: #{_lambda_.39} parent=0 // pred_fallthru
    _
  // Predicated region
  $region22: #{_lambda_.39} parent=0 // pred_check
    _
  $region23: #{_lambda_.39} parent=0 // pred_check_branch
    %427 = sbr.rel (0) target = $region25
  $region24: #{_lambda_.39} parent=0 // pred_region
    _
  $region25: #{_lambda_.39} parent=0 // pred_fallthru
    _
  // Predicated region
  $region26: #{_lambda_.39} parent=0 // pred_check
    _
  $region27: #{_lambda_.39} parent=0 // pred_check_branch
    %429 = sbr.rel (0) target = $region29
  $region28: #{_lambda_.39} parent=0 // pred_region
    _
  $region29: #{_lambda_.39} parent=0 // pred_fallthru
    _
  // Predicated region
  $region30: #{_lambda_.39} parent=0 // pred_check
    _
  $region31: #{_lambda_.39} parent=0 // pred_check_branch
    %431 = sbr.rel (0) target = $region33
  $region32: #{_lambda_.39} parent=0 // pred_region
    _
  $region33: #{_lambda_.39} parent=0 // pred_fallthru
    _

// kernel: _lambda_.41
$region0: #{_lambda_.41}
  #allocation0 [shape = 'u32[]', space=smem, size = 0x4, offset = 0x4, fixed_abs, tag = 'smem constant byte address 0x4 - core index']
  #allocation1 [shape = 'u32[144,128]{1,0:T(1,128)}', space=vmem, size = 0x12000, scoped, tag = 'internal scratch']
  %s0 = inlined_call_operand.vmem [shape: bf16[128,128], index: 0, kind: input, shape index: {}]
  %s1 = inlined_call_operand.vmem [shape: f32[1,128], index: 1, kind: input, shape index: {}]
  %s2 = inlined_call_operand.vmem [shape: f32[1,128], index: 2, kind: input, shape index: {}]
  %s3 = inlined_call_operand.vmem [shape: bf16[128,128], index: 3, kind: input, shape index: {}]
  %s4 = inlined_call_operand.vmem [shape: f32[1,128], index: 4, kind: input, shape index: {}]
  %s5 = inlined_call_operand.vmem [shape: f32[1,128], index: 5, kind: input, shape index: {}]
  %s6 = inlined_call_operand.vmem [shape: bf16[128,128], index: 6, kind: output, shape index: {}]
  %s7 = sld [smem:[#allocation0]]
  $region34: #{_lambda_.41} parent=0
    _
  %s9 = ssub.s32 1, %s7
  %s10 = scalar_select 0, %s9, %s7
  // Predicated region
  $region2: #{_lambda_.41} parent=0 // pred_check
    _
  $region3: #{_lambda_.41} parent=0 // pred_check_branch
    %12 = sbr.rel (0) target = $region5
  $region4: #{_lambda_.41} parent=0 // pred_region
    _
  $region5: #{_lambda_.41} parent=0 // pred_fallthru
    _
  // Predicated region
  $region6: #{_lambda_.41} parent=0 // pred_check
    _
  $region7: #{_lambda_.41} parent=0 // pred_check_branch
    %14 = sbr.rel (0) target = $region9
  $region8: #{_lambda_.41} parent=0 // pred_region
    _
  $region9: #{_lambda_.41} parent=0 // pred_fallthru
    _
  // Predicated region
  $region10: #{_lambda_.41} parent=0 // pred_check
    _
  $region11: #{_lambda_.41} parent=0 // pred_check_branch
    %16 = sbr.rel (0) target = $region13
  $region12: #{_lambda_.41} parent=0 // pred_region
    _
  $region13: #{_lambda_.41} parent=0 // pred_fallthru
    _
  // Predicated region
  $region14: #{_lambda_.41} parent=0 // pred_check
    _
  $region15: #{_lambda_.41} parent=0 // pred_check_branch
    %18 = sbr.rel (0) target = $region17
  $region16: #{_lambda_.41} parent=0 // pred_region
    _
  $region17: #{_lambda_.41} parent=0 // pred_fallthru
    _
  // Predicated region
  $region18: #{_lambda_.41} parent=0 // pred_check
    _
  $region19: #{_lambda_.41} parent=0 // pred_check_branch
    %20 = sbr.rel (0) target = $region21
  $region20: #{_lambda_.41} parent=0 // pred_region
    _
  $region21: #{_lambda_.41} parent=0 // pred_fallthru
    _
  // Predicated region
  $region22: #{_lambda_.41} parent=0 // pred_check
    _
  $region23: #{_lambda_.41} parent=0 // pred_check_branch
    %22 = sbr.rel (0) target = $region25
  $region24: #{_lambda_.41} parent=0 // pred_region
    _
  $region25: #{_lambda_.41} parent=0 // pred_fallthru
    _
  %v23 = vld [vmem:[%s0] sm:$0xf]
  %v24 = vld [vmem:[%s0 + $0x4] sm:$0xf]
  %v25 = vld [vmem:[%s0 + $0x8] sm:$0xf]
  %v26 = vld [vmem:[%s0 + $0xc] sm:$0xf]
  %v27 = vld [vmem:[%s0 + $0x10] sm:$0xf]
  %v28 = vld [vmem:[%s0 + $0x14] sm:$0xf]
  %v29 = vld [vmem:[%s0 + $0x18] sm:$0xf]
  %v30 = vld [vmem:[%s0 + $0x1c] sm:$0xf]
  %v31 = vld [vmem:[%s0 + $0x20] sm:$0xf]
  %v32 = vld [vmem:[%s0 + $0x24] sm:$0xf]
  %v33 = vld [vmem:[%s0 + $0x28] sm:$0xf]
  %v34 = vld [vmem:[%s0 + $0x2c] sm:$0xf]
  %v35 = vld [vmem:[%s0 + $0x30] sm:$0xf]
  %v36 = vld [vmem:[%s0 + $0x34] sm:$0xf]
  %v37 = vld [vmem:[%s0 + $0x38] sm:$0xf]
  %v38 = vld [vmem:[%s0 + $0x3c] sm:$0xf]
  %v39 = vunpack.c.l.bf16 %v23
  %v40 = vunpack.c.l.bf16 %v24
  %v41 = vunpack.c.l.bf16 %v25
  %v42 = vunpack.c.l.bf16 %v26
  %v43 = vunpack.c.l.bf16 %v27
  %v44 = vunpack.c.l.bf16 %v28
  %v45 = vunpack.c.l.bf16 %v29
  %v46 = vunpack.c.l.bf16 %v30
  %v47 = vunpack.c.l.bf16 %v31
  %v48 = vunpack.c.l.bf16 %v32
  %v49 = vunpack.c.l.bf16 %v33
  %v50 = vunpack.c.l.bf16 %v34
  %v51 = vunpack.c.l.bf16 %v35
  %v52 = vunpack.c.l.bf16 %v36
  %v53 = vunpack.c.l.bf16 %v37
  %v54 = vunpack.c.l.bf16 %v38
  %v55 = vld [vmem:[%s1] sm:$0x1]
  %v57 = vlaneseq
  %v58 = vshrl.u32 %v57, 7
  %v59 = vsub.s32 0, %v58
  %v60 = vrot.slane %v55, %v59
  %v62 = vmul.f32 %v39, %v60
  %v63 = vmul.f32 %v40, %v60
  %v64 = vmul.f32 %v41, %v60
  %v65 = vmul.f32 %v42, %v60
  %v66 = vmul.f32 %v43, %v60
  %v67 = vmul.f32 %v44, %v60
  %v68 = vmul.f32 %v45, %v60
  %v69 = vmul.f32 %v46, %v60
  %v70 = vmul.f32 %v47, %v60
  %v71 = vmul.f32 %v48, %v60
  %v72 = vmul.f32 %v49, %v60
  %v73 = vmul.f32 %v50, %v60
  %v74 = vmul.f32 %v51, %v60
  %v75 = vmul.f32 %v52, %v60
  %v76 = vmul.f32 %v53, %v60
  %v77 = vmul.f32 %v54, %v60
  %v78 = vld [vmem:[%s2] sm:$0x1]
  %v80 = vlaneseq
  %v81 = vshrl.u32 %v80, 7
  %v82 = vsub.s32 0, %v81
  %v83 = vrot.slane %v78, %v82
  %v85 = vadd.f32 %v62, %v83
  %v86 = vadd.f32 %v63, %v83
  %v87 = vadd.f32 %v64, %v83
  %v88 = vadd.f32 %v65, %v83
  %v89 = vadd.f32 %v66, %v83
  %v90 = vadd.f32 %v67, %v83
  %v91 = vadd.f32 %v68, %v83
  %v92 = vadd.f32 %v69, %v83
  %v93 = vadd.f32 %v70, %v83
  %v94 = vadd.f32 %v71, %v83
  %v95 = vadd.f32 %v72, %v83
  %v96 = vadd.f32 %v73, %v83
  %v97 = vadd.f32 %v74, %v83
  %v98 = vadd.f32 %v75, %v83
  %v99 = vadd.f32 %v76, %v83
  %v100 = vadd.f32 %v77, %v83
  %v101 = vld [vmem:[%s3] sm:$0xf]
  %v102 = vld [vmem:[%s3 + $0x4] sm:$0xf]
  %v103 = vld [vmem:[%s3 + $0x8] sm:$0xf]
  %v104 = vld [vmem:[%s3 + $0xc] sm:$0xf]
  %v105 = vld [vmem:[%s3 + $0x10] sm:$0xf]
  %v106 = vld [vmem:[%s3 + $0x14] sm:$0xf]
  %v107 = vld [vmem:[%s3 + $0x18] sm:$0xf]
  %v108 = vld [vmem:[%s3 + $0x1c] sm:$0xf]
  %v109 = vld [vmem:[%s3 + $0x20] sm:$0xf]
  %v110 = vld [vmem:[%s3 + $0x24] sm:$0xf]
  %v111 = vld [vmem:[%s3 + $0x28] sm:$0xf]
  %v112 = vld [vmem:[%s3 + $0x2c] sm:$0xf]
  %v113 = vld [vmem:[%s3 + $0x30] sm:$0xf]
  %v114 = vld [vmem:[%s3 + $0x34] sm:$0xf]
  %v115 = vld [vmem:[%s3 + $0x38] sm:$0xf]
  %v116 = vld [vmem:[%s3 + $0x3c] sm:$0xf]
  %v117 = vunpack.c.l.bf16 %v101
  %v118 = vunpack.c.l.bf16 %v102
  %v119 = vunpack.c.l.bf16 %v103
  %v120 = vunpack.c.l.bf16 %v104
  %v121 = vunpack.c.l.bf16 %v105
  %v122 = vunpack.c.l.bf16 %v106
  %v123 = vunpack.c.l.bf16 %v107
  %v124 = vunpack.c.l.bf16 %v108
  %v125 = vunpack.c.l.bf16 %v109
  %v126 = vunpack.c.l.bf16 %v110
  %v127 = vunpack.c.l.bf16 %v111
  %v128 = vunpack.c.l.bf16 %v112
  %v129 = vunpack.c.l.bf16 %v113
  %v130 = vunpack.c.l.bf16 %v114
  %v131 = vunpack.c.l.bf16 %v115
  %v132 = vunpack.c.l.bf16 %v116
  %v133 = vld [vmem:[%s4] sm:$0x1]
  %v135 = vlaneseq
  %v136 = vshrl.u32 %v135, 7
  %v137 = vsub.s32 0, %v136
  %v138 = vrot.slane %v133, %v137
  %v140 = vmul.f32 %v117, %v138
  %v141 = vmul.f32 %v118, %v138
  %v142 = vmul.f32 %v119, %v138
  %v143 = vmul.f32 %v120, %v138
  %v144 = vmul.f32 %v121, %v138
  %v145 = vmul.f32 %v122, %v138
  %v146 = vmul.f32 %v123, %v138
  %v147 = vmul.f32 %v124, %v138
  %v148 = vmul.f32 %v125, %v138
  %v149 = vmul.f32 %v126, %v138
  %v150 = vmul.f32 %v127, %v138
  %v151 = vmul.f32 %v128, %v138
  %v152 = vmul.f32 %v129, %v138
  %v153 = vmul.f32 %v130, %v138
  %v154 = vmul.f32 %v131, %v138
  %v155 = vmul.f32 %v132, %v138
  %v156 = vadd.f32 %v85, %v140
  %v157 = vadd.f32 %v86, %v141
  %v158 = vadd.f32 %v87, %v142
  %v159 = vadd.f32 %v88, %v143
  %v160 = vadd.f32 %v89, %v144
  %v161 = vadd.f32 %v90, %v145
  %v162 = vadd.f32 %v91, %v146
  %v163 = vadd.f32 %v92, %v147
  %v164 = vadd.f32 %v93, %v148
  %v165 = vadd.f32 %v94, %v149
  %v166 = vadd.f32 %v95, %v150
  %v167 = vadd.f32 %v96, %v151
  %v168 = vadd.f32 %v97, %v152
  %v169 = vadd.f32 %v98, %v153
  %v170 = vadd.f32 %v99, %v154
  %v171 = vadd.f32 %v100, %v155
  %v172 = vld [vmem:[%s5] sm:$0x1]
  %v174 = vlaneseq
  %v175 = vshrl.u32 %v174, 7
  %v176 = vsub.s32 0, %v175
  %v177 = vrot.slane %v172, %v176
  %v179 = vadd.f32 %v156, %v177
  %v180 = vadd.f32 %v157, %v177
  %v181 = vadd.f32 %v158, %v177
  %v182 = vadd.f32 %v159, %v177
  %v183 = vadd.f32 %v160, %v177
  %v184 = vadd.f32 %v161, %v177
  %v185 = vadd.f32 %v162, %v177
  %v186 = vadd.f32 %v163, %v177
  %v187 = vadd.f32 %v164, %v177
  %v188 = vadd.f32 %v165, %v177
  %v189 = vadd.f32 %v166, %v177
  %v190 = vadd.f32 %v167, %v177
  %v191 = vadd.f32 %v168, %v177
  %v192 = vadd.f32 %v169, %v177
  %v193 = vadd.f32 %v170, %v177
  %v194 = vadd.f32 %v171, %v177
  %v195 = vmax.f32 %v179, 0.0
  %v196 = vmax.f32 %v180, 0.0
  %v197 = vmax.f32 %v181, 0.0
  %v198 = vmax.f32 %v182, 0.0
  %v199 = vmax.f32 %v183, 0.0
  %v200 = vmax.f32 %v184, 0.0
  %v201 = vmax.f32 %v185, 0.0
  %v202 = vmax.f32 %v186, 0.0
  %v203 = vmax.f32 %v187, 0.0
  %v204 = vmax.f32 %v188, 0.0
  %v205 = vmax.f32 %v189, 0.0
  %v206 = vmax.f32 %v190, 0.0
  %v207 = vmax.f32 %v191, 0.0
  %v208 = vmax.f32 %v192, 0.0
  %v209 = vmax.f32 %v193, 0.0
  %v210 = vmax.f32 %v194, 0.0
  %v211 = vpack.c.bf16 %v196, %v195
  %v212 = vpack.c.bf16 %v198, %v197
  %v213 = vpack.c.bf16 %v200, %v199
  %v214 = vpack.c.bf16 %v202, %v201
  %v215 = vpack.c.bf16 %v204, %v203
  %v216 = vpack.c.bf16 %v206, %v205
  %v217 = vpack.c.bf16 %v208, %v207
  %v218 = vpack.c.bf16 %v210, %v209
  %v227 = vunpack.c.l.b16 %v211
  %v228 = vunpack.c.h.b16 %v211
  %v229 = vunpack.c.l.b16 %v212
  %v230 = vunpack.c.h.b16 %v212
  %v231 = vunpack.c.l.b16 %v213
  %v232 = vunpack.c.h.b16 %v213
  %v233 = vunpack.c.l.b16 %v214
  %v234 = vunpack.c.h.b16 %v214
  %v235 = vunpack.c.l.b16 %v215
  %v236 = vunpack.c.h.b16 %v215
  %v237 = vunpack.c.l.b16 %v216
  %v238 = vunpack.c.h.b16 %v216
  %v239 = vunpack.c.l.b16 %v217
  %v240 = vunpack.c.h.b16 %v217
  %v241 = vunpack.c.l.b16 %v218
  %v242 = vunpack.c.h.b16 %v218
  %v243 = vpack.c.b16 %v227, %v227
  %v244 = vpack.c.b16 %v228, %v228
  %v245 = vpack.c.b16 %v229, %v229
  %v246 = vpack.c.b16 %v230, %v230
  %v247 = vpack.c.b16 %v231, %v231
  %v248 = vpack.c.b16 %v232, %v232
  %v249 = vpack.c.b16 %v233, %v233
  %v250 = vpack.c.b16 %v234, %v234
  %v251 = vpack.c.b16 %v235, %v235
  %v252 = vpack.c.b16 %v236, %v236
  %v253 = vpack.c.b16 %v237, %v237
  %v254 = vpack.c.b16 %v238, %v238
  %v255 = vpack.c.b16 %v239, %v239
  %v256 = vpack.c.b16 %v240, %v240
  %v257 = vpack.c.b16 %v241, %v241
  %v258 = vpack.c.b16 %v242, %v242
  %275 = vst [vmem:[%s6] sm:$0xf] %v243
  %276 = vst [vmem:[%s6 + $0x4] sm:$0xf] %v244
  %277 = vst [vmem:[%s6 + $0x8] sm:$0xf] %v245
  %278 = vst [vmem:[%s6 + $0xc] sm:$0xf] %v246
  %279 = vst [vmem:[%s6 + $0x10] sm:$0xf] %v247
  %280 = vst [vmem:[%s6 + $0x14] sm:$0xf] %v248
  %281 = vst [vmem:[%s6 + $0x18] sm:$0xf] %v249
  %282 = vst [vmem:[%s6 + $0x1c] sm:$0xf] %v250
  %283 = vst [vmem:[%s6 + $0x20] sm:$0xf] %v251
  %284 = vst [vmem:[%s6 + $0x24] sm:$0xf] %v252
  %285 = vst [vmem:[%s6 + $0x28] sm:$0xf] %v253
  %286 = vst [vmem:[%s6 + $0x2c] sm:$0xf] %v254
  %287 = vst [vmem:[%s6 + $0x30] sm:$0xf] %v255
  %288 = vst [vmem:[%s6 + $0x34] sm:$0xf] %v256
  %289 = vst [vmem:[%s6 + $0x38] sm:$0xf] %v257
  %290 = vst [vmem:[%s6 + $0x3c] sm:$0xf] %v258
  // Predicated region
  $region26: #{_lambda_.41} parent=0 // pred_check
    _
  $region27: #{_lambda_.41} parent=0 // pred_check_branch
    %292 = sbr.rel (0) target = $region29
  $region28: #{_lambda_.41} parent=0 // pred_region
    _
  $region29: #{_lambda_.41} parent=0 // pred_fallthru
    _
  // Predicated region
  $region30: #{_lambda_.41} parent=0 // pred_check
    _
  $region31: #{_lambda_.41} parent=0 // pred_check_branch
    %294 = sbr.rel (0) target = $region33
  $region32: #{_lambda_.41} parent=0 // pred_region
    _
  $region33: #{_lambda_.41} parent=0 // pred_fallthru
    _

// kernel: _lambda_.38
$region0: #{_lambda_.38}
  #allocation0 [shape = 'u32[]', space=smem, size = 0x4, offset = 0x4, fixed_abs, tag = 'smem constant byte address 0x4 - core index']
  #allocation1 [shape = 'u32[144,128]{1,0:T(1,128)}', space=vmem, size = 0x12000, scoped, tag = 'internal scratch']
  #allocation2 [shape = 'f32[128,128]{1,0:T(8,128)}', space=vmem, size = 0x10000, scoped, tag = 'scratch operand']
  %s0 = inlined_call_operand.vmem [shape: bf16[128,1152], index: 0, kind: input, shape index: {}]
  %s1 = inlined_call_operand.vmem [shape: bf16[1152,128], index: 1, kind: input, shape index: {}]
  %s2 = inlined_call_operand.vmem [shape: bf16[128,128], index: 2, kind: output, shape index: {0}]
  %s3 = inlined_call_operand.vmem [shape: f32[1,2,128], index: 3, kind: output, shape index: {1}]
  %4 = xla_tuple %s2, %s3
  %s5 = sld [smem:[#allocation0]]
  $region83: #{_lambda_.38} parent=0
    _
  %s7 = ssub.s32 1, %s5
  %s8 = scalar_select 0, %s7, %s5
  $region1: #{_lambda_.38} parent=0
    #allocation3 [shape = 'u8[196608]{0}', space=vmem, size = 0x30000, scoped, tag = 'input window, operand 0']
    loop: start=0, step=1, limit=5
    $region2: #{_lambda_.38} parent=1 // loop_pre_header
      _
    $region3: #{_lambda_.38} parent=1 // loop_header
      %s10 = sphi 0, %s14
      %p11 = scmp.ge.s32.totalorder %s10, 5
      %s17 = sphi 0, %s36
      %s18 = sphi 0, %s32
      %s19 = sphi 0, %s28
      %s20 = sphi 0, %s17
      %s21 = sphi 0, %s18
      %s22 = sphi 0, %s19
      %s23 = sphi 0, %s20
      %s24 = sphi 0, %s21
      %s25 = sphi 0, %s22
      %s41 = sphi 0, %s43
      %s44 = sphi 0, %s41
      %s45 = sphi 0, %s44
      %s61 = sphi 0, %s45
      %s69 = sphi 0, %s71
      %s72 = sphi 0, %s69
      %s73 = sphi 0, %s72
      %s89 = sphi 0, %s73
      %s97 = sphi 0, %s99
      %s100 = sphi 0, %s97
      %s101 = sphi 0, %s100
      %s117 = sphi 0, %s101
      %s125 = sphi 0, %s127
      %s128 = sphi 0, %s125
      %s129 = sphi 0, %s128
      %s145 = sphi 0, %s129
    $region4: #{_lambda_.38} parent=1 // loop_header_branch
      %13 = sbr.rel (%p11) target = $region8
    $region5: #{_lambda_.38} parent=1 // loop_body
      %s15 = ssub.s32 %s10, 1
      %s16 = ssub.s32 %s10, 2
      %s26 = sadd.s32 1, %s19
      %p27 = scmp.ge.s32.totalorder %s26, 3
      %s28 = scalar_select %p27, 0, %s26
      %s29 = sadd.s32 1, %s18
      %s30 = scalar_select %p27, %s29, %s18
      %p31 = scmp.ge.s32.totalorder %s30, 1
      %s32 = scalar_select %p31, 0, %s30
      %s33 = sadd.s32 1, %s17
      %s34 = scalar_select %p31, %s33, %s17
      %p35 = scmp.ge.s32.totalorder %s34, 1
      %s36 = scalar_select %p35, 0, %s34
      %s37 = ssub.s32 %s17, %s36
      %s38 = ssub.s32 %s19, %s28
      %s39 = sor.u32 %s37, %s38
      %p40 = scmp.eq.s32.totalorder %s39, 0
      %s42 = sadd.s32 %s41, 1
      %s43 = scalar_select %p40, %s41, %s42
      %p46 = pneg %p40
      %p47 = scmp.eq.s32.totalorder %s10, 2
      %p48 = por %p46, %p47
      %p49 = scmp.ne.s32.totalorder %s41, %s44
      %p50 = scmp.eq.s32.totalorder %s10, 0
      %p51 = por %p49, %p50
      %p52 = scmp.ne.s32.totalorder %s41, %s44
      %p53 = scmp.eq.s32.totalorder %s15, 2
      %p54 = por %p52, %p53
      %p55 = scmp.ne.s32.totalorder %s44, %s45
      %p56 = scmp.eq.s32.totalorder %s15, 0
      %p57 = por %p55, %p56
      %p58 = scmp.ne.s32.totalorder %s44, %s45
      %p59 = scmp.eq.s32.totalorder %s16, 2
      %p60 = por %p58, %p59
      %p62 = scmp.ne.s32.totalorder %s45, %s61
      %p63 = scmp.eq.s32.totalorder %s16, 0
      %p64 = por %p62, %p63
      %s65 = ssub.s32 %s19, %s28
      %s66 = ssub.s32 %s18, %s32
      %s67 = sor.u32 %s65, %s66
      %p68 = scmp.eq.s32.totalorder %s67, 0
      %s70 = sadd.s32 %s69, 1
      %s71 = scalar_select %p68, %s69, %s70
      %p74 = pneg %p68
      %p75 = scmp.eq.s32.totalorder %s10, 2
      %p76 = por %p74, %p75
      %p77 = scmp.ne.s32.totalorder %s69, %s72
      %p78 = scmp.eq.s32.totalorder %s10, 0
      %p79 = por %p77, %p78
      %p80 = scmp.ne.s32.totalorder %s69, %s72
      %p81 = scmp.eq.s32.totalorder %s15, 2
      %p82 = por %p80, %p81
      %p83 = scmp.ne.s32.totalorder %s72, %s73
      %p84 = scmp.eq.s32.totalorder %s15, 0
      %p85 = por %p83, %p84
      %p86 = scmp.ne.s32.totalorder %s72, %s73
      %p87 = scmp.eq.s32.totalorder %s16, 2
      %p88 = por %p86, %p87
      %p90 = scmp.ne.s32.totalorder %s73, %s89
      %p91 = scmp.eq.s32.totalorder %s16, 0
      %p92 = por %p90, %p91
      %s93 = ssub.s32 %s17, %s36
      %s94 = ssub.s32 %s18, %s32
      %s95 = sor.u32 %s93, %s94
      %p96 = scmp.eq.s32.totalorder %s95, 0
      %s98 = sadd.s32 %s97, 1
      %s99 = scalar_select %p96, %s97, %s98
      %p102 = pneg %p96
      %p103 = scmp.eq.s32.totalorder %s10, 2
      %p104 = por %p102, %p103
      %p105 = scmp.ne.s32.totalorder %s97, %s100
      %p106 = scmp.eq.s32.totalorder %s10, 0
      %p107 = por %p105, %p106
      %p108 = scmp.ne.s32.totalorder %s97, %s100
      %p109 = scmp.eq.s32.totalorder %s15, 2
      %p110 = por %p108, %p109
      %p111 = scmp.ne.s32.totalorder %s100, %s101
      %p112 = scmp.eq.s32.totalorder %s15, 0
      %p113 = por %p111, %p112
      %p114 = scmp.ne.s32.totalorder %s100, %s101
      %p115 = scmp.eq.s32.totalorder %s16, 2
      %p116 = por %p114, %p115
      %p118 = scmp.ne.s32.totalorder %s101, %s117
      %p119 = scmp.eq.s32.totalorder %s16, 0
      %p120 = por %p118, %p119
      %s121 = ssub.s32 %s17, %s36
      %s122 = ssub.s32 %s18, %s32
      %s123 = sor.u32 %s121, %s122
      %p124 = scmp.eq.s32.totalorder %s123, 0
      %s126 = sadd.s32 %s125, 1
      %s127 = scalar_select %p124, %s125, %s126
      %p130 = pneg %p124
      %p131 = scmp.eq.s32.totalorder %s10, 2
      %p132 = por %p130, %p131
      %p133 = scmp.ne.s32.totalorder %s125, %s128
      %p134 = scmp.eq.s32.totalorder %s10, 0
      %p135 = por %p133, %p134
      %p136 = scmp.ne.s32.totalorder %s125, %s128
      %p137 = scmp.eq.s32.totalorder %s15, 2
      %p138 = por %p136, %p137
      %p139 = scmp.ne.s32.totalorder %s128, %s129
      %p140 = scmp.eq.s32.totalorder %s15, 0
      %p141 = por %p139, %p140
      %p142 = scmp.ne.s32.totalorder %s128, %s129
      %p143 = scmp.eq.s32.totalorder %s16, 2
      %p144 = por %p142, %p143
      %p146 = scmp.ne.s32.totalorder %s129, %s145
      %p147 = scmp.eq.s32.totalorder %s16, 0
      %p148 = por %p146, %p147
      %p149 = scmp.le.s32.totalorder 1, %s10
      %p150 = scmp.lt.s32.totalorder %s10, 4
      %p151 = pnand %p149, %p150
      %p152 = pneg %p151
      // Predicated region
      $region9: #{_lambda_.38} parent=5 // pred_check
        _
      $region10: #{_lambda_.38} parent=5 // pred_check_branch
        %154 = sbr.rel (%p151) target = $region12
      $region11: #{_lambda_.38} parent=5 // pred_region
        %s155 = ssub.s32 %s10, 1
      $region12: #{_lambda_.38} parent=5 // pred_fallthru
        _
      %p156 = scmp.lt.s32.totalorder %s10, 3
      // Predicated region
      $region13: #{_lambda_.38} parent=5 // pred_check
        %p157 = pneg %p156
      $region14: #{_lambda_.38} parent=5 // pred_check_branch
        %159 = sbr.rel (%p157) target = $region16
      $region15: #{_lambda_.38} parent=5 // pred_region
        // Predicated region
        $region17: #{_lambda_.38} parent=15 // pred_check
          %p160 = pneg %p51
        $region18: #{_lambda_.38} parent=15 // pred_check_branch
          %162 = sbr.rel (%p160) target = $region20
        $region19: #{_lambda_.38} parent=15 // pred_region
          %s163 = sand.u32 %s41, 1
          %s164 = sand.u32 %s41, 1
          %s165 = smul.addr %s164, 192
          %s166 = scalar_lea.vmem [#allocation3], %s165
          %s167 = smul.u32 16, %s17
          %s168 = smul.u32 3, %s19
          %s169 = smul.addr %s167, 9
          %s170 = sadd.s32 %s168, %s169
          %s171 = smul.addr %s170, 4
          %s172 = scalar_lea.vmem %s0, %s171
          // Predicated region
          $region21: #{_lambda_.38} parent=19 // pred_check
            _
          $region22: #{_lambda_.38} parent=19 // pred_check_branch
            %174 = sbr.rel (0) target = $region24
          $region23: #{_lambda_.38} parent=19 // pred_region
            // Predicated region
            $region25: #{_lambda_.38} parent=23 // pred_check
              _
            $region26: #{_lambda_.38} parent=23 // pred_check_branch
              %176 = sbr.rel (0) target = $region28
            $region27: #{_lambda_.38} parent=23 // pred_region
              %s177 = scalar_lea.vmem %s172, 8
              %s178 = scalar_lea.vmem %s166, 8 [#allocation3]
              loop: start=0, step=1, limit=1
              $region29: #{_lambda_.38} parent=27 // loop_pre_header
                _
              $region30: #{_lambda_.38} parent=27 // loop_header
                %s180 = sphi 0, %s184
                %p181 = scmp.ge.s32.totalorder %s180, 1
                %s185 = sphi %s172, %s172
                %s186 = sphi %s166, %s166
              $region31: #{_lambda_.38} parent=27 // loop_header_branch
                %183 = sbr.rel (%p181) target = $region35
              $region32: #{_lambda_.38} parent=27 // loop_body
                %v187 = vld [vmem:[%s185] sm:$0xff]
                %188 = vst [vmem:[%s186] sm:$0xff] %v187
                %v189 = vld [vmem:[%s185 + $0x24] sm:$0xff]
                %190 = vst [vmem:[%s186 + $0xc] sm:$0xff] %v189
                %v191 = vld [vmem:[%s185 + $0x48] sm:$0xff]
                %192 = vst [vmem:[%s186 + $0x18] sm:$0xff] %v191
                %v193 = vld [vmem:[%s185 + $0x6c] sm:$0xff]
                %194 = vst [vmem:[%s186 + $0x24] sm:$0xff] %v193
                %v195 = vld [vmem:[%s185 + $0x90] sm:$0xff]
                %196 = vst [vmem:[%s186 + $0x30] sm:$0xff] %v195
                %v197 = vld [vmem:[%s185 + $0xb4] sm:$0xff]
                %198 = vst [vmem:[%s186 + $0x3c] sm:$0xff] %v197
                %v199 = vld [vmem:[%s185 + $0xd8] sm:$0xff]
                %200 = vst [vmem:[%s186 + $0x48] sm:$0xff] %v199
                %v201 = vld [vmem:[%s185 + $0xfc] sm:$0xff]
                %202 = vst [vmem:[%s186 + $0x54] sm:$0xff] %v201
                %v203 = vld [vmem:[%s185 + $0x120] sm:$0xff]
                %204 = vst [vmem:[%s186 + $0x60] sm:$0xff] %v203
                %v205 = vld [vmem:[%s185 + $0x144] sm:$0xff]
                %206 = vst [vmem:[%s186 + $0x6c] sm:$0xff] %v205
                %v207 = vld [vmem:[%s185 + $0x168] sm:$0xff]
                %208 = vst [vmem:[%s186 + $0x78] sm:$0xff] %v207
                %v209 = vld [vmem:[%s185 + $0x18c] sm:$0xff]
                %210 = vst [vmem:[%s186 + $0x84] sm:$0xff] %v209
                %v211 = vld [vmem:[%s185 + $0x1b0] sm:$0xff]
                %212 = vst [vmem:[%s186 + $0x90] sm:$0xff] %v211
                %v213 = vld [vmem:[%s185 + $0x1d4] sm:$0xff]
                %214 = vst [vmem:[%s186 + $0x9c] sm:$0xff] %v213
                %v215 = vld [vmem:[%s185 + $0x1f8] sm:$0xff]
                %216 = vst [vmem:[%s186 + $0xa8] sm:$0xff] %v215
                %v217 = vld [vmem:[%s185 + $0x21c] sm:$0xff]
                %218 = vst [vmem:[%s186 + $0xb4] sm:$0xff] %v217
              $region33: #{_lambda_.38} parent=27 // loop_footer
                %s184 = sadd.s32 1, %s180
              $region34: #{_lambda_.38} parent=27 // loop_footer_branch
                %179 = sbr.rel target = $region30
              $region35: #{_lambda_.38} parent=27 // loop_exit
                _
              loop: start=0, step=1, limit=1
              $region36: #{_lambda_.38} parent=27 // loop_pre_header
                _
              $region37: #{_lambda_.38} parent=27 // loop_header
                %s221 = sphi 0, %s225
                %p222 = scmp.ge.s32.totalorder %s221, 1
                %s226 = sphi %s177, %s177
                %s227 = sphi %s178, %s178
              $region38: #{_lambda_.38} parent=27 // loop_header_branch
                %224 = sbr.rel (%p222) target = $region42
              $region39: #{_lambda_.38} parent=27 // loop_body
                %v228 = vld [vmem:[%s226] sm:$0xf]
                %229 = vst [vmem:[%s227] sm:$0xf] %v228
                %v230 = vld [vmem:[%s226 + $0x24] sm:$0xf]
                %231 = vst [vmem:[%s227 + $0xc] sm:$0xf] %v230
                %v232 = vld [vmem:[%s226 + $0x48] sm:$0xf]
                %233 = vst [vmem:[%s227 + $0x18] sm:$0xf] %v232
                %v234 = vld [vmem:[%s226 + $0x6c] sm:$0xf]
                %235 = vst [vmem:[%s227 + $0x24] sm:$0xf] %v234
                %v236 = vld [vmem:[%s226 + $0x90] sm:$0xf]
                %237 = vst [vmem:[%s227 + $0x30] sm:$0xf] %v236
                %v238 = vld [vmem:[%s226 + $0xb4] sm:$0xf]
                %239 = vst [vmem:[%s227 + $0x3c] sm:$0xf] %v238
                %v240 = vld [vmem:[%s226 + $0xd8] sm:$0xf]
                %241 = vst [vmem:[%s227 + $0x48] sm:$0xf] %v240
                %v242 = vld [vmem:[%s226 + $0xfc] sm:$0xf]
                %243 = vst [vmem:[%s227 + $0x54] sm:$0xf] %v242
                %v244 = vld [vmem:[%s226 + $0x120] sm:$0xf]
                %245 = vst [vmem:[%s227 + $0x60] sm:$0xf] %v244
                %v246 = vld [vmem:[%s226 + $0x144] sm:$0xf]
                %247 = vst [vmem:[%s227 + $0x6c] sm:$0xf] %v246
                %v248 = vld [vmem:[%s226 + $0x168] sm:$0xf]
                %249 = vst [vmem:[%s227 + $0x78] sm:$0xf] %v248
                %v250 = vld [vmem:[%s226 + $0x18c] sm:$0xf]
                %251 = vst [vmem:[%s227 + $0x84] sm:$0xf] %v250
                %v252 = vld [vmem:[%s226 + $0x1b0] sm:$0xf]
                %253 = vst [vmem:[%s227 + $0x90] sm:$0xf] %v252
                %v254 = vld [vmem:[%s226 + $0x1d4] sm:$0xf]
                %255 = vst [vmem:[%s227 + $0x9c] sm:$0xf] %v254
                %v256 = vld [vmem:[%s226 + $0x1f8] sm:$0xf]
                %257 = vst [vmem:[%s227 + $0xa8] sm:$0xf] %v256
                %v258 = vld [vmem:[%s226 + $0x21c] sm:$0xf]
                %259 = vst [vmem:[%s227 + $0xb4] sm:$0xf] %v258
              $region40: #{_lambda_.38} parent=27 // loop_footer
                %s225 = sadd.s32 1, %s221
              $region41: #{_lambda_.38} parent=27 // loop_footer_branch
                %220 = sbr.rel target = $region37
              $region42: #{_lambda_.38} parent=27 // loop_exit
                _
            $region28: #{_lambda_.38} parent=23 // pred_fallthru
              _
          $region24: #{_lambda_.38} parent=19 // pred_fallthru
            _
          %260 = vnop
        $region20: #{_lambda_.38} parent=15 // pred_fallthru
          _
        // Predicated region
        $region43: #{_lambda_.38} parent=15 // pred_check
          %p261 = pneg %p79
        $region44: #{_lambda_.38} parent=15 // pred_check_branch
          %263 = sbr.rel (%p261) target = $region46
        $region45: #{_lambda_.38} parent=15 // pred_region
          %s264 = smul.u32 48, %s19
          %p265 = scmp.lt.s32.totalorder %s264, 143
          %s266 = scalar_select %p265, %s264, 143
          %p267 = scmp.lt.s32.totalorder %s18, 0
          %s268 = scalar_select %p267, %s18, 0
          %s269 = sadd.s32 %s268, %s266
          %s270 = smul.addr %s269, 4
          %s271 = scalar_lea.vmem %s1, %s270
          %s272 = smul.u32 48, %s19
        $region46: #{_lambda_.38} parent=15 // pred_fallthru
          _
      $region16: #{_lambda_.38} parent=5 // pred_fallthru
        _
      %p273 = scmp.le.s32.totalorder 1, %s10
      %p274 = scmp.lt.s32.totalorder %s10, 4
      %p275 = pnand %p273, %p274
      %p276 = pneg %p275
      // Predicated region
      $region47: #{_lambda_.38} parent=5 // pred_check
        _
      $region48: #{_lambda_.38} parent=5 // pred_check_branch
        %278 = sbr.rel (%p275) target = $region50
      $region49: #{_lambda_.38} parent=5 // pred_region
        %s279 = ssub.s32 %s10, 1
        %s280 = sand.u32 %s44, 1
        %s281 = sand.u32 %s44, 1
        %s282 = smul.addr %s281, 192
        %s283 = scalar_lea.vmem [#allocation3], %s282
        // Predicated region
        $region51: #{_lambda_.38} parent=49 // pred_check
          %p284 = pneg %p57
        $region52: #{_lambda_.38} parent=49 // pred_check_branch
          %286 = sbr.rel (%p284) target = $region54
        $region53: #{_lambda_.38} parent=49 // pred_region
          _
        $region54: #{_lambda_.38} parent=49 // pred_fallthru
          _
        %s287 = sand.u32 %s44, 1
        %s288 = sand.u32 %s44, 1
        %s289 = smul.addr %s288, 192
        %s290 = scalar_lea.vmem [#allocation3], %s289
        %p291 = pneg %p57
        %p292 = pneg %p54
        %s293 = smul.u32 48, %s22
        %p294 = scmp.lt.s32.totalorder %s293, 143
        %s295 = scalar_select %p294, %s293, 143
        %p296 = scmp.lt.s32.totalorder %s21, 0
        %s297 = scalar_select %p296, %s21, 0
        %s298 = sadd.s32 %s297, %s295
        %s299 = smul.addr %s298, 4
        %s300 = scalar_lea.vmem %s1, %s299
        %p301 = pneg %p85
        %p302 = pneg %p82
        %p303 = pneg %p113
        %p304 = pneg %p110
        %s305 = smul.u32 16, %s20
        %p306 = scmp.lt.s32.totalorder %s305, 15
        %s307 = scalar_select %p306, %s305, 15
        %p308 = scmp.lt.s32.totalorder %s21, 0
        %s309 = scalar_select %p308, %s21, 0
        %s310 = sadd.s32 %s309, %s307
        %s311 = smul.addr %s310, 4
        %s312 = scalar_lea.vmem %s2, %s311
        %p313 = pneg %p141
        %p314 = pneg %p138
        %p315 = scmp.lt.s32.totalorder %s20, 0
        %s316 = scalar_select %p315, %s20, 0
        %p317 = scmp.lt.s32.totalorder %s21, 0
        %s318 = scalar_select %p317, %s21, 0
        %s319 = sadd.s32 %s318, %s316
        %s320 = smul.addr %s319, 2
        %s321 = scalar_lea.vmem %s3, %s320
        %s322 = smul.u32 16, %s20
        %s323 = smul.u32 3, %s22
        %s324 = smul.u32 48, %s22
        %p325 = scmp.lt.s32.totalorder %s324, 143
        %s326 = scalar_select %p325, %s324, 143
        %p327 = scmp.lt.s32.totalorder %s21, 0
        %s328 = scalar_select %p327, %s21, 0
        %s329 = sadd.s32 %s328, %s326
        %s330 = smul.addr %s329, 4
        %s331 = scalar_lea.vmem %s1, %s330
        %s332 = smul.u32 48, %s22
        %s333 = smul.u32 16, %s20
        %p334 = scmp.lt.s32.totalorder %s333, 15
        %s335 = scalar_select %p334, %s333, 15
        %p336 = scmp.lt.s32.totalorder %s21, 0
        %s337 = scalar_select %p336, %s21, 0
        %s338 = sadd.s32 %s337, %s335
        %s339 = smul.addr %s338, 4
        %s340 = scalar_lea.vmem %s2, %s339
        %s341 = smul.u32 16, %s20
        %p342 = scmp.lt.s32.totalorder %s20, 0
        %s343 = scalar_select %p342, %s20, 0
        %p344 = scmp.lt.s32.totalorder %s21, 0
        %s345 = scalar_select %p344, %s21, 0
        %s346 = sadd.s32 %s345, %s343
        %s347 = smul.addr %s346, 2
        %s348 = scalar_lea.vmem %s3, %s347
        %v350 = vld [vmem:[%s283] sm:$0xff]
        %v351 = vld [vmem:[%s283 + $0x8] sm:$0xf]
        %v352 = vld [vmem:[%s283 + $0xc] sm:$0xff]
        %v353 = vld [vmem:[%s283 + $0x14] sm:$0xf]
        %v354 = vld [vmem:[%s283 + $0x18] sm:$0xff]
        %v355 = vld [vmem:[%s283 + $0x20] sm:$0xf]
        %v356 = vld [vmem:[%s283 + $0x24] sm:$0xff]
        %v357 = vld [vmem:[%s283 + $0x2c] sm:$0xf]
        %v358 = vld [vmem:[%s283 + $0x30] sm:$0xff]
        %v359 = vld [vmem:[%s283 + $0x38] sm:$0xf]
        %v360 = vld [vmem:[%s283 + $0x3c] sm:$0xff]
        %v361 = vld [vmem:[%s283 + $0x44] sm:$0xf]
        %v362 = vld [vmem:[%s283 + $0x48] sm:$0xff]
        %v363 = vld [vmem:[%s283 + $0x50] sm:$0xf]
        %v364 = vld [vmem:[%s283 + $0x54] sm:$0xff]
        %v365 = vld [vmem:[%s283 + $0x5c] sm:$0xf]
        %v366 = vld [vmem:[%s283 + $0x60] sm:$0xff]
        %v367 = vld [vmem:[%s283 + $0x68] sm:$0xf]
        %v368 = vld [vmem:[%s283 + $0x6c] sm:$0xff]
        %v369 = vld [vmem:[%s283 + $0x74] sm:$0xf]
        %v370 = vld [vmem:[%s283 + $0x78] sm:$0xff]
        %v371 = vld [vmem:[%s283 + $0x80] sm:$0xf]
        %v372 = vld [vmem:[%s283 + $0x84] sm:$0xff]
        %v373 = vld [vmem:[%s283 + $0x8c] sm:$0xf]
        %v374 = vld [vmem:[%s283 + $0x90] sm:$0xff]
        %v375 = vld [vmem:[%s283 + $0x98] sm:$0xf]
        %v376 = vld [vmem:[%s283 + $0x9c] sm:$0xff]
        %v377 = vld [vmem:[%s283 + $0xa4] sm:$0xf]
        %v378 = vld [vmem:[%s283 + $0xa8] sm:$0xff]
        %v379 = vld [vmem:[%s283 + $0xb0] sm:$0xf]
        %v380 = vld [vmem:[%s283 + $0xb4] sm:$0xff]
        %v381 = vld [vmem:[%s283 + $0xbc] sm:$0xf]
        %v382 = vld [vmem:[%s331] sm:$0xf]
        %v383 = vld [vmem:[%s331 + $0x4] sm:$0xf]
        %v384 = vld [vmem:[%s331 + $0x8] sm:$0xf]
        %v385 = vld [vmem:[%s331 + $0xc] sm:$0xf]
        %v386 = vld [vmem:[%s331 + $0x10] sm:$0xf]
        %v387 = vld [vmem:[%s331 + $0x14] sm:$0xf]
        %v388 = vld [vmem:[%s331 + $0x18] sm:$0xf]
        %v389 = vld [vmem:[%s331 + $0x1c] sm:$0xf]
        %v390 = vld [vmem:[%s331 + $0x20] sm:$0xf]
        %v391 = vld [vmem:[%s331 + $0x24] sm:$0xf]
        %v392 = vld [vmem:[%s331 + $0x28] sm:$0xf]
        %v393 = vld [vmem:[%s331 + $0x2c] sm:$0xf]
        %v394 = vld [vmem:[%s331 + $0x30] sm:$0xf]
        %v395 = vld [vmem:[%s331 + $0x34] sm:$0xf]
        %v396 = vld [vmem:[%s331 + $0x38] sm:$0xf]
        %v397 = vld [vmem:[%s331 + $0x3c] sm:$0xf]
        %v398 = vld [vmem:[%s331 + $0x40] sm:$0xf]
        %v399 = vld [vmem:[%s331 + $0x44] sm:$0xf]
        %v400 = vld [vmem:[%s331 + $0x48] sm:$0xf]
        %v401 = vld [vmem:[%s331 + $0x4c] sm:$0xf]
        %v402 = vld [vmem:[%s331 + $0x50] sm:$0xf]
        %v403 = vld [vmem:[%s331 + $0x54] sm:$0xf]
        %v404 = vld [vmem:[%s331 + $0x58] sm:$0xf]
        %v405 = vld [vmem:[%s331 + $0x5c] sm:$0xf]
        %v406 = vld [vmem:[%s331 + $0x60] sm:$0xf]
        %v407 = vld [vmem:[%s331 + $0x64] sm:$0xf]
        %v408 = vld [vmem:[%s331 + $0x68] sm:$0xf]
        %v409 = vld [vmem:[%s331 + $0x6c] sm:$0xf]
        %v410 = vld [vmem:[%s331 + $0x70] sm:$0xf]
        %v411 = vld [vmem:[%s331 + $0x74] sm:$0xf]
        %v412 = vld [vmem:[%s331 + $0x78] sm:$0xf]
        %v413 = vld [vmem:[%s331 + $0x7c] sm:$0xf]
        %v414 = vld [vmem:[%s331 + $0x80] sm:$0xf]
        %v415 = vld [vmem:[%s331 + $0x84] sm:$0xf]
        %v416 = vld [vmem:[%s331 + $0x88] sm:$0xf]
        %v417 = vld [vmem:[%s331 + $0x8c] sm:$0xf]
        %v418 = vld [vmem:[%s331 + $0x90] sm:$0xf]
        %v419 = vld [vmem:[%s331 + $0x94] sm:$0xf]
        %v420 = vld [vmem:[%s331 + $0x98] sm:$0xf]
        %v421 = vld [vmem:[%s331 + $0x9c] sm:$0xf]
        %v422 = vld [vmem:[%s331 + $0xa0] sm:$0xf]
        %v423 = vld [vmem:[%s331 + $0xa4] sm:$0xf]
        %v424 = vld [vmem:[%s331 + $0xa8] sm:$0xf]
        %v425 = vld [vmem:[%s331 + $0xac] sm:$0xf]
        %v426 = vld [vmem:[%s331 + $0xb0] sm:$0xf]
        %v427 = vld [vmem:[%s331 + $0xb4] sm:$0xf]
        %v428 = vld [vmem:[%s331 + $0xb8] sm:$0xf]
        %v429 = vld [vmem:[%s331 + $0xbc] sm:$0xf]
        %v462 = vunpack.c.l.b16 %v350
        %v463 = vunpack.c.h.b16 %v350
        %v464 = vunpack.c.l.b16 %v351
        %v465 = vunpack.c.l.b16 %v352
        %v466 = vunpack.c.h.b16 %v352
        %v467 = vunpack.c.l.b16 %v353
        %v468 = vunpack.c.l.b16 %v354
        %v469 = vunpack.c.h.b16 %v354
        %v470 = vunpack.c.l.b16 %v355
        %v471 = vunpack.c.l.b16 %v356
        %v472 = vunpack.c.h.b16 %v356
        %v473 = vunpack.c.l.b16 %v357
        %v474 = vunpack.c.l.b16 %v358
        %v475 = vunpack.c.h.b16 %v358
        %v476 = vunpack.c.l.b16 %v359
        %v477 = vunpack.c.l.b16 %v360
        %v478 = vunpack.c.h.b16 %v360
        %v479 = vunpack.c.l.b16 %v361
        %v480 = vunpack.c.l.b16 %v362
        %v481 = vunpack.c.h.b16 %v362
        %v482 = vunpack.c.l.b16 %v363
        %v483 = vunpack.c.l.b16 %v364
        %v484 = vunpack.c.h.b16 %v364
        %v485 = vunpack.c.l.b16 %v365
        %v486 = vunpack.c.l.b16 %v366
        %v487 = vunpack.c.h.b16 %v366
        %v488 = vunpack.c.l.b16 %v367
        %v489 = vunpack.c.l.b16 %v368
        %v490 = vunpack.c.h.b16 %v368
        %v491 = vunpack.c.l.b16 %v369
        %v492 = vunpack.c.l.b16 %v370
        %v493 = vunpack.c.h.b16 %v370
        %v494 = vunpack.c.l.b16 %v371
        %v495 = vunpack.c.l.b16 %v372
        %v496 = vunpack.c.h.b16 %v372
        %v497 = vunpack.c.l.b16 %v373
        %v498 = vunpack.c.l.b16 %v374
        %v499 = vunpack.c.h.b16 %v374
        %v500 = vunpack.c.l.b16 %v375
        %v501 = vunpack.c.l.b16 %v376
        %v502 = vunpack.c.h.b16 %v376
        %v503 = vunpack.c.l.b16 %v377
        %v504 = vunpack.c.l.b16 %v378
        %v505 = vunpack.c.h.b16 %v378
        %v506 = vunpack.c.l.b16 %v379
        %v507 = vunpack.c.l.b16 %v380
        %v508 = vunpack.c.h.b16 %v380
        %v509 = vunpack.c.l.b16 %v381
        %v510 = vpack.c.b16 %v465, %v462
        %v511 = vpack.c.b16 %v466, %v463
        %v512 = vpack.c.b16 %v467, %v464
        %v513 = vpack.c.b16 %v471, %v468
        %v514 = vpack.c.b16 %v472, %v469
        %v515 = vpack.c.b16 %v473, %v470
        %v516 = vpack.c.b16 %v477, %v474
        %v517 = vpack.c.b16 %v478, %v475
        %v518 = vpack.c.b16 %v479, %v476
        %v519 = vpack.c.b16 %v483, %v480
        %v520 = vpack.c.b16 %v484, %v481
        %v521 = vpack.c.b16 %v485, %v482
        %v522 = vpack.c.b16 %v489, %v486
        %v523 = vpack.c.b16 %v490, %v487
        %v524 = vpack.c.b16 %v491, %v488
        %v525 = vpack.c.b16 %v495, %v492
        %v526 = vpack.c.b16 %v496, %v493
        %v527 = vpack.c.b16 %v497, %v494
        %v528 = vpack.c.b16 %v501, %v498
        %v529 = vpack.c.b16 %v502, %v499
        %v530 = vpack.c.b16 %v503, %v500
        %v531 = vpack.c.b16 %v507, %v504
        %v532 = vpack.c.b16 %v508, %v505
        %v533 = vpack.c.b16 %v509, %v506
        %v606 = vunpack.c.l.b16 %v382
        %v607 = vunpack.c.l.b16 %v383
        %v608 = vunpack.c.l.b16 %v384
        %v609 = vunpack.c.l.b16 %v385
        %v610 = vunpack.c.l.b16 %v386
        %v611 = vunpack.c.l.b16 %v387
        %v612 = vunpack.c.l.b16 %v388
        %v613 = vunpack.c.l.b16 %v389
        %v614 = vunpack.c.l.b16 %v390
        %v615 = vunpack.c.l.b16 %v391
        %v616 = vunpack.c.l.b16 %v392
        %v617 = vunpack.c.l.b16 %v393
        %v618 = vunpack.c.l.b16 %v394
        %v619 = vunpack.c.l.b16 %v395
        %v620 = vunpack.c.l.b16 %v396
        %v621 = vunpack.c.l.b16 %v397
        %v622 = vunpack.c.l.b16 %v398
        %v623 = vunpack.c.l.b16 %v399
        %v624 = vunpack.c.l.b16 %v400
        %v625 = vunpack.c.l.b16 %v401
        %v626 = vunpack.c.l.b16 %v402
        %v627 = vunpack.c.l.b16 %v403
        %v628 = vunpack.c.l.b16 %v404
        %v629 = vunpack.c.l.b16 %v405
        %v630 = vunpack.c.l.b16 %v406
        %v631 = vunpack.c.l.b16 %v407
        %v632 = vunpack.c.l.b16 %v408
        %v633 = vunpack.c.l.b16 %v409
        %v634 = vunpack.c.l.b16 %v410
        %v635 = vunpack.c.l.b16 %v411
        %v636 = vunpack.c.l.b16 %v412
        %v637 = vunpack.c.l.b16 %v413
        %v638 = vunpack.c.l.b16 %v414
        %v639 = vunpack.c.l.b16 %v415
        %v640 = vunpack.c.l.b16 %v416
        %v641 = vunpack.c.l.b16 %v417
        %v642 = vunpack.c.l.b16 %v418
        %v643 = vunpack.c.l.b16 %v419
        %v644 = vunpack.c.l.b16 %v420
        %v645 = vunpack.c.l.b16 %v421
        %v646 = vunpack.c.l.b16 %v422
        %v647 = vunpack.c.l.b16 %v423
        %v648 = vunpack.c.l.b16 %v424
        %v649 = vunpack.c.l.b16 %v425
        %v650 = vunpack.c.l.b16 %v426
        %v651 = vunpack.c.l.b16 %v427
        %v652 = vunpack.c.l.b16 %v428
        %v653 = vunpack.c.l.b16 %v429
        %v654 = vpack.c.b16 %v607, %v606
        %v655 = vpack.c.b16 %v609, %v608
        %v656 = vpack.c.b16 %v611, %v610
        %v657 = vpack.c.b16 %v613, %v612
        %v658 = vpack.c.b16 %v615, %v614
        %v659 = vpack.c.b16 %v617, %v616
        %v660 = vpack.c.b16 %v619, %v618
        %v661 = vpack.c.b16 %v621, %v620
        %v662 = vpack.c.b16 %v623, %v622
        %v663 = vpack.c.b16 %v625, %v624
        %v664 = vpack.c.b16 %v627, %v626
        %v665 = vpack.c.b16 %v629, %v628
        %v666 = vpack.c.b16 %v631, %v630
        %v667 = vpack.c.b16 %v633, %v632
        %v668 = vpack.c.b16 %v635, %v634
        %v669 = vpack.c.b16 %v637, %v636
        %v670 = vpack.c.b16 %v639, %v638
        %v671 = vpack.c.b16 %v641, %v640
        %v672 = vpack.c.b16 %v643, %v642
        %v673 = vpack.c.b16 %v645, %v644
        %v674 = vpack.c.b16 %v647, %v646
        %v675 = vpack.c.b16 %v649, %v648
        %v676 = vpack.c.b16 %v651, %v650
        %v677 = vpack.c.b16 %v653, %v652
        %702 = vmatprep.subr.bf16.mxu0 0
        %703 = vmatpush1.bf16.msra.mxu0 %v654
        %704 = vmatprep.subr.bf16.mxu0 0
        %705 = vmatpush1.bf16.msra.mxu0 %v655
        %706 = vmatprep.subr.bf16.mxu0 0
        %707 = vmatpush1.bf16.msra.mxu0 %v656
        %708 = vmatprep.subr.bf16.mxu0 0
        %709 = vmatpush1.bf16.msra.mxu0 %v657
        %710 = vmatprep.subr.bf16.mxu0 0
        %711 = vmatpush1.bf16.msra.mxu0 %v658
        %712 = vmatprep.subr.bf16.mxu0 0
        %713 = vmatpush1.bf16.msra.mxu0 %v659
        %714 = vmatprep.subr.bf16.mxu0 0
        %715 = vmatpush1.bf16.msra.mxu0 %v660
        %716 = vmatprep.subr.bf16.mxu0 0
        %717 = vmatpush1.bf16.msra.mxu0 %v661
        %718 = vmatprep.subr.bf16.mxu0 0
        %719 = vmatpush1.bf16.msra.mxu0 %v662
        %720 = vmatprep.subr.bf16.mxu0 0
        %721 = vmatpush1.bf16.msra.mxu0 %v663
        %722 = vmatprep.subr.bf16.mxu0 0
        %723 = vmatpush1.bf16.msra.mxu0 %v664
        %724 = vmatprep.subr.bf16.mxu0 0
        %725 = vmatpush1.bf16.msra.mxu0 %v665
        %726 = vmatprep.subr.bf16.mxu0 0
        %727 = vmatpush1.bf16.msra.mxu0 %v666
        %728 = vmatprep.subr.bf16.mxu0 0
        %729 = vmatpush1.bf16.msra.mxu0 %v667
        %730 = vmatprep.subr.bf16.mxu0 0
        %731 = vmatpush1.bf16.msra.mxu0 %v668
        %732 = vmatprep.subr.bf16.mxu0 0
        %733 = vmatpush1.bf16.msra.mxu0 %v669
        %734 = vmatprep.mubr.bf16.mxu0 %v511
        %735 = vmatmul.mubr.bf16.gmra.mrb[0].mxu0 %v510
        %v736 = vpop.f32.mrb[0].mxu0
        %v737 = vadd.f32 0.0, %v736
        %v738 = vpop.f32.mrb[0].mxu0
        %v739 = vpop.f32.mrb[0].mxu0
        %v740 = vadd.f32 0.0, %v739
        %v741 = vpop.f32.mrb[0].mxu0
        %742 = vmatprep.mubr.bf16.mxu0 %v514
        %743 = vmatmul.mubr.bf16.gmra.mrb[0].mxu0 %v513
        %v744 = vpop.f32.mrb[0].mxu0
        %v745 = vadd.f32 0.0, %v744
        %v746 = vpop.f32.mrb[0].mxu0
        %v747 = vpop.f32.mrb[0].mxu0
        %v748 = vadd.f32 0.0, %v747
        %v749 = vpop.f32.mrb[0].mxu0
        %750 = vmatprep.mubr.bf16.mxu0 %v517
        %751 = vmatmul.mubr.bf16.gmra.mrb[0].mxu0 %v516
        %v752 = vpop.f32.mrb[0].mxu0
        %v753 = vadd.f32 0.0, %v752
        %v754 = vpop.f32.mrb[0].mxu0
        %v755 = vpop.f32.mrb[0].mxu0
        %v756 = vadd.f32 0.0, %v755
        %v757 = vpop.f32.mrb[0].mxu0
        %758 = vmatprep.mubr.bf16.mxu0 %v520
        %759 = vmatmul.mubr.bf16.gmra.mrb[0].mxu0 %v519
        %v760 = vpop.f32.mrb[0].mxu0
        %v761 = vadd.f32 0.0, %v760
        %v762 = vpop.f32.mrb[0].mxu0
        %v763 = vpop.f32.mrb[0].mxu0
        %v764 = vadd.f32 0.0, %v763
        %v765 = vpop.f32.mrb[0].mxu0
        %766 = vmatprep.mubr.bf16.mxu0 %v523
        %767 = vmatmul.mubr.bf16.gmra.mrb[0].mxu0 %v522
        %v768 = vpop.f32.mrb[0].mxu0
        %v769 = vadd.f32 0.0, %v768
        %v770 = vpop.f32.mrb[0].mxu0
        %v771 = vpop.f32.mrb[0].mxu0
        %v772 = vadd.f32 0.0, %v771
        %v773 = vpop.f32.mrb[0].mxu0
        %774 = vmatprep.mubr.bf16.mxu0 %v526
        %775 = vmatmul.mubr.bf16.gmra.mrb[0].mxu0 %v525
        %v776 = vpop.f32.mrb[0].mxu0
        %v777 = vadd.f32 0.0, %v776
        %v778 = vpop.f32.mrb[0].mxu0
        %v779 = vpop.f32.mrb[0].mxu0
        %v780 = vadd.f32 0.0, %v779
        %v781 = vpop.f32.mrb[0].mxu0
        %782 = vmatprep.mubr.bf16.mxu0 %v529
        %783 = vmatmul.mubr.bf16.gmra.mrb[0].mxu0 %v528
        %v784 = vpop.f32.mrb[0].mxu0
        %v785 = vadd.f32 0.0, %v784
        %v786 = vpop.f32.mrb[0].mxu0
        %v787 = vpop.f32.mrb[0].mxu0
        %v788 = vadd.f32 0.0, %v787
        %v789 = vpop.f32.mrb[0].mxu0
        %790 = vmatprep.mubr.bf16.mxu0 %v532
        %791 = vmatmul.mubr.bf16.gmra.mrb[0].mxu0 %v531
        %v792 = vpop.f32.mrb[0].mxu0
        %v793 = vadd.f32 0.0, %v792
        %v794 = vpop.f32.mrb[0].mxu0
        %v795 = vpop.f32.mrb[0].mxu0
        %v796 = vadd.f32 0.0, %v795
        %v797 = vpop.f32.mrb[0].mxu0
        %798 = vdwg.mxu0
        %799 = vmatprep.subr.bf16.mxu0 0
        %800 = vmatpush1.bf16.msra.mxu0 %v670
        %801 = vmatprep.subr.bf16.mxu0 0
        %802 = vmatpush1.bf16.msra.mxu0 %v671
        %803 = vmatprep.subr.bf16.mxu0 0
        %804 = vmatpush1.bf16.msra.mxu0 %v672
        %805 = vmatprep.subr.bf16.mxu0 0
        %806 = vmatpush1.bf16.msra.mxu0 %v673
        %807 = vmatprep.subr.bf16.mxu0 0
        %808 = vmatpush1.bf16.msra.mxu0 %v674
        %809 = vmatprep.subr.bf16.mxu0 0
        %810 = vmatpush1.bf16.msra.mxu0 %v675
        %811 = vmatprep.subr.bf16.mxu0 0
        %812 = vmatpush1.bf16.msra.mxu0 %v676
        %813 = vmatprep.subr.bf16.mxu0 0
        %814 = vmatpush1.bf16.msra.mxu0 %v677
        %815 = vmatprep.subr.bf16.mxu0 0
        %816 = vmatpush1.bf16.msra.mxu0 0
        %817 = vmatprep.subr.bf16.mxu0 0
        %818 = vmatpush1.bf16.msra.mxu0 0
        %819 = vmatprep.subr.bf16.mxu0 0
        %820 = vmatpush1.bf16.msra.mxu0 0
        %821 = vmatprep.subr.bf16.mxu0 0
        %822 = vmatpush1.bf16.msra.mxu0 0
        %823 = vmatprep.subr.bf16.mxu0 0
        %824 = vmatpush1.bf16.msra.mxu0 0
        %825 = vmatprep.subr.bf16.mxu0 0
        %826 = vmatpush1.bf16.msra.mxu0 0
        %827 = vmatprep.subr.bf16.mxu0 0
        %828 = vmatpush1.bf16.msra.mxu0 0
        %829 = vmatprep.subr.bf16.mxu0 0
        %830 = vmatpush1.bf16.msra.mxu0 0
        %831 = vmatprep.mubr.bf16.mxu0 0
        %832 = vmatmul.mubr.bf16.gmra.mrb[0].mxu0 %v512
        %v833 = vpop.f32.mrb[0].mxu0
        %v834 = vadd.f32 %v737, %v833
        %v835 = vpop.f32.mrb[0].mxu0
        %v836 = vpop.f32.mrb[0].mxu0
        %v837 = vadd.f32 %v740, %v836
        %v838 = vpop.f32.mrb[0].mxu0
        %839 = vmatprep.mubr.bf16.mxu0 0
        %840 = vmatmul.mubr.bf16.gmra.mrb[0].mxu0 %v515
        %v841 = vpop.f32.mrb[0].mxu0
        %v842 = vadd.f32 %v745, %v841
        %v843 = vpop.f32.mrb[0].mxu0
        %v844 = vpop.f32.mrb[0].mxu0
        %v845 = vadd.f32 %v748, %v844
        %v846 = vpop.f32.mrb[0].mxu0
        %847 = vmatprep.mubr.bf16.mxu0 0
        %848 = vmatmul.mubr.bf16.gmra.mrb[0].mxu0 %v518
        %v849 = vpop.f32.mrb[0].mxu0
        %v850 = vadd.f32 %v753, %v849
        %v851 = vpop.f32.mrb[0].mxu0
        %v852 = vpop.f32.mrb[0].mxu0
        %v853 = vadd.f32 %v756, %v852
        %v854 = vpop.f32.mrb[0].mxu0
        %855 = vmatprep.mubr.bf16.mxu0 0
        %856 = vmatmul.mubr.bf16.gmra.mrb[0].mxu0 %v521
        %v857 = vpop.f32.mrb[0].mxu0
        %v858 = vadd.f32 %v761, %v857
        %v859 = vpop.f32.mrb[0].mxu0
        %v860 = vpop.f32.mrb[0].mxu0
        %v861 = vadd.f32 %v764, %v860
        %v862 = vpop.f32.mrb[0].mxu0
        %863 = vmatprep.mubr.bf16.mxu0 0
        %864 = vmatmul.mubr.bf16.gmra.mrb[0].mxu0 %v524
        %v865 = vpop.f32.mrb[0].mxu0
        %v866 = vadd.f32 %v769, %v865
        %v867 = vpop.f32.mrb[0].mxu0
        %v868 = vpop.f32.mrb[0].mxu0
        %v869 = vadd.f32 %v772, %v868
        %v870 = vpop.f32.mrb[0].mxu0
        %871 = vmatprep.mubr.bf16.mxu0 0
        %872 = vmatmul.mubr.bf16.gmra.mrb[0].mxu0 %v527
        %v873 = vpop.f32.mrb[0].mxu0
        %v874 = vadd.f32 %v777, %v873
        %v875 = vpop.f32.mrb[0].mxu0
        %v876 = vpop.f32.mrb[0].mxu0
        %v877 = vadd.f32 %v780, %v876
        %v878 = vpop.f32.mrb[0].mxu0
        %879 = vmatprep.mubr.bf16.mxu0 0
        %880 = vmatmul.mubr.bf16.gmra.mrb[0].mxu0 %v530
        %v881 = vpop.f32.mrb[0].mxu0
        %v882 = vadd.f32 %v785, %v881
        %v883 = vpop.f32.mrb[0].mxu0
        %v884 = vpop.f32.mrb[0].mxu0
        %v885 = vadd.f32 %v788, %v884
        %v886 = vpop.f32.mrb[0].mxu0
        %887 = vmatprep.mubr.bf16.mxu0 0
        %888 = vmatmul.mubr.bf16.gmra.mrb[0].mxu0 %v533
        %v889 = vpop.f32.mrb[0].mxu0
        %v890 = vadd.f32 %v793, %v889
        %v891 = vpop.f32.mrb[0].mxu0
        %v892 = vpop.f32.mrb[0].mxu0
        %v893 = vadd.f32 %v796, %v892
        %v894 = vpop.f32.mrb[0].mxu0
        %895 = vdwg.mxu0
        %p896 = scmp.eq.s32.totalorder %s22, 0
        // Predicated region
        $region55: #{_lambda_.38} parent=49 // pred_check
          %p897 = pneg %p896
        $region56: #{_lambda_.38} parent=49 // pred_check_branch
          %899 = sbr.rel (%p897) target = $region58
        $region57: #{_lambda_.38} parent=49 // pred_region
          %900 = vst [vmem:[#allocation2] sm:$0xff] 0.0
          %901 = vst [vmem:[#allocation2 + $0x8] sm:$0xff] 0.0
          %902 = vst [vmem:[#allocation2 + $0x10] sm:$0xff] 0.0
          %903 = vst [vmem:[#allocation2 + $0x18] sm:$0xff] 0.0
          %904 = vst [vmem:[#allocation2 + $0x20] sm:$0xff] 0.0
          %905 = vst [vmem:[#allocation2 + $0x28] sm:$0xff] 0.0
          %906 = vst [vmem:[#allocation2 + $0x30] sm:$0xff] 0.0
          %907 = vst [vmem:[#allocation2 + $0x38] sm:$0xff] 0.0
          %908 = vst [vmem:[#allocation2 + $0x40] sm:$0xff] 0.0
          %909 = vst [vmem:[#allocation2 + $0x48] sm:$0xff] 0.0
          %910 = vst [vmem:[#allocation2 + $0x50] sm:$0xff] 0.0
          %911 = vst [vmem:[#allocation2 + $0x58] sm:$0xff] 0.0
          %912 = vst [vmem:[#allocation2 + $0x60] sm:$0xff] 0.0
          %913 = vst [vmem:[#allocation2 + $0x68] sm:$0xff] 0.0
          %914 = vst [vmem:[#allocation2 + $0x70] sm:$0xff] 0.0
          %915 = vst [vmem:[#allocation2 + $0x78] sm:$0xff] 0.0
        $region58: #{_lambda_.38} parent=49 // pred_fallthru
          _
        %v916 = vld [vmem:[#allocation2] sm:$0xff]
        %v917 = vld [vmem:[#allocation2 + $0x8] sm:$0xff]
        %v918 = vld [vmem:[#allocation2 + $0x10] sm:$0xff]
        %v919 = vld [vmem:[#allocation2 + $0x18] sm:$0xff]
        %v920 = vld [vmem:[#allocation2 + $0x20] sm:$0xff]
        %v921 = vld [vmem:[#allocation2 + $0x28] sm:$0xff]
        %v922 = vld [vmem:[#allocation2 + $0x30] sm:$0xff]
        %v923 = vld [vmem:[#allocation2 + $0x38] sm:$0xff]
        %v924 = vld [vmem:[#allocation2 + $0x40] sm:$0xff]
        %v925 = vld [vmem:[#allocation2 + $0x48] sm:$0xff]
        %v926 = vld [vmem:[#allocation2 + $0x50] sm:$0xff]
        %v927 = vld [vmem:[#allocation2 + $0x58] sm:$0xff]
        %v928 = vld [vmem:[#allocation2 + $0x60] sm:$0xff]
        %v929 = vld [vmem:[#allocation2 + $0x68] sm:$0xff]
        %v930 = vld [vmem:[#allocation2 + $0x70] sm:$0xff]
        %v931 = vld [vmem:[#allocation2 + $0x78] sm:$0xff]
        %v932 = vadd.f32 %v916, %v834
        %v933 = vadd.f32 %v917, %v837
        %v934 = vadd.f32 %v918, %v842
        %v935 = vadd.f32 %v919, %v845
        %v936 = vadd.f32 %v920, %v850
        %v937 = vadd.f32 %v921, %v853
        %v938 = vadd.f32 %v922, %v858
        %v939 = vadd.f32 %v923, %v861
        %v940 = vadd.f32 %v924, %v866
        %v941 = vadd.f32 %v925, %v869
        %v942 = vadd.f32 %v926, %v874
        %v943 = vadd.f32 %v927, %v877
        %v944 = vadd.f32 %v928, %v882
        %v945 = vadd.f32 %v929, %v885
        %v946 = vadd.f32 %v930, %v890
        %v947 = vadd.f32 %v931, %v893
        %948 = vst [vmem:[#allocation2] sm:$0xff] %v932
        %949 = vst [vmem:[#allocation2 + $0x8] sm:$0xff] %v933
        %950 = vst [vmem:[#allocation2 + $0x10] sm:$0xff] %v934
        %951 = vst [vmem:[#allocation2 + $0x18] sm:$0xff] %v935
        %952 = vst [vmem:[#allocation2 + $0x20] sm:$0xff] %v936
        %953 = vst [vmem:[#allocation2 + $0x28] sm:$0xff] %v937
        %954 = vst [vmem:[#allocation2 + $0x30] sm:$0xff] %v938
        %955 = vst [vmem:[#allocation2 + $0x38] sm:$0xff] %v939
        %956 = vst [vmem:[#allocation2 + $0x40] sm:$0xff] %v940
        %957 = vst [vmem:[#allocation2 + $0x48] sm:$0xff] %v941
        %958 = vst [vmem:[#allocation2 + $0x50] sm:$0xff] %v942
        %959 = vst [vmem:[#allocation2 + $0x58] sm:$0xff] %v943
        %960 = vst [vmem:[#allocation2 + $0x60] sm:$0xff] %v944
        %961 = vst [vmem:[#allocation2 + $0x68] sm:$0xff] %v945
        %962 = vst [vmem:[#allocation2 + $0x70] sm:$0xff] %v946
        %963 = vst [vmem:[#allocation2 + $0x78] sm:$0xff] %v947
        %p964 = scmp.eq.s32.totalorder %s22, 2
        // Predicated region
        $region59: #{_lambda_.38} parent=49 // pred_check
          %p965 = pneg %p964
        $region60: #{_lambda_.38} parent=49 // pred_check_branch
          %967 = sbr.rel (%p965) target = $region62
        $region61: #{_lambda_.38} parent=49 // pred_region
          %v968 = vld [vmem:[#allocation2] sm:$0xff]
          %v969 = vld [vmem:[#allocation2 + $0x8] sm:$0xff]
          %v970 = vld [vmem:[#allocation2 + $0x10] sm:$0xff]
          %v971 = vld [vmem:[#allocation2 + $0x18] sm:$0xff]
          %v972 = vld [vmem:[#allocation2 + $0x20] sm:$0xff]
          %v973 = vld [vmem:[#allocation2 + $0x28] sm:$0xff]
          %v974 = vld [vmem:[#allocation2 + $0x30] sm:$0xff]
          %v975 = vld [vmem:[#allocation2 + $0x38] sm:$0xff]
          %v976 = vld [vmem:[#allocation2 + $0x40] sm:$0xff]
          %v977 = vld [vmem:[#allocation2 + $0x48] sm:$0xff]
          %v978 = vld [vmem:[#allocation2 + $0x50] sm:$0xff]
          %v979 = vld [vmem:[#allocation2 + $0x58] sm:$0xff]
          %v980 = vld [vmem:[#allocation2 + $0x60] sm:$0xff]
          %v981 = vld [vmem:[#allocation2 + $0x68] sm:$0xff]
          %v982 = vld [vmem:[#allocation2 + $0x70] sm:$0xff]
          %v983 = vld [vmem:[#allocation2 + $0x78] sm:$0xff]
          %v984 = vpack.c.bf16 %v969, %v968
          %v985 = vpack.c.bf16 %v971, %v970
          %v986 = vpack.c.bf16 %v973, %v972
          %v987 = vpack.c.bf16 %v975, %v974
          %v988 = vpack.c.bf16 %v977, %v976
          %v989 = vpack.c.bf16 %v979, %v978
          %v990 = vpack.c.bf16 %v981, %v980
          %v991 = vpack.c.bf16 %v983, %v982
          %v1000 = vunpack.c.l.b16 %v984
          %v1001 = vunpack.c.h.b16 %v984
          %v1002 = vunpack.c.l.b16 %v985
          %v1003 = vunpack.c.h.b16 %v985
          %v1004 = vunpack.c.l.b16 %v986
          %v1005 = vunpack.c.h.b16 %v986
          %v1006 = vunpack.c.l.b16 %v987
          %v1007 = vunpack.c.h.b16 %v987
          %v1008 = vunpack.c.l.b16 %v988
          %v1009 = vunpack.c.h.b16 %v988
          %v1010 = vunpack.c.l.b16 %v989
          %v1011 = vunpack.c.h.b16 %v989
          %v1012 = vunpack.c.l.b16 %v990
          %v1013 = vunpack.c.h.b16 %v990
          %v1014 = vunpack.c.l.b16 %v991
          %v1015 = vunpack.c.h.b16 %v991
          %v1016 = vpack.c.b16 %v1000, %v1000
          %v1017 = vpack.c.b16 %v1001, %v1001
          %v1018 = vpack.c.b16 %v1002, %v1002
          %v1019 = vpack.c.b16 %v1003, %v1003
          %v1020 = vpack.c.b16 %v1004, %v1004
          %v1021 = vpack.c.b16 %v1005, %v1005
          %v1022 = vpack.c.b16 %v1006, %v1006
          %v1023 = vpack.c.b16 %v1007, %v1007
          %v1024 = vpack.c.b16 %v1008, %v1008
          %v1025 = vpack.c.b16 %v1009, %v1009
          %v1026 = vpack.c.b16 %v1010, %v1010
          %v1027 = vpack.c.b16 %v1011, %v1011
          %v1028 = vpack.c.b16 %v1012, %v1012
          %v1029 = vpack.c.b16 %v1013, %v1013
          %v1030 = vpack.c.b16 %v1014, %v1014
          %v1031 = vpack.c.b16 %v1015, %v1015
          %1048 = vst [vmem:[%s340] sm:$0xf] %v1016
          %1049 = vst [vmem:[%s340 + $0x4] sm:$0xf] %v1017
          %1050 = vst [vmem:[%s340 + $0x8] sm:$0xf] %v1018
          %1051 = vst [vmem:[%s340 + $0xc] sm:$0xf] %v1019
          %1052 = vst [vmem:[%s340 + $0x10] sm:$0xf] %v1020
          %1053 = vst [vmem:[%s340 + $0x14] sm:$0xf] %v1021
          %1054 = vst [vmem:[%s340 + $0x18] sm:$0xf] %v1022
          %1055 = vst [vmem:[%s340 + $0x1c] sm:$0xf] %v1023
          %1056 = vst [vmem:[%s340 + $0x20] sm:$0xf] %v1024
          %1057 = vst [vmem:[%s340 + $0x24] sm:$0xf] %v1025
          %1058 = vst [vmem:[%s340 + $0x28] sm:$0xf] %v1026
          %1059 = vst [vmem:[%s340 + $0x2c] sm:$0xf] %v1027
          %1060 = vst [vmem:[%s340 + $0x30] sm:$0xf] %v1028
          %1061 = vst [vmem:[%s340 + $0x34] sm:$0xf] %v1029
          %1062 = vst [vmem:[%s340 + $0x38] sm:$0xf] %v1030
          %1063 = vst [vmem:[%s340 + $0x3c] sm:$0xf] %v1031
          %v1064 = vadd.f32 %v968, %v969
          %v1065 = vadd.f32 %v1064, %v970
          %v1066 = vadd.f32 %v1065, %v971
          %v1067 = vadd.f32 %v1066, %v972
          %v1068 = vadd.f32 %v1067, %v973
          %v1069 = vadd.f32 %v1068, %v974
          %v1070 = vadd.f32 %v1069, %v975
          %v1071 = vadd.f32 %v1070, %v976
          %v1072 = vadd.f32 %v1071, %v977
          %v1073 = vadd.f32 %v1072, %v978
          %v1074 = vadd.f32 %v1073, %v979
          %v1075 = vadd.f32 %v1074, %v980
          %v1076 = vadd.f32 %v1075, %v981
          %v1077 = vadd.f32 %v1076, %v982
          %v1078 = vadd.f32 %v1077, %v983
          %v1079 = vrot.slane %v1078, 4
          %v1080 = vadd.f32 %v1078, %v1079
          %v1081 = vrot.slane %v1080, 2
          %v1082 = vadd.f32 %v1080, %v1081
          %v1083 = vrot.slane %v1082, 1
          %v1084 = vadd.f32 %v1082, %v1083
          %v1085 = vmul.f32 %v968, %v968
          %v1086 = vmul.f32 %v969, %v969
          %v1087 = vmul.f32 %v970, %v970
          %v1088 = vmul.f32 %v971, %v971
          %v1089 = vmul.f32 %v972, %v972
          %v1090 = vmul.f32 %v973, %v973
          %v1091 = vmul.f32 %v974, %v974
          %v1092 = vmul.f32 %v975, %v975
          %v1093 = vmul.f32 %v976, %v976
          %v1094 = vmul.f32 %v977, %v977
          %v1095 = vmul.f32 %v978, %v978
          %v1096 = vmul.f32 %v979, %v979
          %v1097 = vmul.f32 %v980, %v980
          %v1098 = vmul.f32 %v981, %v981
          %v1099 = vmul.f32 %v982, %v982
          %v1100 = vmul.f32 %v983, %v983
          %v1101 = vadd.f32 %v1085, %v1086
          %v1102 = vadd.f32 %v1101, %v1087
          %v1103 = vadd.f32 %v1102, %v1088
          %v1104 = vadd.f32 %v1103, %v1089
          %v1105 = vadd.f32 %v1104, %v1090
          %v1106 = vadd.f32 %v1105, %v1091
          %v1107 = vadd.f32 %v1106, %v1092
          %v1108 = vadd.f32 %v1107, %v1093
          %v1109 = vadd.f32 %v1108, %v1094
          %v1110 = vadd.f32 %v1109, %v1095
          %v1111 = vadd.f32 %v1110, %v1096
          %v1112 = vadd.f32 %v1111, %v1097
          %v1113 = vadd.f32 %v1112, %v1098
          %v1114 = vadd.f32 %v1113, %v1099
          %v1115 = vadd.f32 %v1114, %v1100
          %v1116 = vrot.slane %v1115, 4
          %v1117 = vadd.f32 %v1115, %v1116
          %v1118 = vrot.slane %v1117, 2
          %v1119 = vadd.f32 %v1117, %v1118
          %v1120 = vrot.slane %v1119, 1
          %v1121 = vadd.f32 %v1119, %v1120
          %vm1122 = vcmask 1040384
          %v1123 = vsel %vm1122, %v1084, %v1121
          %1124 = vst [vmem:[%s348] sm:$0x3] %v1123
        $region62: #{_lambda_.38} parent=49 // pred_fallthru
          _
        %s1125 = smul.u32 16, %s20
        %p1126 = scmp.lt.s32.totalorder %s1125, 15
        %s1127 = scalar_select %p1126, %s1125, 15
        %p1128 = scmp.lt.s32.totalorder %s21, 0
        %s1129 = scalar_select %p1128, %s21, 0
        %s1130 = sadd.s32 %s1129, %s1127
        %s1131 = smul.addr %s1130, 4
        %s1132 = scalar_lea.vmem %s2, %s1131
        %p1133 = scmp.lt.s32.totalorder %s20, 0
        %s1134 = scalar_select %p1133, %s20, 0
        %p1135 = scmp.lt.s32.totalorder %s21, 0
        %s1136 = scalar_select %p1135, %s21, 0
        %s1137 = sadd.s32 %s1136, %s1134
        %s1138 = smul.addr %s1137, 2
        %s1139 = scalar_lea.vmem %s3, %s1138
        // Predicated region
        $region63: #{_lambda_.38} parent=49 // pred_check
          %p1140 = pneg %p110
        $region64: #{_lambda_.38} parent=49 // pred_check_branch
          %1142 = sbr.rel (%p1140) target = $region66
        $region65: #{_lambda_.38} parent=49 // pred_region
          %s1143 = smul.u32 16, %s20
        $region66: #{_lambda_.38} parent=49 // pred_fallthru
          _
        // Predicated region
        $region67: #{_lambda_.38} parent=49 // pred_check
          %p1144 = pneg %p138
        $region68: #{_lambda_.38} parent=49 // pred_check_branch
          %1146 = sbr.rel (%p1144) target = $region70
        $region69: #{_lambda_.38} parent=49 // pred_region
          _
        $region70: #{_lambda_.38} parent=49 // pred_fallthru
          _
        // Predicated region
        $region71: #{_lambda_.38} parent=49 // pred_check
          %p1147 = pneg %p110
        $region72: #{_lambda_.38} parent=49 // pred_check_branch
          %1149 = sbr.rel (%p1147) target = $region74
        $region73: #{_lambda_.38} parent=49 // pred_region
          %s1150 = smul.u32 16, %s20
          %p1151 = scmp.lt.s32.totalorder %s1150, 15
          %s1152 = scalar_select %p1151, %s1150, 15
          %p1153 = scmp.lt.s32.totalorder %s21, 0
          %s1154 = scalar_select %p1153, %s21, 0
          %s1155 = sadd.s32 %s1154, %s1152
          %s1156 = smul.addr %s1155, 4
          %s1157 = scalar_lea.vmem %s2, %s1156
        $region74: #{_lambda_.38} parent=49 // pred_fallthru
          _
        // Predicated region
        $region75: #{_lambda_.38} parent=49 // pred_check
          %p1158 = pneg %p138
        $region76: #{_lambda_.38} parent=49 // pred_check_branch
          %1160 = sbr.rel (%p1158) target = $region78
        $region77: #{_lambda_.38} parent=49 // pred_region
          %p1161 = scmp.lt.s32.totalorder %s20, 0
          %s1162 = scalar_select %p1161, %s20, 0
          %p1163 = scmp.lt.s32.totalorder %s21, 0
          %s1164 = scalar_select %p1163, %s21, 0
          %s1165 = sadd.s32 %s1164, %s1162
          %s1166 = smul.addr %s1165, 2
          %s1167 = scalar_lea.vmem %s3, %s1166
        $region78: #{_lambda_.38} parent=49 // pred_fallthru
          _
      $region50: #{_lambda_.38} parent=5 // pred_fallthru
        _
      %p1168 = scmp.le.s32.totalorder 2, %s10
      // Predicated region
      $region79: #{_lambda_.38} parent=5 // pred_check
        %p1169 = pneg %p1168
      $region80: #{_lambda_.38} parent=5 // pred_check_branch
        %1171 = sbr.rel (%p1169) target = $region82
      $region81: #{_lambda_.38} parent=5 // pred_region
        %s1172 = ssub.s32 %s10, 2
      $region82: #{_lambda_.38} parent=5 // pred_fallthru
        _
    $region6: #{_lambda_.38} parent=1 // loop_footer
      %s14 = sadd.s32 1, %s10
    $region7: #{_lambda_.38} parent=1 // loop_footer_branch
      %9 = sbr.rel target = $region3
    $region8: #{_lambda_.38} parent=1 // loop_exit
      _

// kernel: _lambda_.46
$region0: #{_lambda_.46}
  #allocation0 [shape = 'u32[]', space=smem, size = 0x4, offset = 0x4, fixed_abs, tag = 'smem constant byte address 0x4 - core index']
  #allocation1 [shape = 'u32[144,128]{1,0:T(1,128)}', space=vmem, size = 0x12000, scoped, tag = 'internal scratch']
  %s0 = inlined_call_operand.vmem [shape: bf16[32,128], index: 0, kind: input, shape index: {}]
  %s1 = inlined_call_operand.vmem [shape: bf16[128,32], index: 1, kind: input, shape index: {}]
  %s2 = inlined_call_operand.vmem [shape: f32[1,32], index: 2, kind: input, shape index: {}]
  %s3 = inlined_call_operand.vmem [shape: bf16[32,32], index: 3, kind: output, shape index: {0}]
  %s4 = inlined_call_operand.vmem [shape: f32[1,2,32], index: 4, kind: output, shape index: {1}]
  %5 = xla_tuple %s3, %s4
  %s6 = sld [smem:[#allocation0]]
  $region30: #{_lambda_.46} parent=0
    _
  %s8 = ssub.s32 1, %s6
  %s9 = scalar_select 0, %s8, %s6
  // Predicated region
  $region2: #{_lambda_.46} parent=0 // pred_check
    _
  $region3: #{_lambda_.46} parent=0 // pred_check_branch
    %11 = sbr.rel (0) target = $region5
  $region4: #{_lambda_.46} parent=0 // pred_region
    _
  $region5: #{_lambda_.46} parent=0 // pred_fallthru
    _
  // Predicated region
  $region6: #{_lambda_.46} parent=0 // pred_check
    _
  $region7: #{_lambda_.46} parent=0 // pred_check_branch
    %13 = sbr.rel (0) target = $region9
  $region8: #{_lambda_.46} parent=0 // pred_region
    _
  $region9: #{_lambda_.46} parent=0 // pred_fallthru
    _
  // Predicated region
  $region10: #{_lambda_.46} parent=0 // pred_check
    _
  $region11: #{_lambda_.46} parent=0 // pred_check_branch
    %15 = sbr.rel (0) target = $region13
  $region12: #{_lambda_.46} parent=0 // pred_region
    _
  $region13: #{_lambda_.46} parent=0 // pred_fallthru
    _
  %v17 = vld [vmem:[%s0] sm:$0xf]
  %v18 = vld [vmem:[%s0 + $0x4] sm:$0xf]
  %v19 = vld [vmem:[%s0 + $0x8] sm:$0xf]
  %v20 = vld [vmem:[%s0 + $0xc] sm:$0xf]
  %v21 = vmax.bf16 %v17, 0
  %v22 = vmax.bf16 %v18, 0
  %v23 = vmax.bf16 %v19, 0
  %v24 = vmax.bf16 %v20, 0
  %v25 = vld [vmem:[%s1] sm:$0xf]
  %v26 = vld [vmem:[%s1 + $0x4] sm:$0xf]
  %v27 = vld [vmem:[%s1 + $0x8] sm:$0xf]
  %v28 = vld [vmem:[%s1 + $0xc] sm:$0xf]
  %v29 = vld [vmem:[%s1 + $0x10] sm:$0xf]
  %v30 = vld [vmem:[%s1 + $0x14] sm:$0xf]
  %v31 = vld [vmem:[%s1 + $0x18] sm:$0xf]
  %v32 = vld [vmem:[%s1 + $0x1c] sm:$0xf]
  %v33 = vld [vmem:[%s1 + $0x20] sm:$0xf]
  %v34 = vld [vmem:[%s1 + $0x24] sm:$0xf]
  %v35 = vld [vmem:[%s1 + $0x28] sm:$0xf]
  %v36 = vld [vmem:[%s1 + $0x2c] sm:$0xf]
  %v37 = vld [vmem:[%s1 + $0x30] sm:$0xf]
  %v38 = vld [vmem:[%s1 + $0x34] sm:$0xf]
  %v39 = vld [vmem:[%s1 + $0x38] sm:$0xf]
  %v40 = vld [vmem:[%s1 + $0x3c] sm:$0xf]
  %v41 = vld [vmem:[%s2] sm:$0x1]
  %v43 = vlaneseq
  %v44 = vshrl.u32 %v43, 7
  %v45 = vsub.s32 0, %v44
  %v46 = vrot.slane %v41, %v45
  %v52 = vunpack.c.l.b16 %v21
  %v53 = vunpack.c.l.b16 %v22
  %v54 = vunpack.c.l.b16 %v23
  %v55 = vunpack.c.l.b16 %v24
  %v56 = vpack.c.b16 %v53, %v52
  %v57 = vpack.c.b16 %v55, %v54
  %v76 = vunpack.c.l.b16 %v25
  %v77 = vunpack.c.l.b16 %v26
  %v78 = vunpack.c.l.b16 %v27
  %v79 = vunpack.c.l.b16 %v28
  %v80 = vunpack.c.l.b16 %v29
  %v81 = vunpack.c.l.b16 %v30
  %v82 = vunpack.c.l.b16 %v31
  %v83 = vunpack.c.l.b16 %v32
  %v84 = vunpack.c.l.b16 %v33
  %v85 = vunpack.c.l.b16 %v34
  %v86 = vunpack.c.l.b16 %v35
  %v87 = vunpack.c.l.b16 %v36
  %v88 = vunpack.c.l.b16 %v37
  %v89 = vunpack.c.l.b16 %v38
  %v90 = vunpack.c.l.b16 %v39
  %v91 = vunpack.c.l.b16 %v40
  %v92 = vpack.c.b16 %v77, %v76
  %v93 = vpack.c.b16 %v79, %v78
  %v94 = vpack.c.b16 %v81, %v80
  %v95 = vpack.c.b16 %v83, %v82
  %v96 = vpack.c.b16 %v85, %v84
  %v97 = vpack.c.b16 %v87, %v86
  %v98 = vpack.c.b16 %v89, %v88
  %v99 = vpack.c.b16 %v91, %v90
  %108 = vmatprep.subr.bf16.mxu0 0
  %109 = vmatpush1.bf16.msra.mxu0 %v92
  %110 = vmatprep.subr.bf16.mxu0 0
  %111 = vmatpush1.bf16.msra.mxu0 %v93
  %112 = vmatprep.subr.bf16.mxu0 0
  %113 = vmatpush1.bf16.msra.mxu0 %v94
  %114 = vmatprep.subr.bf16.mxu0 0
  %115 = vmatpush1.bf16.msra.mxu0 %v95
  %116 = vmatprep.subr.bf16.mxu0 0
  %117 = vmatpush1.bf16.msra.mxu0 %v96
  %118 = vmatprep.subr.bf16.mxu0 0
  %119 = vmatpush1.bf16.msra.mxu0 %v97
  %120 = vmatprep.subr.bf16.mxu0 0
  %121 = vmatpush1.bf16.msra.mxu0 %v98
  %122 = vmatprep.subr.bf16.mxu0 0
  %123 = vmatpush1.bf16.msra.mxu0 %v99
  %124 = vmatprep.subr.bf16.mxu0 0
  %125 = vmatpush1.bf16.msra.mxu0 0
  %126 = vmatprep.subr.bf16.mxu0 0
  %127 = vmatpush1.bf16.msra.mxu0 0
  %128 = vmatprep.subr.bf16.mxu0 0
  %129 = vmatpush1.bf16.msra.mxu0 0
  %130 = vmatprep.subr.bf16.mxu0 0
  %131 = vmatpush1.bf16.msra.mxu0 0
  %132 = vmatprep.subr.bf16.mxu0 0
  %133 = vmatpush1.bf16.msra.mxu0 0
  %134 = vmatprep.subr.bf16.mxu0 0
  %135 = vmatpush1.bf16.msra.mxu0 0
  %136 = vmatprep.subr.bf16.mxu0 0
  %137 = vmatpush1.bf16.msra.mxu0 0
  %138 = vmatprep.subr.bf16.mxu0 0
  %139 = vmatpush1.bf16.msra.mxu0 0
  %140 = vmatprep.mubr.bf16.mxu0 0
  %141 = vmatmul.mubr.bf16.gmra.mrb[0].mxu0 %v56
  %v142 = vpop.f32.mrb[0].mxu0
  %v143 = vadd.f32 %v46, %v142
  %v144 = vpop.f32.mrb[0].mxu0
  %v145 = vpop.f32.mrb[0].mxu0
  %v146 = vadd.f32 %v46, %v145
  %v147 = vpop.f32.mrb[0].mxu0
  %148 = vmatprep.mubr.bf16.mxu0 0
  %149 = vmatmul.mubr.bf16.gmra.mrb[0].mxu0 %v57
  %v150 = vpop.f32.mrb[0].mxu0
  %v151 = vadd.f32 %v46, %v150
  %v152 = vpop.f32.mrb[0].mxu0
  %v153 = vpop.f32.mrb[0].mxu0
  %v154 = vadd.f32 %v46, %v153
  %v155 = vpop.f32.mrb[0].mxu0
  %156 = vdwg.mxu0
  %v157 = vpack.c.bf16 %v146, %v143
  %v158 = vpack.c.bf16 %v154, %v151
  %v161 = vunpack.c.l.b16 %v157
  %v162 = vunpack.c.h.b16 %v157
  %v163 = vunpack.c.l.b16 %v158
  %v164 = vunpack.c.h.b16 %v158
  %v165 = vpack.c.b16 %v161, %v161
  %v166 = vpack.c.b16 %v162, %v162
  %v167 = vpack.c.b16 %v163, %v163
  %v168 = vpack.c.b16 %v164, %v164
  %vm173 = vcmask 257024
  %174 = vst.msk [vmem:[%s3] sm:$0xf] %vm173, %v165
  %175 = vst.msk [vmem:[%s3 + $0x4] sm:$0xf] %vm173, %v166
  %176 = vst.msk [vmem:[%s3 + $0x8] sm:$0xf] %vm173, %v167
  %177 = vst.msk [vmem:[%s3 + $0xc] sm:$0xf] %vm173, %v168
  %vm178 = vcmask 261120
  %v179 = vsel %vm178, %v143, 0.0
  %v180 = vsel %vm178, %v146, 0.0
  %v181 = vadd.f32 %v179, %v180
  %v182 = vsel %vm178, %v151, 0.0
  %v183 = vadd.f32 %v181, %v182
  %v184 = vsel %vm178, %v154, 0.0
  %v185 = vadd.f32 %v183, %v184
  %v186 = vrot.slane %v185, 4
  %v187 = vadd.f32 %v185, %v186
  %v188 = vrot.slane %v187, 2
  %v189 = vadd.f32 %v187, %v188
  %v190 = vrot.slane %v189, 1
  %v191 = vadd.f32 %v189, %v190
  %v192 = vmul.f32 %v143, %v143
  %v193 = vmul.f32 %v146, %v146
  %v194 = vmul.f32 %v151, %v151
  %v195 = vmul.f32 %v154, %v154
  %v196 = vsel %vm178, %v192, 0.0
  %v197 = vsel %vm178, %v193, 0.0
  %v198 = vadd.f32 %v196, %v197
  %v199 = vsel %vm178, %v194, 0.0
  %v200 = vadd.f32 %v198, %v199
  %v201 = vsel %vm178, %v195, 0.0
  %v202 = vadd.f32 %v200, %v201
  %v203 = vrot.slane %v202, 4
  %v204 = vadd.f32 %v202, %v203
  %v205 = vrot.slane %v204, 2
  %v206 = vadd.f32 %v204, %v205
  %v207 = vrot.slane %v206, 1
  %v208 = vadd.f32 %v206, %v207
  %vm209 = vcmask 1040384
  %v210 = vsel %vm209, %v191, %v208
  %vm211 = vcmask 254976
  %212 = vst.msk [vmem:[%s4] sm:$0x3] %vm211, %v210
  // Predicated region
  $region14: #{_lambda_.46} parent=0 // pred_check
    _
  $region15: #{_lambda_.46} parent=0 // pred_check_branch
    %214 = sbr.rel (0) target = $region17
  $region16: #{_lambda_.46} parent=0 // pred_region
    _
  $region17: #{_lambda_.46} parent=0 // pred_fallthru
    _
  // Predicated region
  $region18: #{_lambda_.46} parent=0 // pred_check
    _
  $region19: #{_lambda_.46} parent=0 // pred_check_branch
    %216 = sbr.rel (0) target = $region21
  $region20: #{_lambda_.46} parent=0 // pred_region
    _
  $region21: #{_lambda_.46} parent=0 // pred_fallthru
    _
  // Predicated region
  $region22: #{_lambda_.46} parent=0 // pred_check
    _
  $region23: #{_lambda_.46} parent=0 // pred_check_branch
    %218 = sbr.rel (0) target = $region25
  $region24: #{_lambda_.46} parent=0 // pred_region
    _
  $region25: #{_lambda_.46} parent=0 // pred_fallthru
    _
  // Predicated region
  $region26: #{_lambda_.46} parent=0 // pred_check
    _
  $region27: #{_lambda_.46} parent=0 // pred_check_branch
    %220 = sbr.rel (0) target = $region29
  $region28: #{_lambda_.46} parent=0 // pred_region
    _
  $region29: #{_lambda_.46} parent=0 // pred_fallthru
    _

// kernel: _lambda_.45
$region0: #{_lambda_.45}
  #allocation0 [shape = 'u32[]', space=smem, size = 0x4, offset = 0x4, fixed_abs, tag = 'smem constant byte address 0x4 - core index']
  #allocation1 [shape = 'u32[144,128]{1,0:T(1,128)}', space=vmem, size = 0x12000, scoped, tag = 'internal scratch']
  %s0 = inlined_call_operand.vmem [shape: bf16[32,128], index: 0, kind: input, shape index: {}]
  %s1 = inlined_call_operand.vmem [shape: bf16[128,128], index: 1, kind: input, shape index: {}]
  %s2 = inlined_call_operand.vmem [shape: f32[1,128], index: 2, kind: input, shape index: {}]
  %s3 = inlined_call_operand.vmem [shape: f32[1,128], index: 3, kind: input, shape index: {}]
  %s4 = inlined_call_operand.vmem [shape: bf16[32,128], index: 4, kind: output, shape index: {0}]
  %s5 = inlined_call_operand.vmem [shape: f32[1,2,128], index: 5, kind: output, shape index: {1}]
  %6 = xla_tuple %s4, %s5
  %s7 = sld [smem:[#allocation0]]
  $region34: #{_lambda_.45} parent=0
    _
  %s9 = ssub.s32 1, %s7
  %s10 = scalar_select 0, %s9, %s7
  // Predicated region
  $region2: #{_lambda_.45} parent=0 // pred_check
    _
  $region3: #{_lambda_.45} parent=0 // pred_check_branch
    %12 = sbr.rel (0) target = $region5
  $region4: #{_lambda_.45} parent=0 // pred_region
    _
  $region5: #{_lambda_.45} parent=0 // pred_fallthru
    _
  // Predicated region
  $region6: #{_lambda_.45} parent=0 // pred_check
    _
  $region7: #{_lambda_.45} parent=0 // pred_check_branch
    %14 = sbr.rel (0) target = $region9
  $region8: #{_lambda_.45} parent=0 // pred_region
    _
  $region9: #{_lambda_.45} parent=0 // pred_fallthru
    _
  // Predicated region
  $region10: #{_lambda_.45} parent=0 // pred_check
    _
  $region11: #{_lambda_.45} parent=0 // pred_check_branch
    %16 = sbr.rel (0) target = $region13
  $region12: #{_lambda_.45} parent=0 // pred_region
    _
  $region13: #{_lambda_.45} parent=0 // pred_fallthru
    _
  // Predicated region
  $region14: #{_lambda_.45} parent=0 // pred_check
    _
  $region15: #{_lambda_.45} parent=0 // pred_check_branch
    %18 = sbr.rel (0) target = $region17
  $region16: #{_lambda_.45} parent=0 // pred_region
    _
  $region17: #{_lambda_.45} parent=0 // pred_fallthru
    _
  %v20 = vld [vmem:[%s0] sm:$0xf]
  %v21 = vld [vmem:[%s0 + $0x4] sm:$0xf]
  %v22 = vld [vmem:[%s0 + $0x8] sm:$0xf]
  %v23 = vld [vmem:[%s0 + $0xc] sm:$0xf]
  %v24 = vunpack.c.l.bf16 %v20
  %v25 = vunpack.c.l.bf16 %v21
  %v26 = vunpack.c.l.bf16 %v22
  %v27 = vunpack.c.l.bf16 %v23
  %v28 = vld [vmem:[%s2] sm:$0x1]
  %v30 = vlaneseq
  %v31 = vshrl.u32 %v30, 7
  %v32 = vsub.s32 0, %v31
  %v33 = vrot.slane %v28, %v32
  %v35 = vmul.f32 %v24, %v33
  %v36 = vmul.f32 %v25, %v33
  %v37 = vmul.f32 %v26, %v33
  %v38 = vmul.f32 %v27, %v33
  %v39 = vld [vmem:[%s3] sm:$0x1]
  %v41 = vlaneseq
  %v42 = vshrl.u32 %v41, 7
  %v43 = vsub.s32 0, %v42
  %v44 = vrot.slane %v39, %v43
  %v46 = vadd.f32 %v35, %v44
  %v47 = vadd.f32 %v36, %v44
  %v48 = vadd.f32 %v37, %v44
  %v49 = vadd.f32 %v38, %v44
  %v50 = vmax.f32 %v46, 0.0
  %v51 = vmax.f32 %v47, 0.0
  %v52 = vmax.f32 %v48, 0.0
  %v53 = vmax.f32 %v49, 0.0
  %v54 = vpack.c.bf16 %v51, %v50
  %v55 = vpack.c.bf16 %v53, %v52
  %v56 = vld [vmem:[%s1] sm:$0xf]
  %v57 = vld [vmem:[%s1 + $0x4] sm:$0xf]
  %v58 = vld [vmem:[%s1 + $0x8] sm:$0xf]
  %v59 = vld [vmem:[%s1 + $0xc] sm:$0xf]
  %v60 = vld [vmem:[%s1 + $0x10] sm:$0xf]
  %v61 = vld [vmem:[%s1 + $0x14] sm:$0xf]
  %v62 = vld [vmem:[%s1 + $0x18] sm:$0xf]
  %v63 = vld [vmem:[%s1 + $0x1c] sm:$0xf]
  %v64 = vld [vmem:[%s1 + $0x20] sm:$0xf]
  %v65 = vld [vmem:[%s1 + $0x24] sm:$0xf]
  %v66 = vld [vmem:[%s1 + $0x28] sm:$0xf]
  %v67 = vld [vmem:[%s1 + $0x2c] sm:$0xf]
  %v68 = vld [vmem:[%s1 + $0x30] sm:$0xf]
  %v69 = vld [vmem:[%s1 + $0x34] sm:$0xf]
  %v70 = vld [vmem:[%s1 + $0x38] sm:$0xf]
  %v71 = vld [vmem:[%s1 + $0x3c] sm:$0xf]
  %v88 = vunpack.c.l.b16 %v56
  %v89 = vunpack.c.l.b16 %v57
  %v90 = vunpack.c.l.b16 %v58
  %v91 = vunpack.c.l.b16 %v59
  %v92 = vunpack.c.l.b16 %v60
  %v93 = vunpack.c.l.b16 %v61
  %v94 = vunpack.c.l.b16 %v62
  %v95 = vunpack.c.l.b16 %v63
  %v96 = vunpack.c.l.b16 %v64
  %v97 = vunpack.c.l.b16 %v65
  %v98 = vunpack.c.l.b16 %v66
  %v99 = vunpack.c.l.b16 %v67
  %v100 = vunpack.c.l.b16 %v68
  %v101 = vunpack.c.l.b16 %v69
  %v102 = vunpack.c.l.b16 %v70
  %v103 = vunpack.c.l.b16 %v71
  %v104 = vpack.c.b16 %v89, %v88
  %v105 = vpack.c.b16 %v91, %v90
  %v106 = vpack.c.b16 %v93, %v92
  %v107 = vpack.c.b16 %v95, %v94
  %v108 = vpack.c.b16 %v97, %v96
  %v109 = vpack.c.b16 %v99, %v98
  %v110 = vpack.c.b16 %v101, %v100
  %v111 = vpack.c.b16 %v103, %v102
  %120 = vmatprep.subr.bf16.mxu0 0
  %121 = vmatpush1.bf16.msra.mxu0 %v104
  %122 = vmatprep.subr.bf16.mxu0 0
  %123 = vmatpush1.bf16.msra.mxu0 %v105
  %124 = vmatprep.subr.bf16.mxu0 0
  %125 = vmatpush1.bf16.msra.mxu0 %v106
  %126 = vmatprep.subr.bf16.mxu0 0
  %127 = vmatpush1.bf16.msra.mxu0 %v107
  %128 = vmatprep.subr.bf16.mxu0 0
  %129 = vmatpush1.bf16.msra.mxu0 %v108
  %130 = vmatprep.subr.bf16.mxu0 0
  %131 = vmatpush1.bf16.msra.mxu0 %v109
  %132 = vmatprep.subr.bf16.mxu0 0
  %133 = vmatpush1.bf16.msra.mxu0 %v110
  %134 = vmatprep.subr.bf16.mxu0 0
  %135 = vmatpush1.bf16.msra.mxu0 %v111
  %136 = vmatprep.subr.bf16.mxu0 0
  %137 = vmatpush1.bf16.msra.mxu0 0
  %138 = vmatprep.subr.bf16.mxu0 0
  %139 = vmatpush1.bf16.msra.mxu0 0
  %140 = vmatprep.subr.bf16.mxu0 0
  %141 = vmatpush1.bf16.msra.mxu0 0
  %142 = vmatprep.subr.bf16.mxu0 0
  %143 = vmatpush1.bf16.msra.mxu0 0
  %144 = vmatprep.subr.bf16.mxu0 0
  %145 = vmatpush1.bf16.msra.mxu0 0
  %146 = vmatprep.subr.bf16.mxu0 0
  %147 = vmatpush1.bf16.msra.mxu0 0
  %148 = vmatprep.subr.bf16.mxu0 0
  %149 = vmatpush1.bf16.msra.mxu0 0
  %150 = vmatprep.subr.bf16.mxu0 0
  %151 = vmatpush1.bf16.msra.mxu0 0
  %152 = vmatprep.mubr.bf16.mxu0 0
  %153 = vmatmul.mubr.bf16.gmra.mrb[0].mxu0 %v54
  %v154 = vpop.f32.mrb[0].mxu0
  %v155 = vadd.f32 0.0, %v154
  %v156 = vpop.f32.mrb[0].mxu0
  %v157 = vpop.f32.mrb[0].mxu0
  %v158 = vadd.f32 0.0, %v157
  %v159 = vpop.f32.mrb[0].mxu0
  %160 = vmatprep.mubr.bf16.mxu0 0
  %161 = vmatmul.mubr.bf16.gmra.mrb[0].mxu0 %v55
  %v162 = vpop.f32.mrb[0].mxu0
  %v163 = vadd.f32 0.0, %v162
  %v164 = vpop.f32.mrb[0].mxu0
  %v165 = vpop.f32.mrb[0].mxu0
  %v166 = vadd.f32 0.0, %v165
  %v167 = vpop.f32.mrb[0].mxu0
  %168 = vdwg.mxu0
  %v169 = vpack.c.bf16 %v158, %v155
  %v170 = vpack.c.bf16 %v166, %v163
  %v173 = vunpack.c.l.b16 %v169
  %v174 = vunpack.c.h.b16 %v169
  %v175 = vunpack.c.l.b16 %v170
  %v176 = vunpack.c.h.b16 %v170
  %v177 = vpack.c.b16 %v173, %v173
  %v178 = vpack.c.b16 %v174, %v174
  %v179 = vpack.c.b16 %v175, %v175
  %v180 = vpack.c.b16 %v176, %v176
  %185 = vst [vmem:[%s4] sm:$0xf] %v177
  %186 = vst [vmem:[%s4 + $0x4] sm:$0xf] %v178
  %187 = vst [vmem:[%s4 + $0x8] sm:$0xf] %v179
  %188 = vst [vmem:[%s4 + $0xc] sm:$0xf] %v180
  %v189 = vadd.f32 %v155, %v158
  %v190 = vadd.f32 %v189, %v163
  %v191 = vadd.f32 %v190, %v166
  %v192 = vrot.slane %v191, 4
  %v193 = vadd.f32 %v191, %v192
  %v194 = vrot.slane %v193, 2
  %v195 = vadd.f32 %v193, %v194
  %v196 = vrot.slane %v195, 1
  %v197 = vadd.f32 %v195, %v196
  %v198 = vmul.f32 %v155, %v155
  %v199 = vmul.f32 %v158, %v158
  %v200 = vmul.f32 %v163, %v163
  %v201 = vmul.f32 %v166, %v166
  %v202 = vadd.f32 %v198, %v199
  %v203 = vadd.f32 %v202, %v200
  %v204 = vadd.f32 %v203, %v201
  %v205 = vrot.slane %v204, 4
  %v206 = vadd.f32 %v204, %v205
  %v207 = vrot.slane %v206, 2
  %v208 = vadd.f32 %v206, %v207
  %v209 = vrot.slane %v208, 1
  %v210 = vadd.f32 %v208, %v209
  %vm211 = vcmask 1040384
  %v212 = vsel %vm211, %v197, %v210
  %213 = vst [vmem:[%s5] sm:$0x3] %v212
  // Predicated region
  $region18: #{_lambda_.45} parent=0 // pred_check
    _
  $region19: #{_lambda_.45} parent=0 // pred_check_branch
    %215 = sbr.rel (0) target = $region21
  $region20: #{_lambda_.45} parent=0 // pred_region
    _
  $region21: #{_lambda_.45} parent=0 // pred_fallthru
    _
  // Predicated region
  $region22: #{_lambda_.45} parent=0 // pred_check
    _
  $region23: #{_lambda_.45} parent=0 // pred_check_branch
    %217 = sbr.rel (0) target = $region25
  $region24: #{_lambda_.45} parent=0 // pred_region
    _
  $region25: #{_lambda_.45} parent=0 // pred_fallthru
    _
  // Predicated region
  $region26: #{_lambda_.45} parent=0 // pred_check
    _
  $region27: #{_lambda_.45} parent=0 // pred_check_branch
    %219 = sbr.rel (0) target = $region29
  $region28: #{_lambda_.45} parent=0 // pred_region
    _
  $region29: #{_lambda_.45} parent=0 // pred_fallthru
    _
  // Predicated region
  $region30: #{_lambda_.45} parent=0 // pred_check
    _
  $region31: #{_lambda_.45} parent=0 // pred_check_branch
    %221 = sbr.rel (0) target = $region33
  $region32: #{_lambda_.45} parent=0 // pred_region
    _
  $region33: #{_lambda_.45} parent=0 // pred_fallthru
    _

// kernel: _lambda_.48
$region0: #{_lambda_.48}
  #allocation0 [shape = 'u32[]', space=smem, size = 0x4, offset = 0x4, fixed_abs, tag = 'smem constant byte address 0x4 - core index']
  #allocation1 [shape = 'u32[144,128]{1,0:T(1,128)}', space=vmem, size = 0x12000, scoped, tag = 'internal scratch']
  %s0 = inlined_call_operand.vmem [shape: bf16[32,128], index: 0, kind: input, shape index: {}]
  %s1 = inlined_call_operand.vmem [shape: f32[1,128], index: 1, kind: input, shape index: {}]
  %s2 = inlined_call_operand.vmem [shape: f32[1,128], index: 2, kind: input, shape index: {}]
  %s3 = inlined_call_operand.vmem [shape: bf16[32,128], index: 3, kind: input, shape index: {}]
  %s4 = inlined_call_operand.vmem [shape: f32[1,128], index: 4, kind: input, shape index: {}]
  %s5 = inlined_call_operand.vmem [shape: f32[1,128], index: 5, kind: input, shape index: {}]
  %s6 = inlined_call_operand.vmem [shape: bf16[32,128], index: 6, kind: output, shape index: {}]
  %s7 = sld [smem:[#allocation0]]
  $region34: #{_lambda_.48} parent=0
    _
  %s9 = ssub.s32 1, %s7
  %s10 = scalar_select 0, %s9, %s7
  // Predicated region
  $region2: #{_lambda_.48} parent=0 // pred_check
    _
  $region3: #{_lambda_.48} parent=0 // pred_check_branch
    %12 = sbr.rel (0) target = $region5
  $region4: #{_lambda_.48} parent=0 // pred_region
    _
  $region5: #{_lambda_.48} parent=0 // pred_fallthru
    _
  // Predicated region
  $region6: #{_lambda_.48} parent=0 // pred_check
    _
  $region7: #{_lambda_.48} parent=0 // pred_check_branch
    %14 = sbr.rel (0) target = $region9
  $region8: #{_lambda_.48} parent=0 // pred_region
    _
  $region9: #{_lambda_.48} parent=0 // pred_fallthru
    _
  // Predicated region
  $region10: #{_lambda_.48} parent=0 // pred_check
    _
  $region11: #{_lambda_.48} parent=0 // pred_check_branch
    %16 = sbr.rel (0) target = $region13
  $region12: #{_lambda_.48} parent=0 // pred_region
    _
  $region13: #{_lambda_.48} parent=0 // pred_fallthru
    _
  // Predicated region
  $region14: #{_lambda_.48} parent=0 // pred_check
    _
  $region15: #{_lambda_.48} parent=0 // pred_check_branch
    %18 = sbr.rel (0) target = $region17
  $region16: #{_lambda_.48} parent=0 // pred_region
    _
  $region17: #{_lambda_.48} parent=0 // pred_fallthru
    _
  // Predicated region
  $region18: #{_lambda_.48} parent=0 // pred_check
    _
  $region19: #{_lambda_.48} parent=0 // pred_check_branch
    %20 = sbr.rel (0) target = $region21
  $region20: #{_lambda_.48} parent=0 // pred_region
    _
  $region21: #{_lambda_.48} parent=0 // pred_fallthru
    _
  // Predicated region
  $region22: #{_lambda_.48} parent=0 // pred_check
    _
  $region23: #{_lambda_.48} parent=0 // pred_check_branch
    %22 = sbr.rel (0) target = $region25
  $region24: #{_lambda_.48} parent=0 // pred_region
    _
  $region25: #{_lambda_.48} parent=0 // pred_fallthru
    _
  %v23 = vld [vmem:[%s0] sm:$0xf]
  %v24 = vld [vmem:[%s0 + $0x4] sm:$0xf]
  %v25 = vld [vmem:[%s0 + $0x8] sm:$0xf]
  %v26 = vld [vmem:[%s0 + $0xc] sm:$0xf]
  %v27 = vunpack.c.l.bf16 %v23
  %v28 = vunpack.c.l.bf16 %v24
  %v29 = vunpack.c.l.bf16 %v25
  %v30 = vunpack.c.l.bf16 %v26
  %v31 = vld [vmem:[%s1] sm:$0x1]
  %v33 = vlaneseq
  %v34 = vshrl.u32 %v33, 7
  %v35 = vsub.s32 0, %v34
  %v36 = vrot.slane %v31, %v35
  %v38 = vmul.f32 %v27, %v36
  %v39 = vmul.f32 %v28, %v36
  %v40 = vmul.f32 %v29, %v36
  %v41 = vmul.f32 %v30, %v36
  %v42 = vld [vmem:[%s2] sm:$0x1]
  %v44 = vlaneseq
  %v45 = vshrl.u32 %v44, 7
  %v46 = vsub.s32 0, %v45
  %v47 = vrot.slane %v42, %v46
  %v49 = vadd.f32 %v38, %v47
  %v50 = vadd.f32 %v39, %v47
  %v51 = vadd.f32 %v40, %v47
  %v52 = vadd.f32 %v41, %v47
  %v53 = vld [vmem:[%s3] sm:$0xf]
  %v54 = vld [vmem:[%s3 + $0x4] sm:$0xf]
  %v55 = vld [vmem:[%s3 + $0x8] sm:$0xf]
  %v56 = vld [vmem:[%s3 + $0xc] sm:$0xf]
  %v57 = vunpack.c.l.bf16 %v53
  %v58 = vunpack.c.l.bf16 %v54
  %v59 = vunpack.c.l.bf16 %v55
  %v60 = vunpack.c.l.bf16 %v56
  %v61 = vld [vmem:[%s4] sm:$0x1]
  %v63 = vlaneseq
  %v64 = vshrl.u32 %v63, 7
  %v65 = vsub.s32 0, %v64
  %v66 = vrot.slane %v61, %v65
  %v68 = vmul.f32 %v57, %v66
  %v69 = vmul.f32 %v58, %v66
  %v70 = vmul.f32 %v59, %v66
  %v71 = vmul.f32 %v60, %v66
  %v72 = vadd.f32 %v49, %v68
  %v73 = vadd.f32 %v50, %v69
  %v74 = vadd.f32 %v51, %v70
  %v75 = vadd.f32 %v52, %v71
  %v76 = vld [vmem:[%s5] sm:$0x1]
  %v78 = vlaneseq
  %v79 = vshrl.u32 %v78, 7
  %v80 = vsub.s32 0, %v79
  %v81 = vrot.slane %v76, %v80
  %v83 = vadd.f32 %v72, %v81
  %v84 = vadd.f32 %v73, %v81
  %v85 = vadd.f32 %v74, %v81
  %v86 = vadd.f32 %v75, %v81
  %v87 = vmax.f32 %v83, 0.0
  %v88 = vmax.f32 %v84, 0.0
  %v89 = vmax.f32 %v85, 0.0
  %v90 = vmax.f32 %v86, 0.0
  %v91 = vpack.c.bf16 %v88, %v87
  %v92 = vpack.c.bf16 %v90, %v89
  %v95 = vunpack.c.l.b16 %v91
  %v96 = vunpack.c.h.b16 %v91
  %v97 = vunpack.c.l.b16 %v92
  %v98 = vunpack.c.h.b16 %v92
  %v99 = vpack.c.b16 %v95, %v95
  %v100 = vpack.c.b16 %v96, %v96
  %v101 = vpack.c.b16 %v97, %v97
  %v102 = vpack.c.b16 %v98, %v98
  %107 = vst [vmem:[%s6] sm:$0xf] %v99
  %108 = vst [vmem:[%s6 + $0x4] sm:$0xf] %v100
  %109 = vst [vmem:[%s6 + $0x8] sm:$0xf] %v101
  %110 = vst [vmem:[%s6 + $0xc] sm:$0xf] %v102
  // Predicated region
  $region26: #{_lambda_.48} parent=0 // pred_check
    _
  $region27: #{_lambda_.48} parent=0 // pred_check_branch
    %112 = sbr.rel (0) target = $region29
  $region28: #{_lambda_.48} parent=0 // pred_region
    _
  $region29: #{_lambda_.48} parent=0 // pred_fallthru
    _
  // Predicated region
  $region30: #{_lambda_.48} parent=0 // pred_check
    _
  $region31: #{_lambda_.48} parent=0 // pred_check_branch
    %114 = sbr.rel (0) target = $region33
  $region32: #{_lambda_.48} parent=0 // pred_region
    _
  $region33: #{_lambda_.48} parent=0 // pred_fallthru
    _

// kernel: _lambda_.44
$region0: #{_lambda_.44}
  #allocation0 [shape = 'u32[]', space=smem, size = 0x4, offset = 0x4, fixed_abs, tag = 'smem constant byte address 0x4 - core index']
  #allocation1 [shape = 'u32[144,128]{1,0:T(1,128)}', space=vmem, size = 0x12000, scoped, tag = 'internal scratch']
  #allocation2 [shape = 'f32[32,128]{1,0:T(8,128)}', space=vmem, size = 0x4000, scoped, tag = 'scratch operand']
  %s0 = inlined_call_operand.vmem [shape: bf16[32,1152], index: 0, kind: input, shape index: {}]
  %s1 = inlined_call_operand.vmem [shape: bf16[1152,128], index: 1, kind: input, shape index: {}]
  %s2 = inlined_call_operand.vmem [shape: bf16[32,128], index: 2, kind: output, shape index: {0}]
  %s3 = inlined_call_operand.vmem [shape: f32[1,2,128], index: 3, kind: output, shape index: {1}]
  %4 = xla_tuple %s2, %s3
  %s5 = sld [smem:[#allocation0]]
  $region83: #{_lambda_.44} parent=0
    _
  %s7 = ssub.s32 1, %s5
  %s8 = scalar_select 0, %s7, %s5
  $region1: #{_lambda_.44} parent=0
    #allocation3 [shape = 'u8[49152]{0}', space=vmem, size = 0xc000, scoped, tag = 'input window, operand 0']
    loop: start=0, step=1, limit=5
    $region2: #{_lambda_.44} parent=1 // loop_pre_header
      _
    $region3: #{_lambda_.44} parent=1 // loop_header
      %s10 = sphi 0, %s14
      %p11 = scmp.ge.s32.totalorder %s10, 5
      %s17 = sphi 0, %s36
      %s18 = sphi 0, %s32
      %s19 = sphi 0, %s28
      %s20 = sphi 0, %s17
      %s21 = sphi 0, %s18
      %s22 = sphi 0, %s19
      %s23 = sphi 0, %s20
      %s24 = sphi 0, %s21
      %s25 = sphi 0, %s22
      %s41 = sphi 0, %s43
      %s44 = sphi 0, %s41
      %s45 = sphi 0, %s44
      %s61 = sphi 0, %s45
      %s69 = sphi 0, %s71
      %s72 = sphi 0, %s69
      %s73 = sphi 0, %s72
      %s89 = sphi 0, %s73
      %s97 = sphi 0, %s99
      %s100 = sphi 0, %s97
      %s101 = sphi 0, %s100
      %s117 = sphi 0, %s101
      %s125 = sphi 0, %s127
      %s128 = sphi 0, %s125
      %s129 = sphi 0, %s128
      %s145 = sphi 0, %s129
    $region4: #{_lambda_.44} parent=1 // loop_header_branch
      %13 = sbr.rel (%p11) target = $region8
    $region5: #{_lambda_.44} parent=1 // loop_body
      %s15 = ssub.s32 %s10, 1
      %s16 = ssub.s32 %s10, 2
      %s26 = sadd.s32 1, %s19
      %p27 = scmp.ge.s32.totalorder %s26, 3
      %s28 = scalar_select %p27, 0, %s26
      %s29 = sadd.s32 1, %s18
      %s30 = scalar_select %p27, %s29, %s18
      %p31 = scmp.ge.s32.totalorder %s30, 1
      %s32 = scalar_select %p31, 0, %s30
      %s33 = sadd.s32 1, %s17
      %s34 = scalar_select %p31, %s33, %s17
      %p35 = scmp.ge.s32.totalorder %s34, 1
      %s36 = scalar_select %p35, 0, %s34
      %s37 = ssub.s32 %s17, %s36
      %s38 = ssub.s32 %s19, %s28
      %s39 = sor.u32 %s37, %s38
      %p40 = scmp.eq.s32.totalorder %s39, 0
      %s42 = sadd.s32 %s41, 1
      %s43 = scalar_select %p40, %s41, %s42
      %p46 = pneg %p40
      %p47 = scmp.eq.s32.totalorder %s10, 2
      %p48 = por %p46, %p47
      %p49 = scmp.ne.s32.totalorder %s41, %s44
      %p50 = scmp.eq.s32.totalorder %s10, 0
      %p51 = por %p49, %p50
      %p52 = scmp.ne.s32.totalorder %s41, %s44
      %p53 = scmp.eq.s32.totalorder %s15, 2
      %p54 = por %p52, %p53
      %p55 = scmp.ne.s32.totalorder %s44, %s45
      %p56 = scmp.eq.s32.totalorder %s15, 0
      %p57 = por %p55, %p56
      %p58 = scmp.ne.s32.totalorder %s44, %s45
      %p59 = scmp.eq.s32.totalorder %s16, 2
      %p60 = por %p58, %p59
      %p62 = scmp.ne.s32.totalorder %s45, %s61
      %p63 = scmp.eq.s32.totalorder %s16, 0
      %p64 = por %p62, %p63
      %s65 = ssub.s32 %s19, %s28
      %s66 = ssub.s32 %s18, %s32
      %s67 = sor.u32 %s65, %s66
      %p68 = scmp.eq.s32.totalorder %s67, 0
      %s70 = sadd.s32 %s69, 1
      %s71 = scalar_select %p68, %s69, %s70
      %p74 = pneg %p68
      %p75 = scmp.eq.s32.totalorder %s10, 2
      %p76 = por %p74, %p75
      %p77 = scmp.ne.s32.totalorder %s69, %s72
      %p78 = scmp.eq.s32.totalorder %s10, 0
      %p79 = por %p77, %p78
      %p80 = scmp.ne.s32.totalorder %s69, %s72
      %p81 = scmp.eq.s32.totalorder %s15, 2
      %p82 = por %p80, %p81
      %p83 = scmp.ne.s32.totalorder %s72, %s73
      %p84 = scmp.eq.s32.totalorder %s15, 0
      %p85 = por %p83, %p84
      %p86 = scmp.ne.s32.totalorder %s72, %s73
      %p87 = scmp.eq.s32.totalorder %s16, 2
      %p88 = por %p86, %p87
      %p90 = scmp.ne.s32.totalorder %s73, %s89
      %p91 = scmp.eq.s32.totalorder %s16, 0
      %p92 = por %p90, %p91
      %s93 = ssub.s32 %s17, %s36
      %s94 = ssub.s32 %s18, %s32
      %s95 = sor.u32 %s93, %s94
      %p96 = scmp.eq.s32.totalorder %s95, 0
      %s98 = sadd.s32 %s97, 1
      %s99 = scalar_select %p96, %s97, %s98
      %p102 = pneg %p96
      %p103 = scmp.eq.s32.totalorder %s10, 2
      %p104 = por %p102, %p103
      %p105 = scmp.ne.s32.totalorder %s97, %s100
      %p106 = scmp.eq.s32.totalorder %s10, 0
      %p107 = por %p105, %p106
      %p108 = scmp.ne.s32.totalorder %s97, %s100
      %p109 = scmp.eq.s32.totalorder %s15, 2
      %p110 = por %p108, %p109
      %p111 = scmp.ne.s32.totalorder %s100, %s101
      %p112 = scmp.eq.s32.totalorder %s15, 0
      %p113 = por %p111, %p112
      %p114 = scmp.ne.s32.totalorder %s100, %s101
      %p115 = scmp.eq.s32.totalorder %s16, 2
      %p116 = por %p114, %p115
      %p118 = scmp.ne.s32.totalorder %s101, %s117
      %p119 = scmp.eq.s32.totalorder %s16, 0
      %p120 = por %p118, %p119
      %s121 = ssub.s32 %s17, %s36
      %s122 = ssub.s32 %s18, %s32
      %s123 = sor.u32 %s121, %s122
      %p124 = scmp.eq.s32.totalorder %s123, 0
      %s126 = sadd.s32 %s125, 1
      %s127 = scalar_select %p124, %s125, %s126
      %p130 = pneg %p124
      %p131 = scmp.eq.s32.totalorder %s10, 2
      %p132 = por %p130, %p131
      %p133 = scmp.ne.s32.totalorder %s125, %s128
      %p134 = scmp.eq.s32.totalorder %s10, 0
      %p135 = por %p133, %p134
      %p136 = scmp.ne.s32.totalorder %s125, %s128
      %p137 = scmp.eq.s32.totalorder %s15, 2
      %p138 = por %p136, %p137
      %p139 = scmp.ne.s32.totalorder %s128, %s129
      %p140 = scmp.eq.s32.totalorder %s15, 0
      %p141 = por %p139, %p140
      %p142 = scmp.ne.s32.totalorder %s128, %s129
      %p143 = scmp.eq.s32.totalorder %s16, 2
      %p144 = por %p142, %p143
      %p146 = scmp.ne.s32.totalorder %s129, %s145
      %p147 = scmp.eq.s32.totalorder %s16, 0
      %p148 = por %p146, %p147
      %p149 = scmp.le.s32.totalorder 1, %s10
      %p150 = scmp.lt.s32.totalorder %s10, 4
      %p151 = pnand %p149, %p150
      %p152 = pneg %p151
      // Predicated region
      $region9: #{_lambda_.44} parent=5 // pred_check
        _
      $region10: #{_lambda_.44} parent=5 // pred_check_branch
        %154 = sbr.rel (%p151) target = $region12
      $region11: #{_lambda_.44} parent=5 // pred_region
        %s155 = ssub.s32 %s10, 1
      $region12: #{_lambda_.44} parent=5 // pred_fallthru
        _
      %p156 = scmp.lt.s32.totalorder %s10, 3
      // Predicated region
      $region13: #{_lambda_.44} parent=5 // pred_check
        %p157 = pneg %p156
      $region14: #{_lambda_.44} parent=5 // pred_check_branch
        %159 = sbr.rel (%p157) target = $region16
      $region15: #{_lambda_.44} parent=5 // pred_region
        // Predicated region
        $region17: #{_lambda_.44} parent=15 // pred_check
          %p160 = pneg %p51
        $region18: #{_lambda_.44} parent=15 // pred_check_branch
          %162 = sbr.rel (%p160) target = $region20
        $region19: #{_lambda_.44} parent=15 // pred_region
          %s163 = sand.u32 %s41, 1
          %s164 = sand.u32 %s41, 1
          %s165 = smul.addr %s164, 48
          %s166 = scalar_lea.vmem [#allocation3], %s165
          %s167 = smul.u32 4, %s17
          %s168 = smul.u32 3, %s19
          %s169 = smul.addr %s167, 9
          %s170 = sadd.s32 %s168, %s169
          %s171 = smul.addr %s170, 4
          %s172 = scalar_lea.vmem %s0, %s171
          // Predicated region
          $region21: #{_lambda_.44} parent=19 // pred_check
            _
          $region22: #{_lambda_.44} parent=19 // pred_check_branch
            %174 = sbr.rel (0) target = $region24
          $region23: #{_lambda_.44} parent=19 // pred_region
            // Predicated region
            $region25: #{_lambda_.44} parent=23 // pred_check
              _
            $region26: #{_lambda_.44} parent=23 // pred_check_branch
              %176 = sbr.rel (0) target = $region28
            $region27: #{_lambda_.44} parent=23 // pred_region
              %s177 = scalar_lea.vmem %s172, 8
              %s178 = scalar_lea.vmem %s166, 8 [#allocation3]
              loop: start=0, step=1, limit=1
              $region29: #{_lambda_.44} parent=27 // loop_pre_header
                _
              $region30: #{_lambda_.44} parent=27 // loop_header
                %s180 = sphi 0, %s184
                %p181 = scmp.ge.s32.totalorder %s180, 1
                %s185 = sphi %s172, %s172
                %s186 = sphi %s166, %s166
              $region31: #{_lambda_.44} parent=27 // loop_header_branch
                %183 = sbr.rel (%p181) target = $region35
              $region32: #{_lambda_.44} parent=27 // loop_body
                %v187 = vld [vmem:[%s185] sm:$0xff]
                %188 = vst [vmem:[%s186] sm:$0xff] %v187
                %v189 = vld [vmem:[%s185 + $0x24] sm:$0xff]
                %190 = vst [vmem:[%s186 + $0xc] sm:$0xff] %v189
                %v191 = vld [vmem:[%s185 + $0x48] sm:$0xff]
                %192 = vst [vmem:[%s186 + $0x18] sm:$0xff] %v191
                %v193 = vld [vmem:[%s185 + $0x6c] sm:$0xff]
                %194 = vst [vmem:[%s186 + $0x24] sm:$0xff] %v193
              $region33: #{_lambda_.44} parent=27 // loop_footer
                %s184 = sadd.s32 1, %s180
              $region34: #{_lambda_.44} parent=27 // loop_footer_branch
                %179 = sbr.rel target = $region30
              $region35: #{_lambda_.44} parent=27 // loop_exit
                _
              loop: start=0, step=1, limit=1
              $region36: #{_lambda_.44} parent=27 // loop_pre_header
                _
              $region37: #{_lambda_.44} parent=27 // loop_header
                %s197 = sphi 0, %s201
                %p198 = scmp.ge.s32.totalorder %s197, 1
                %s202 = sphi %s177, %s177
                %s203 = sphi %s178, %s178
              $region38: #{_lambda_.44} parent=27 // loop_header_branch
                %200 = sbr.rel (%p198) target = $region42
              $region39: #{_lambda_.44} parent=27 // loop_body
                %v204 = vld [vmem:[%s202] sm:$0xf]
                %205 = vst [vmem:[%s203] sm:$0xf] %v204
                %v206 = vld [vmem:[%s202 + $0x24] sm:$0xf]
                %207 = vst [vmem:[%s203 + $0xc] sm:$0xf] %v206
                %v208 = vld [vmem:[%s202 + $0x48] sm:$0xf]
                %209 = vst [vmem:[%s203 + $0x18] sm:$0xf] %v208
                %v210 = vld [vmem:[%s202 + $0x6c] sm:$0xf]
                %211 = vst [vmem:[%s203 + $0x24] sm:$0xf] %v210
              $region40: #{_lambda_.44} parent=27 // loop_footer
                %s201 = sadd.s32 1, %s197
              $region41: #{_lambda_.44} parent=27 // loop_footer_branch
                %196 = sbr.rel target = $region37
              $region42: #{_lambda_.44} parent=27 // loop_exit
                _
            $region28: #{_lambda_.44} parent=23 // pred_fallthru
              _
          $region24: #{_lambda_.44} parent=19 // pred_fallthru
            _
          %212 = vnop
        $region20: #{_lambda_.44} parent=15 // pred_fallthru
          _
        // Predicated region
        $region43: #{_lambda_.44} parent=15 // pred_check
          %p213 = pneg %p79
        $region44: #{_lambda_.44} parent=15 // pred_check_branch
          %215 = sbr.rel (%p213) target = $region46
        $region45: #{_lambda_.44} parent=15 // pred_region
          %s216 = smul.u32 48, %s19
          %p217 = scmp.lt.s32.totalorder %s216, 143
          %s218 = scalar_select %p217, %s216, 143
          %p219 = scmp.lt.s32.totalorder %s18, 0
          %s220 = scalar_select %p219, %s18, 0
          %s221 = sadd.s32 %s220, %s218
          %s222 = smul.addr %s221, 4
          %s223 = scalar_lea.vmem %s1, %s222
          %s224 = smul.u32 48, %s19
        $region46: #{_lambda_.44} parent=15 // pred_fallthru
          _
      $region16: #{_lambda_.44} parent=5 // pred_fallthru
        _
      %p225 = scmp.le.s32.totalorder 1, %s10
      %p226 = scmp.lt.s32.totalorder %s10, 4
      %p227 = pnand %p225, %p226
      %p228 = pneg %p227
      // Predicated region
      $region47: #{_lambda_.44} parent=5 // pred_check
        _
      $region48: #{_lambda_.44} parent=5 // pred_check_branch
        %230 = sbr.rel (%p227) target = $region50
      $region49: #{_lambda_.44} parent=5 // pred_region
        %s231 = ssub.s32 %s10, 1
        %s232 = sand.u32 %s44, 1
        %s233 = sand.u32 %s44, 1
        %s234 = smul.addr %s233, 48
        %s235 = scalar_lea.vmem [#allocation3], %s234
        // Predicated region
        $region51: #{_lambda_.44} parent=49 // pred_check
          %p236 = pneg %p57
        $region52: #{_lambda_.44} parent=49 // pred_check_branch
          %238 = sbr.rel (%p236) target = $region54
        $region53: #{_lambda_.44} parent=49 // pred_region
          _
        $region54: #{_lambda_.44} parent=49 // pred_fallthru
          _
        %s239 = sand.u32 %s44, 1
        %s240 = sand.u32 %s44, 1
        %s241 = smul.addr %s240, 48
        %s242 = scalar_lea.vmem [#allocation3], %s241
        %p243 = pneg %p57
        %p244 = pneg %p54
        %s245 = smul.u32 48, %s22
        %p246 = scmp.lt.s32.totalorder %s245, 143
        %s247 = scalar_select %p246, %s245, 143
        %p248 = scmp.lt.s32.totalorder %s21, 0
        %s249 = scalar_select %p248, %s21, 0
        %s250 = sadd.s32 %s249, %s247
        %s251 = smul.addr %s250, 4
        %s252 = scalar_lea.vmem %s1, %s251
        %p253 = pneg %p85
        %p254 = pneg %p82
        %p255 = pneg %p113
        %p256 = pneg %p110
        %s257 = smul.u32 4, %s20
        %p258 = scmp.lt.s32.totalorder %s257, 3
        %s259 = scalar_select %p258, %s257, 3
        %p260 = scmp.lt.s32.totalorder %s21, 0
        %s261 = scalar_select %p260, %s21, 0
        %s262 = sadd.s32 %s261, %s259
        %s263 = smul.addr %s262, 4
        %s264 = scalar_lea.vmem %s2, %s263
        %p265 = pneg %p141
        %p266 = pneg %p138
        %p267 = scmp.lt.s32.totalorder %s20, 0
        %s268 = scalar_select %p267, %s20, 0
        %p269 = scmp.lt.s32.totalorder %s21, 0
        %s270 = scalar_select %p269, %s21, 0
        %s271 = sadd.s32 %s270, %s268
        %s272 = smul.addr %s271, 2
        %s273 = scalar_lea.vmem %s3, %s272
        %s274 = smul.u32 4, %s20
        %s275 = smul.u32 3, %s22
        %s276 = smul.u32 48, %s22
        %p277 = scmp.lt.s32.totalorder %s276, 143
        %s278 = scalar_select %p277, %s276, 143
        %p279 = scmp.lt.s32.totalorder %s21, 0
        %s280 = scalar_select %p279, %s21, 0
        %s281 = sadd.s32 %s280, %s278
        %s282 = smul.addr %s281, 4
        %s283 = scalar_lea.vmem %s1, %s282
        %s284 = smul.u32 48, %s22
        %s285 = smul.u32 4, %s20
        %p286 = scmp.lt.s32.totalorder %s285, 3
        %s287 = scalar_select %p286, %s285, 3
        %p288 = scmp.lt.s32.totalorder %s21, 0
        %s289 = scalar_select %p288, %s21, 0
        %s290 = sadd.s32 %s289, %s287
        %s291 = smul.addr %s290, 4
        %s292 = scalar_lea.vmem %s2, %s291
        %s293 = smul.u32 4, %s20
        %p294 = scmp.lt.s32.totalorder %s20, 0
        %s295 = scalar_select %p294, %s20, 0
        %p296 = scmp.lt.s32.totalorder %s21, 0
        %s297 = scalar_select %p296, %s21, 0
        %s298 = sadd.s32 %s297, %s295
        %s299 = smul.addr %s298, 2
        %s300 = scalar_lea.vmem %s3, %s299
        %v302 = vld [vmem:[%s235] sm:$0xff]
        %v303 = vld [vmem:[%s235 + $0x8] sm:$0xf]
        %v304 = vld [vmem:[%s235 + $0xc] sm:$0xff]
        %v305 = vld [vmem:[%s235 + $0x14] sm:$0xf]
        %v306 = vld [vmem:[%s235 + $0x18] sm:$0xff]
        %v307 = vld [vmem:[%s235 + $0x20] sm:$0xf]
        %v308 = vld [vmem:[%s235 + $0x24] sm:$0xff]
        %v309 = vld [vmem:[%s235 + $0x2c] sm:$0xf]
        %v310 = vld [vmem:[%s283] sm:$0xf]
        %v311 = vld [vmem:[%s283 + $0x4] sm:$0xf]
        %v312 = vld [vmem:[%s283 + $0x8] sm:$0xf]
        %v313 = vld [vmem:[%s283 + $0xc] sm:$0xf]
        %v314 = vld [vmem:[%s283 + $0x10] sm:$0xf]
        %v315 = vld [vmem:[%s283 + $0x14] sm:$0xf]
        %v316 = vld [vmem:[%s283 + $0x18] sm:$0xf]
        %v317 = vld [vmem:[%s283 + $0x1c] sm:$0xf]
        %v318 = vld [vmem:[%s283 + $0x20] sm:$0xf]
        %v319 = vld [vmem:[%s283 + $0x24] sm:$0xf]
        %v320 = vld [vmem:[%s283 + $0x28] sm:$0xf]
        %v321 = vld [vmem:[%s283 + $0x2c] sm:$0xf]
        %v322 = vld [vmem:[%s283 + $0x30] sm:$0xf]
        %v323 = vld [vmem:[%s283 + $0x34] sm:$0xf]
        %v324 = vld [vmem:[%s283 + $0x38] sm:$0xf]
        %v325 = vld [vmem:[%s283 + $0x3c] sm:$0xf]
        %v326 = vld [vmem:[%s283 + $0x40] sm:$0xf]
        %v327 = vld [vmem:[%s283 + $0x44] sm:$0xf]
        %v328 = vld [vmem:[%s283 + $0x48] sm:$0xf]
        %v329 = vld [vmem:[%s283 + $0x4c] sm:$0xf]
        %v330 = vld [vmem:[%s283 + $0x50] sm:$0xf]
        %v331 = vld [vmem:[%s283 + $0x54] sm:$0xf]
        %v332 = vld [vmem:[%s283 + $0x58] sm:$0xf]
        %v333 = vld [vmem:[%s283 + $0x5c] sm:$0xf]
        %v334 = vld [vmem:[%s283 + $0x60] sm:$0xf]
        %v335 = vld [vmem:[%s283 + $0x64] sm:$0xf]
        %v336 = vld [vmem:[%s283 + $0x68] sm:$0xf]
        %v337 = vld [vmem:[%s283 + $0x6c] sm:$0xf]
        %v338 = vld [vmem:[%s283 + $0x70] sm:$0xf]
        %v339 = vld [vmem:[%s283 + $0x74] sm:$0xf]
        %v340 = vld [vmem:[%s283 + $0x78] sm:$0xf]
        %v341 = vld [vmem:[%s283 + $0x7c] sm:$0xf]
        %v342 = vld [vmem:[%s283 + $0x80] sm:$0xf]
        %v343 = vld [vmem:[%s283 + $0x84] sm:$0xf]
        %v344 = vld [vmem:[%s283 + $0x88] sm:$0xf]
        %v345 = vld [vmem:[%s283 + $0x8c] sm:$0xf]
        %v346 = vld [vmem:[%s283 + $0x90] sm:$0xf]
        %v347 = vld [vmem:[%s283 + $0x94] sm:$0xf]
        %v348 = vld [vmem:[%s283 + $0x98] sm:$0xf]
        %v349 = vld [vmem:[%s283 + $0x9c] sm:$0xf]
        %v350 = vld [vmem:[%s283 + $0xa0] sm:$0xf]
        %v351 = vld [vmem:[%s283 + $0xa4] sm:$0xf]
        %v352 = vld [vmem:[%s283 + $0xa8] sm:$0xf]
        %v353 = vld [vmem:[%s283 + $0xac] sm:$0xf]
        %v354 = vld [vmem:[%s283 + $0xb0] sm:$0xf]
        %v355 = vld [vmem:[%s283 + $0xb4] sm:$0xf]
        %v356 = vld [vmem:[%s283 + $0xb8] sm:$0xf]
        %v357 = vld [vmem:[%s283 + $0xbc] sm:$0xf]
        %v366 = vunpack.c.l.b16 %v302
        %v367 = vunpack.c.h.b16 %v302
        %v368 = vunpack.c.l.b16 %v303
        %v369 = vunpack.c.l.b16 %v304
        %v370 = vunpack.c.h.b16 %v304
        %v371 = vunpack.c.l.b16 %v305
        %v372 = vunpack.c.l.b16 %v306
        %v373 = vunpack.c.h.b16 %v306
        %v374 = vunpack.c.l.b16 %v307
        %v375 = vunpack.c.l.b16 %v308
        %v376 = vunpack.c.h.b16 %v308
        %v377 = vunpack.c.l.b16 %v309
        %v378 = vpack.c.b16 %v369, %v366
        %v379 = vpack.c.b16 %v370, %v367
        %v380 = vpack.c.b16 %v371, %v368
        %v381 = vpack.c.b16 %v375, %v372
        %v382 = vpack.c.b16 %v376, %v373
        %v383 = vpack.c.b16 %v377, %v374
        %v438 = vunpack.c.l.b16 %v310
        %v439 = vunpack.c.l.b16 %v311
        %v440 = vunpack.c.l.b16 %v312
        %v441 = vunpack.c.l.b16 %v313
        %v442 = vunpack.c.l.b16 %v314
        %v443 = vunpack.c.l.b16 %v315
        %v444 = vunpack.c.l.b16 %v316
        %v445 = vunpack.c.l.b16 %v317
        %v446 = vunpack.c.l.b16 %v318
        %v447 = vunpack.c.l.b16 %v319
        %v448 = vunpack.c.l.b16 %v320
        %v449 = vunpack.c.l.b16 %v321
        %v450 = vunpack.c.l.b16 %v322
        %v451 = vunpack.c.l.b16 %v323
        %v452 = vunpack.c.l.b16 %v324
        %v453 = vunpack.c.l.b16 %v325
        %v454 = vunpack.c.l.b16 %v326
        %v455 = vunpack.c.l.b16 %v327
        %v456 = vunpack.c.l.b16 %v328
        %v457 = vunpack.c.l.b16 %v329
        %v458 = vunpack.c.l.b16 %v330
        %v459 = vunpack.c.l.b16 %v331
        %v460 = vunpack.c.l.b16 %v332
        %v461 = vunpack.c.l.b16 %v333
        %v462 = vunpack.c.l.b16 %v334
        %v463 = vunpack.c.l.b16 %v335
        %v464 = vunpack.c.l.b16 %v336
        %v465 = vunpack.c.l.b16 %v337
        %v466 = vunpack.c.l.b16 %v338
        %v467 = vunpack.c.l.b16 %v339
        %v468 = vunpack.c.l.b16 %v340
        %v469 = vunpack.c.l.b16 %v341
        %v470 = vunpack.c.l.b16 %v342
        %v471 = vunpack.c.l.b16 %v343
        %v472 = vunpack.c.l.b16 %v344
        %v473 = vunpack.c.l.b16 %v345
        %v474 = vunpack.c.l.b16 %v346
        %v475 = vunpack.c.l.b16 %v347
        %v476 = vunpack.c.l.b16 %v348
        %v477 = vunpack.c.l.b16 %v349
        %v478 = vunpack.c.l.b16 %v350
        %v479 = vunpack.c.l.b16 %v351
        %v480 = vunpack.c.l.b16 %v352
        %v481 = vunpack.c.l.b16 %v353
        %v482 = vunpack.c.l.b16 %v354
        %v483 = vunpack.c.l.b16 %v355
        %v484 = vunpack.c.l.b16 %v356
        %v485 = vunpack.c.l.b16 %v357
        %v486 = vpack.c.b16 %v439, %v438
        %v487 = vpack.c.b16 %v441, %v440
        %v488 = vpack.c.b16 %v443, %v442
        %v489 = vpack.c.b16 %v445, %v444
        %v490 = vpack.c.b16 %v447, %v446
        %v491 = vpack.c.b16 %v449, %v448
        %v492 = vpack.c.b16 %v451, %v450
        %v493 = vpack.c.b16 %v453, %v452
        %v494 = vpack.c.b16 %v455, %v454
        %v495 = vpack.c.b16 %v457, %v456
        %v496 = vpack.c.b16 %v459, %v458
        %v497 = vpack.c.b16 %v461, %v460
        %v498 = vpack.c.b16 %v463, %v462
        %v499 = vpack.c.b16 %v465, %v464
        %v500 = vpack.c.b16 %v467, %v466
        %v501 = vpack.c.b16 %v469, %v468
        %v502 = vpack.c.b16 %v471, %v470
        %v503 = vpack.c.b16 %v473, %v472
        %v504 = vpack.c.b16 %v475, %v474
        %v505 = vpack.c.b16 %v477, %v476
        %v506 = vpack.c.b16 %v479, %v478
        %v507 = vpack.c.b16 %v481, %v480
        %v508 = vpack.c.b16 %v483, %v482
        %v509 = vpack.c.b16 %v485, %v484
        %534 = vmatprep.subr.bf16.mxu0 0
        %535 = vmatpush1.bf16.msra.mxu0 %v486
        %536 = vmatprep.subr.bf16.mxu0 0
        %537 = vmatpush1.bf16.msra.mxu0 %v487
        %538 = vmatprep.subr.bf16.mxu0 0
        %539 = vmatpush1.bf16.msra.mxu0 %v488
        %540 = vmatprep.subr.bf16.mxu0 0
        %541 = vmatpush1.bf16.msra.mxu0 %v489
        %542 = vmatprep.subr.bf16.mxu0 0
        %543 = vmatpush1.bf16.msra.mxu0 %v490
        %544 = vmatprep.subr.bf16.mxu0 0
        %545 = vmatpush1.bf16.msra.mxu0 %v491
        %546 = vmatprep.subr.bf16.mxu0 0
        %547 = vmatpush1.bf16.msra.mxu0 %v492
        %548 = vmatprep.subr.bf16.mxu0 0
        %549 = vmatpush1.bf16.msra.mxu0 %v493
        %550 = vmatprep.subr.bf16.mxu0 0
        %551 = vmatpush1.bf16.msra.mxu0 %v494
        %552 = vmatprep.subr.bf16.mxu0 0
        %553 = vmatpush1.bf16.msra.mxu0 %v495
        %554 = vmatprep.subr.bf16.mxu0 0
        %555 = vmatpush1.bf16.msra.mxu0 %v496
        %556 = vmatprep.subr.bf16.mxu0 0
        %557 = vmatpush1.bf16.msra.mxu0 %v497
        %558 = vmatprep.subr.bf16.mxu0 0
        %559 = vmatpush1.bf16.msra.mxu0 %v498
        %560 = vmatprep.subr.bf16.mxu0 0
        %561 = vmatpush1.bf16.msra.mxu0 %v499
        %562 = vmatprep.subr.bf16.mxu0 0
        %563 = vmatpush1.bf16.msra.mxu0 %v500
        %564 = vmatprep.subr.bf16.mxu0 0
        %565 = vmatpush1.bf16.msra.mxu0 %v501
        %566 = vmatprep.mubr.bf16.mxu0 %v379
        %567 = vmatmul.mubr.bf16.gmra.mrb[0].mxu0 %v378
        %v568 = vpop.f32.mrb[0].mxu0
        %v569 = vadd.f32 0.0, %v568
        %v570 = vpop.f32.mrb[0].mxu0
        %v571 = vpop.f32.mrb[0].mxu0
        %v572 = vadd.f32 0.0, %v571
        %v573 = vpop.f32.mrb[0].mxu0
        %574 = vmatprep.mubr.bf16.mxu0 %v382
        %575 = vmatmul.mubr.bf16.gmra.mrb[0].mxu0 %v381
        %v576 = vpop.f32.mrb[0].mxu0
        %v577 = vadd.f32 0.0, %v576
        %v578 = vpop.f32.mrb[0].mxu0
        %v579 = vpop.f32.mrb[0].mxu0
        %v580 = vadd.f32 0.0, %v579
        %v581 = vpop.f32.mrb[0].mxu0
        %582 = vdwg.mxu0
        %583 = vmatprep.subr.bf16.mxu0 0
        %584 = vmatpush1.bf16.msra.mxu0 %v502
        %585 = vmatprep.subr.bf16.mxu0 0
        %586 = vmatpush1.bf16.msra.mxu0 %v503
        %587 = vmatprep.subr.bf16.mxu0 0
        %588 = vmatpush1.bf16.msra.mxu0 %v504
        %589 = vmatprep.subr.bf16.mxu0 0
        %590 = vmatpush1.bf16.msra.mxu0 %v505
        %591 = vmatprep.subr.bf16.mxu0 0
        %592 = vmatpush1.bf16.msra.mxu0 %v506
        %593 = vmatprep.subr.bf16.mxu0 0
        %594 = vmatpush1.bf16.msra.mxu0 %v507
        %595 = vmatprep.subr.bf16.mxu0 0
        %596 = vmatpush1.bf16.msra.mxu0 %v508
        %597 = vmatprep.subr.bf16.mxu0 0
        %598 = vmatpush1.bf16.msra.mxu0 %v509
        %599 = vmatprep.subr.bf16.mxu0 0
        %600 = vmatpush1.bf16.msra.mxu0 0
        %601 = vmatprep.subr.bf16.mxu0 0
        %602 = vmatpush1.bf16.msra.mxu0 0
        %603 = vmatprep.subr.bf16.mxu0 0
        %604 = vmatpush1.bf16.msra.mxu0 0
        %605 = vmatprep.subr.bf16.mxu0 0
        %606 = vmatpush1.bf16.msra.mxu0 0
        %607 = vmatprep.subr.bf16.mxu0 0
        %608 = vmatpush1.bf16.msra.mxu0 0
        %609 = vmatprep.subr.bf16.mxu0 0
        %610 = vmatpush1.bf16.msra.mxu0 0
        %611 = vmatprep.subr.bf16.mxu0 0
        %612 = vmatpush1.bf16.msra.mxu0 0
        %613 = vmatprep.subr.bf16.mxu0 0
        %614 = vmatpush1.bf16.msra.mxu0 0
        %615 = vmatprep.mubr.bf16.mxu0 0
        %616 = vmatmul.mubr.bf16.gmra.mrb[0].mxu0 %v380
        %v617 = vpop.f32.mrb[0].mxu0
        %v618 = vadd.f32 %v569, %v617
        %v619 = vpop.f32.mrb[0].mxu0
        %v620 = vpop.f32.mrb[0].mxu0
        %v621 = vadd.f32 %v572, %v620
        %v622 = vpop.f32.mrb[0].mxu0
        %623 = vmatprep.mubr.bf16.mxu0 0
        %624 = vmatmul.mubr.bf16.gmra.mrb[0].mxu0 %v383
        %v625 = vpop.f32.mrb[0].mxu0
        %v626 = vadd.f32 %v577, %v625
        %v627 = vpop.f32.mrb[0].mxu0
        %v628 = vpop.f32.mrb[0].mxu0
        %v629 = vadd.f32 %v580, %v628
        %v630 = vpop.f32.mrb[0].mxu0
        %631 = vdwg.mxu0
        %p632 = scmp.eq.s32.totalorder %s22, 0
        // Predicated region
        $region55: #{_lambda_.44} parent=49 // pred_check
          %p633 = pneg %p632
        $region56: #{_lambda_.44} parent=49 // pred_check_branch
          %635 = sbr.rel (%p633) target = $region58
        $region57: #{_lambda_.44} parent=49 // pred_region
          %636 = vst [vmem:[#allocation2] sm:$0xff] 0.0
          %637 = vst [vmem:[#allocation2 + $0x8] sm:$0xff] 0.0
          %638 = vst [vmem:[#allocation2 + $0x10] sm:$0xff] 0.0
          %639 = vst [vmem:[#allocation2 + $0x18] sm:$0xff] 0.0
        $region58: #{_lambda_.44} parent=49 // pred_fallthru
          _
        %v640 = vld [vmem:[#allocation2] sm:$0xff]
        %v641 = vld [vmem:[#allocation2 + $0x8] sm:$0xff]
        %v642 = vld [vmem:[#allocation2 + $0x10] sm:$0xff]
        %v643 = vld [vmem:[#allocation2 + $0x18] sm:$0xff]
        %v644 = vadd.f32 %v640, %v618
        %v645 = vadd.f32 %v641, %v621
        %v646 = vadd.f32 %v642, %v626
        %v647 = vadd.f32 %v643, %v629
        %648 = vst [vmem:[#allocation2] sm:$0xff] %v644
        %649 = vst [vmem:[#allocation2 + $0x8] sm:$0xff] %v645
        %650 = vst [vmem:[#allocation2 + $0x10] sm:$0xff] %v646
        %651 = vst [vmem:[#allocation2 + $0x18] sm:$0xff] %v647
        %p652 = scmp.eq.s32.totalorder %s22, 2
        // Predicated region
        $region59: #{_lambda_.44} parent=49 // pred_check
          %p653 = pneg %p652
        $region60: #{_lambda_.44} parent=49 // pred_check_branch
          %655 = sbr.rel (%p653) target = $region62
        $region61: #{_lambda_.44} parent=49 // pred_region
          %v656 = vld [vmem:[#allocation2] sm:$0xff]
          %v657 = vld [vmem:[#allocation2 + $0x8] sm:$0xff]
          %v658 = vld [vmem:[#allocation2 + $0x10] sm:$0xff]
          %v659 = vld [vmem:[#allocation2 + $0x18] sm:$0xff]
          %v660 = vpack.c.bf16 %v657, %v656
          %v661 = vpack.c.bf16 %v659, %v658
          %v664 = vunpack.c.l.b16 %v660
          %v665 = vunpack.c.h.b16 %v660
          %v666 = vunpack.c.l.b16 %v661
          %v667 = vunpack.c.h.b16 %v661
          %v668 = vpack.c.b16 %v664, %v664
          %v669 = vpack.c.b16 %v665, %v665
          %v670 = vpack.c.b16 %v666, %v666
          %v671 = vpack.c.b16 %v667, %v667
          %676 = vst [vmem:[%s292] sm:$0xf] %v668
          %677 = vst [vmem:[%s292 + $0x4] sm:$0xf] %v669
          %678 = vst [vmem:[%s292 + $0x8] sm:$0xf] %v670
          %679 = vst [vmem:[%s292 + $0xc] sm:$0xf] %v671
          %v680 = vadd.f32 %v656, %v657
          %v681 = vadd.f32 %v680, %v658
          %v682 = vadd.f32 %v681, %v659
          %v683 = vrot.slane %v682, 4
          %v684 = vadd.f32 %v682, %v683
          %v685 = vrot.slane %v684, 2
          %v686 = vadd.f32 %v684, %v685
          %v687 = vrot.slane %v686, 1
          %v688 = vadd.f32 %v686, %v687
          %v689 = vmul.f32 %v656, %v656
          %v690 = vmul.f32 %v657, %v657
          %v691 = vmul.f32 %v658, %v658
          %v692 = vmul.f32 %v659, %v659
          %v693 = vadd.f32 %v689, %v690
          %v694 = vadd.f32 %v693, %v691
          %v695 = vadd.f32 %v694, %v692
          %v696 = vrot.slane %v695, 4
          %v697 = vadd.f32 %v695, %v696
          %v698 = vrot.slane %v697, 2
          %v699 = vadd.f32 %v697, %v698
          %v700 = vrot.slane %v699, 1
          %v701 = vadd.f32 %v699, %v700
          %vm702 = vcmask 1040384
          %v703 = vsel %vm702, %v688, %v701
          %704 = vst [vmem:[%s300] sm:$0x3] %v703
        $region62: #{_lambda_.44} parent=49 // pred_fallthru
          _
        %s705 = smul.u32 4, %s20
        %p706 = scmp.lt.s32.totalorder %s705, 3
        %s707 = scalar_select %p706, %s705, 3
        %p708 = scmp.lt.s32.totalorder %s21, 0
        %s709 = scalar_select %p708, %s21, 0
        %s710 = sadd.s32 %s709, %s707
        %s711 = smul.addr %s710, 4
        %s712 = scalar_lea.vmem %s2, %s711
        %p713 = scmp.lt.s32.totalorder %s20, 0
        %s714 = scalar_select %p713, %s20, 0
        %p715 = scmp.lt.s32.totalorder %s21, 0
        %s716 = scalar_select %p715, %s21, 0
        %s717 = sadd.s32 %s716, %s714
        %s718 = smul.addr %s717, 2
        %s719 = scalar_lea.vmem %s3, %s718
        // Predicated region
        $region63: #{_lambda_.44} parent=49 // pred_check
          %p720 = pneg %p110
        $region64: #{_lambda_.44} parent=49 // pred_check_branch
          %722 = sbr.rel (%p720) target = $region66
        $region65: #{_lambda_.44} parent=49 // pred_region
          %s723 = smul.u32 4, %s20
        $region66: #{_lambda_.44} parent=49 // pred_fallthru
          _
        // Predicated region
        $region67: #{_lambda_.44} parent=49 // pred_check
          %p724 = pneg %p138
        $region68: #{_lambda_.44} parent=49 // pred_check_branch
          %726 = sbr.rel (%p724) target = $region70
        $region69: #{_lambda_.44} parent=49 // pred_region
          _
        $region70: #{_lambda_.44} parent=49 // pred_fallthru
          _
        // Predicated region
        $region71: #{_lambda_.44} parent=49 // pred_check
          %p727 = pneg %p110
        $region72: #{_lambda_.44} parent=49 // pred_check_branch
          %729 = sbr.rel (%p727) target = $region74
        $region73: #{_lambda_.44} parent=49 // pred_region
          %s730 = smul.u32 4, %s20
          %p731 = scmp.lt.s32.totalorder %s730, 3
          %s732 = scalar_select %p731, %s730, 3
          %p733 = scmp.lt.s32.totalorder %s21, 0
          %s734 = scalar_select %p733, %s21, 0
          %s735 = sadd.s32 %s734, %s732
          %s736 = smul.addr %s735, 4
          %s737 = scalar_lea.vmem %s2, %s736
        $region74: #{_lambda_.44} parent=49 // pred_fallthru
          _
        // Predicated region
        $region75: #{_lambda_.44} parent=49 // pred_check
          %p738 = pneg %p138
        $region76: #{_lambda_.44} parent=49 // pred_check_branch
          %740 = sbr.rel (%p738) target = $region78
        $region77: #{_lambda_.44} parent=49 // pred_region
          %p741 = scmp.lt.s32.totalorder %s20, 0
          %s742 = scalar_select %p741, %s20, 0
          %p743 = scmp.lt.s32.totalorder %s21, 0
          %s744 = scalar_select %p743, %s21, 0
          %s745 = sadd.s32 %s744, %s742
          %s746 = smul.addr %s745, 2
          %s747 = scalar_lea.vmem %s3, %s746
        $region78: #{_lambda_.44} parent=49 // pred_fallthru
          _
      $region50: #{_lambda_.44} parent=5 // pred_fallthru
        _
      %p748 = scmp.le.s32.totalorder 2, %s10
      // Predicated region
      $region79: #{_lambda_.44} parent=5 // pred_check
        %p749 = pneg %p748
      $region80: #{_lambda_.44} parent=5 // pred_check_branch
        %751 = sbr.rel (%p749) target = $region82
      $region81: #{_lambda_.44} parent=5 // pred_region
        %s752 = ssub.s32 %s10, 2
      $region82: #{_lambda_.44} parent=5 // pred_fallthru
        _
    $region6: #{_lambda_.44} parent=1 // loop_footer
      %s14 = sadd.s32 1, %s10
    $region7: #{_lambda_.44} parent=1 // loop_footer_branch
      %9 = sbr.rel target = $region3
    $region8: #{_lambda_.44} parent=1 // loop_exit
      _

// kernel: _lambda_.53
$region0: #{_lambda_.53}
  #allocation0 [shape = 'u32[]', space=smem, size = 0x4, offset = 0x4, fixed_abs, tag = 'smem constant byte address 0x4 - core index']
  #allocation1 [shape = 'u32[144,128]{1,0:T(1,128)}', space=vmem, size = 0x12000, scoped, tag = 'internal scratch']
  %s0 = inlined_call_operand.vmem [shape: bf16[8,128], index: 0, kind: input, shape index: {}]
  %s1 = inlined_call_operand.vmem [shape: bf16[128,64], index: 1, kind: input, shape index: {}]
  %s2 = inlined_call_operand.vmem [shape: f32[1,64], index: 2, kind: input, shape index: {}]
  %s3 = inlined_call_operand.vmem [shape: bf16[8,64], index: 3, kind: output, shape index: {0}]
  %s4 = inlined_call_operand.vmem [shape: f32[1,2,64], index: 4, kind: output, shape index: {1}]
  %5 = xla_tuple %s3, %s4
  %s6 = sld [smem:[#allocation0]]
  $region30: #{_lambda_.53} parent=0
    _
  %s8 = ssub.s32 1, %s6
  %s9 = scalar_select 0, %s8, %s6
  // Predicated region
  $region2: #{_lambda_.53} parent=0 // pred_check
    _
  $region3: #{_lambda_.53} parent=0 // pred_check_branch
    %11 = sbr.rel (0) target = $region5
  $region4: #{_lambda_.53} parent=0 // pred_region
    _
  $region5: #{_lambda_.53} parent=0 // pred_fallthru
    _
  // Predicated region
  $region6: #{_lambda_.53} parent=0 // pred_check
    _
  $region7: #{_lambda_.53} parent=0 // pred_check_branch
    %13 = sbr.rel (0) target = $region9
  $region8: #{_lambda_.53} parent=0 // pred_region
    _
  $region9: #{_lambda_.53} parent=0 // pred_fallthru
    _
  // Predicated region
  $region10: #{_lambda_.53} parent=0 // pred_check
    _
  $region11: #{_lambda_.53} parent=0 // pred_check_branch
    %15 = sbr.rel (0) target = $region13
  $region12: #{_lambda_.53} parent=0 // pred_region
    _
  $region13: #{_lambda_.53} parent=0 // pred_fallthru
    _
  %v17 = vld [vmem:[%s0] sm:$0xf]
  %v18 = vmax.bf16 %v17, 0
  %v19 = vld [vmem:[%s1] sm:$0xf]
  %v20 = vld [vmem:[%s1 + $0x4] sm:$0xf]
  %v21 = vld [vmem:[%s1 + $0x8] sm:$0xf]
  %v22 = vld [vmem:[%s1 + $0xc] sm:$0xf]
  %v23 = vld [vmem:[%s1 + $0x10] sm:$0xf]
  %v24 = vld [vmem:[%s1 + $0x14] sm:$0xf]
  %v25 = vld [vmem:[%s1 + $0x18] sm:$0xf]
  %v26 = vld [vmem:[%s1 + $0x1c] sm:$0xf]
  %v27 = vld [vmem:[%s1 + $0x20] sm:$0xf]
  %v28 = vld [vmem:[%s1 + $0x24] sm:$0xf]
  %v29 = vld [vmem:[%s1 + $0x28] sm:$0xf]
  %v30 = vld [vmem:[%s1 + $0x2c] sm:$0xf]
  %v31 = vld [vmem:[%s1 + $0x30] sm:$0xf]
  %v32 = vld [vmem:[%s1 + $0x34] sm:$0xf]
  %v33 = vld [vmem:[%s1 + $0x38] sm:$0xf]
  %v34 = vld [vmem:[%s1 + $0x3c] sm:$0xf]
  %v35 = vld [vmem:[%s2] sm:$0x1]
  %v37 = vlaneseq
  %v38 = vshrl.u32 %v37, 7
  %v39 = vsub.s32 0, %v38
  %v40 = vrot.slane %v35, %v39
  %v58 = vunpack.c.l.b16 %v19
  %v59 = vunpack.c.l.b16 %v20
  %v60 = vunpack.c.l.b16 %v21
  %v61 = vunpack.c.l.b16 %v22
  %v62 = vunpack.c.l.b16 %v23
  %v63 = vunpack.c.l.b16 %v24
  %v64 = vunpack.c.l.b16 %v25
  %v65 = vunpack.c.l.b16 %v26
  %v66 = vunpack.c.l.b16 %v27
  %v67 = vunpack.c.l.b16 %v28
  %v68 = vunpack.c.l.b16 %v29
  %v69 = vunpack.c.l.b16 %v30
  %v70 = vunpack.c.l.b16 %v31
  %v71 = vunpack.c.l.b16 %v32
  %v72 = vunpack.c.l.b16 %v33
  %v73 = vunpack.c.l.b16 %v34
  %v74 = vpack.c.b16 %v59, %v58
  %v75 = vpack.c.b16 %v61, %v60
  %v76 = vpack.c.b16 %v63, %v62
  %v77 = vpack.c.b16 %v65, %v64
  %v78 = vpack.c.b16 %v67, %v66
  %v79 = vpack.c.b16 %v69, %v68
  %v80 = vpack.c.b16 %v71, %v70
  %v81 = vpack.c.b16 %v73, %v72
  %90 = vmatprep.subr.bf16.mxu0 0
  %91 = vmatpush1.bf16.msra.mxu0 %v74
  %92 = vmatprep.subr.bf16.mxu0 0
  %93 = vmatpush1.bf16.msra.mxu0 %v75
  %94 = vmatprep.subr.bf16.mxu0 0
  %95 = vmatpush1.bf16.msra.mxu0 %v76
  %96 = vmatprep.subr.bf16.mxu0 0
  %97 = vmatpush1.bf16.msra.mxu0 %v77
  %98 = vmatprep.subr.bf16.mxu0 0
  %99 = vmatpush1.bf16.msra.mxu0 %v78
  %100 = vmatprep.subr.bf16.mxu0 0
  %101 = vmatpush1.bf16.msra.mxu0 %v79
  %102 = vmatprep.subr.bf16.mxu0 0
  %103 = vmatpush1.bf16.msra.mxu0 %v80
  %104 = vmatprep.subr.bf16.mxu0 0
  %105 = vmatpush1.bf16.msra.mxu0 %v81
  %106 = vmatprep.subr.bf16.mxu0 0
  %107 = vmatpush1.bf16.msra.mxu0 0
  %108 = vmatprep.subr.bf16.mxu0 0
  %109 = vmatpush1.bf16.msra.mxu0 0
  %110 = vmatprep.subr.bf16.mxu0 0
  %111 = vmatpush1.bf16.msra.mxu0 0
  %112 = vmatprep.subr.bf16.mxu0 0
  %113 = vmatpush1.bf16.msra.mxu0 0
  %114 = vmatprep.subr.bf16.mxu0 0
  %115 = vmatpush1.bf16.msra.mxu0 0
  %116 = vmatprep.subr.bf16.mxu0 0
  %117 = vmatpush1.bf16.msra.mxu0 0
  %118 = vmatprep.subr.bf16.mxu0 0
  %119 = vmatpush1.bf16.msra.mxu0 0
  %120 = vmatprep.subr.bf16.mxu0 0
  %121 = vmatpush1.bf16.msra.mxu0 0
  %122 = vmatprep.mubr.bf16.mxu0 0
  %123 = vmatmul.mubr.bf16.gmra.mrb[0].mxu0 %v18
  %v124 = vpop.f32.mrb[0].mxu0
  %v125 = vadd.f32 %v40, %v124
  %v126 = vpop.f32.mrb[0].mxu0
  %v127 = vpop.f32.mrb[0].mxu0
  %v128 = vpop.f32.mrb[0].mxu0
  %129 = vdwg.mxu0
  %v130 = vpack.c.bf16 %v125, %v125
  %vm131 = vcmask 519168
  %132 = vst.msk [vmem:[%s3] sm:$0xf] %vm131, %v130
  %vm133 = vcmask 523264
  %v134 = vsel %vm133, %v125, 0.0
  %v135 = vrot.slane %v134, 4
  %v136 = vadd.f32 %v134, %v135
  %v137 = vrot.slane %v136, 2
  %v138 = vadd.f32 %v136, %v137
  %v139 = vrot.slane %v138, 1
  %v140 = vadd.f32 %v138, %v139
  %v141 = vmul.f32 %v125, %v125
  %v142 = vsel %vm133, %v141, 0.0
  %v143 = vrot.slane %v142, 4
  %v144 = vadd.f32 %v142, %v143
  %v145 = vrot.slane %v144, 2
  %v146 = vadd.f32 %v144, %v145
  %v147 = vrot.slane %v146, 1
  %v148 = vadd.f32 %v146, %v147
  %vm149 = vcmask 1040384
  %v150 = vsel %vm149, %v140, %v148
  %vm151 = vcmask 517120
  %152 = vst.msk [vmem:[%s4] sm:$0x3] %vm151, %v150
  // Predicated region
  $region14: #{_lambda_.53} parent=0 // pred_check
    _
  $region15: #{_lambda_.53} parent=0 // pred_check_branch
    %154 = sbr.rel (0) target = $region17
  $region16: #{_lambda_.53} parent=0 // pred_region
    _
  $region17: #{_lambda_.53} parent=0 // pred_fallthru
    _
  // Predicated region
  $region18: #{_lambda_.53} parent=0 // pred_check
    _
  $region19: #{_lambda_.53} parent=0 // pred_check_branch
    %156 = sbr.rel (0) target = $region21
  $region20: #{_lambda_.53} parent=0 // pred_region
    _
  $region21: #{_lambda_.53} parent=0 // pred_fallthru
    _
  // Predicated region
  $region22: #{_lambda_.53} parent=0 // pred_check
    _
  $region23: #{_lambda_.53} parent=0 // pred_check_branch
    %158 = sbr.rel (0) target = $region25
  $region24: #{_lambda_.53} parent=0 // pred_region
    _
  $region25: #{_lambda_.53} parent=0 // pred_fallthru
    _
  // Predicated region
  $region26: #{_lambda_.53} parent=0 // pred_check
    _
  $region27: #{_lambda_.53} parent=0 // pred_check_branch
    %160 = sbr.rel (0) target = $region29
  $region28: #{_lambda_.53} parent=0 // pred_region
    _
  $region29: #{_lambda_.53} parent=0 // pred_fallthru
    _

// kernel: _lambda_.50
$region0: #{_lambda_.50}
  #allocation0 [shape = 'u32[]', space=smem, size = 0x4, offset = 0x4, fixed_abs, tag = 'smem constant byte address 0x4 - core index']
  #allocation1 [shape = 'u32[144,128]{1,0:T(1,128)}', space=vmem, size = 0x12000, scoped, tag = 'internal scratch']
  %s0 = inlined_call_operand.vmem [shape: bf16[32,128], index: 0, kind: input, shape index: {}]
  %s1 = inlined_call_operand.vmem [shape: f32[1,128], index: 1, kind: input, shape index: {}]
  %s2 = inlined_call_operand.vmem [shape: f32[1,128], index: 2, kind: input, shape index: {}]
  %s3 = inlined_call_operand.vmem [shape: bf16[32,128], index: 3, kind: output, shape index: {}]
  %s4 = sld [smem:[#allocation0]]
  $region22: #{_lambda_.50} parent=0
    _
  %s6 = ssub.s32 1, %s4
  %s7 = scalar_select 0, %s6, %s4
  // Predicated region
  $region2: #{_lambda_.50} parent=0 // pred_check
    _
  $region3: #{_lambda_.50} parent=0 // pred_check_branch
    %9 = sbr.rel (0) target = $region5
  $region4: #{_lambda_.50} parent=0 // pred_region
    _
  $region5: #{_lambda_.50} parent=0 // pred_fallthru
    _
  // Predicated region
  $region6: #{_lambda_.50} parent=0 // pred_check
    _
  $region7: #{_lambda_.50} parent=0 // pred_check_branch
    %11 = sbr.rel (0) target = $region9
  $region8: #{_lambda_.50} parent=0 // pred_region
    _
  $region9: #{_lambda_.50} parent=0 // pred_fallthru
    _
  // Predicated region
  $region10: #{_lambda_.50} parent=0 // pred_check
    _
  $region11: #{_lambda_.50} parent=0 // pred_check_branch
    %13 = sbr.rel (0) target = $region13
  $region12: #{_lambda_.50} parent=0 // pred_region
    _
  $region13: #{_lambda_.50} parent=0 // pred_fallthru
    _
  %v14 = vld [vmem:[%s0] sm:$0xf]
  %v15 = vld [vmem:[%s0 + $0x4] sm:$0xf]
  %v16 = vld [vmem:[%s0 + $0x8] sm:$0xf]
  %v17 = vld [vmem:[%s0 + $0xc] sm:$0xf]
  %v18 = vunpack.c.l.bf16 %v14
  %v19 = vunpack.c.l.bf16 %v15
  %v20 = vunpack.c.l.bf16 %v16
  %v21 = vunpack.c.l.bf16 %v17
  %v22 = vld [vmem:[%s1] sm:$0x1]
  %v24 = vlaneseq
  %v25 = vshrl.u32 %v24, 7
  %v26 = vsub.s32 0, %v25
  %v27 = vrot.slane %v22, %v26
  %v29 = vmul.f32 %v18, %v27
  %v30 = vmul.f32 %v19, %v27
  %v31 = vmul.f32 %v20, %v27
  %v32 = vmul.f32 %v21, %v27
  %v33 = vld [vmem:[%s2] sm:$0x1]
  %v35 = vlaneseq
  %v36 = vshrl.u32 %v35, 7
  %v37 = vsub.s32 0, %v36
  %v38 = vrot.slane %v33, %v37
  %v40 = vadd.f32 %v29, %v38
  %v41 = vadd.f32 %v30, %v38
  %v42 = vadd.f32 %v31, %v38
  %v43 = vadd.f32 %v32, %v38
  %v44 = vmax.f32 %v40, 0.0
  %v45 = vmax.f32 %v41, 0.0
  %v46 = vmax.f32 %v42, 0.0
  %v47 = vmax.f32 %v43, 0.0
  %v48 = vpack.c.bf16 %v45, %v44
  %v49 = vpack.c.bf16 %v47, %v46
  %v52 = vunpack.c.l.b16 %v48
  %v53 = vunpack.c.h.b16 %v48
  %v54 = vunpack.c.l.b16 %v49
  %v55 = vunpack.c.h.b16 %v49
  %v56 = vpack.c.b16 %v52, %v52
  %v57 = vpack.c.b16 %v53, %v53
  %v58 = vpack.c.b16 %v54, %v54
  %v59 = vpack.c.b16 %v55, %v55
  %64 = vst [vmem:[%s3] sm:$0xf] %v56
  %65 = vst [vmem:[%s3 + $0x4] sm:$0xf] %v57
  %66 = vst [vmem:[%s3 + $0x8] sm:$0xf] %v58
  %67 = vst [vmem:[%s3 + $0xc] sm:$0xf] %v59
  // Predicated region
  $region14: #{_lambda_.50} parent=0 // pred_check
    _
  $region15: #{_lambda_.50} parent=0 // pred_check_branch
    %69 = sbr.rel (0) target = $region17
  $region16: #{_lambda_.50} parent=0 // pred_region
    _
  $region17: #{_lambda_.50} parent=0 // pred_fallthru
    _
  // Predicated region
  $region18: #{_lambda_.50} parent=0 // pred_check
    _
  $region19: #{_lambda_.50} parent=0 // pred_check_branch
    %71 = sbr.rel (0) target = $region21
  $region20: #{_lambda_.50} parent=0 // pred_region
    _
  $region21: #{_lambda_.50} parent=0 // pred_fallthru
    _

// kernel: _lambda_.49
$region0: #{_lambda_.49}
  #allocation0 [shape = 'u32[]', space=smem, size = 0x4, offset = 0x4, fixed_abs, tag = 'smem constant byte address 0x4 - core index']
  #allocation1 [shape = 'u32[144,128]{1,0:T(1,128)}', space=vmem, size = 0x12000, scoped, tag = 'internal scratch']
  %s0 = inlined_call_operand.vmem [shape: bf16[32,128], index: 0, kind: input, shape index: {}]
  %s1 = inlined_call_operand.vmem [shape: bf16[128,128], index: 1, kind: input, shape index: {}]
  %s2 = inlined_call_operand.vmem [shape: bf16[32,128], index: 2, kind: output, shape index: {0}]
  %s3 = inlined_call_operand.vmem [shape: f32[1,2,128], index: 3, kind: output, shape index: {1}]
  %4 = xla_tuple %s2, %s3
  %s5 = sld [smem:[#allocation0]]
  $region26: #{_lambda_.49} parent=0
    _
  %s7 = ssub.s32 1, %s5
  %s8 = scalar_select 0, %s7, %s5
  // Predicated region
  $region2: #{_lambda_.49} parent=0 // pred_check
    _
  $region3: #{_lambda_.49} parent=0 // pred_check_branch
    %10 = sbr.rel (0) target = $region5
  $region4: #{_lambda_.49} parent=0 // pred_region
    _
  $region5: #{_lambda_.49} parent=0 // pred_fallthru
    _
  // Predicated region
  $region6: #{_lambda_.49} parent=0 // pred_check
    _
  $region7: #{_lambda_.49} parent=0 // pred_check_branch
    %12 = sbr.rel (0) target = $region9
  $region8: #{_lambda_.49} parent=0 // pred_region
    _
  $region9: #{_lambda_.49} parent=0 // pred_fallthru
    _
  %v14 = vld [vmem:[%s0] sm:$0xf]
  %v15 = vld [vmem:[%s0 + $0x4] sm:$0xf]
  %v16 = vld [vmem:[%s0 + $0x8] sm:$0xf]
  %v17 = vld [vmem:[%s0 + $0xc] sm:$0xf]
  %v18 = vld [vmem:[%s1] sm:$0xf]
  %v19 = vld [vmem:[%s1 + $0x4] sm:$0xf]
  %v20 = vld [vmem:[%s1 + $0x8] sm:$0xf]
  %v21 = vld [vmem:[%s1 + $0xc] sm:$0xf]
  %v22 = vld [vmem:[%s1 + $0x10] sm:$0xf]
  %v23 = vld [vmem:[%s1 + $0x14] sm:$0xf]
  %v24 = vld [vmem:[%s1 + $0x18] sm:$0xf]
  %v25 = vld [vmem:[%s1 + $0x1c] sm:$0xf]
  %v26 = vld [vmem:[%s1 + $0x20] sm:$0xf]
  %v27 = vld [vmem:[%s1 + $0x24] sm:$0xf]
  %v28 = vld [vmem:[%s1 + $0x28] sm:$0xf]
  %v29 = vld [vmem:[%s1 + $0x2c] sm:$0xf]
  %v30 = vld [vmem:[%s1 + $0x30] sm:$0xf]
  %v31 = vld [vmem:[%s1 + $0x34] sm:$0xf]
  %v32 = vld [vmem:[%s1 + $0x38] sm:$0xf]
  %v33 = vld [vmem:[%s1 + $0x3c] sm:$0xf]
  %v38 = vunpack.c.l.b16 %v14
  %v39 = vunpack.c.l.b16 %v15
  %v40 = vunpack.c.l.b16 %v16
  %v41 = vunpack.c.l.b16 %v17
  %v42 = vpack.c.b16 %v39, %v38
  %v43 = vpack.c.b16 %v41, %v40
  %v62 = vunpack.c.l.b16 %v18
  %v63 = vunpack.c.l.b16 %v19
  %v64 = vunpack.c.l.b16 %v20
  %v65 = vunpack.c.l.b16 %v21
  %v66 = vunpack.c.l.b16 %v22
  %v67 = vunpack.c.l.b16 %v23
  %v68 = vunpack.c.l.b16 %v24
  %v69 = vunpack.c.l.b16 %v25
  %v70 = vunpack.c.l.b16 %v26
  %v71 = vunpack.c.l.b16 %v27
  %v72 = vunpack.c.l.b16 %v28
  %v73 = vunpack.c.l.b16 %v29
  %v74 = vunpack.c.l.b16 %v30
  %v75 = vunpack.c.l.b16 %v31
  %v76 = vunpack.c.l.b16 %v32
  %v77 = vunpack.c.l.b16 %v33
  %v78 = vpack.c.b16 %v63, %v62
  %v79 = vpack.c.b16 %v65, %v64
  %v80 = vpack.c.b16 %v67, %v66
  %v81 = vpack.c.b16 %v69, %v68
  %v82 = vpack.c.b16 %v71, %v70
  %v83 = vpack.c.b16 %v73, %v72
  %v84 = vpack.c.b16 %v75, %v74
  %v85 = vpack.c.b16 %v77, %v76
  %94 = vmatprep.subr.bf16.mxu0 0
  %95 = vmatpush1.bf16.msra.mxu0 %v78
  %96 = vmatprep.subr.bf16.mxu0 0
  %97 = vmatpush1.bf16.msra.mxu0 %v79
  %98 = vmatprep.subr.bf16.mxu0 0
  %99 = vmatpush1.bf16.msra.mxu0 %v80
  %100 = vmatprep.subr.bf16.mxu0 0
  %101 = vmatpush1.bf16.msra.mxu0 %v81
  %102 = vmatprep.subr.bf16.mxu0 0
  %103 = vmatpush1.bf16.msra.mxu0 %v82
  %104 = vmatprep.subr.bf16.mxu0 0
  %105 = vmatpush1.bf16.msra.mxu0 %v83
  %106 = vmatprep.subr.bf16.mxu0 0
  %107 = vmatpush1.bf16.msra.mxu0 %v84
  %108 = vmatprep.subr.bf16.mxu0 0
  %109 = vmatpush1.bf16.msra.mxu0 %v85
  %110 = vmatprep.subr.bf16.mxu0 0
  %111 = vmatpush1.bf16.msra.mxu0 0
  %112 = vmatprep.subr.bf16.mxu0 0
  %113 = vmatpush1.bf16.msra.mxu0 0
  %114 = vmatprep.subr.bf16.mxu0 0
  %115 = vmatpush1.bf16.msra.mxu0 0
  %116 = vmatprep.subr.bf16.mxu0 0
  %117 = vmatpush1.bf16.msra.mxu0 0
  %118 = vmatprep.subr.bf16.mxu0 0
  %119 = vmatpush1.bf16.msra.mxu0 0
  %120 = vmatprep.subr.bf16.mxu0 0
  %121 = vmatpush1.bf16.msra.mxu0 0
  %122 = vmatprep.subr.bf16.mxu0 0
  %123 = vmatpush1.bf16.msra.mxu0 0
  %124 = vmatprep.subr.bf16.mxu0 0
  %125 = vmatpush1.bf16.msra.mxu0 0
  %126 = vmatprep.mubr.bf16.mxu0 0
  %127 = vmatmul.mubr.bf16.gmra.mrb[0].mxu0 %v42
  %v128 = vpop.f32.mrb[0].mxu0
  %v129 = vadd.f32 0.0, %v128
  %v130 = vpop.f32.mrb[0].mxu0
  %v131 = vpop.f32.mrb[0].mxu0
  %v132 = vadd.f32 0.0, %v131
  %v133 = vpop.f32.mrb[0].mxu0
  %134 = vmatprep.mubr.bf16.mxu0 0
  %135 = vmatmul.mubr.bf16.gmra.mrb[0].mxu0 %v43
  %v136 = vpop.f32.mrb[0].mxu0
  %v137 = vadd.f32 0.0, %v136
  %v138 = vpop.f32.mrb[0].mxu0
  %v139 = vpop.f32.mrb[0].mxu0
  %v140 = vadd.f32 0.0, %v139
  %v141 = vpop.f32.mrb[0].mxu0
  %142 = vdwg.mxu0
  %v143 = vpack.c.bf16 %v132, %v129
  %v144 = vpack.c.bf16 %v140, %v137
  %v147 = vunpack.c.l.b16 %v143
  %v148 = vunpack.c.h.b16 %v143
  %v149 = vunpack.c.l.b16 %v144
  %v150 = vunpack.c.h.b16 %v144
  %v151 = vpack.c.b16 %v147, %v147
  %v152 = vpack.c.b16 %v148, %v148
  %v153 = vpack.c.b16 %v149, %v149
  %v154 = vpack.c.b16 %v150, %v150
  %159 = vst [vmem:[%s2] sm:$0xf] %v151
  %160 = vst [vmem:[%s2 + $0x4] sm:$0xf] %v152
  %161 = vst [vmem:[%s2 + $0x8] sm:$0xf] %v153
  %162 = vst [vmem:[%s2 + $0xc] sm:$0xf] %v154
  %v163 = vadd.f32 %v129, %v132
  %v164 = vadd.f32 %v163, %v137
  %v165 = vadd.f32 %v164, %v140
  %v166 = vrot.slane %v165, 4
  %v167 = vadd.f32 %v165, %v166
  %v168 = vrot.slane %v167, 2
  %v169 = vadd.f32 %v167, %v168
  %v170 = vrot.slane %v169, 1
  %v171 = vadd.f32 %v169, %v170
  %v172 = vmul.f32 %v129, %v129
  %v173 = vmul.f32 %v132, %v132
  %v174 = vmul.f32 %v137, %v137
  %v175 = vmul.f32 %v140, %v140
  %v176 = vadd.f32 %v172, %v173
  %v177 = vadd.f32 %v176, %v174
  %v178 = vadd.f32 %v177, %v175
  %v179 = vrot.slane %v178, 4
  %v180 = vadd.f32 %v178, %v179
  %v181 = vrot.slane %v180, 2
  %v182 = vadd.f32 %v180, %v181
  %v183 = vrot.slane %v182, 1
  %v184 = vadd.f32 %v182, %v183
  %vm185 = vcmask 1040384
  %v186 = vsel %vm185, %v171, %v184
  %187 = vst [vmem:[%s3] sm:$0x3] %v186
  // Predicated region
  $region10: #{_lambda_.49} parent=0 // pred_check
    _
  $region11: #{_lambda_.49} parent=0 // pred_check_branch
    %189 = sbr.rel (0) target = $region13
  $region12: #{_lambda_.49} parent=0 // pred_region
    _
  $region13: #{_lambda_.49} parent=0 // pred_fallthru
    _
  // Predicated region
  $region14: #{_lambda_.49} parent=0 // pred_check
    _
  $region15: #{_lambda_.49} parent=0 // pred_check_branch
    %191 = sbr.rel (0) target = $region17
  $region16: #{_lambda_.49} parent=0 // pred_region
    _
  $region17: #{_lambda_.49} parent=0 // pred_fallthru
    _
  // Predicated region
  $region18: #{_lambda_.49} parent=0 // pred_check
    _
  $region19: #{_lambda_.49} parent=0 // pred_check_branch
    %193 = sbr.rel (0) target = $region21
  $region20: #{_lambda_.49} parent=0 // pred_region
    _
  $region21: #{_lambda_.49} parent=0 // pred_fallthru
    _
  // Predicated region
  $region22: #{_lambda_.49} parent=0 // pred_check
    _
  $region23: #{_lambda_.49} parent=0 // pred_check_branch
    %195 = sbr.rel (0) target = $region25
  $region24: #{_lambda_.49} parent=0 // pred_region
    _
  $region25: #{_lambda_.49} parent=0 // pred_fallthru
    _

// kernel: _lambda_.52
$region0: #{_lambda_.52}
  #allocation0 [shape = 'u32[]', space=smem, size = 0x4, offset = 0x4, fixed_abs, tag = 'smem constant byte address 0x4 - core index']
  #allocation1 [shape = 'u32[144,128]{1,0:T(1,128)}', space=vmem, size = 0x12000, scoped, tag = 'internal scratch']
  %s0 = inlined_call_operand.vmem [shape: bf16[8,128], index: 0, kind: input, shape index: {}]
  %s1 = inlined_call_operand.vmem [shape: bf16[128,128], index: 1, kind: input, shape index: {}]
  %s2 = inlined_call_operand.vmem [shape: f32[1,128], index: 2, kind: input, shape index: {}]
  %s3 = inlined_call_operand.vmem [shape: f32[1,128], index: 3, kind: input, shape index: {}]
  %s4 = inlined_call_operand.vmem [shape: bf16[8,128], index: 4, kind: output, shape index: {0}]
  %s5 = inlined_call_operand.vmem [shape: f32[1,2,128], index: 5, kind: output, shape index: {1}]
  %6 = xla_tuple %s4, %s5
  %s7 = sld [smem:[#allocation0]]
  $region34: #{_lambda_.52} parent=0
    _
  %s9 = ssub.s32 1, %s7
  %s10 = scalar_select 0, %s9, %s7
  // Predicated region
  $region2: #{_lambda_.52} parent=0 // pred_check
    _
  $region3: #{_lambda_.52} parent=0 // pred_check_branch
    %12 = sbr.rel (0) target = $region5
  $region4: #{_lambda_.52} parent=0 // pred_region
    _
  $region5: #{_lambda_.52} parent=0 // pred_fallthru
    _
  // Predicated region
  $region6: #{_lambda_.52} parent=0 // pred_check
    _
  $region7: #{_lambda_.52} parent=0 // pred_check_branch
    %14 = sbr.rel (0) target = $region9
  $region8: #{_lambda_.52} parent=0 // pred_region
    _
  $region9: #{_lambda_.52} parent=0 // pred_fallthru
    _
  // Predicated region
  $region10: #{_lambda_.52} parent=0 // pred_check
    _
  $region11: #{_lambda_.52} parent=0 // pred_check_branch
    %16 = sbr.rel (0) target = $region13
  $region12: #{_lambda_.52} parent=0 // pred_region
    _
  $region13: #{_lambda_.52} parent=0 // pred_fallthru
    _
  // Predicated region
  $region14: #{_lambda_.52} parent=0 // pred_check
    _
  $region15: #{_lambda_.52} parent=0 // pred_check_branch
    %18 = sbr.rel (0) target = $region17
  $region16: #{_lambda_.52} parent=0 // pred_region
    _
  $region17: #{_lambda_.52} parent=0 // pred_fallthru
    _
  %v20 = vld [vmem:[%s0] sm:$0xf]
  %v21 = vunpack.c.l.bf16 %v20
  %v22 = vld [vmem:[%s2] sm:$0x1]
  %v24 = vlaneseq
  %v25 = vshrl.u32 %v24, 7
  %v26 = vsub.s32 0, %v25
  %v27 = vrot.slane %v22, %v26
  %v29 = vmul.f32 %v21, %v27
  %v30 = vld [vmem:[%s3] sm:$0x1]
  %v32 = vlaneseq
  %v33 = vshrl.u32 %v32, 7
  %v34 = vsub.s32 0, %v33
  %v35 = vrot.slane %v30, %v34
  %v37 = vadd.f32 %v29, %v35
  %v38 = vmax.f32 %v37, 0.0
  %v39 = vpack.c.bf16 %v38, %v38
  %v40 = vld [vmem:[%s1] sm:$0xf]
  %v41 = vld [vmem:[%s1 + $0x4] sm:$0xf]
  %v42 = vld [vmem:[%s1 + $0x8] sm:$0xf]
  %v43 = vld [vmem:[%s1 + $0xc] sm:$0xf]
  %v44 = vld [vmem:[%s1 + $0x10] sm:$0xf]
  %v45 = vld [vmem:[%s1 + $0x14] sm:$0xf]
  %v46 = vld [vmem:[%s1 + $0x18] sm:$0xf]
  %v47 = vld [vmem:[%s1 + $0x1c] sm:$0xf]
  %v48 = vld [vmem:[%s1 + $0x20] sm:$0xf]
  %v49 = vld [vmem:[%s1 + $0x24] sm:$0xf]
  %v50 = vld [vmem:[%s1 + $0x28] sm:$0xf]
  %v51 = vld [vmem:[%s1 + $0x2c] sm:$0xf]
  %v52 = vld [vmem:[%s1 + $0x30] sm:$0xf]
  %v53 = vld [vmem:[%s1 + $0x34] sm:$0xf]
  %v54 = vld [vmem:[%s1 + $0x38] sm:$0xf]
  %v55 = vld [vmem:[%s1 + $0x3c] sm:$0xf]
  %v72 = vunpack.c.l.b16 %v40
  %v73 = vunpack.c.l.b16 %v41
  %v74 = vunpack.c.l.b16 %v42
  %v75 = vunpack.c.l.b16 %v43
  %v76 = vunpack.c.l.b16 %v44
  %v77 = vunpack.c.l.b16 %v45
  %v78 = vunpack.c.l.b16 %v46
  %v79 = vunpack.c.l.b16 %v47
  %v80 = vunpack.c.l.b16 %v48
  %v81 = vunpack.c.l.b16 %v49
  %v82 = vunpack.c.l.b16 %v50
  %v83 = vunpack.c.l.b16 %v51
  %v84 = vunpack.c.l.b16 %v52
  %v85 = vunpack.c.l.b16 %v53
  %v86 = vunpack.c.l.b16 %v54
  %v87 = vunpack.c.l.b16 %v55
  %v88 = vpack.c.b16 %v73, %v72
  %v89 = vpack.c.b16 %v75, %v74
  %v90 = vpack.c.b16 %v77, %v76
  %v91 = vpack.c.b16 %v79, %v78
  %v92 = vpack.c.b16 %v81, %v80
  %v93 = vpack.c.b16 %v83, %v82
  %v94 = vpack.c.b16 %v85, %v84
  %v95 = vpack.c.b16 %v87, %v86
  %104 = vmatprep.subr.bf16.mxu0 0
  %105 = vmatpush1.bf16.msra.mxu0 %v88
  %106 = vmatprep.subr.bf16.mxu0 0
  %107 = vmatpush1.bf16.msra.mxu0 %v89
  %108 = vmatprep.subr.bf16.mxu0 0
  %109 = vmatpush1.bf16.msra.mxu0 %v90
  %110 = vmatprep.subr.bf16.mxu0 0
  %111 = vmatpush1.bf16.msra.mxu0 %v91
  %112 = vmatprep.subr.bf16.mxu0 0
  %113 = vmatpush1.bf16.msra.mxu0 %v92
  %114 = vmatprep.subr.bf16.mxu0 0
  %115 = vmatpush1.bf16.msra.mxu0 %v93
  %116 = vmatprep.subr.bf16.mxu0 0
  %117 = vmatpush1.bf16.msra.mxu0 %v94
  %118 = vmatprep.subr.bf16.mxu0 0
  %119 = vmatpush1.bf16.msra.mxu0 %v95
  %120 = vmatprep.subr.bf16.mxu0 0
  %121 = vmatpush1.bf16.msra.mxu0 0
  %122 = vmatprep.subr.bf16.mxu0 0
  %123 = vmatpush1.bf16.msra.mxu0 0
  %124 = vmatprep.subr.bf16.mxu0 0
  %125 = vmatpush1.bf16.msra.mxu0 0
  %126 = vmatprep.subr.bf16.mxu0 0
  %127 = vmatpush1.bf16.msra.mxu0 0
  %128 = vmatprep.subr.bf16.mxu0 0
  %129 = vmatpush1.bf16.msra.mxu0 0
  %130 = vmatprep.subr.bf16.mxu0 0
  %131 = vmatpush1.bf16.msra.mxu0 0
  %132 = vmatprep.subr.bf16.mxu0 0
  %133 = vmatpush1.bf16.msra.mxu0 0
  %134 = vmatprep.subr.bf16.mxu0 0
  %135 = vmatpush1.bf16.msra.mxu0 0
  %136 = vmatprep.mubr.bf16.mxu0 0
  %137 = vmatmul.mubr.bf16.gmra.mrb[0].mxu0 %v39
  %v138 = vpop.f32.mrb[0].mxu0
  %v139 = vadd.f32 0.0, %v138
  %v140 = vpop.f32.mrb[0].mxu0
  %v141 = vpop.f32.mrb[0].mxu0
  %v142 = vpop.f32.mrb[0].mxu0
  %143 = vdwg.mxu0
  %v144 = vpack.c.bf16 %v139, %v139
  %145 = vst [vmem:[%s4] sm:$0xf] %v144
  %v146 = vrot.slane %v139, 4
  %v147 = vadd.f32 %v139, %v146
  %v148 = vrot.slane %v147, 2
  %v149 = vadd.f32 %v147, %v148
  %v150 = vrot.slane %v149, 1
  %v151 = vadd.f32 %v149, %v150
  %v152 = vmul.f32 %v139, %v139
  %v153 = vrot.slane %v152, 4
  %v154 = vadd.f32 %v152, %v153
  %v155 = vrot.slane %v154, 2
  %v156 = vadd.f32 %v154, %v155
  %v157 = vrot.slane %v156, 1
  %v158 = vadd.f32 %v156, %v157
  %vm159 = vcmask 1040384
  %v160 = vsel %vm159, %v151, %v158
  %161 = vst [vmem:[%s5] sm:$0x3] %v160
  // Predicated region
  $region18: #{_lambda_.52} parent=0 // pred_check
    _
  $region19: #{_lambda_.52} parent=0 // pred_check_branch
    %163 = sbr.rel (0) target = $region21
  $region20: #{_lambda_.52} parent=0 // pred_region
    _
  $region21: #{_lambda_.52} parent=0 // pred_fallthru
    _
  // Predicated region
  $region22: #{_lambda_.52} parent=0 // pred_check
    _
  $region23: #{_lambda_.52} parent=0 // pred_check_branch
    %165 = sbr.rel (0) target = $region25
  $region24: #{_lambda_.52} parent=0 // pred_region
    _
  $region25: #{_lambda_.52} parent=0 // pred_fallthru
    _
  // Predicated region
  $region26: #{_lambda_.52} parent=0 // pred_check
    _
  $region27: #{_lambda_.52} parent=0 // pred_check_branch
    %167 = sbr.rel (0) target = $region29
  $region28: #{_lambda_.52} parent=0 // pred_region
    _
  $region29: #{_lambda_.52} parent=0 // pred_fallthru
    _
  // Predicated region
  $region30: #{_lambda_.52} parent=0 // pred_check
    _
  $region31: #{_lambda_.52} parent=0 // pred_check_branch
    %169 = sbr.rel (0) target = $region33
  $region32: #{_lambda_.52} parent=0 // pred_region
    _
  $region33: #{_lambda_.52} parent=0 // pred_fallthru
    _

// kernel: _lambda_.51
$region0: #{_lambda_.51}
  #allocation0 [shape = 'u32[]', space=smem, size = 0x4, offset = 0x4, fixed_abs, tag = 'smem constant byte address 0x4 - core index']
  #allocation1 [shape = 'u32[144,128]{1,0:T(1,128)}', space=vmem, size = 0x12000, scoped, tag = 'internal scratch']
  #allocation2 [shape = 'f32[8,128]{1,0:T(8,128)}', space=vmem, size = 0x1000, scoped, tag = 'scratch operand']
  %s0 = inlined_call_operand.vmem [shape: bf16[8,1152], index: 0, kind: input, shape index: {}]
  %s1 = inlined_call_operand.vmem [shape: bf16[1152,128], index: 1, kind: input, shape index: {}]
  %s2 = inlined_call_operand.vmem [shape: bf16[8,128], index: 2, kind: output, shape index: {0}]
  %s3 = inlined_call_operand.vmem [shape: f32[1,2,128], index: 3, kind: output, shape index: {1}]
  %4 = xla_tuple %s2, %s3
  %s5 = sld [smem:[#allocation0]]
  $region57: #{_lambda_.51} parent=0
    _
  %s7 = ssub.s32 1, %s5
  %s8 = scalar_select 0, %s7, %s5
  loop: start=0, step=1, limit=5
  $region2: #{_lambda_.51} parent=0 // loop_pre_header
    _
  $region3: #{_lambda_.51} parent=0 // loop_header
    %s10 = sphi 0, %s14
    %p11 = scmp.ge.s32.totalorder %s10, 5
    %s17 = sphi 0, %s36
    %s18 = sphi 0, %s32
    %s19 = sphi 0, %s28
    %s20 = sphi 0, %s17
    %s21 = sphi 0, %s18
    %s22 = sphi 0, %s19
    %s23 = sphi 0, %s20
    %s24 = sphi 0, %s21
    %s25 = sphi 0, %s22
    %s41 = sphi 0, %s43
    %s44 = sphi 0, %s41
    %s45 = sphi 0, %s44
    %s61 = sphi 0, %s45
    %s69 = sphi 0, %s71
    %s72 = sphi 0, %s69
    %s73 = sphi 0, %s72
    %s89 = sphi 0, %s73
    %s97 = sphi 0, %s99
    %s100 = sphi 0, %s97
    %s101 = sphi 0, %s100
    %s117 = sphi 0, %s101
    %s125 = sphi 0, %s127
    %s128 = sphi 0, %s125
    %s129 = sphi 0, %s128
    %s145 = sphi 0, %s129
  $region4: #{_lambda_.51} parent=0 // loop_header_branch
    %13 = sbr.rel (%p11) target = $region8
  $region5: #{_lambda_.51} parent=0 // loop_body
    %s15 = ssub.s32 %s10, 1
    %s16 = ssub.s32 %s10, 2
    %s26 = sadd.s32 1, %s19
    %p27 = scmp.ge.s32.totalorder %s26, 3
    %s28 = scalar_select %p27, 0, %s26
    %s29 = sadd.s32 1, %s18
    %s30 = scalar_select %p27, %s29, %s18
    %p31 = scmp.ge.s32.totalorder %s30, 1
    %s32 = scalar_select %p31, 0, %s30
    %s33 = sadd.s32 1, %s17
    %s34 = scalar_select %p31, %s33, %s17
    %p35 = scmp.ge.s32.totalorder %s34, 1
    %s36 = scalar_select %p35, 0, %s34
    %s37 = ssub.s32 %s17, %s36
    %s38 = ssub.s32 %s19, %s28
    %s39 = sor.u32 %s37, %s38
    %p40 = scmp.eq.s32.totalorder %s39, 0
    %s42 = sadd.s32 %s41, 1
    %s43 = scalar_select %p40, %s41, %s42
    %p46 = pneg %p40
    %p47 = scmp.eq.s32.totalorder %s10, 2
    %p48 = por %p46, %p47
    %p49 = scmp.ne.s32.totalorder %s41, %s44
    %p50 = scmp.eq.s32.totalorder %s10, 0
    %p51 = por %p49, %p50
    %p52 = scmp.ne.s32.totalorder %s41, %s44
    %p53 = scmp.eq.s32.totalorder %s15, 2
    %p54 = por %p52, %p53
    %p55 = scmp.ne.s32.totalorder %s44, %s45
    %p56 = scmp.eq.s32.totalorder %s15, 0
    %p57 = por %p55, %p56
    %p58 = scmp.ne.s32.totalorder %s44, %s45
    %p59 = scmp.eq.s32.totalorder %s16, 2
    %p60 = por %p58, %p59
    %p62 = scmp.ne.s32.totalorder %s45, %s61
    %p63 = scmp.eq.s32.totalorder %s16, 0
    %p64 = por %p62, %p63
    %s65 = ssub.s32 %s19, %s28
    %s66 = ssub.s32 %s18, %s32
    %s67 = sor.u32 %s65, %s66
    %p68 = scmp.eq.s32.totalorder %s67, 0
    %s70 = sadd.s32 %s69, 1
    %s71 = scalar_select %p68, %s69, %s70
    %p74 = pneg %p68
    %p75 = scmp.eq.s32.totalorder %s10, 2
    %p76 = por %p74, %p75
    %p77 = scmp.ne.s32.totalorder %s69, %s72
    %p78 = scmp.eq.s32.totalorder %s10, 0
    %p79 = por %p77, %p78
    %p80 = scmp.ne.s32.totalorder %s69, %s72
    %p81 = scmp.eq.s32.totalorder %s15, 2
    %p82 = por %p80, %p81
    %p83 = scmp.ne.s32.totalorder %s72, %s73
    %p84 = scmp.eq.s32.totalorder %s15, 0
    %p85 = por %p83, %p84
    %p86 = scmp.ne.s32.totalorder %s72, %s73
    %p87 = scmp.eq.s32.totalorder %s16, 2
    %p88 = por %p86, %p87
    %p90 = scmp.ne.s32.totalorder %s73, %s89
    %p91 = scmp.eq.s32.totalorder %s16, 0
    %p92 = por %p90, %p91
    %s93 = ssub.s32 %s17, %s36
    %s94 = ssub.s32 %s18, %s32
    %s95 = sor.u32 %s93, %s94
    %p96 = scmp.eq.s32.totalorder %s95, 0
    %s98 = sadd.s32 %s97, 1
    %s99 = scalar_select %p96, %s97, %s98
    %p102 = pneg %p96
    %p103 = scmp.eq.s32.totalorder %s10, 2
    %p104 = por %p102, %p103
    %p105 = scmp.ne.s32.totalorder %s97, %s100
    %p106 = scmp.eq.s32.totalorder %s10, 0
    %p107 = por %p105, %p106
    %p108 = scmp.ne.s32.totalorder %s97, %s100
    %p109 = scmp.eq.s32.totalorder %s15, 2
    %p110 = por %p108, %p109
    %p111 = scmp.ne.s32.totalorder %s100, %s101
    %p112 = scmp.eq.s32.totalorder %s15, 0
    %p113 = por %p111, %p112
    %p114 = scmp.ne.s32.totalorder %s100, %s101
    %p115 = scmp.eq.s32.totalorder %s16, 2
    %p116 = por %p114, %p115
    %p118 = scmp.ne.s32.totalorder %s101, %s117
    %p119 = scmp.eq.s32.totalorder %s16, 0
    %p120 = por %p118, %p119
    %s121 = ssub.s32 %s17, %s36
    %s122 = ssub.s32 %s18, %s32
    %s123 = sor.u32 %s121, %s122
    %p124 = scmp.eq.s32.totalorder %s123, 0
    %s126 = sadd.s32 %s125, 1
    %s127 = scalar_select %p124, %s125, %s126
    %p130 = pneg %p124
    %p131 = scmp.eq.s32.totalorder %s10, 2
    %p132 = por %p130, %p131
    %p133 = scmp.ne.s32.totalorder %s125, %s128
    %p134 = scmp.eq.s32.totalorder %s10, 0
    %p135 = por %p133, %p134
    %p136 = scmp.ne.s32.totalorder %s125, %s128
    %p137 = scmp.eq.s32.totalorder %s15, 2
    %p138 = por %p136, %p137
    %p139 = scmp.ne.s32.totalorder %s128, %s129
    %p140 = scmp.eq.s32.totalorder %s15, 0
    %p141 = por %p139, %p140
    %p142 = scmp.ne.s32.totalorder %s128, %s129
    %p143 = scmp.eq.s32.totalorder %s16, 2
    %p144 = por %p142, %p143
    %p146 = scmp.ne.s32.totalorder %s129, %s145
    %p147 = scmp.eq.s32.totalorder %s16, 0
    %p148 = por %p146, %p147
    %p149 = scmp.le.s32.totalorder 1, %s10
    %p150 = scmp.lt.s32.totalorder %s10, 4
    %p151 = pnand %p149, %p150
    %p152 = pneg %p151
    // Predicated region
    $region9: #{_lambda_.51} parent=5 // pred_check
      _
    $region10: #{_lambda_.51} parent=5 // pred_check_branch
      %154 = sbr.rel (%p151) target = $region12
    $region11: #{_lambda_.51} parent=5 // pred_region
      %s155 = ssub.s32 %s10, 1
    $region12: #{_lambda_.51} parent=5 // pred_fallthru
      _
    %p156 = scmp.lt.s32.totalorder %s10, 3
    // Predicated region
    $region13: #{_lambda_.51} parent=5 // pred_check
      %p157 = pneg %p156
    $region14: #{_lambda_.51} parent=5 // pred_check_branch
      %159 = sbr.rel (%p157) target = $region16
    $region15: #{_lambda_.51} parent=5 // pred_region
      // Predicated region
      $region17: #{_lambda_.51} parent=15 // pred_check
        %p160 = pneg %p51
      $region18: #{_lambda_.51} parent=15 // pred_check_branch
        %162 = sbr.rel (%p160) target = $region20
      $region19: #{_lambda_.51} parent=15 // pred_region
        %s163 = smul.u32 3, %s19
        %p164 = scmp.lt.s32.totalorder %s17, 0
        %s165 = scalar_select %p164, %s17, 0
        %p166 = scmp.lt.s32.totalorder %s163, 8
        %s167 = scalar_select %p166, %s163, 8
        %s168 = smul.addr %s165, 9
        %s169 = sadd.s32 %s167, %s168
        %s170 = smul.addr %s169, 4
        %s171 = scalar_lea.vmem %s0, %s170
        %s172 = smul.u32 3, %s19
      $region20: #{_lambda_.51} parent=15 // pred_fallthru
        _
      // Predicated region
      $region21: #{_lambda_.51} parent=15 // pred_check
        %p173 = pneg %p79
      $region22: #{_lambda_.51} parent=15 // pred_check_branch
        %175 = sbr.rel (%p173) target = $region24
      $region23: #{_lambda_.51} parent=15 // pred_region
        %s176 = smul.u32 48, %s19
        %p177 = scmp.lt.s32.totalorder %s176, 143
        %s178 = scalar_select %p177, %s176, 143
        %p179 = scmp.lt.s32.totalorder %s18, 0
        %s180 = scalar_select %p179, %s18, 0
        %s181 = sadd.s32 %s180, %s178
        %s182 = smul.addr %s181, 4
        %s183 = scalar_lea.vmem %s1, %s182
        %s184 = smul.u32 48, %s19
      $region24: #{_lambda_.51} parent=15 // pred_fallthru
        _
    $region16: #{_lambda_.51} parent=5 // pred_fallthru
      _
    %p185 = scmp.le.s32.totalorder 1, %s10
    %p186 = scmp.lt.s32.totalorder %s10, 4
    %p187 = pnand %p185, %p186
    %p188 = pneg %p187
    // Predicated region
    $region25: #{_lambda_.51} parent=5 // pred_check
      _
    $region26: #{_lambda_.51} parent=5 // pred_check_branch
      %190 = sbr.rel (%p187) target = $region28
    $region27: #{_lambda_.51} parent=5 // pred_region
      %s191 = ssub.s32 %s10, 1
      %s192 = smul.u32 3, %s22
      %p193 = scmp.lt.s32.totalorder %s20, 0
      %s194 = scalar_select %p193, %s20, 0
      %p195 = scmp.lt.s32.totalorder %s192, 8
      %s196 = scalar_select %p195, %s192, 8
      %s197 = smul.addr %s194, 9
      %s198 = sadd.s32 %s196, %s197
      %s199 = smul.addr %s198, 4
      %s200 = scalar_lea.vmem %s0, %s199
      %p201 = pneg %p57
      %p202 = pneg %p54
      %s203 = smul.u32 48, %s22
      %p204 = scmp.lt.s32.totalorder %s203, 143
      %s205 = scalar_select %p204, %s203, 143
      %p206 = scmp.lt.s32.totalorder %s21, 0
      %s207 = scalar_select %p206, %s21, 0
      %s208 = sadd.s32 %s207, %s205
      %s209 = smul.addr %s208, 4
      %s210 = scalar_lea.vmem %s1, %s209
      %p211 = pneg %p85
      %p212 = pneg %p82
      %p213 = pneg %p113
      %p214 = pneg %p110
      %p215 = scmp.lt.s32.totalorder %s20, 0
      %s216 = scalar_select %p215, %s20, 0
      %p217 = scmp.lt.s32.totalorder %s21, 0
      %s218 = scalar_select %p217, %s21, 0
      %s219 = sadd.s32 %s218, %s216
      %s220 = smul.addr %s219, 4
      %s221 = scalar_lea.vmem %s2, %s220
      %p222 = pneg %p141
      %p223 = pneg %p138
      %p224 = scmp.lt.s32.totalorder %s20, 0
      %s225 = scalar_select %p224, %s20, 0
      %p226 = scmp.lt.s32.totalorder %s21, 0
      %s227 = scalar_select %p226, %s21, 0
      %s228 = sadd.s32 %s227, %s225
      %s229 = smul.addr %s228, 2
      %s230 = scalar_lea.vmem %s3, %s229
      %s231 = smul.u32 3, %s22
      %p232 = scmp.lt.s32.totalorder %s20, 0
      %s233 = scalar_select %p232, %s20, 0
      %p234 = scmp.lt.s32.totalorder %s231, 8
      %s235 = scalar_select %p234, %s231, 8
      %s236 = smul.addr %s233, 9
      %s237 = sadd.s32 %s235, %s236
      %s238 = smul.addr %s237, 4
      %s239 = scalar_lea.vmem %s0, %s238
      %s240 = smul.u32 3, %s22
      %s241 = smul.u32 48, %s22
      %p242 = scmp.lt.s32.totalorder %s241, 143
      %s243 = scalar_select %p242, %s241, 143
      %p244 = scmp.lt.s32.totalorder %s21, 0
      %s245 = scalar_select %p244, %s21, 0
      %s246 = sadd.s32 %s245, %s243
      %s247 = smul.addr %s246, 4
      %s248 = scalar_lea.vmem %s1, %s247
      %s249 = smul.u32 48, %s22
      %p250 = scmp.lt.s32.totalorder %s20, 0
      %s251 = scalar_select %p250, %s20, 0
      %p252 = scmp.lt.s32.totalorder %s21, 0
      %s253 = scalar_select %p252, %s21, 0
      %s254 = sadd.s32 %s253, %s251
      %s255 = smul.addr %s254, 4
      %s256 = scalar_lea.vmem %s2, %s255
      %p257 = scmp.lt.s32.totalorder %s20, 0
      %s258 = scalar_select %p257, %s20, 0
      %p259 = scmp.lt.s32.totalorder %s21, 0
      %s260 = scalar_select %p259, %s21, 0
      %s261 = sadd.s32 %s260, %s258
      %s262 = smul.addr %s261, 2
      %s263 = scalar_lea.vmem %s3, %s262
      %v265 = vld [vmem:[%s239] sm:$0xff]
      %v266 = vld [vmem:[%s239 + $0x8] sm:$0xf]
      %v267 = vld [vmem:[%s248] sm:$0xf]
      %v268 = vld [vmem:[%s248 + $0x4] sm:$0xf]
      %v269 = vld [vmem:[%s248 + $0x8] sm:$0xf]
      %v270 = vld [vmem:[%s248 + $0xc] sm:$0xf]
      %v271 = vld [vmem:[%s248 + $0x10] sm:$0xf]
      %v272 = vld [vmem:[%s248 + $0x14] sm:$0xf]
      %v273 = vld [vmem:[%s248 + $0x18] sm:$0xf]
      %v274 = vld [vmem:[%s248 + $0x1c] sm:$0xf]
      %v275 = vld [vmem:[%s248 + $0x20] sm:$0xf]
      %v276 = vld [vmem:[%s248 + $0x24] sm:$0xf]
      %v277 = vld [vmem:[%s248 + $0x28] sm:$0xf]
      %v278 = vld [vmem:[%s248 + $0x2c] sm:$0xf]
      %v279 = vld [vmem:[%s248 + $0x30] sm:$0xf]
      %v280 = vld [vmem:[%s248 + $0x34] sm:$0xf]
      %v281 = vld [vmem:[%s248 + $0x38] sm:$0xf]
      %v282 = vld [vmem:[%s248 + $0x3c] sm:$0xf]
      %v283 = vld [vmem:[%s248 + $0x40] sm:$0xf]
      %v284 = vld [vmem:[%s248 + $0x44] sm:$0xf]
      %v285 = vld [vmem:[%s248 + $0x48] sm:$0xf]
      %v286 = vld [vmem:[%s248 + $0x4c] sm:$0xf]
      %v287 = vld [vmem:[%s248 + $0x50] sm:$0xf]
      %v288 = vld [vmem:[%s248 + $0x54] sm:$0xf]
      %v289 = vld [vmem:[%s248 + $0x58] sm:$0xf]
      %v290 = vld [vmem:[%s248 + $0x5c] sm:$0xf]
      %v291 = vld [vmem:[%s248 + $0x60] sm:$0xf]
      %v292 = vld [vmem:[%s248 + $0x64] sm:$0xf]
      %v293 = vld [vmem:[%s248 + $0x68] sm:$0xf]
      %v294 = vld [vmem:[%s248 + $0x6c] sm:$0xf]
      %v295 = vld [vmem:[%s248 + $0x70] sm:$0xf]
      %v296 = vld [vmem:[%s248 + $0x74] sm:$0xf]
      %v297 = vld [vmem:[%s248 + $0x78] sm:$0xf]
      %v298 = vld [vmem:[%s248 + $0x7c] sm:$0xf]
      %v299 = vld [vmem:[%s248 + $0x80] sm:$0xf]
      %v300 = vld [vmem:[%s248 + $0x84] sm:$0xf]
      %v301 = vld [vmem:[%s248 + $0x88] sm:$0xf]
      %v302 = vld [vmem:[%s248 + $0x8c] sm:$0xf]
      %v303 = vld [vmem:[%s248 + $0x90] sm:$0xf]
      %v304 = vld [vmem:[%s248 + $0x94] sm:$0xf]
      %v305 = vld [vmem:[%s248 + $0x98] sm:$0xf]
      %v306 = vld [vmem:[%s248 + $0x9c] sm:$0xf]
      %v307 = vld [vmem:[%s248 + $0xa0] sm:$0xf]
      %v308 = vld [vmem:[%s248 + $0xa4] sm:$0xf]
      %v309 = vld [vmem:[%s248 + $0xa8] sm:$0xf]
      %v310 = vld [vmem:[%s248 + $0xac] sm:$0xf]
      %v311 = vld [vmem:[%s248 + $0xb0] sm:$0xf]
      %v312 = vld [vmem:[%s248 + $0xb4] sm:$0xf]
      %v313 = vld [vmem:[%s248 + $0xb8] sm:$0xf]
      %v314 = vld [vmem:[%s248 + $0xbc] sm:$0xf]
      %v317 = vunpack.c.l.b16 %v265
      %v318 = vunpack.c.h.b16 %v265
      %v319 = vunpack.c.l.b16 %v266
      %v320 = vpack.c.b16 %v317, %v317
      %v321 = vpack.c.b16 %v318, %v318
      %v322 = vpack.c.b16 %v319, %v319
      %v374 = vunpack.c.l.b16 %v267
      %v375 = vunpack.c.l.b16 %v268
      %v376 = vunpack.c.l.b16 %v269
      %v377 = vunpack.c.l.b16 %v270
      %v378 = vunpack.c.l.b16 %v271
      %v379 = vunpack.c.l.b16 %v272
      %v380 = vunpack.c.l.b16 %v273
      %v381 = vunpack.c.l.b16 %v274
      %v382 = vunpack.c.l.b16 %v275
      %v383 = vunpack.c.l.b16 %v276
      %v384 = vunpack.c.l.b16 %v277
      %v385 = vunpack.c.l.b16 %v278
      %v386 = vunpack.c.l.b16 %v279
      %v387 = vunpack.c.l.b16 %v280
      %v388 = vunpack.c.l.b16 %v281
      %v389 = vunpack.c.l.b16 %v282
      %v390 = vunpack.c.l.b16 %v283
      %v391 = vunpack.c.l.b16 %v284
      %v392 = vunpack.c.l.b16 %v285
      %v393 = vunpack.c.l.b16 %v286
      %v394 = vunpack.c.l.b16 %v287
      %v395 = vunpack.c.l.b16 %v288
      %v396 = vunpack.c.l.b16 %v289
      %v397 = vunpack.c.l.b16 %v290
      %v398 = vunpack.c.l.b16 %v291
      %v399 = vunpack.c.l.b16 %v292
      %v400 = vunpack.c.l.b16 %v293
      %v401 = vunpack.c.l.b16 %v294
      %v402 = vunpack.c.l.b16 %v295
      %v403 = vunpack.c.l.b16 %v296
      %v404 = vunpack.c.l.b16 %v297
      %v405 = vunpack.c.l.b16 %v298
      %v406 = vunpack.c.l.b16 %v299
      %v407 = vunpack.c.l.b16 %v300
      %v408 = vunpack.c.l.b16 %v301
      %v409 = vunpack.c.l.b16 %v302
      %v410 = vunpack.c.l.b16 %v303
      %v411 = vunpack.c.l.b16 %v304
      %v412 = vunpack.c.l.b16 %v305
      %v413 = vunpack.c.l.b16 %v306
      %v414 = vunpack.c.l.b16 %v307
      %v415 = vunpack.c.l.b16 %v308
      %v416 = vunpack.c.l.b16 %v309
      %v417 = vunpack.c.l.b16 %v310
      %v418 = vunpack.c.l.b16 %v311
      %v419 = vunpack.c.l.b16 %v312
      %v420 = vunpack.c.l.b16 %v313
      %v421 = vunpack.c.l.b16 %v314
      %v422 = vpack.c.b16 %v375, %v374
      %v423 = vpack.c.b16 %v377, %v376
      %v424 = vpack.c.b16 %v379, %v378
      %v425 = vpack.c.b16 %v381, %v380
      %v426 = vpack.c.b16 %v383, %v382
      %v427 = vpack.c.b16 %v385, %v384
      %v428 = vpack.c.b16 %v387, %v386
      %v429 = vpack.c.b16 %v389, %v388
      %v430 = vpack.c.b16 %v391, %v390
      %v431 = vpack.c.b16 %v393, %v392
      %v432 = vpack.c.b16 %v395, %v394
      %v433 = vpack.c.b16 %v397, %v396
      %v434 = vpack.c.b16 %v399, %v398
      %v435 = vpack.c.b16 %v401, %v400
      %v436 = vpack.c.b16 %v403, %v402
      %v437 = vpack.c.b16 %v405, %v404
      %v438 = vpack.c.b16 %v407, %v406
      %v439 = vpack.c.b16 %v409, %v408
      %v440 = vpack.c.b16 %v411, %v410
      %v441 = vpack.c.b16 %v413, %v412
      %v442 = vpack.c.b16 %v415, %v414
      %v443 = vpack.c.b16 %v417, %v416
      %v444 = vpack.c.b16 %v419, %v418
      %v445 = vpack.c.b16 %v421, %v420
      %470 = vmatprep.subr.bf16.mxu0 0
      %471 = vmatpush1.bf16.msra.mxu0 %v422
      %472 = vmatprep.subr.bf16.mxu0 0
      %473 = vmatpush1.bf16.msra.mxu0 %v423
      %474 = vmatprep.subr.bf16.mxu0 0
      %475 = vmatpush1.bf16.msra.mxu0 %v424
      %476 = vmatprep.subr.bf16.mxu0 0
      %477 = vmatpush1.bf16.msra.mxu0 %v425
      %478 = vmatprep.subr.bf16.mxu0 0
      %479 = vmatpush1.bf16.msra.mxu0 %v426
      %480 = vmatprep.subr.bf16.mxu0 0
      %481 = vmatpush1.bf16.msra.mxu0 %v427
      %482 = vmatprep.subr.bf16.mxu0 0
      %483 = vmatpush1.bf16.msra.mxu0 %v428
      %484 = vmatprep.subr.bf16.mxu0 0
      %485 = vmatpush1.bf16.msra.mxu0 %v429
      %486 = vmatprep.subr.bf16.mxu0 0
      %487 = vmatpush1.bf16.msra.mxu0 %v430
      %488 = vmatprep.subr.bf16.mxu0 0
      %489 = vmatpush1.bf16.msra.mxu0 %v431
      %490 = vmatprep.subr.bf16.mxu0 0
      %491 = vmatpush1.bf16.msra.mxu0 %v432
      %492 = vmatprep.subr.bf16.mxu0 0
      %493 = vmatpush1.bf16.msra.mxu0 %v433
      %494 = vmatprep.subr.bf16.mxu0 0
      %495 = vmatpush1.bf16.msra.mxu0 %v434
      %496 = vmatprep.subr.bf16.mxu0 0
      %497 = vmatpush1.bf16.msra.mxu0 %v435
      %498 = vmatprep.subr.bf16.mxu0 0
      %499 = vmatpush1.bf16.msra.mxu0 %v436
      %500 = vmatprep.subr.bf16.mxu0 0
      %501 = vmatpush1.bf16.msra.mxu0 %v437
      %502 = vmatprep.mubr.bf16.mxu0 %v321
      %503 = vmatmul.mubr.bf16.gmra.mrb[0].mxu0 %v320
      %v504 = vpop.f32.mrb[0].mxu0
      %v505 = vadd.f32 0.0, %v504
      %v506 = vpop.f32.mrb[0].mxu0
      %v507 = vpop.f32.mrb[0].mxu0
      %v508 = vpop.f32.mrb[0].mxu0
      %509 = vdwg.mxu0
      %510 = vmatprep.subr.bf16.mxu0 0
      %511 = vmatpush1.bf16.msra.mxu0 %v438
      %512 = vmatprep.subr.bf16.mxu0 0
      %513 = vmatpush1.bf16.msra.mxu0 %v439
      %514 = vmatprep.subr.bf16.mxu0 0
      %515 = vmatpush1.bf16.msra.mxu0 %v440
      %516 = vmatprep.subr.bf16.mxu0 0
      %517 = vmatpush1.bf16.msra.mxu0 %v441
      %518 = vmatprep.subr.bf16.mxu0 0
      %519 = vmatpush1.bf16.msra.mxu0 %v442
      %520 = vmatprep.subr.bf16.mxu0 0
      %521 = vmatpush1.bf16.msra.mxu0 %v443
      %522 = vmatprep.subr.bf16.mxu0 0
      %523 = vmatpush1.bf16.msra.mxu0 %v444
      %524 = vmatprep.subr.bf16.mxu0 0
      %525 = vmatpush1.bf16.msra.mxu0 %v445
      %526 = vmatprep.subr.bf16.mxu0 0
      %527 = vmatpush1.bf16.msra.mxu0 0
      %528 = vmatprep.subr.bf16.mxu0 0
      %529 = vmatpush1.bf16.msra.mxu0 0
      %530 = vmatprep.subr.bf16.mxu0 0
      %531 = vmatpush1.bf16.msra.mxu0 0
      %532 = vmatprep.subr.bf16.mxu0 0
      %533 = vmatpush1.bf16.msra.mxu0 0
      %534 = vmatprep.subr.bf16.mxu0 0
      %535 = vmatpush1.bf16.msra.mxu0 0
      %536 = vmatprep.subr.bf16.mxu0 0
      %537 = vmatpush1.bf16.msra.mxu0 0
      %538 = vmatprep.subr.bf16.mxu0 0
      %539 = vmatpush1.bf16.msra.mxu0 0
      %540 = vmatprep.subr.bf16.mxu0 0
      %541 = vmatpush1.bf16.msra.mxu0 0
      %542 = vmatprep.mubr.bf16.mxu0 0
      %543 = vmatmul.mubr.bf16.gmra.mrb[0].mxu0 %v322
      %v544 = vpop.f32.mrb[0].mxu0
      %v545 = vadd.f32 %v505, %v544
      %v546 = vpop.f32.mrb[0].mxu0
      %v547 = vpop.f32.mrb[0].mxu0
      %v548 = vpop.f32.mrb[0].mxu0
      %549 = vdwg.mxu0
      %p550 = scmp.eq.s32.totalorder %s22, 0
      // Predicated region
      $region29: #{_lambda_.51} parent=27 // pred_check
        %p551 = pneg %p550
      $region30: #{_lambda_.51} parent=27 // pred_check_branch
        %553 = sbr.rel (%p551) target = $region32
      $region31: #{_lambda_.51} parent=27 // pred_region
        %554 = vst [vmem:[#allocation2] sm:$0xff] 0.0
      $region32: #{_lambda_.51} parent=27 // pred_fallthru
        _
      %v555 = vld [vmem:[#allocation2] sm:$0xff]
      %v556 = vadd.f32 %v555, %v545
      %557 = vst [vmem:[#allocation2] sm:$0xff] %v556
      %p558 = scmp.eq.s32.totalorder %s22, 2
      // Predicated region
      $region33: #{_lambda_.51} parent=27 // pred_check
        %p559 = pneg %p558
      $region34: #{_lambda_.51} parent=27 // pred_check_branch
        %561 = sbr.rel (%p559) target = $region36
      $region35: #{_lambda_.51} parent=27 // pred_region
        %v562 = vld [vmem:[#allocation2] sm:$0xff]
        %v563 = vpack.c.bf16 %v562, %v562
        %564 = vst [vmem:[%s256] sm:$0xf] %v563
        %v565 = vrot.slane %v562, 4
        %v566 = vadd.f32 %v562, %v565
        %v567 = vrot.slane %v566, 2
        %v568 = vadd.f32 %v566, %v567
        %v569 = vrot.slane %v568, 1
        %v570 = vadd.f32 %v568, %v569
        %v571 = vmul.f32 %v562, %v562
        %v572 = vrot.slane %v571, 4
        %v573 = vadd.f32 %v571, %v572
        %v574 = vrot.slane %v573, 2
        %v575 = vadd.f32 %v573, %v574
        %v576 = vrot.slane %v575, 1
        %v577 = vadd.f32 %v575, %v576
        %vm578 = vcmask 1040384
        %v579 = vsel %vm578, %v570, %v577
        %580 = vst [vmem:[%s263] sm:$0x3] %v579
      $region36: #{_lambda_.51} parent=27 // pred_fallthru
        _
      %p581 = scmp.lt.s32.totalorder %s20, 0
      %s582 = scalar_select %p581, %s20, 0
      %p583 = scmp.lt.s32.totalorder %s21, 0
      %s584 = scalar_select %p583, %s21, 0
      %s585 = sadd.s32 %s584, %s582
      %s586 = smul.addr %s585, 4
      %s587 = scalar_lea.vmem %s2, %s586
      %p588 = scmp.lt.s32.totalorder %s20, 0
      %s589 = scalar_select %p588, %s20, 0
      %p590 = scmp.lt.s32.totalorder %s21, 0
      %s591 = scalar_select %p590, %s21, 0
      %s592 = sadd.s32 %s591, %s589
      %s593 = smul.addr %s592, 2
      %s594 = scalar_lea.vmem %s3, %s593
      // Predicated region
      $region37: #{_lambda_.51} parent=27 // pred_check
        %p595 = pneg %p110
      $region38: #{_lambda_.51} parent=27 // pred_check_branch
        %597 = sbr.rel (%p595) target = $region40
      $region39: #{_lambda_.51} parent=27 // pred_region
        _
      $region40: #{_lambda_.51} parent=27 // pred_fallthru
        _
      // Predicated region
      $region41: #{_lambda_.51} parent=27 // pred_check
        %p598 = pneg %p138
      $region42: #{_lambda_.51} parent=27 // pred_check_branch
        %600 = sbr.rel (%p598) target = $region44
      $region43: #{_lambda_.51} parent=27 // pred_region
        _
      $region44: #{_lambda_.51} parent=27 // pred_fallthru
        _
      // Predicated region
      $region45: #{_lambda_.51} parent=27 // pred_check
        %p601 = pneg %p110
      $region46: #{_lambda_.51} parent=27 // pred_check_branch
        %603 = sbr.rel (%p601) target = $region48
      $region47: #{_lambda_.51} parent=27 // pred_region
        %p604 = scmp.lt.s32.totalorder %s20, 0
        %s605 = scalar_select %p604, %s20, 0
        %p606 = scmp.lt.s32.totalorder %s21, 0
        %s607 = scalar_select %p606, %s21, 0
        %s608 = sadd.s32 %s607, %s605
        %s609 = smul.addr %s608, 4
        %s610 = scalar_lea.vmem %s2, %s609
      $region48: #{_lambda_.51} parent=27 // pred_fallthru
        _
      // Predicated region
      $region49: #{_lambda_.51} parent=27 // pred_check
        %p611 = pneg %p138
      $region50: #{_lambda_.51} parent=27 // pred_check_branch
        %613 = sbr.rel (%p611) target = $region52
      $region51: #{_lambda_.51} parent=27 // pred_region
        %p614 = scmp.lt.s32.totalorder %s20, 0
        %s615 = scalar_select %p614, %s20, 0
        %p616 = scmp.lt.s32.totalorder %s21, 0
        %s617 = scalar_select %p616, %s21, 0
        %s618 = sadd.s32 %s617, %s615
        %s619 = smul.addr %s618, 2
        %s620 = scalar_lea.vmem %s3, %s619
      $region52: #{_lambda_.51} parent=27 // pred_fallthru
        _
    $region28: #{_lambda_.51} parent=5 // pred_fallthru
      _
    %p621 = scmp.le.s32.totalorder 2, %s10
    // Predicated region
    $region53: #{_lambda_.51} parent=5 // pred_check
      %p622 = pneg %p621
    $region54: #{_lambda_.51} parent=5 // pred_check_branch
      %624 = sbr.rel (%p622) target = $region56
    $region55: #{_lambda_.51} parent=5 // pred_region
      %s625 = ssub.s32 %s10, 2
    $region56: #{_lambda_.51} parent=5 // pred_fallthru
      _
  $region6: #{_lambda_.51} parent=0 // loop_footer
    %s14 = sadd.s32 1, %s10
  $region7: #{_lambda_.51} parent=0 // loop_footer_branch
    %9 = sbr.rel target = $region3
  $region8: #{_lambda_.51} parent=0 // loop_exit
    _

// kernel: _lambda_.55
$region0: #{_lambda_.55}
  #allocation0 [shape = 'u32[]', space=smem, size = 0x4, offset = 0x4, fixed_abs, tag = 'smem constant byte address 0x4 - core index']
  #allocation1 [shape = 'u32[144,128]{1,0:T(1,128)}', space=vmem, size = 0x12000, scoped, tag = 'internal scratch']
  %s0 = inlined_call_operand.vmem [shape: bf16[8,128], index: 0, kind: input, shape index: {}]
  %s1 = inlined_call_operand.vmem [shape: f32[1,128], index: 1, kind: input, shape index: {}]
  %s2 = inlined_call_operand.vmem [shape: f32[1,128], index: 2, kind: input, shape index: {}]
  %s3 = inlined_call_operand.vmem [shape: bf16[8,128], index: 3, kind: input, shape index: {}]
  %s4 = inlined_call_operand.vmem [shape: f32[1,128], index: 4, kind: input, shape index: {}]
  %s5 = inlined_call_operand.vmem [shape: f32[1,128], index: 5, kind: input, shape index: {}]
  %s6 = inlined_call_operand.vmem [shape: bf16[8,128], index: 6, kind: output, shape index: {}]
  %s7 = sld [smem:[#allocation0]]
  $region34: #{_lambda_.55} parent=0
    _
  %s9 = ssub.s32 1, %s7
  %s10 = scalar_select 0, %s9, %s7
  // Predicated region
  $region2: #{_lambda_.55} parent=0 // pred_check
    _
  $region3: #{_lambda_.55} parent=0 // pred_check_branch
    %12 = sbr.rel (0) target = $region5
  $region4: #{_lambda_.55} parent=0 // pred_region
    _
  $region5: #{_lambda_.55} parent=0 // pred_fallthru
    _
  // Predicated region
  $region6: #{_lambda_.55} parent=0 // pred_check
    _
  $region7: #{_lambda_.55} parent=0 // pred_check_branch
    %14 = sbr.rel (0) target = $region9
  $region8: #{_lambda_.55} parent=0 // pred_region
    _
  $region9: #{_lambda_.55} parent=0 // pred_fallthru
    _
  // Predicated region
  $region10: #{_lambda_.55} parent=0 // pred_check
    _
  $region11: #{_lambda_.55} parent=0 // pred_check_branch
    %16 = sbr.rel (0) target = $region13
  $region12: #{_lambda_.55} parent=0 // pred_region
    _
  $region13: #{_lambda_.55} parent=0 // pred_fallthru
    _
  // Predicated region
  $region14: #{_lambda_.55} parent=0 // pred_check
    _
  $region15: #{_lambda_.55} parent=0 // pred_check_branch
    %18 = sbr.rel (0) target = $region17
  $region16: #{_lambda_.55} parent=0 // pred_region
    _
  $region17: #{_lambda_.55} parent=0 // pred_fallthru
    _
  // Predicated region
  $region18: #{_lambda_.55} parent=0 // pred_check
    _
  $region19: #{_lambda_.55} parent=0 // pred_check_branch
    %20 = sbr.rel (0) target = $region21
  $region20: #{_lambda_.55} parent=0 // pred_region
    _
  $region21: #{_lambda_.55} parent=0 // pred_fallthru
    _
  // Predicated region
  $region22: #{_lambda_.55} parent=0 // pred_check
    _
  $region23: #{_lambda_.55} parent=0 // pred_check_branch
    %22 = sbr.rel (0) target = $region25
  $region24: #{_lambda_.55} parent=0 // pred_region
    _
  $region25: #{_lambda_.55} parent=0 // pred_fallthru
    _
  %v23 = vld [vmem:[%s0] sm:$0xf]
  %v24 = vunpack.c.l.bf16 %v23
  %v25 = vld [vmem:[%s1] sm:$0x1]
  %v27 = vlaneseq
  %v28 = vshrl.u32 %v27, 7
  %v29 = vsub.s32 0, %v28
  %v30 = vrot.slane %v25, %v29
  %v32 = vmul.f32 %v24, %v30
  %v33 = vld [vmem:[%s2] sm:$0x1]
  %v35 = vlaneseq
  %v36 = vshrl.u32 %v35, 7
  %v37 = vsub.s32 0, %v36
  %v38 = vrot.slane %v33, %v37
  %v40 = vadd.f32 %v32, %v38
  %v41 = vld [vmem:[%s3] sm:$0xf]
  %v42 = vunpack.c.l.bf16 %v41
  %v43 = vld [vmem:[%s4] sm:$0x1]
  %v45 = vlaneseq
  %v46 = vshrl.u32 %v45, 7
  %v47 = vsub.s32 0, %v46
  %v48 = vrot.slane %v43, %v47
  %v50 = vmul.f32 %v42, %v48
  %v51 = vadd.f32 %v40, %v50
  %v52 = vld [vmem:[%s5] sm:$0x1]
  %v54 = vlaneseq
  %v55 = vshrl.u32 %v54, 7
  %v56 = vsub.s32 0, %v55
  %v57 = vrot.slane %v52, %v56
  %v59 = vadd.f32 %v51, %v57
  %v60 = vmax.f32 %v59, 0.0
  %v61 = vpack.c.bf16 %v60, %v60
  %62 = vst [vmem:[%s6] sm:$0xf] %v61
  // Predicated region
  $region26: #{_lambda_.55} parent=0 // pred_check
    _
  $region27: #{_lambda_.55} parent=0 // pred_check_branch
    %64 = sbr.rel (0) target = $region29
  $region28: #{_lambda_.55} parent=0 // pred_region
    _
  $region29: #{_lambda_.55} parent=0 // pred_fallthru
    _
  // Predicated region
  $region30: #{_lambda_.55} parent=0 // pred_check
    _
  $region31: #{_lambda_.55} parent=0 // pred_check_branch
    %66 = sbr.rel (0) target = $region33
  $region32: #{_lambda_.55} parent=0 // pred_region
    _
  $region33: #{_lambda_.55} parent=0 // pred_fallthru
    _

// kernel: _lambda_.60
$region0: #{_lambda_.60}
  #allocation0 [shape = 'u32[]', space=smem, size = 0x4, offset = 0x4, fixed_abs, tag = 'smem constant byte address 0x4 - core index']
  #allocation1 [shape = 'u32[144,128]{1,0:T(1,128)}', space=vmem, size = 0x12000, scoped, tag = 'internal scratch']
  %s0 = inlined_call_operand.vmem [shape: bf16[8,128], index: 0, kind: input, shape index: {}]
  %s1 = inlined_call_operand.vmem [shape: bf16[128,128], index: 1, kind: input, shape index: {}]
  %s2 = inlined_call_operand.vmem [shape: f32[1,128], index: 2, kind: input, shape index: {}]
  %s3 = inlined_call_operand.vmem [shape: bf16[8,128], index: 3, kind: output, shape index: {0}]
  %s4 = inlined_call_operand.vmem [shape: f32[1,2,128], index: 4, kind: output, shape index: {1}]
  %5 = xla_tuple %s3, %s4
  %s6 = sld [smem:[#allocation0]]
  $region30: #{_lambda_.60} parent=0
    _
  %s8 = ssub.s32 1, %s6
  %s9 = scalar_select 0, %s8, %s6
  // Predicated region
  $region2: #{_lambda_.60} parent=0 // pred_check
    _
  $region3: #{_lambda_.60} parent=0 // pred_check_branch
    %11 = sbr.rel (0) target = $region5
  $region4: #{_lambda_.60} parent=0 // pred_region
    _
  $region5: #{_lambda_.60} parent=0 // pred_fallthru
    _
  // Predicated region
  $region6: #{_lambda_.60} parent=0 // pred_check
    _
  $region7: #{_lambda_.60} parent=0 // pred_check_branch
    %13 = sbr.rel (0) target = $region9
  $region8: #{_lambda_.60} parent=0 // pred_region
    _
  $region9: #{_lambda_.60} parent=0 // pred_fallthru
    _
  // Predicated region
  $region10: #{_lambda_.60} parent=0 // pred_check
    _
  $region11: #{_lambda_.60} parent=0 // pred_check_branch
    %15 = sbr.rel (0) target = $region13
  $region12: #{_lambda_.60} parent=0 // pred_region
    _
  $region13: #{_lambda_.60} parent=0 // pred_fallthru
    _
  %v17 = vld [vmem:[%s0] sm:$0xf]
  %v18 = vmax.bf16 %v17, 0
  %v19 = vld [vmem:[%s1] sm:$0xf]
  %v20 = vld [vmem:[%s1 + $0x4] sm:$0xf]
  %v21 = vld [vmem:[%s1 + $0x8] sm:$0xf]
  %v22 = vld [vmem:[%s1 + $0xc] sm:$0xf]
  %v23 = vld [vmem:[%s1 + $0x10] sm:$0xf]
  %v24 = vld [vmem:[%s1 + $0x14] sm:$0xf]
  %v25 = vld [vmem:[%s1 + $0x18] sm:$0xf]
  %v26 = vld [vmem:[%s1 + $0x1c] sm:$0xf]
  %v27 = vld [vmem:[%s1 + $0x20] sm:$0xf]
  %v28 = vld [vmem:[%s1 + $0x24] sm:$0xf]
  %v29 = vld [vmem:[%s1 + $0x28] sm:$0xf]
  %v30 = vld [vmem:[%s1 + $0x2c] sm:$0xf]
  %v31 = vld [vmem:[%s1 + $0x30] sm:$0xf]
  %v32 = vld [vmem:[%s1 + $0x34] sm:$0xf]
  %v33 = vld [vmem:[%s1 + $0x38] sm:$0xf]
  %v34 = vld [vmem:[%s1 + $0x3c] sm:$0xf]
  %v35 = vld [vmem:[%s2] sm:$0x1]
  %v37 = vlaneseq
  %v38 = vshrl.u32 %v37, 7
  %v39 = vsub.s32 0, %v38
  %v40 = vrot.slane %v35, %v39
  %v58 = vunpack.c.l.b16 %v19
  %v59 = vunpack.c.l.b16 %v20
  %v60 = vunpack.c.l.b16 %v21
  %v61 = vunpack.c.l.b16 %v22
  %v62 = vunpack.c.l.b16 %v23
  %v63 = vunpack.c.l.b16 %v24
  %v64 = vunpack.c.l.b16 %v25
  %v65 = vunpack.c.l.b16 %v26
  %v66 = vunpack.c.l.b16 %v27
  %v67 = vunpack.c.l.b16 %v28
  %v68 = vunpack.c.l.b16 %v29
  %v69 = vunpack.c.l.b16 %v30
  %v70 = vunpack.c.l.b16 %v31
  %v71 = vunpack.c.l.b16 %v32
  %v72 = vunpack.c.l.b16 %v33
  %v73 = vunpack.c.l.b16 %v34
  %v74 = vpack.c.b16 %v59, %v58
  %v75 = vpack.c.b16 %v61, %v60
  %v76 = vpack.c.b16 %v63, %v62
  %v77 = vpack.c.b16 %v65, %v64
  %v78 = vpack.c.b16 %v67, %v66
  %v79 = vpack.c.b16 %v69, %v68
  %v80 = vpack.c.b16 %v71, %v70
  %v81 = vpack.c.b16 %v73, %v72
  %90 = vmatprep.subr.bf16.mxu0 0
  %91 = vmatpush1.bf16.msra.mxu0 %v74
  %92 = vmatprep.subr.bf16.mxu0 0
  %93 = vmatpush1.bf16.msra.mxu0 %v75
  %94 = vmatprep.subr.bf16.mxu0 0
  %95 = vmatpush1.bf16.msra.mxu0 %v76
  %96 = vmatprep.subr.bf16.mxu0 0
  %97 = vmatpush1.bf16.msra.mxu0 %v77
  %98 = vmatprep.subr.bf16.mxu0 0
  %99 = vmatpush1.bf16.msra.mxu0 %v78
  %100 = vmatprep.subr.bf16.mxu0 0
  %101 = vmatpush1.bf16.msra.mxu0 %v79
  %102 = vmatprep.subr.bf16.mxu0 0
  %103 = vmatpush1.bf16.msra.mxu0 %v80
  %104 = vmatprep.subr.bf16.mxu0 0
  %105 = vmatpush1.bf16.msra.mxu0 %v81
  %106 = vmatprep.subr.bf16.mxu0 0
  %107 = vmatpush1.bf16.msra.mxu0 0
  %108 = vmatprep.subr.bf16.mxu0 0
  %109 = vmatpush1.bf16.msra.mxu0 0
  %110 = vmatprep.subr.bf16.mxu0 0
  %111 = vmatpush1.bf16.msra.mxu0 0
  %112 = vmatprep.subr.bf16.mxu0 0
  %113 = vmatpush1.bf16.msra.mxu0 0
  %114 = vmatprep.subr.bf16.mxu0 0
  %115 = vmatpush1.bf16.msra.mxu0 0
  %116 = vmatprep.subr.bf16.mxu0 0
  %117 = vmatpush1.bf16.msra.mxu0 0
  %118 = vmatprep.subr.bf16.mxu0 0
  %119 = vmatpush1.bf16.msra.mxu0 0
  %120 = vmatprep.subr.bf16.mxu0 0
  %121 = vmatpush1.bf16.msra.mxu0 0
  %122 = vmatprep.mubr.bf16.mxu0 0
  %123 = vmatmul.mubr.bf16.gmra.mrb[0].mxu0 %v18
  %v124 = vpop.f32.mrb[0].mxu0
  %v125 = vadd.f32 %v40, %v124
  %v126 = vpop.f32.mrb[0].mxu0
  %v127 = vpop.f32.mrb[0].mxu0
  %v128 = vpop.f32.mrb[0].mxu0
  %129 = vdwg.mxu0
  %v130 = vpack.c.bf16 %v125, %v125
  %131 = vst [vmem:[%s3] sm:$0xf] %v130
  %v132 = vlaneseq
  %v133 = vshrl.u32 %v132, 7
  %s134 = smul.u32 0, 8
  %v135 = vstv %s134
  %v136 = vadd.s32 %v133, %v135
  %vm137 = vcmp.lt.s32.totalorder %v136, 2
  %v138 = vsel %vm137, %v125, 0.0
  %v139 = vrot.slane %v138, 4
  %v140 = vadd.f32 %v138, %v139
  %v141 = vrot.slane %v140, 2
  %v142 = vadd.f32 %v140, %v141
  %v143 = vrot.slane %v142, 1
  %v144 = vadd.f32 %v142, %v143
  %v145 = vmul.f32 %v138, %v138
  %v146 = vrot.slane %v145, 4
  %v147 = vadd.f32 %v145, %v146
  %v148 = vrot.slane %v147, 2
  %v149 = vadd.f32 %v147, %v148
  %v150 = vrot.slane %v149, 1
  %v151 = vadd.f32 %v149, %v150
  %vm152 = vcmask 1040384
  %v153 = vsel %vm152, %v144, %v151
  %154 = vst [vmem:[%s4] sm:$0x3] %v153
  // Predicated region
  $region14: #{_lambda_.60} parent=0 // pred_check
    _
  $region15: #{_lambda_.60} parent=0 // pred_check_branch
    %156 = sbr.rel (0) target = $region17
  $region16: #{_lambda_.60} parent=0 // pred_region
    _
  $region17: #{_lambda_.60} parent=0 // pred_fallthru
    _
  // Predicated region
  $region18: #{_lambda_.60} parent=0 // pred_check
    _
  $region19: #{_lambda_.60} parent=0 // pred_check_branch
    %158 = sbr.rel (0) target = $region21
  $region20: #{_lambda_.60} parent=0 // pred_region
    _
  $region21: #{_lambda_.60} parent=0 // pred_fallthru
    _
  // Predicated region
  $region22: #{_lambda_.60} parent=0 // pred_check
    _
  $region23: #{_lambda_.60} parent=0 // pred_check_branch
    %160 = sbr.rel (0) target = $region25
  $region24: #{_lambda_.60} parent=0 // pred_region
    _
  $region25: #{_lambda_.60} parent=0 // pred_fallthru
    _
  // Predicated region
  $region26: #{_lambda_.60} parent=0 // pred_check
    _
  $region27: #{_lambda_.60} parent=0 // pred_check_branch
    %162 = sbr.rel (0) target = $region29
  $region28: #{_lambda_.60} parent=0 // pred_region
    _
  $region29: #{_lambda_.60} parent=0 // pred_fallthru
    _

// kernel: _lambda_.56
$region0: #{_lambda_.56}
  #allocation0 [shape = 'u32[]', space=smem, size = 0x4, offset = 0x4, fixed_abs, tag = 'smem constant byte address 0x4 - core index']
  #allocation1 [shape = 'u32[144,128]{1,0:T(1,128)}', space=vmem, size = 0x12000, scoped, tag = 'internal scratch']
  %s0 = inlined_call_operand.vmem [shape: bf16[8,128], index: 0, kind: input, shape index: {}]
  %s1 = inlined_call_operand.vmem [shape: bf16[128,128], index: 1, kind: input, shape index: {}]
  %s2 = inlined_call_operand.vmem [shape: bf16[8,128], index: 2, kind: output, shape index: {0}]
  %s3 = inlined_call_operand.vmem [shape: f32[1,2,128], index: 3, kind: output, shape index: {1}]
  %4 = xla_tuple %s2, %s3
  %s5 = sld [smem:[#allocation0]]
  $region26: #{_lambda_.56} parent=0
    _
  %s7 = ssub.s32 1, %s5
  %s8 = scalar_select 0, %s7, %s5
  // Predicated region
  $region2: #{_lambda_.56} parent=0 // pred_check
    _
  $region3: #{_lambda_.56} parent=0 // pred_check_branch
    %10 = sbr.rel (0) target = $region5
  $region4: #{_lambda_.56} parent=0 // pred_region
    _
  $region5: #{_lambda_.56} parent=0 // pred_fallthru
    _
  // Predicated region
  $region6: #{_lambda_.56} parent=0 // pred_check
    _
  $region7: #{_lambda_.56} parent=0 // pred_check_branch
    %12 = sbr.rel (0) target = $region9
  $region8: #{_lambda_.56} parent=0 // pred_region
    _
  $region9: #{_lambda_.56} parent=0 // pred_fallthru
    _
  %v14 = vld [vmem:[%s0] sm:$0xf]
  %v15 = vld [vmem:[%s1] sm:$0xf]
  %v16 = vld [vmem:[%s1 + $0x4] sm:$0xf]
  %v17 = vld [vmem:[%s1 + $0x8] sm:$0xf]
  %v18 = vld [vmem:[%s1 + $0xc] sm:$0xf]
  %v19 = vld [vmem:[%s1 + $0x10] sm:$0xf]
  %v20 = vld [vmem:[%s1 + $0x14] sm:$0xf]
  %v21 = vld [vmem:[%s1 + $0x18] sm:$0xf]
  %v22 = vld [vmem:[%s1 + $0x1c] sm:$0xf]
  %v23 = vld [vmem:[%s1 + $0x20] sm:$0xf]
  %v24 = vld [vmem:[%s1 + $0x24] sm:$0xf]
  %v25 = vld [vmem:[%s1 + $0x28] sm:$0xf]
  %v26 = vld [vmem:[%s1 + $0x2c] sm:$0xf]
  %v27 = vld [vmem:[%s1 + $0x30] sm:$0xf]
  %v28 = vld [vmem:[%s1 + $0x34] sm:$0xf]
  %v29 = vld [vmem:[%s1 + $0x38] sm:$0xf]
  %v30 = vld [vmem:[%s1 + $0x3c] sm:$0xf]
  %v47 = vunpack.c.l.b16 %v15
  %v48 = vunpack.c.l.b16 %v16
  %v49 = vunpack.c.l.b16 %v17
  %v50 = vunpack.c.l.b16 %v18
  %v51 = vunpack.c.l.b16 %v19
  %v52 = vunpack.c.l.b16 %v20
  %v53 = vunpack.c.l.b16 %v21
  %v54 = vunpack.c.l.b16 %v22
  %v55 = vunpack.c.l.b16 %v23
  %v56 = vunpack.c.l.b16 %v24
  %v57 = vunpack.c.l.b16 %v25
  %v58 = vunpack.c.l.b16 %v26
  %v59 = vunpack.c.l.b16 %v27
  %v60 = vunpack.c.l.b16 %v28
  %v61 = vunpack.c.l.b16 %v29
  %v62 = vunpack.c.l.b16 %v30
  %v63 = vpack.c.b16 %v48, %v47
  %v64 = vpack.c.b16 %v50, %v49
  %v65 = vpack.c.b16 %v52, %v51
  %v66 = vpack.c.b16 %v54, %v53
  %v67 = vpack.c.b16 %v56, %v55
  %v68 = vpack.c.b16 %v58, %v57
  %v69 = vpack.c.b16 %v60, %v59
  %v70 = vpack.c.b16 %v62, %v61
  %79 = vmatprep.subr.bf16.mxu0 0
  %80 = vmatpush1.bf16.msra.mxu0 %v63
  %81 = vmatprep.subr.bf16.mxu0 0
  %82 = vmatpush1.bf16.msra.mxu0 %v64
  %83 = vmatprep.subr.bf16.mxu0 0
  %84 = vmatpush1.bf16.msra.mxu0 %v65
  %85 = vmatprep.subr.bf16.mxu0 0
  %86 = vmatpush1.bf16.msra.mxu0 %v66
  %87 = vmatprep.subr.bf16.mxu0 0
  %88 = vmatpush1.bf16.msra.mxu0 %v67
  %89 = vmatprep.subr.bf16.mxu0 0
  %90 = vmatpush1.bf16.msra.mxu0 %v68
  %91 = vmatprep.subr.bf16.mxu0 0
  %92 = vmatpush1.bf16.msra.mxu0 %v69
  %93 = vmatprep.subr.bf16.mxu0 0
  %94 = vmatpush1.bf16.msra.mxu0 %v70
  %95 = vmatprep.subr.bf16.mxu0 0
  %96 = vmatpush1.bf16.msra.mxu0 0
  %97 = vmatprep.subr.bf16.mxu0 0
  %98 = vmatpush1.bf16.msra.mxu0 0
  %99 = vmatprep.subr.bf16.mxu0 0
  %100 = vmatpush1.bf16.msra.mxu0 0
  %101 = vmatprep.subr.bf16.mxu0 0
  %102 = vmatpush1.bf16.msra.mxu0 0
  %103 = vmatprep.subr.bf16.mxu0 0
  %104 = vmatpush1.bf16.msra.mxu0 0
  %105 = vmatprep.subr.bf16.mxu0 0
  %106 = vmatpush1.bf16.msra.mxu0 0
  %107 = vmatprep.subr.bf16.mxu0 0
  %108 = vmatpush1.bf16.msra.mxu0 0
  %109 = vmatprep.subr.bf16.mxu0 0
  %110 = vmatpush1.bf16.msra.mxu0 0
  %111 = vmatprep.mubr.bf16.mxu0 0
  %112 = vmatmul.mubr.bf16.gmra.mrb[0].mxu0 %v14
  %v113 = vpop.f32.mrb[0].mxu0
  %v114 = vadd.f32 0.0, %v113
  %v115 = vpop.f32.mrb[0].mxu0
  %v116 = vpop.f32.mrb[0].mxu0
  %v117 = vpop.f32.mrb[0].mxu0
  %118 = vdwg.mxu0
  %v119 = vpack.c.bf16 %v114, %v114
  %120 = vst [vmem:[%s2] sm:$0xf] %v119
  %v121 = vrot.slane %v114, 4
  %v122 = vadd.f32 %v114, %v121
  %v123 = vrot.slane %v122, 2
  %v124 = vadd.f32 %v122, %v123
  %v125 = vrot.slane %v124, 1
  %v126 = vadd.f32 %v124, %v125
  %v127 = vmul.f32 %v114, %v114
  %v128 = vrot.slane %v127, 4
  %v129 = vadd.f32 %v127, %v128
  %v130 = vrot.slane %v129, 2
  %v131 = vadd.f32 %v129, %v130
  %v132 = vrot.slane %v131, 1
  %v133 = vadd.f32 %v131, %v132
  %vm134 = vcmask 1040384
  %v135 = vsel %vm134, %v126, %v133
  %136 = vst [vmem:[%s3] sm:$0x3] %v135
  // Predicated region
  $region10: #{_lambda_.56} parent=0 // pred_check
    _
  $region11: #{_lambda_.56} parent=0 // pred_check_branch
    %138 = sbr.rel (0) target = $region13
  $region12: #{_lambda_.56} parent=0 // pred_region
    _
  $region13: #{_lambda_.56} parent=0 // pred_fallthru
    _
  // Predicated region
  $region14: #{_lambda_.56} parent=0 // pred_check
    _
  $region15: #{_lambda_.56} parent=0 // pred_check_branch
    %140 = sbr.rel (0) target = $region17
  $region16: #{_lambda_.56} parent=0 // pred_region
    _
  $region17: #{_lambda_.56} parent=0 // pred_fallthru
    _
  // Predicated region
  $region18: #{_lambda_.56} parent=0 // pred_check
    _
  $region19: #{_lambda_.56} parent=0 // pred_check_branch
    %142 = sbr.rel (0) target = $region21
  $region20: #{_lambda_.56} parent=0 // pred_region
    _
  $region21: #{_lambda_.56} parent=0 // pred_fallthru
    _
  // Predicated region
  $region22: #{_lambda_.56} parent=0 // pred_check
    _
  $region23: #{_lambda_.56} parent=0 // pred_check_branch
    %144 = sbr.rel (0) target = $region25
  $region24: #{_lambda_.56} parent=0 // pred_region
    _
  $region25: #{_lambda_.56} parent=0 // pred_fallthru
    _

// kernel: _lambda_.57
$region0: #{_lambda_.57}
  #allocation0 [shape = 'u32[]', space=smem, size = 0x4, offset = 0x4, fixed_abs, tag = 'smem constant byte address 0x4 - core index']
  #allocation1 [shape = 'u32[144,128]{1,0:T(1,128)}', space=vmem, size = 0x12000, scoped, tag = 'internal scratch']
  %s0 = inlined_call_operand.vmem [shape: bf16[8,128], index: 0, kind: input, shape index: {}]
  %s1 = inlined_call_operand.vmem [shape: f32[1,128], index: 1, kind: input, shape index: {}]
  %s2 = inlined_call_operand.vmem [shape: f32[1,128], index: 2, kind: input, shape index: {}]
  %s3 = inlined_call_operand.vmem [shape: bf16[8,128], index: 3, kind: output, shape index: {}]
  %s4 = sld [smem:[#allocation0]]
  $region22: #{_lambda_.57} parent=0
    _
  %s6 = ssub.s32 1, %s4
  %s7 = scalar_select 0, %s6, %s4
  // Predicated region
  $region2: #{_lambda_.57} parent=0 // pred_check
    _
  $region3: #{_lambda_.57} parent=0 // pred_check_branch
    %9 = sbr.rel (0) target = $region5
  $region4: #{_lambda_.57} parent=0 // pred_region
    _
  $region5: #{_lambda_.57} parent=0 // pred_fallthru
    _
  // Predicated region
  $region6: #{_lambda_.57} parent=0 // pred_check
    _
  $region7: #{_lambda_.57} parent=0 // pred_check_branch
    %11 = sbr.rel (0) target = $region9
  $region8: #{_lambda_.57} parent=0 // pred_region
    _
  $region9: #{_lambda_.57} parent=0 // pred_fallthru
    _
  // Predicated region
  $region10: #{_lambda_.57} parent=0 // pred_check
    _
  $region11: #{_lambda_.57} parent=0 // pred_check_branch
    %13 = sbr.rel (0) target = $region13
  $region12: #{_lambda_.57} parent=0 // pred_region
    _
  $region13: #{_lambda_.57} parent=0 // pred_fallthru
    _
  %v14 = vld [vmem:[%s0] sm:$0xf]
  %v15 = vunpack.c.l.bf16 %v14
  %v16 = vld [vmem:[%s1] sm:$0x1]
  %v18 = vlaneseq
  %v19 = vshrl.u32 %v18, 7
  %v20 = vsub.s32 0, %v19
  %v21 = vrot.slane %v16, %v20
  %v23 = vmul.f32 %v15, %v21
  %v24 = vld [vmem:[%s2] sm:$0x1]
  %v26 = vlaneseq
  %v27 = vshrl.u32 %v26, 7
  %v28 = vsub.s32 0, %v27
  %v29 = vrot.slane %v24, %v28
  %v31 = vadd.f32 %v23, %v29
  %v32 = vmax.f32 %v31, 0.0
  %v33 = vpack.c.bf16 %v32, %v32
  %34 = vst [vmem:[%s3] sm:$0xf] %v33
  // Predicated region
  $region14: #{_lambda_.57} parent=0 // pred_check
    _
  $region15: #{_lambda_.57} parent=0 // pred_check_branch
    %36 = sbr.rel (0) target = $region17
  $region16: #{_lambda_.57} parent=0 // pred_region
    _
  $region17: #{_lambda_.57} parent=0 // pred_fallthru
    _
  // Predicated region
  $region18: #{_lambda_.57} parent=0 // pred_check
    _
  $region19: #{_lambda_.57} parent=0 // pred_check_branch
    %38 = sbr.rel (0) target = $region21
  $region20: #{_lambda_.57} parent=0 // pred_region
    _
  $region21: #{_lambda_.57} parent=0 // pred_fallthru
    _

// kernel: _lambda_.58
$region0: #{_lambda_.58}
  #allocation0 [shape = 'u32[]', space=smem, size = 0x4, offset = 0x4, fixed_abs, tag = 'smem constant byte address 0x4 - core index']
  #allocation1 [shape = 'u32[144,128]{1,0:T(1,128)}', space=vmem, size = 0x12000, scoped, tag = 'internal scratch']
  #allocation2 [shape = 'f32[8,128]{1,0:T(8,128)}', space=vmem, size = 0x1000, scoped, tag = 'scratch operand']
  %s0 = inlined_call_operand.vmem [shape: bf16[8,1152], index: 0, kind: input, shape index: {}]
  %s1 = inlined_call_operand.vmem [shape: bf16[1152,128], index: 1, kind: input, shape index: {}]
  %s2 = inlined_call_operand.vmem [shape: bf16[8,128], index: 2, kind: output, shape index: {0}]
  %s3 = inlined_call_operand.vmem [shape: f32[1,2,128], index: 3, kind: output, shape index: {1}]
  %4 = xla_tuple %s2, %s3
  %s5 = sld [smem:[#allocation0]]
  $region57: #{_lambda_.58} parent=0
    _
  %s7 = ssub.s32 1, %s5
  %s8 = scalar_select 0, %s7, %s5
  loop: start=0, step=1, limit=5
  $region2: #{_lambda_.58} parent=0 // loop_pre_header
    _
  $region3: #{_lambda_.58} parent=0 // loop_header
    %s10 = sphi 0, %s14
    %p11 = scmp.ge.s32.totalorder %s10, 5
    %s17 = sphi 0, %s36
    %s18 = sphi 0, %s32
    %s19 = sphi 0, %s28
    %s20 = sphi 0, %s17
    %s21 = sphi 0, %s18
    %s22 = sphi 0, %s19
    %s23 = sphi 0, %s20
    %s24 = sphi 0, %s21
    %s25 = sphi 0, %s22
    %s41 = sphi 0, %s43
    %s44 = sphi 0, %s41
    %s45 = sphi 0, %s44
    %s61 = sphi 0, %s45
    %s69 = sphi 0, %s71
    %s72 = sphi 0, %s69
    %s73 = sphi 0, %s72
    %s89 = sphi 0, %s73
    %s97 = sphi 0, %s99
    %s100 = sphi 0, %s97
    %s101 = sphi 0, %s100
    %s117 = sphi 0, %s101
    %s125 = sphi 0, %s127
    %s128 = sphi 0, %s125
    %s129 = sphi 0, %s128
    %s145 = sphi 0, %s129
  $region4: #{_lambda_.58} parent=0 // loop_header_branch
    %13 = sbr.rel (%p11) target = $region8
  $region5: #{_lambda_.58} parent=0 // loop_body
    %s15 = ssub.s32 %s10, 1
    %s16 = ssub.s32 %s10, 2
    %s26 = sadd.s32 1, %s19
    %p27 = scmp.ge.s32.totalorder %s26, 3
    %s28 = scalar_select %p27, 0, %s26
    %s29 = sadd.s32 1, %s18
    %s30 = scalar_select %p27, %s29, %s18
    %p31 = scmp.ge.s32.totalorder %s30, 1
    %s32 = scalar_select %p31, 0, %s30
    %s33 = sadd.s32 1, %s17
    %s34 = scalar_select %p31, %s33, %s17
    %p35 = scmp.ge.s32.totalorder %s34, 1
    %s36 = scalar_select %p35, 0, %s34
    %s37 = ssub.s32 %s17, %s36
    %s38 = ssub.s32 %s19, %s28
    %s39 = sor.u32 %s37, %s38
    %p40 = scmp.eq.s32.totalorder %s39, 0
    %s42 = sadd.s32 %s41, 1
    %s43 = scalar_select %p40, %s41, %s42
    %p46 = pneg %p40
    %p47 = scmp.eq.s32.totalorder %s10, 2
    %p48 = por %p46, %p47
    %p49 = scmp.ne.s32.totalorder %s41, %s44
    %p50 = scmp.eq.s32.totalorder %s10, 0
    %p51 = por %p49, %p50
    %p52 = scmp.ne.s32.totalorder %s41, %s44
    %p53 = scmp.eq.s32.totalorder %s15, 2
    %p54 = por %p52, %p53
    %p55 = scmp.ne.s32.totalorder %s44, %s45
    %p56 = scmp.eq.s32.totalorder %s15, 0
    %p57 = por %p55, %p56
    %p58 = scmp.ne.s32.totalorder %s44, %s45
    %p59 = scmp.eq.s32.totalorder %s16, 2
    %p60 = por %p58, %p59
    %p62 = scmp.ne.s32.totalorder %s45, %s61
    %p63 = scmp.eq.s32.totalorder %s16, 0
    %p64 = por %p62, %p63
    %s65 = ssub.s32 %s19, %s28
    %s66 = ssub.s32 %s18, %s32
    %s67 = sor.u32 %s65, %s66
    %p68 = scmp.eq.s32.totalorder %s67, 0
    %s70 = sadd.s32 %s69, 1
    %s71 = scalar_select %p68, %s69, %s70
    %p74 = pneg %p68
    %p75 = scmp.eq.s32.totalorder %s10, 2
    %p76 = por %p74, %p75
    %p77 = scmp.ne.s32.totalorder %s69, %s72
    %p78 = scmp.eq.s32.totalorder %s10, 0
    %p79 = por %p77, %p78
    %p80 = scmp.ne.s32.totalorder %s69, %s72
    %p81 = scmp.eq.s32.totalorder %s15, 2
    %p82 = por %p80, %p81
    %p83 = scmp.ne.s32.totalorder %s72, %s73
    %p84 = scmp.eq.s32.totalorder %s15, 0
    %p85 = por %p83, %p84
    %p86 = scmp.ne.s32.totalorder %s72, %s73
    %p87 = scmp.eq.s32.totalorder %s16, 2
    %p88 = por %p86, %p87
    %p90 = scmp.ne.s32.totalorder %s73, %s89
    %p91 = scmp.eq.s32.totalorder %s16, 0
    %p92 = por %p90, %p91
    %s93 = ssub.s32 %s17, %s36
    %s94 = ssub.s32 %s18, %s32
    %s95 = sor.u32 %s93, %s94
    %p96 = scmp.eq.s32.totalorder %s95, 0
    %s98 = sadd.s32 %s97, 1
    %s99 = scalar_select %p96, %s97, %s98
    %p102 = pneg %p96
    %p103 = scmp.eq.s32.totalorder %s10, 2
    %p104 = por %p102, %p103
    %p105 = scmp.ne.s32.totalorder %s97, %s100
    %p106 = scmp.eq.s32.totalorder %s10, 0
    %p107 = por %p105, %p106
    %p108 = scmp.ne.s32.totalorder %s97, %s100
    %p109 = scmp.eq.s32.totalorder %s15, 2
    %p110 = por %p108, %p109
    %p111 = scmp.ne.s32.totalorder %s100, %s101
    %p112 = scmp.eq.s32.totalorder %s15, 0
    %p113 = por %p111, %p112
    %p114 = scmp.ne.s32.totalorder %s100, %s101
    %p115 = scmp.eq.s32.totalorder %s16, 2
    %p116 = por %p114, %p115
    %p118 = scmp.ne.s32.totalorder %s101, %s117
    %p119 = scmp.eq.s32.totalorder %s16, 0
    %p120 = por %p118, %p119
    %s121 = ssub.s32 %s17, %s36
    %s122 = ssub.s32 %s18, %s32
    %s123 = sor.u32 %s121, %s122
    %p124 = scmp.eq.s32.totalorder %s123, 0
    %s126 = sadd.s32 %s125, 1
    %s127 = scalar_select %p124, %s125, %s126
    %p130 = pneg %p124
    %p131 = scmp.eq.s32.totalorder %s10, 2
    %p132 = por %p130, %p131
    %p133 = scmp.ne.s32.totalorder %s125, %s128
    %p134 = scmp.eq.s32.totalorder %s10, 0
    %p135 = por %p133, %p134
    %p136 = scmp.ne.s32.totalorder %s125, %s128
    %p137 = scmp.eq.s32.totalorder %s15, 2
    %p138 = por %p136, %p137
    %p139 = scmp.ne.s32.totalorder %s128, %s129
    %p140 = scmp.eq.s32.totalorder %s15, 0
    %p141 = por %p139, %p140
    %p142 = scmp.ne.s32.totalorder %s128, %s129
    %p143 = scmp.eq.s32.totalorder %s16, 2
    %p144 = por %p142, %p143
    %p146 = scmp.ne.s32.totalorder %s129, %s145
    %p147 = scmp.eq.s32.totalorder %s16, 0
    %p148 = por %p146, %p147
    %p149 = scmp.le.s32.totalorder 1, %s10
    %p150 = scmp.lt.s32.totalorder %s10, 4
    %p151 = pnand %p149, %p150
    %p152 = pneg %p151
    // Predicated region
    $region9: #{_lambda_.58} parent=5 // pred_check
      _
    $region10: #{_lambda_.58} parent=5 // pred_check_branch
      %154 = sbr.rel (%p151) target = $region12
    $region11: #{_lambda_.58} parent=5 // pred_region
      %s155 = ssub.s32 %s10, 1
    $region12: #{_lambda_.58} parent=5 // pred_fallthru
      _
    %p156 = scmp.lt.s32.totalorder %s10, 3
    // Predicated region
    $region13: #{_lambda_.58} parent=5 // pred_check
      %p157 = pneg %p156
    $region14: #{_lambda_.58} parent=5 // pred_check_branch
      %159 = sbr.rel (%p157) target = $region16
    $region15: #{_lambda_.58} parent=5 // pred_region
      // Predicated region
      $region17: #{_lambda_.58} parent=15 // pred_check
        %p160 = pneg %p51
      $region18: #{_lambda_.58} parent=15 // pred_check_branch
        %162 = sbr.rel (%p160) target = $region20
      $region19: #{_lambda_.58} parent=15 // pred_region
        %s163 = smul.u32 3, %s19
        %p164 = scmp.lt.s32.totalorder %s17, 0
        %s165 = scalar_select %p164, %s17, 0
        %p166 = scmp.lt.s32.totalorder %s163, 8
        %s167 = scalar_select %p166, %s163, 8
        %s168 = smul.addr %s165, 9
        %s169 = sadd.s32 %s167, %s168
        %s170 = smul.addr %s169, 4
        %s171 = scalar_lea.vmem %s0, %s170
        %s172 = smul.u32 3, %s19
      $region20: #{_lambda_.58} parent=15 // pred_fallthru
        _
      // Predicated region
      $region21: #{_lambda_.58} parent=15 // pred_check
        %p173 = pneg %p79
      $region22: #{_lambda_.58} parent=15 // pred_check_branch
        %175 = sbr.rel (%p173) target = $region24
      $region23: #{_lambda_.58} parent=15 // pred_region
        %s176 = smul.u32 48, %s19
        %p177 = scmp.lt.s32.totalorder %s176, 143
        %s178 = scalar_select %p177, %s176, 143
        %p179 = scmp.lt.s32.totalorder %s18, 0
        %s180 = scalar_select %p179, %s18, 0
        %s181 = sadd.s32 %s180, %s178
        %s182 = smul.addr %s181, 4
        %s183 = scalar_lea.vmem %s1, %s182
        %s184 = smul.u32 48, %s19
      $region24: #{_lambda_.58} parent=15 // pred_fallthru
        _
    $region16: #{_lambda_.58} parent=5 // pred_fallthru
      _
    %p185 = scmp.le.s32.totalorder 1, %s10
    %p186 = scmp.lt.s32.totalorder %s10, 4
    %p187 = pnand %p185, %p186
    %p188 = pneg %p187
    // Predicated region
    $region25: #{_lambda_.58} parent=5 // pred_check
      _
    $region26: #{_lambda_.58} parent=5 // pred_check_branch
      %190 = sbr.rel (%p187) target = $region28
    $region27: #{_lambda_.58} parent=5 // pred_region
      %s191 = ssub.s32 %s10, 1
      %s192 = smul.u32 3, %s22
      %p193 = scmp.lt.s32.totalorder %s20, 0
      %s194 = scalar_select %p193, %s20, 0
      %p195 = scmp.lt.s32.totalorder %s192, 8
      %s196 = scalar_select %p195, %s192, 8
      %s197 = smul.addr %s194, 9
      %s198 = sadd.s32 %s196, %s197
      %s199 = smul.addr %s198, 4
      %s200 = scalar_lea.vmem %s0, %s199
      %p201 = pneg %p57
      %p202 = pneg %p54
      %s203 = smul.u32 48, %s22
      %p204 = scmp.lt.s32.totalorder %s203, 143
      %s205 = scalar_select %p204, %s203, 143
      %p206 = scmp.lt.s32.totalorder %s21, 0
      %s207 = scalar_select %p206, %s21, 0
      %s208 = sadd.s32 %s207, %s205
      %s209 = smul.addr %s208, 4
      %s210 = scalar_lea.vmem %s1, %s209
      %p211 = pneg %p85
      %p212 = pneg %p82
      %p213 = pneg %p113
      %p214 = pneg %p110
      %p215 = scmp.lt.s32.totalorder %s20, 0
      %s216 = scalar_select %p215, %s20, 0
      %p217 = scmp.lt.s32.totalorder %s21, 0
      %s218 = scalar_select %p217, %s21, 0
      %s219 = sadd.s32 %s218, %s216
      %s220 = smul.addr %s219, 4
      %s221 = scalar_lea.vmem %s2, %s220
      %p222 = pneg %p141
      %p223 = pneg %p138
      %p224 = scmp.lt.s32.totalorder %s20, 0
      %s225 = scalar_select %p224, %s20, 0
      %p226 = scmp.lt.s32.totalorder %s21, 0
      %s227 = scalar_select %p226, %s21, 0
      %s228 = sadd.s32 %s227, %s225
      %s229 = smul.addr %s228, 2
      %s230 = scalar_lea.vmem %s3, %s229
      %s231 = smul.u32 3, %s22
      %p232 = scmp.lt.s32.totalorder %s20, 0
      %s233 = scalar_select %p232, %s20, 0
      %p234 = scmp.lt.s32.totalorder %s231, 8
      %s235 = scalar_select %p234, %s231, 8
      %s236 = smul.addr %s233, 9
      %s237 = sadd.s32 %s235, %s236
      %s238 = smul.addr %s237, 4
      %s239 = scalar_lea.vmem %s0, %s238
      %s240 = smul.u32 3, %s22
      %s241 = smul.u32 48, %s22
      %p242 = scmp.lt.s32.totalorder %s241, 143
      %s243 = scalar_select %p242, %s241, 143
      %p244 = scmp.lt.s32.totalorder %s21, 0
      %s245 = scalar_select %p244, %s21, 0
      %s246 = sadd.s32 %s245, %s243
      %s247 = smul.addr %s246, 4
      %s248 = scalar_lea.vmem %s1, %s247
      %s249 = smul.u32 48, %s22
      %p250 = scmp.lt.s32.totalorder %s20, 0
      %s251 = scalar_select %p250, %s20, 0
      %p252 = scmp.lt.s32.totalorder %s21, 0
      %s253 = scalar_select %p252, %s21, 0
      %s254 = sadd.s32 %s253, %s251
      %s255 = smul.addr %s254, 4
      %s256 = scalar_lea.vmem %s2, %s255
      %p257 = scmp.lt.s32.totalorder %s20, 0
      %s258 = scalar_select %p257, %s20, 0
      %p259 = scmp.lt.s32.totalorder %s21, 0
      %s260 = scalar_select %p259, %s21, 0
      %s261 = sadd.s32 %s260, %s258
      %s262 = smul.addr %s261, 2
      %s263 = scalar_lea.vmem %s3, %s262
      %v265 = vld [vmem:[%s239] sm:$0xff]
      %v266 = vld [vmem:[%s239 + $0x8] sm:$0xf]
      %v267 = vld [vmem:[%s248] sm:$0xf]
      %v268 = vld [vmem:[%s248 + $0x4] sm:$0xf]
      %v269 = vld [vmem:[%s248 + $0x8] sm:$0xf]
      %v270 = vld [vmem:[%s248 + $0xc] sm:$0xf]
      %v271 = vld [vmem:[%s248 + $0x10] sm:$0xf]
      %v272 = vld [vmem:[%s248 + $0x14] sm:$0xf]
      %v273 = vld [vmem:[%s248 + $0x18] sm:$0xf]
      %v274 = vld [vmem:[%s248 + $0x1c] sm:$0xf]
      %v275 = vld [vmem:[%s248 + $0x20] sm:$0xf]
      %v276 = vld [vmem:[%s248 + $0x24] sm:$0xf]
      %v277 = vld [vmem:[%s248 + $0x28] sm:$0xf]
      %v278 = vld [vmem:[%s248 + $0x2c] sm:$0xf]
      %v279 = vld [vmem:[%s248 + $0x30] sm:$0xf]
      %v280 = vld [vmem:[%s248 + $0x34] sm:$0xf]
      %v281 = vld [vmem:[%s248 + $0x38] sm:$0xf]
      %v282 = vld [vmem:[%s248 + $0x3c] sm:$0xf]
      %v283 = vld [vmem:[%s248 + $0x40] sm:$0xf]
      %v284 = vld [vmem:[%s248 + $0x44] sm:$0xf]
      %v285 = vld [vmem:[%s248 + $0x48] sm:$0xf]
      %v286 = vld [vmem:[%s248 + $0x4c] sm:$0xf]
      %v287 = vld [vmem:[%s248 + $0x50] sm:$0xf]
      %v288 = vld [vmem:[%s248 + $0x54] sm:$0xf]
      %v289 = vld [vmem:[%s248 + $0x58] sm:$0xf]
      %v290 = vld [vmem:[%s248 + $0x5c] sm:$0xf]
      %v291 = vld [vmem:[%s248 + $0x60] sm:$0xf]
      %v292 = vld [vmem:[%s248 + $0x64] sm:$0xf]
      %v293 = vld [vmem:[%s248 + $0x68] sm:$0xf]
      %v294 = vld [vmem:[%s248 + $0x6c] sm:$0xf]
      %v295 = vld [vmem:[%s248 + $0x70] sm:$0xf]
      %v296 = vld [vmem:[%s248 + $0x74] sm:$0xf]
      %v297 = vld [vmem:[%s248 + $0x78] sm:$0xf]
      %v298 = vld [vmem:[%s248 + $0x7c] sm:$0xf]
      %v299 = vld [vmem:[%s248 + $0x80] sm:$0xf]
      %v300 = vld [vmem:[%s248 + $0x84] sm:$0xf]
      %v301 = vld [vmem:[%s248 + $0x88] sm:$0xf]
      %v302 = vld [vmem:[%s248 + $0x8c] sm:$0xf]
      %v303 = vld [vmem:[%s248 + $0x90] sm:$0xf]
      %v304 = vld [vmem:[%s248 + $0x94] sm:$0xf]
      %v305 = vld [vmem:[%s248 + $0x98] sm:$0xf]
      %v306 = vld [vmem:[%s248 + $0x9c] sm:$0xf]
      %v307 = vld [vmem:[%s248 + $0xa0] sm:$0xf]
      %v308 = vld [vmem:[%s248 + $0xa4] sm:$0xf]
      %v309 = vld [vmem:[%s248 + $0xa8] sm:$0xf]
      %v310 = vld [vmem:[%s248 + $0xac] sm:$0xf]
      %v311 = vld [vmem:[%s248 + $0xb0] sm:$0xf]
      %v312 = vld [vmem:[%s248 + $0xb4] sm:$0xf]
      %v313 = vld [vmem:[%s248 + $0xb8] sm:$0xf]
      %v314 = vld [vmem:[%s248 + $0xbc] sm:$0xf]
      %v317 = vunpack.c.l.b16 %v265
      %v318 = vunpack.c.h.b16 %v265
      %v319 = vunpack.c.l.b16 %v266
      %v320 = vpack.c.b16 %v317, %v317
      %v321 = vpack.c.b16 %v318, %v318
      %v322 = vpack.c.b16 %v319, %v319
      %v374 = vunpack.c.l.b16 %v267
      %v375 = vunpack.c.l.b16 %v268
      %v376 = vunpack.c.l.b16 %v269
      %v377 = vunpack.c.l.b16 %v270
      %v378 = vunpack.c.l.b16 %v271
      %v379 = vunpack.c.l.b16 %v272
      %v380 = vunpack.c.l.b16 %v273
      %v381 = vunpack.c.l.b16 %v274
      %v382 = vunpack.c.l.b16 %v275
      %v383 = vunpack.c.l.b16 %v276
      %v384 = vunpack.c.l.b16 %v277
      %v385 = vunpack.c.l.b16 %v278
      %v386 = vunpack.c.l.b16 %v279
      %v387 = vunpack.c.l.b16 %v280
      %v388 = vunpack.c.l.b16 %v281
      %v389 = vunpack.c.l.b16 %v282
      %v390 = vunpack.c.l.b16 %v283
      %v391 = vunpack.c.l.b16 %v284
      %v392 = vunpack.c.l.b16 %v285
      %v393 = vunpack.c.l.b16 %v286
      %v394 = vunpack.c.l.b16 %v287
      %v395 = vunpack.c.l.b16 %v288
      %v396 = vunpack.c.l.b16 %v289
      %v397 = vunpack.c.l.b16 %v290
      %v398 = vunpack.c.l.b16 %v291
      %v399 = vunpack.c.l.b16 %v292
      %v400 = vunpack.c.l.b16 %v293
      %v401 = vunpack.c.l.b16 %v294
      %v402 = vunpack.c.l.b16 %v295
      %v403 = vunpack.c.l.b16 %v296
      %v404 = vunpack.c.l.b16 %v297
      %v405 = vunpack.c.l.b16 %v298
      %v406 = vunpack.c.l.b16 %v299
      %v407 = vunpack.c.l.b16 %v300
      %v408 = vunpack.c.l.b16 %v301
      %v409 = vunpack.c.l.b16 %v302
      %v410 = vunpack.c.l.b16 %v303
      %v411 = vunpack.c.l.b16 %v304
      %v412 = vunpack.c.l.b16 %v305
      %v413 = vunpack.c.l.b16 %v306
      %v414 = vunpack.c.l.b16 %v307
      %v415 = vunpack.c.l.b16 %v308
      %v416 = vunpack.c.l.b16 %v309
      %v417 = vunpack.c.l.b16 %v310
      %v418 = vunpack.c.l.b16 %v311
      %v419 = vunpack.c.l.b16 %v312
      %v420 = vunpack.c.l.b16 %v313
      %v421 = vunpack.c.l.b16 %v314
      %v422 = vpack.c.b16 %v375, %v374
      %v423 = vpack.c.b16 %v377, %v376
      %v424 = vpack.c.b16 %v379, %v378
      %v425 = vpack.c.b16 %v381, %v380
      %v426 = vpack.c.b16 %v383, %v382
      %v427 = vpack.c.b16 %v385, %v384
      %v428 = vpack.c.b16 %v387, %v386
      %v429 = vpack.c.b16 %v389, %v388
      %v430 = vpack.c.b16 %v391, %v390
      %v431 = vpack.c.b16 %v393, %v392
      %v432 = vpack.c.b16 %v395, %v394
      %v433 = vpack.c.b16 %v397, %v396
      %v434 = vpack.c.b16 %v399, %v398
      %v435 = vpack.c.b16 %v401, %v400
      %v436 = vpack.c.b16 %v403, %v402
      %v437 = vpack.c.b16 %v405, %v404
      %v438 = vpack.c.b16 %v407, %v406
      %v439 = vpack.c.b16 %v409, %v408
      %v440 = vpack.c.b16 %v411, %v410
      %v441 = vpack.c.b16 %v413, %v412
      %v442 = vpack.c.b16 %v415, %v414
      %v443 = vpack.c.b16 %v417, %v416
      %v444 = vpack.c.b16 %v419, %v418
      %v445 = vpack.c.b16 %v421, %v420
      %470 = vmatprep.subr.bf16.mxu0 0
      %471 = vmatpush1.bf16.msra.mxu0 %v422
      %472 = vmatprep.subr.bf16.mxu0 0
      %473 = vmatpush1.bf16.msra.mxu0 %v423
      %474 = vmatprep.subr.bf16.mxu0 0
      %475 = vmatpush1.bf16.msra.mxu0 %v424
      %476 = vmatprep.subr.bf16.mxu0 0
      %477 = vmatpush1.bf16.msra.mxu0 %v425
      %478 = vmatprep.subr.bf16.mxu0 0
      %479 = vmatpush1.bf16.msra.mxu0 %v426
      %480 = vmatprep.subr.bf16.mxu0 0
      %481 = vmatpush1.bf16.msra.mxu0 %v427
      %482 = vmatprep.subr.bf16.mxu0 0
      %483 = vmatpush1.bf16.msra.mxu0 %v428
      %484 = vmatprep.subr.bf16.mxu0 0
      %485 = vmatpush1.bf16.msra.mxu0 %v429
      %486 = vmatprep.subr.bf16.mxu0 0
      %487 = vmatpush1.bf16.msra.mxu0 %v430
      %488 = vmatprep.subr.bf16.mxu0 0
      %489 = vmatpush1.bf16.msra.mxu0 %v431
      %490 = vmatprep.subr.bf16.mxu0 0
      %491 = vmatpush1.bf16.msra.mxu0 %v432
      %492 = vmatprep.subr.bf16.mxu0 0
      %493 = vmatpush1.bf16.msra.mxu0 %v433
      %494 = vmatprep.subr.bf16.mxu0 0
      %495 = vmatpush1.bf16.msra.mxu0 %v434
      %496 = vmatprep.subr.bf16.mxu0 0
      %497 = vmatpush1.bf16.msra.mxu0 %v435
      %498 = vmatprep.subr.bf16.mxu0 0
      %499 = vmatpush1.bf16.msra.mxu0 %v436
      %500 = vmatprep.subr.bf16.mxu0 0
      %501 = vmatpush1.bf16.msra.mxu0 %v437
      %502 = vmatprep.mubr.bf16.mxu0 %v321
      %503 = vmatmul.mubr.bf16.gmra.mrb[0].mxu0 %v320
      %v504 = vpop.f32.mrb[0].mxu0
      %v505 = vadd.f32 0.0, %v504
      %v506 = vpop.f32.mrb[0].mxu0
      %v507 = vpop.f32.mrb[0].mxu0
      %v508 = vpop.f32.mrb[0].mxu0
      %509 = vdwg.mxu0
      %510 = vmatprep.subr.bf16.mxu0 0
      %511 = vmatpush1.bf16.msra.mxu0 %v438
      %512 = vmatprep.subr.bf16.mxu0 0
      %513 = vmatpush1.bf16.msra.mxu0 %v439
      %514 = vmatprep.subr.bf16.mxu0 0
      %515 = vmatpush1.bf16.msra.mxu0 %v440
      %516 = vmatprep.subr.bf16.mxu0 0
      %517 = vmatpush1.bf16.msra.mxu0 %v441
      %518 = vmatprep.subr.bf16.mxu0 0
      %519 = vmatpush1.bf16.msra.mxu0 %v442
      %520 = vmatprep.subr.bf16.mxu0 0
      %521 = vmatpush1.bf16.msra.mxu0 %v443
      %522 = vmatprep.subr.bf16.mxu0 0
      %523 = vmatpush1.bf16.msra.mxu0 %v444
      %524 = vmatprep.subr.bf16.mxu0 0
      %525 = vmatpush1.bf16.msra.mxu0 %v445
      %526 = vmatprep.subr.bf16.mxu0 0
      %527 = vmatpush1.bf16.msra.mxu0 0
      %528 = vmatprep.subr.bf16.mxu0 0
      %529 = vmatpush1.bf16.msra.mxu0 0
      %530 = vmatprep.subr.bf16.mxu0 0
      %531 = vmatpush1.bf16.msra.mxu0 0
      %532 = vmatprep.subr.bf16.mxu0 0
      %533 = vmatpush1.bf16.msra.mxu0 0
      %534 = vmatprep.subr.bf16.mxu0 0
      %535 = vmatpush1.bf16.msra.mxu0 0
      %536 = vmatprep.subr.bf16.mxu0 0
      %537 = vmatpush1.bf16.msra.mxu0 0
      %538 = vmatprep.subr.bf16.mxu0 0
      %539 = vmatpush1.bf16.msra.mxu0 0
      %540 = vmatprep.subr.bf16.mxu0 0
      %541 = vmatpush1.bf16.msra.mxu0 0
      %542 = vmatprep.mubr.bf16.mxu0 0
      %543 = vmatmul.mubr.bf16.gmra.mrb[0].mxu0 %v322
      %v544 = vpop.f32.mrb[0].mxu0
      %v545 = vadd.f32 %v505, %v544
      %v546 = vpop.f32.mrb[0].mxu0
      %v547 = vpop.f32.mrb[0].mxu0
      %v548 = vpop.f32.mrb[0].mxu0
      %549 = vdwg.mxu0
      %p550 = scmp.eq.s32.totalorder %s22, 0
      // Predicated region
      $region29: #{_lambda_.58} parent=27 // pred_check
        %p551 = pneg %p550
      $region30: #{_lambda_.58} parent=27 // pred_check_branch
        %553 = sbr.rel (%p551) target = $region32
      $region31: #{_lambda_.58} parent=27 // pred_region
        %554 = vst [vmem:[#allocation2] sm:$0xff] 0.0
      $region32: #{_lambda_.58} parent=27 // pred_fallthru
        _
      %v555 = vld [vmem:[#allocation2] sm:$0xff]
      %v556 = vadd.f32 %v555, %v545
      %557 = vst [vmem:[#allocation2] sm:$0xff] %v556
      %p558 = scmp.eq.s32.totalorder %s22, 2
      // Predicated region
      $region33: #{_lambda_.58} parent=27 // pred_check
        %p559 = pneg %p558
      $region34: #{_lambda_.58} parent=27 // pred_check_branch
        %561 = sbr.rel (%p559) target = $region36
      $region35: #{_lambda_.58} parent=27 // pred_region
        %v562 = vld [vmem:[#allocation2] sm:$0xff]
        %v563 = vpack.c.bf16 %v562, %v562
        %564 = vst [vmem:[%s256] sm:$0xf] %v563
        %v565 = vlaneseq
        %v566 = vshrl.u32 %v565, 7
        %s567 = smul.u32 %s20, 8
        %v568 = vstv %s567
        %v569 = vadd.s32 %v566, %v568
        %vm570 = vcmp.lt.s32.totalorder %v569, 2
        %v571 = vsel %vm570, %v562, 0.0
        %v572 = vrot.slane %v571, 4
        %v573 = vadd.f32 %v571, %v572
        %v574 = vrot.slane %v573, 2
        %v575 = vadd.f32 %v573, %v574
        %v576 = vrot.slane %v575, 1
        %v577 = vadd.f32 %v575, %v576
        %v578 = vmul.f32 %v571, %v571
        %v579 = vrot.slane %v578, 4
        %v580 = vadd.f32 %v578, %v579
        %v581 = vrot.slane %v580, 2
        %v582 = vadd.f32 %v580, %v581
        %v583 = vrot.slane %v582, 1
        %v584 = vadd.f32 %v582, %v583
        %vm585 = vcmask 1040384
        %v586 = vsel %vm585, %v577, %v584
        %587 = vst [vmem:[%s263] sm:$0x3] %v586
      $region36: #{_lambda_.58} parent=27 // pred_fallthru
        _
      %p588 = scmp.lt.s32.totalorder %s20, 0
      %s589 = scalar_select %p588, %s20, 0
      %p590 = scmp.lt.s32.totalorder %s21, 0
      %s591 = scalar_select %p590, %s21, 0
      %s592 = sadd.s32 %s591, %s589
      %s593 = smul.addr %s592, 4
      %s594 = scalar_lea.vmem %s2, %s593
      %p595 = scmp.lt.s32.totalorder %s20, 0
      %s596 = scalar_select %p595, %s20, 0
      %p597 = scmp.lt.s32.totalorder %s21, 0
      %s598 = scalar_select %p597, %s21, 0
      %s599 = sadd.s32 %s598, %s596
      %s600 = smul.addr %s599, 2
      %s601 = scalar_lea.vmem %s3, %s600
      // Predicated region
      $region37: #{_lambda_.58} parent=27 // pred_check
        %p602 = pneg %p110
      $region38: #{_lambda_.58} parent=27 // pred_check_branch
        %604 = sbr.rel (%p602) target = $region40
      $region39: #{_lambda_.58} parent=27 // pred_region
        _
      $region40: #{_lambda_.58} parent=27 // pred_fallthru
        _
      // Predicated region
      $region41: #{_lambda_.58} parent=27 // pred_check
        %p605 = pneg %p138
      $region42: #{_lambda_.58} parent=27 // pred_check_branch
        %607 = sbr.rel (%p605) target = $region44
      $region43: #{_lambda_.58} parent=27 // pred_region
        _
      $region44: #{_lambda_.58} parent=27 // pred_fallthru
        _
      // Predicated region
      $region45: #{_lambda_.58} parent=27 // pred_check
        %p608 = pneg %p110
      $region46: #{_lambda_.58} parent=27 // pred_check_branch
        %610 = sbr.rel (%p608) target = $region48
      $region47: #{_lambda_.58} parent=27 // pred_region
        %p611 = scmp.lt.s32.totalorder %s20, 0
        %s612 = scalar_select %p611, %s20, 0
        %p613 = scmp.lt.s32.totalorder %s21, 0
        %s614 = scalar_select %p613, %s21, 0
        %s615 = sadd.s32 %s614, %s612
        %s616 = smul.addr %s615, 4
        %s617 = scalar_lea.vmem %s2, %s616
      $region48: #{_lambda_.58} parent=27 // pred_fallthru
        _
      // Predicated region
      $region49: #{_lambda_.58} parent=27 // pred_check
        %p618 = pneg %p138
      $region50: #{_lambda_.58} parent=27 // pred_check_branch
        %620 = sbr.rel (%p618) target = $region52
      $region51: #{_lambda_.58} parent=27 // pred_region
        %p621 = scmp.lt.s32.totalorder %s20, 0
        %s622 = scalar_select %p621, %s20, 0
        %p623 = scmp.lt.s32.totalorder %s21, 0
        %s624 = scalar_select %p623, %s21, 0
        %s625 = sadd.s32 %s624, %s622
        %s626 = smul.addr %s625, 2
        %s627 = scalar_lea.vmem %s3, %s626
      $region52: #{_lambda_.58} parent=27 // pred_fallthru
        _
    $region28: #{_lambda_.58} parent=5 // pred_fallthru
      _
    %p628 = scmp.le.s32.totalorder 2, %s10
    // Predicated region
    $region53: #{_lambda_.58} parent=5 // pred_check
      %p629 = pneg %p628
    $region54: #{_lambda_.58} parent=5 // pred_check_branch
      %631 = sbr.rel (%p629) target = $region56
    $region55: #{_lambda_.58} parent=5 // pred_region
      %s632 = ssub.s32 %s10, 2
    $region56: #{_lambda_.58} parent=5 // pred_fallthru
      _
  $region6: #{_lambda_.58} parent=0 // loop_footer
    %s14 = sadd.s32 1, %s10
  $region7: #{_lambda_.58} parent=0 // loop_footer_branch
    %9 = sbr.rel target = $region3
  $region8: #{_lambda_.58} parent=0 // loop_exit
    _

// kernel: _lambda_.62
$region0: #{_lambda_.62}
  #allocation0 [shape = 'u32[]', space=smem, size = 0x4, offset = 0x4, fixed_abs, tag = 'smem constant byte address 0x4 - core index']
  #allocation1 [shape = 'u32[144,128]{1,0:T(1,128)}', space=vmem, size = 0x12000, scoped, tag = 'internal scratch']
  %s0 = inlined_call_operand.vmem [shape: bf16[8,256], index: 0, kind: input, shape index: {}]
  %s1 = inlined_call_operand.vmem [shape: f32[1,256], index: 1, kind: input, shape index: {}]
  %s2 = inlined_call_operand.vmem [shape: f32[1,256], index: 2, kind: input, shape index: {}]
  %s3 = inlined_call_operand.vmem [shape: bf16[8,256], index: 3, kind: input, shape index: {}]
  %s4 = inlined_call_operand.vmem [shape: f32[1,256], index: 4, kind: input, shape index: {}]
  %s5 = inlined_call_operand.vmem [shape: f32[1,256], index: 5, kind: input, shape index: {}]
  %s6 = inlined_call_operand.vmem [shape: bf16[8,256], index: 6, kind: output, shape index: {}]
  %s7 = sld [smem:[#allocation0]]
  $region34: #{_lambda_.62} parent=0
    _
  %s9 = ssub.s32 1, %s7
  %s10 = scalar_select 0, %s9, %s7
  // Predicated region
  $region2: #{_lambda_.62} parent=0 // pred_check
    _
  $region3: #{_lambda_.62} parent=0 // pred_check_branch
    %12 = sbr.rel (0) target = $region5
  $region4: #{_lambda_.62} parent=0 // pred_region
    _
  $region5: #{_lambda_.62} parent=0 // pred_fallthru
    _
  // Predicated region
  $region6: #{_lambda_.62} parent=0 // pred_check
    _
  $region7: #{_lambda_.62} parent=0 // pred_check_branch
    %14 = sbr.rel (0) target = $region9
  $region8: #{_lambda_.62} parent=0 // pred_region
    _
  $region9: #{_lambda_.62} parent=0 // pred_fallthru
    _
  // Predicated region
  $region10: #{_lambda_.62} parent=0 // pred_check
    _
  $region11: #{_lambda_.62} parent=0 // pred_check_branch
    %16 = sbr.rel (0) target = $region13
  $region12: #{_lambda_.62} parent=0 // pred_region
    _
  $region13: #{_lambda_.62} parent=0 // pred_fallthru
    _
  // Predicated region
  $region14: #{_lambda_.62} parent=0 // pred_check
    _
  $region15: #{_lambda_.62} parent=0 // pred_check_branch
    %18 = sbr.rel (0) target = $region17
  $region16: #{_lambda_.62} parent=0 // pred_region
    _
  $region17: #{_lambda_.62} parent=0 // pred_fallthru
    _
  // Predicated region
  $region18: #{_lambda_.62} parent=0 // pred_check
    _
  $region19: #{_lambda_.62} parent=0 // pred_check_branch
    %20 = sbr.rel (0) target = $region21
  $region20: #{_lambda_.62} parent=0 // pred_region
    _
  $region21: #{_lambda_.62} parent=0 // pred_fallthru
    _
  // Predicated region
  $region22: #{_lambda_.62} parent=0 // pred_check
    _
  $region23: #{_lambda_.62} parent=0 // pred_check_branch
    %22 = sbr.rel (0) target = $region25
  $region24: #{_lambda_.62} parent=0 // pred_region
    _
  $region25: #{_lambda_.62} parent=0 // pred_fallthru
    _
  %v23 = vld [vmem:[%s0] sm:$0xff]
  %v24 = vunpack.c.l.bf16 %v23
  %v25 = vunpack.c.h.bf16 %v23
  %v26 = vld [vmem:[%s1] sm:$0x3]
  %v28 = vlaneseq
  %v29 = vshrl.u32 %v28, 7
  %v30 = vsub.s32 0, %v29
  %v31 = vrot.slane %v26, %v30
  %v32 = vlaneseq
  %v33 = vshrl.u32 %v32, 7
  %v34 = vsub.s32 1, %v33
  %v35 = vrot.slane %v26, %v34
  %v38 = vmul.f32 %v24, %v31
  %v39 = vmul.f32 %v25, %v35
  %v40 = vld [vmem:[%s2] sm:$0x3]
  %v42 = vlaneseq
  %v43 = vshrl.u32 %v42, 7
  %v44 = vsub.s32 0, %v43
  %v45 = vrot.slane %v40, %v44
  %v46 = vlaneseq
  %v47 = vshrl.u32 %v46, 7
  %v48 = vsub.s32 1, %v47
  %v49 = vrot.slane %v40, %v48
  %v52 = vadd.f32 %v38, %v45
  %v53 = vadd.f32 %v39, %v49
  %v54 = vld [vmem:[%s3] sm:$0xff]
  %v55 = vunpack.c.l.bf16 %v54
  %v56 = vunpack.c.h.bf16 %v54
  %v57 = vld [vmem:[%s4] sm:$0x3]
  %v59 = vlaneseq
  %v60 = vshrl.u32 %v59, 7
  %v61 = vsub.s32 0, %v60
  %v62 = vrot.slane %v57, %v61
  %v63 = vlaneseq
  %v64 = vshrl.u32 %v63, 7
  %v65 = vsub.s32 1, %v64
  %v66 = vrot.slane %v57, %v65
  %v69 = vmul.f32 %v55, %v62
  %v70 = vmul.f32 %v56, %v66
  %v71 = vadd.f32 %v52, %v69
  %v72 = vadd.f32 %v53, %v70
  %v73 = vld [vmem:[%s5] sm:$0x3]
  %v75 = vlaneseq
  %v76 = vshrl.u32 %v75, 7
  %v77 = vsub.s32 0, %v76
  %v78 = vrot.slane %v73, %v77
  %v79 = vlaneseq
  %v80 = vshrl.u32 %v79, 7
  %v81 = vsub.s32 1, %v80
  %v82 = vrot.slane %v73, %v81
  %v85 = vadd.f32 %v71, %v78
  %v86 = vadd.f32 %v72, %v82
  %v87 = vmax.f32 %v85, 0.0
  %v88 = vmax.f32 %v86, 0.0
  %v89 = vpack.c.bf16 %v87, %v87
  %v90 = vpack.c.bf16 %v88, %v88
  %v93 = vunpack.c.l.b16 %v89
  %v94 = vunpack.c.l.b16 %v90
  %v95 = vpack.c.b16 %v94, %v93
  %97 = vst [vmem:[%s6] sm:$0xff] %v95
  // Predicated region
  $region26: #{_lambda_.62} parent=0 // pred_check
    _
  $region27: #{_lambda_.62} parent=0 // pred_check_branch
    %99 = sbr.rel (0) target = $region29
  $region28: #{_lambda_.62} parent=0 // pred_region
    _
  $region29: #{_lambda_.62} parent=0 // pred_fallthru
    _
  // Predicated region
  $region30: #{_lambda_.62} parent=0 // pred_check
    _
  $region31: #{_lambda_.62} parent=0 // pred_check_branch
    %101 = sbr.rel (0) target = $region33
  $region32: #{_lambda_.62} parent=0 // pred_region
    _
  $region33: #{_lambda_.62} parent=0 // pred_fallthru
    _

// kernel: _lambda_.59
$region0: #{_lambda_.59}
  #allocation0 [shape = 'u32[]', space=smem, size = 0x4, offset = 0x4, fixed_abs, tag = 'smem constant byte address 0x4 - core index']
  #allocation1 [shape = 'u32[144,128]{1,0:T(1,128)}', space=vmem, size = 0x12000, scoped, tag = 'internal scratch']
  %s0 = inlined_call_operand.vmem [shape: bf16[8,128], index: 0, kind: input, shape index: {}]
  %s1 = inlined_call_operand.vmem [shape: bf16[128,256], index: 1, kind: input, shape index: {}]
  %s2 = inlined_call_operand.vmem [shape: f32[1,128], index: 2, kind: input, shape index: {}]
  %s3 = inlined_call_operand.vmem [shape: f32[1,128], index: 3, kind: input, shape index: {}]
  %s4 = inlined_call_operand.vmem [shape: bf16[8,256], index: 4, kind: output, shape index: {0}]
  %s5 = inlined_call_operand.vmem [shape: f32[1,2,256], index: 5, kind: output, shape index: {1}]
  %6 = xla_tuple %s4, %s5
  %s7 = sld [smem:[#allocation0]]
  $region34: #{_lambda_.59} parent=0
    _
  %s9 = ssub.s32 1, %s7
  %s10 = scalar_select 0, %s9, %s7
  // Predicated region
  $region2: #{_lambda_.59} parent=0 // pred_check
    _
  $region3: #{_lambda_.59} parent=0 // pred_check_branch
    %12 = sbr.rel (0) target = $region5
  $region4: #{_lambda_.59} parent=0 // pred_region
    _
  $region5: #{_lambda_.59} parent=0 // pred_fallthru
    _
  // Predicated region
  $region6: #{_lambda_.59} parent=0 // pred_check
    _
  $region7: #{_lambda_.59} parent=0 // pred_check_branch
    %14 = sbr.rel (0) target = $region9
  $region8: #{_lambda_.59} parent=0 // pred_region
    _
  $region9: #{_lambda_.59} parent=0 // pred_fallthru
    _
  // Predicated region
  $region10: #{_lambda_.59} parent=0 // pred_check
    _
  $region11: #{_lambda_.59} parent=0 // pred_check_branch
    %16 = sbr.rel (0) target = $region13
  $region12: #{_lambda_.59} parent=0 // pred_region
    _
  $region13: #{_lambda_.59} parent=0 // pred_fallthru
    _
  // Predicated region
  $region14: #{_lambda_.59} parent=0 // pred_check
    _
  $region15: #{_lambda_.59} parent=0 // pred_check_branch
    %18 = sbr.rel (0) target = $region17
  $region16: #{_lambda_.59} parent=0 // pred_region
    _
  $region17: #{_lambda_.59} parent=0 // pred_fallthru
    _
  %v20 = vld [vmem:[%s0] sm:$0xf]
  %v21 = vunpack.c.l.bf16 %v20
  %v22 = vld [vmem:[%s2] sm:$0x1]
  %v24 = vlaneseq
  %v25 = vshrl.u32 %v24, 7
  %v26 = vsub.s32 0, %v25
  %v27 = vrot.slane %v22, %v26
  %v29 = vmul.f32 %v21, %v27
  %v30 = vld [vmem:[%s3] sm:$0x1]
  %v32 = vlaneseq
  %v33 = vshrl.u32 %v32, 7
  %v34 = vsub.s32 0, %v33
  %v35 = vrot.slane %v30, %v34
  %v37 = vadd.f32 %v29, %v35
  %v38 = vmax.f32 %v37, 0.0
  %v39 = vpack.c.bf16 %v38, %v38
  %v40 = vld [vmem:[%s1] sm:$0xff]
  %v41 = vld [vmem:[%s1 + $0x8] sm:$0xff]
  %v42 = vld [vmem:[%s1 + $0x10] sm:$0xff]
  %v43 = vld [vmem:[%s1 + $0x18] sm:$0xff]
  %v44 = vld [vmem:[%s1 + $0x20] sm:$0xff]
  %v45 = vld [vmem:[%s1 + $0x28] sm:$0xff]
  %v46 = vld [vmem:[%s1 + $0x30] sm:$0xff]
  %v47 = vld [vmem:[%s1 + $0x38] sm:$0xff]
  %v48 = vld [vmem:[%s1 + $0x40] sm:$0xff]
  %v49 = vld [vmem:[%s1 + $0x48] sm:$0xff]
  %v50 = vld [vmem:[%s1 + $0x50] sm:$0xff]
  %v51 = vld [vmem:[%s1 + $0x58] sm:$0xff]
  %v52 = vld [vmem:[%s1 + $0x60] sm:$0xff]
  %v53 = vld [vmem:[%s1 + $0x68] sm:$0xff]
  %v54 = vld [vmem:[%s1 + $0x70] sm:$0xff]
  %v55 = vld [vmem:[%s1 + $0x78] sm:$0xff]
  %v72 = vunpack.c.l.b16 %v40
  %v73 = vunpack.c.h.b16 %v40
  %v74 = vunpack.c.l.b16 %v41
  %v75 = vunpack.c.h.b16 %v41
  %v76 = vunpack.c.l.b16 %v42
  %v77 = vunpack.c.h.b16 %v42
  %v78 = vunpack.c.l.b16 %v43
  %v79 = vunpack.c.h.b16 %v43
  %v80 = vunpack.c.l.b16 %v44
  %v81 = vunpack.c.h.b16 %v44
  %v82 = vunpack.c.l.b16 %v45
  %v83 = vunpack.c.h.b16 %v45
  %v84 = vunpack.c.l.b16 %v46
  %v85 = vunpack.c.h.b16 %v46
  %v86 = vunpack.c.l.b16 %v47
  %v87 = vunpack.c.h.b16 %v47
  %v88 = vunpack.c.l.b16 %v48
  %v89 = vunpack.c.h.b16 %v48
  %v90 = vunpack.c.l.b16 %v49
  %v91 = vunpack.c.h.b16 %v49
  %v92 = vunpack.c.l.b16 %v50
  %v93 = vunpack.c.h.b16 %v50
  %v94 = vunpack.c.l.b16 %v51
  %v95 = vunpack.c.h.b16 %v51
  %v96 = vunpack.c.l.b16 %v52
  %v97 = vunpack.c.h.b16 %v52
  %v98 = vunpack.c.l.b16 %v53
  %v99 = vunpack.c.h.b16 %v53
  %v100 = vunpack.c.l.b16 %v54
  %v101 = vunpack.c.h.b16 %v54
  %v102 = vunpack.c.l.b16 %v55
  %v103 = vunpack.c.h.b16 %v55
  %v104 = vpack.c.b16 %v74, %v72
  %v105 = vpack.c.b16 %v75, %v73
  %v106 = vpack.c.b16 %v78, %v76
  %v107 = vpack.c.b16 %v79, %v77
  %v108 = vpack.c.b16 %v82, %v80
  %v109 = vpack.c.b16 %v83, %v81
  %v110 = vpack.c.b16 %v86, %v84
  %v111 = vpack.c.b16 %v87, %v85
  %v112 = vpack.c.b16 %v90, %v88
  %v113 = vpack.c.b16 %v91, %v89
  %v114 = vpack.c.b16 %v94, %v92
  %v115 = vpack.c.b16 %v95, %v93
  %v116 = vpack.c.b16 %v98, %v96
  %v117 = vpack.c.b16 %v99, %v97
  %v118 = vpack.c.b16 %v102, %v100
  %v119 = vpack.c.b16 %v103, %v101
  %136 = vmatprep.subr.bf16.mxu0 %v105
  %137 = vmatpush1.bf16.msra.mxu0 %v104
  %138 = vmatprep.subr.bf16.mxu0 %v107
  %139 = vmatpush1.bf16.msra.mxu0 %v106
  %140 = vmatprep.subr.bf16.mxu0 %v109
  %141 = vmatpush1.bf16.msra.mxu0 %v108
  %142 = vmatprep.subr.bf16.mxu0 %v111
  %143 = vmatpush1.bf16.msra.mxu0 %v110
  %144 = vmatprep.subr.bf16.mxu0 %v113
  %145 = vmatpush1.bf16.msra.mxu0 %v112
  %146 = vmatprep.subr.bf16.mxu0 %v115
  %147 = vmatpush1.bf16.msra.mxu0 %v114
  %148 = vmatprep.subr.bf16.mxu0 %v117
  %149 = vmatpush1.bf16.msra.mxu0 %v116
  %150 = vmatprep.subr.bf16.mxu0 %v119
  %151 = vmatpush1.bf16.msra.mxu0 %v118
  %152 = vmatprep.subr.bf16.mxu0 0
  %153 = vmatpush1.bf16.msra.mxu0 0
  %154 = vmatprep.subr.bf16.mxu0 0
  %155 = vmatpush1.bf16.msra.mxu0 0
  %156 = vmatprep.subr.bf16.mxu0 0
  %157 = vmatpush1.bf16.msra.mxu0 0
  %158 = vmatprep.subr.bf16.mxu0 0
  %159 = vmatpush1.bf16.msra.mxu0 0
  %160 = vmatprep.subr.bf16.mxu0 0
  %161 = vmatpush1.bf16.msra.mxu0 0
  %162 = vmatprep.subr.bf16.mxu0 0
  %163 = vmatpush1.bf16.msra.mxu0 0
  %164 = vmatprep.subr.bf16.mxu0 0
  %165 = vmatpush1.bf16.msra.mxu0 0
  %166 = vmatprep.subr.bf16.mxu0 0
  %167 = vmatpush1.bf16.msra.mxu0 0
  %168 = vmatprep.mubr.bf16.mxu0 0
  %169 = vmatmul.mubr.bf16.gmra.mrb[0].mxu0 %v39
  %v170 = vpop.f32.mrb[0].mxu0
  %v171 = vadd.f32 0.0, %v170
  %v172 = vpop.f32.mrb[0].mxu0
  %v173 = vadd.f32 0.0, %v172
  %v174 = vpop.f32.mrb[0].mxu0
  %v175 = vpop.f32.mrb[0].mxu0
  %176 = vdwg.mxu0
  %v177 = vpack.c.bf16 %v171, %v171
  %v178 = vpack.c.bf16 %v173, %v173
  %v181 = vunpack.c.l.b16 %v177
  %v182 = vunpack.c.l.b16 %v178
  %v183 = vpack.c.b16 %v182, %v181
  %185 = vst [vmem:[%s4] sm:$0xff] %v183
  %v186 = vlaneseq
  %v187 = vshrl.u32 %v186, 7
  %s188 = smul.u32 0, 8
  %v189 = vstv %s188
  %v190 = vadd.s32 %v187, %v189
  %vm191 = vcmp.lt.s32.totalorder %v190, 2
  %v192 = vsel %vm191, %v171, 0.0
  %v193 = vsel %vm191, %v173, 0.0
  %v194 = vrot.slane %v192, 4
  %v195 = vadd.f32 %v192, %v194
  %v196 = vrot.slane %v195, 2
  %v197 = vadd.f32 %v195, %v196
  %v198 = vrot.slane %v197, 1
  %v199 = vadd.f32 %v197, %v198
  %v200 = vrot.slane %v193, 4
  %v201 = vadd.f32 %v193, %v200
  %v202 = vrot.slane %v201, 2
  %v203 = vadd.f32 %v201, %v202
  %v204 = vrot.slane %v203, 1
  %v205 = vadd.f32 %v203, %v204
  %v206 = vmul.f32 %v192, %v192
  %v207 = vmul.f32 %v193, %v193
  %v208 = vrot.slane %v206, 4
  %v209 = vadd.f32 %v206, %v208
  %v210 = vrot.slane %v209, 2
  %v211 = vadd.f32 %v209, %v210
  %v212 = vrot.slane %v211, 1
  %v213 = vadd.f32 %v211, %v212
  %v214 = vrot.slane %v207, 4
  %v215 = vadd.f32 %v207, %v214
  %v216 = vrot.slane %v215, 2
  %v217 = vadd.f32 %v215, %v216
  %v218 = vrot.slane %v217, 1
  %v219 = vadd.f32 %v217, %v218
  %vm220 = vcmask 1040384
  %v221 = vsel %vm220, %v199, %v213
  %v222 = vsel %vm220, %v205, %v219
  %v225 = vcombine.low %v221, %v222
  %v227 = vunpack.c.l.s4 1983009808
  %v228 = vunpack.c.0.s8 %v227
  %v229 = vlaneseq
  %v230 = vshrl.u32 %v229, 7
  %v231 = vsub.s32 %v228, %v230
  %v232 = vrot.slane %v225, %v231
  %234 = vst [vmem:[%s5] sm:$0xf] %v232
  // Predicated region
  $region18: #{_lambda_.59} parent=0 // pred_check
    _
  $region19: #{_lambda_.59} parent=0 // pred_check_branch
    %236 = sbr.rel (0) target = $region21
  $region20: #{_lambda_.59} parent=0 // pred_region
    _
  $region21: #{_lambda_.59} parent=0 // pred_fallthru
    _
  // Predicated region
  $region22: #{_lambda_.59} parent=0 // pred_check
    _
  $region23: #{_lambda_.59} parent=0 // pred_check_branch
    %238 = sbr.rel (0) target = $region25
  $region24: #{_lambda_.59} parent=0 // pred_region
    _
  $region25: #{_lambda_.59} parent=0 // pred_fallthru
    _
  // Predicated region
  $region26: #{_lambda_.59} parent=0 // pred_check
    _
  $region27: #{_lambda_.59} parent=0 // pred_check_branch
    %240 = sbr.rel (0) target = $region29
  $region28: #{_lambda_.59} parent=0 // pred_region
    _
  $region29: #{_lambda_.59} parent=0 // pred_fallthru
    _
  // Predicated region
  $region30: #{_lambda_.59} parent=0 // pred_check
    _
  $region31: #{_lambda_.59} parent=0 // pred_check_branch
    %242 = sbr.rel (0) target = $region33
  $region32: #{_lambda_.59} parent=0 // pred_region
    _
  $region33: #{_lambda_.59} parent=0 // pred_fallthru
    _

// kernel: _lambda_.63
$region0: #{_lambda_.63}
  #allocation0 [shape = 'u32[]', space=smem, size = 0x4, offset = 0x4, fixed_abs, tag = 'smem constant byte address 0x4 - core index']
  #allocation1 [shape = 'u32[144,128]{1,0:T(1,128)}', space=vmem, size = 0x12000, scoped, tag = 'internal scratch']
  %s0 = inlined_call_operand.vmem [shape: bf16[2,1,256], index: 0, kind: input, shape index: {}]
  %s1 = inlined_call_operand.vmem [shape: f32[2,256], index: 1, kind: output, shape index: {}]
  %s2 = sld [smem:[#allocation0]]
  $region14: #{_lambda_.63} parent=0
    _
  %s4 = ssub.s32 1, %s2
  %s5 = scalar_select 0, %s4, %s2
  // Predicated region
  $region2: #{_lambda_.63} parent=0 // pred_check
    _
  $region3: #{_lambda_.63} parent=0 // pred_check_branch
    %7 = sbr.rel (0) target = $region5
  $region4: #{_lambda_.63} parent=0 // pred_region
    _
  $region5: #{_lambda_.63} parent=0 // pred_fallthru
    _
  %v8 = vld [vmem:[%s0] sm:$0x3]
  %v9 = vld [vmem:[%s0 + $0x2] sm:$0x3]
  %v10 = vunpack.c.l.bf16 %v8
  %v11 = vunpack.c.l.bf16 %v9
  %v12 = vadd.f32 %v10, 0.0
  %v13 = vadd.f32 %v11, 0.0
  %vm16 = vcmask 1044484
  %v17 = vsel %vm16, %v12, %v12
  %vm18 = vcmask 1046534
  %v19 = vsel %vm18, %v12, %v17
  %v20 = vrot.slane %v13, 7
  %vm21 = vcmask 1041409
  %v22 = vsel %vm21, %v20, %v19
  %vm23 = vcmask 1043459
  %v24 = vsel %vm23, %v20, %v22
  %vm25 = vcmask 1045509
  %v26 = vsel %vm25, %v20, %v24
  %vm27 = vcmask 1047559
  %v28 = vsel %vm27, %v20, %v26
  %30 = vst [vmem:[%s1] sm:$0xf] %v28
  // Predicated region
  $region6: #{_lambda_.63} parent=0 // pred_check
    _
  $region7: #{_lambda_.63} parent=0 // pred_check_branch
    %32 = sbr.rel (0) target = $region9
  $region8: #{_lambda_.63} parent=0 // pred_region
    _
  $region9: #{_lambda_.63} parent=0 // pred_fallthru
    _
  // Predicated region
  $region10: #{_lambda_.63} parent=0 // pred_check
    _
  $region11: #{_lambda_.63} parent=0 // pred_check_branch
    %34 = sbr.rel (0) target = $region13
  $region12: #{_lambda_.63} parent=0 // pred_region
    _
  $region13: #{_lambda_.63} parent=0 // pred_fallthru
    _

// kernel: _lambda_.64
$region0: #{_lambda_.64}
  #allocation0 [shape = 'u32[]', space=smem, size = 0x4, offset = 0x4, fixed_abs, tag = 'smem constant byte address 0x4 - core index']
  #allocation1 [shape = 'u32[144,128]{1,0:T(1,128)}', space=vmem, size = 0x12000, scoped, tag = 'internal scratch']
  %s0 = inlined_call_operand.vmem [shape: bf16[8,256], index: 0, kind: input, shape index: {}]
  %s1 = inlined_call_operand.vmem [shape: bf16[256,128], index: 1, kind: input, shape index: {}]
  %s2 = inlined_call_operand.vmem [shape: f32[1,128], index: 2, kind: input, shape index: {}]
  %s3 = inlined_call_operand.vmem [shape: f32[8,128], index: 3, kind: output, shape index: {}]
  %s4 = sld [smem:[#allocation0]]
  $region22: #{_lambda_.64} parent=0
    _
  %s6 = ssub.s32 1, %s4
  %s7 = scalar_select 0, %s6, %s4
  // Predicated region
  $region2: #{_lambda_.64} parent=0 // pred_check
    _
  $region3: #{_lambda_.64} parent=0 // pred_check_branch
    %9 = sbr.rel (0) target = $region5
  $region4: #{_lambda_.64} parent=0 // pred_region
    _
  $region5: #{_lambda_.64} parent=0 // pred_fallthru
    _
  // Predicated region
  $region6: #{_lambda_.64} parent=0 // pred_check
    _
  $region7: #{_lambda_.64} parent=0 // pred_check_branch
    %11 = sbr.rel (0) target = $region9
  $region8: #{_lambda_.64} parent=0 // pred_region
    _
  $region9: #{_lambda_.64} parent=0 // pred_fallthru
    _
  // Predicated region
  $region10: #{_lambda_.64} parent=0 // pred_check
    _
  $region11: #{_lambda_.64} parent=0 // pred_check_branch
    %13 = sbr.rel (0) target = $region13
  $region12: #{_lambda_.64} parent=0 // pred_region
    _
  $region13: #{_lambda_.64} parent=0 // pred_fallthru
    _
  %v15 = vld [vmem:[%s0] sm:$0xff]
  %v16 = vld [vmem:[%s1] sm:$0xf]
  %v17 = vld [vmem:[%s1 + $0x4] sm:$0xf]
  %v18 = vld [vmem:[%s1 + $0x8] sm:$0xf]
  %v19 = vld [vmem:[%s1 + $0xc] sm:$0xf]
  %v20 = vld [vmem:[%s1 + $0x10] sm:$0xf]
  %v21 = vld [vmem:[%s1 + $0x14] sm:$0xf]
  %v22 = vld [vmem:[%s1 + $0x18] sm:$0xf]
  %v23 = vld [vmem:[%s1 + $0x1c] sm:$0xf]
  %v24 = vld [vmem:[%s1 + $0x20] sm:$0xf]
  %v25 = vld [vmem:[%s1 + $0x24] sm:$0xf]
  %v26 = vld [vmem:[%s1 + $0x28] sm:$0xf]
  %v27 = vld [vmem:[%s1 + $0x2c] sm:$0xf]
  %v28 = vld [vmem:[%s1 + $0x30] sm:$0xf]
  %v29 = vld [vmem:[%s1 + $0x34] sm:$0xf]
  %v30 = vld [vmem:[%s1 + $0x38] sm:$0xf]
  %v31 = vld [vmem:[%s1 + $0x3c] sm:$0xf]
  %v32 = vld [vmem:[%s1 + $0x40] sm:$0xf]
  %v33 = vld [vmem:[%s1 + $0x44] sm:$0xf]
  %v34 = vld [vmem:[%s1 + $0x48] sm:$0xf]
  %v35 = vld [vmem:[%s1 + $0x4c] sm:$0xf]
  %v36 = vld [vmem:[%s1 + $0x50] sm:$0xf]
  %v37 = vld [vmem:[%s1 + $0x54] sm:$0xf]
  %v38 = vld [vmem:[%s1 + $0x58] sm:$0xf]
  %v39 = vld [vmem:[%s1 + $0x5c] sm:$0xf]
  %v40 = vld [vmem:[%s1 + $0x60] sm:$0xf]
  %v41 = vld [vmem:[%s1 + $0x64] sm:$0xf]
  %v42 = vld [vmem:[%s1 + $0x68] sm:$0xf]
  %v43 = vld [vmem:[%s1 + $0x6c] sm:$0xf]
  %v44 = vld [vmem:[%s1 + $0x70] sm:$0xf]
  %v45 = vld [vmem:[%s1 + $0x74] sm:$0xf]
  %v46 = vld [vmem:[%s1 + $0x78] sm:$0xf]
  %v47 = vld [vmem:[%s1 + $0x7c] sm:$0xf]
  %v48 = vld [vmem:[%s2] sm:$0x1]
  %v50 = vlaneseq
  %v51 = vshrl.u32 %v50, 7
  %v52 = vsub.s32 0, %v51
  %v53 = vrot.slane %v48, %v52
  %v56 = vunpack.c.l.b16 %v15
  %v57 = vunpack.c.h.b16 %v15
  %v58 = vpack.c.b16 %v56, %v56
  %v59 = vpack.c.b16 %v57, %v57
  %v94 = vunpack.c.l.b16 %v16
  %v95 = vunpack.c.l.b16 %v17
  %v96 = vunpack.c.l.b16 %v18
  %v97 = vunpack.c.l.b16 %v19
  %v98 = vunpack.c.l.b16 %v20
  %v99 = vunpack.c.l.b16 %v21
  %v100 = vunpack.c.l.b16 %v22
  %v101 = vunpack.c.l.b16 %v23
  %v102 = vunpack.c.l.b16 %v24
  %v103 = vunpack.c.l.b16 %v25
  %v104 = vunpack.c.l.b16 %v26
  %v105 = vunpack.c.l.b16 %v27
  %v106 = vunpack.c.l.b16 %v28
  %v107 = vunpack.c.l.b16 %v29
  %v108 = vunpack.c.l.b16 %v30
  %v109 = vunpack.c.l.b16 %v31
  %v110 = vunpack.c.l.b16 %v32
  %v111 = vunpack.c.l.b16 %v33
  %v112 = vunpack.c.l.b16 %v34
  %v113 = vunpack.c.l.b16 %v35
  %v114 = vunpack.c.l.b16 %v36
  %v115 = vunpack.c.l.b16 %v37
  %v116 = vunpack.c.l.b16 %v38
  %v117 = vunpack.c.l.b16 %v39
  %v118 = vunpack.c.l.b16 %v40
  %v119 = vunpack.c.l.b16 %v41
  %v120 = vunpack.c.l.b16 %v42
  %v121 = vunpack.c.l.b16 %v43
  %v122 = vunpack.c.l.b16 %v44
  %v123 = vunpack.c.l.b16 %v45
  %v124 = vunpack.c.l.b16 %v46
  %v125 = vunpack.c.l.b16 %v47
  %v126 = vpack.c.b16 %v95, %v94
  %v127 = vpack.c.b16 %v97, %v96
  %v128 = vpack.c.b16 %v99, %v98
  %v129 = vpack.c.b16 %v101, %v100
  %v130 = vpack.c.b16 %v103, %v102
  %v131 = vpack.c.b16 %v105, %v104
  %v132 = vpack.c.b16 %v107, %v106
  %v133 = vpack.c.b16 %v109, %v108
  %v134 = vpack.c.b16 %v111, %v110
  %v135 = vpack.c.b16 %v113, %v112
  %v136 = vpack.c.b16 %v115, %v114
  %v137 = vpack.c.b16 %v117, %v116
  %v138 = vpack.c.b16 %v119, %v118
  %v139 = vpack.c.b16 %v121, %v120
  %v140 = vpack.c.b16 %v123, %v122
  %v141 = vpack.c.b16 %v125, %v124
  %158 = vmatprep.subr.bf16.mxu0 0
  %159 = vmatpush1.bf16.msra.mxu0 %v126
  %160 = vmatprep.subr.bf16.mxu0 0
  %161 = vmatpush1.bf16.msra.mxu0 %v127
  %162 = vmatprep.subr.bf16.mxu0 0
  %163 = vmatpush1.bf16.msra.mxu0 %v128
  %164 = vmatprep.subr.bf16.mxu0 0
  %165 = vmatpush1.bf16.msra.mxu0 %v129
  %166 = vmatprep.subr.bf16.mxu0 0
  %167 = vmatpush1.bf16.msra.mxu0 %v130
  %168 = vmatprep.subr.bf16.mxu0 0
  %169 = vmatpush1.bf16.msra.mxu0 %v131
  %170 = vmatprep.subr.bf16.mxu0 0
  %171 = vmatpush1.bf16.msra.mxu0 %v132
  %172 = vmatprep.subr.bf16.mxu0 0
  %173 = vmatpush1.bf16.msra.mxu0 %v133
  %174 = vmatprep.subr.bf16.mxu0 0
  %175 = vmatpush1.bf16.msra.mxu0 %v134
  %176 = vmatprep.subr.bf16.mxu0 0
  %177 = vmatpush1.bf16.msra.mxu0 %v135
  %178 = vmatprep.subr.bf16.mxu0 0
  %179 = vmatpush1.bf16.msra.mxu0 %v136
  %180 = vmatprep.subr.bf16.mxu0 0
  %181 = vmatpush1.bf16.msra.mxu0 %v137
  %182 = vmatprep.subr.bf16.mxu0 0
  %183 = vmatpush1.bf16.msra.mxu0 %v138
  %184 = vmatprep.subr.bf16.mxu0 0
  %185 = vmatpush1.bf16.msra.mxu0 %v139
  %186 = vmatprep.subr.bf16.mxu0 0
  %187 = vmatpush1.bf16.msra.mxu0 %v140
  %188 = vmatprep.subr.bf16.mxu0 0
  %189 = vmatpush1.bf16.msra.mxu0 %v141
  %190 = vmatprep.mubr.bf16.mxu0 %v59
  %191 = vmatmul.mubr.bf16.gmra.mrb[0].mxu0 %v58
  %v192 = vpop.f32.mrb[0].mxu0
  %v193 = vadd.f32 %v53, %v192
  %v194 = vpop.f32.mrb[0].mxu0
  %v195 = vpop.f32.mrb[0].mxu0
  %v196 = vpop.f32.mrb[0].mxu0
  %197 = vdwg.mxu0
  %198 = vst [vmem:[%s3] sm:$0xff] %v193
  // Predicated region
  $region14: #{_lambda_.64} parent=0 // pred_check
    _
  $region15: #{_lambda_.64} parent=0 // pred_check_branch
    %200 = sbr.rel (0) target = $region17
  $region16: #{_lambda_.64} parent=0 // pred_region
    _
  $region17: #{_lambda_.64} parent=0 // pred_fallthru
    _
  // Predicated region
  $region18: #{_lambda_.64} parent=0 // pred_check
    _
  $region19: #{_lambda_.64} parent=0 // pred_check_branch
    %202 = sbr.rel (0) target = $region21
  $region20: #{_lambda_.64} parent=0 // pred_region
    _
  $region21: #{_lambda_.64} parent=0 // pred_fallthru
    _

</llo_original>
